<compile_context>
chip_gen: v7x
topology: tpu7x:2x2x1
jax: 0.10.0
libtpu: 0.0.40
codegen_flags: <defaults>
</compile_context>

<pallas_src>
import functools

import jax
import jax.numpy as jnp
from jax.experimental import pallas as pl
from jax.experimental.pallas import tpu as pltpu


def _round_up(x, m):
    return (x + m - 1) // m * m


# -------------------- Conv + BN + ReLU as a single-K GEMM --------------------

def _gemm_shift_act_kernel(a_ref, w_ref, shift_ref, o_ref, *, activation):
    y = jnp.dot(a_ref[...], w_ref[...], preferred_element_type=jnp.float32)
    y = y + shift_ref[...]
    if activation == "relu":
        y = jnp.maximum(y, 0.0)
    o_ref[...] = y.astype(o_ref.dtype)


def matmul_shift_act(a, w, shift, *, activation, out_dtype):
    """a: (M, K) bf16; w: (K, N) bf16; shift: (1, N) f32.  Single K block,
    grid over M only (N <= 128 always here); no accumulator scratch needed."""
    m, k = a.shape
    k2, n = w.shape
    assert k == k2
    mp = _round_up(m, 8)
    if mp != m:
        a = jnp.pad(a, ((0, mp - m), (0, 0)))
    if mp >= 512:
        tm = 512
    elif mp >= 256:
        tm = 256
    elif mp >= 128:
        tm = 128
    else:
        tm = mp                       # single full-dim block
    grid = (pl.cdiv(mp, tm),)

    out = pl.pallas_call(
        functools.partial(_gemm_shift_act_kernel, activation=activation),
        out_shape=jax.ShapeDtypeStruct((mp, n), out_dtype),
        grid_spec=pltpu.PrefetchScalarGridSpec(
            num_scalar_prefetch=0,
            grid=grid,
            in_specs=[
                pl.BlockSpec((tm, k), lambda i: (i, 0)),
                pl.BlockSpec((k, n), lambda i: (0, 0)),
                pl.BlockSpec((1, n), lambda i: (0, 0)),
            ],
            out_specs=pl.BlockSpec((tm, n), lambda i: (i, 0)),
        ),
        compiler_params=pltpu.CompilerParams(
            dimension_semantics=("parallel",)),
    )(a, w, shift)
    return out[:m] if mp != m else out


def im2col_nhwc(x, k, stride, pad):
    """x: (N,H,W,C) bf16 -> (N*Ho*Wo, K*K*C) bf16 in (ky, kx, c) column order.
    Built from static strided slices + one concat (copy-only XLA ops)."""
    n, h, w, c = x.shape
    ho = (h + 2 * pad - k) // stride + 1
    wo = (w + 2 * pad - k) // stride + 1
    if pad:
        x = jnp.pad(x, ((0, 0), (pad, pad), (pad, pad), (0, 0)))
    patches = []
    for ky in range(k):
        for kx in range(k):
            patches.append(
                x[:, ky:ky + stride * ho:stride, kx:kx + stride * wo:stride, :])
    cols = jnp.concatenate(patches, axis=-1)              # (n, ho, wo, k*k*c)
    return cols.reshape(n * ho * wo, k * k * c), ho, wo


def conv_bn_relu(x, w, shift, *, k, stride, pad):
    """Conv2d + BatchNorm2d(eval) + ReLU as one Pallas GEMM (NHWC, bf16)."""
    n = x.shape[0]
    cols, ho, wo = im2col_nhwc(x, k, stride, pad)
    cout = w.shape[1]
    out = matmul_shift_act(cols, w, shift, activation="relu",
                           out_dtype=jnp.bfloat16)
    return out.reshape(n, ho, wo, cout)


# ------------------------------ MaxPool2d(2,2) --------------------------------

def _maxpool_kernel(a_ref, b_ref, o_ref):
    a = a_ref[...]                                     # (tr, 2, wo, c) even cols
    b = b_ref[...]                                     # (tr, 2, wo, c) odd  cols
    o_ref[...] = jnp.maximum(jnp.maximum(a[:, 0], a[:, 1]),
                             jnp.maximum(b[:, 0], b[:, 1]))


def maxpool2x2(x):
    """MaxPool2d(2,2) on NHWC: one gridded Pallas pass; vertical row-pairs are
    handled in-kernel via the free (n*ho, 2, ...) view."""
    n, h, w, c = x.shape
    ho, wo = h // 2, w // 2
    rows = n * ho
    xa = x[:, :, 0::2, :].reshape(rows, 2, wo, c)
    xb = x[:, :, 1::2, :].reshape(rows, 2, wo, c)
    tr = rows if rows <= 256 else 256
    grid = (pl.cdiv(rows, tr),)

    out = pl.pallas_call(
        _maxpool_kernel,
        out_shape=jax.ShapeDtypeStruct((rows, wo, c), x.dtype),
        grid_spec=pltpu.PrefetchScalarGridSpec(
            num_scalar_prefetch=0,
            grid=grid,
            in_specs=[pl.BlockSpec((tr, 2, wo, c), lambda i: (i, 0, 0, 0)),
                      pl.BlockSpec((tr, 2, wo, c), lambda i: (i, 0, 0, 0))],
            out_specs=pl.BlockSpec((tr, wo, c), lambda i: (i, 0, 0)),
        ),
        compiler_params=pltpu.CompilerParams(
            dimension_semantics=("parallel",)),
    )(xa, xb)
    return out.reshape(n, ho, wo, c)


# ----------------- fused upsampling + score conv + sigmoid -------------------

def _upscore_kernel(a1_ref, a2_ref, a3_ref, a4_ref,
                    w1_ref, w2_ref, w3_ref, w4_ref, shift_ref, o_ref):
    acc = jnp.dot(a1_ref[...], w1_ref[...], preferred_element_type=jnp.float32)
    acc = acc + jnp.dot(a2_ref[...], w2_ref[...], preferred_element_type=jnp.float32)
    acc = acc + jnp.dot(a3_ref[...], w3_ref[...], preferred_element_type=jnp.float32)
    acc = acc + jnp.dot(a4_ref[...], w4_ref[...], preferred_element_type=jnp.float32)
    y = acc + shift_ref[...]
    o_ref[...] = (0.5 * (jnp.tanh(0.5 * y) + 1.0)).astype(o_ref.dtype)  # sigmoid


def upsample_score(feats, up_ws, shift_row, out_size):
    """4x ConvTranspose2d + stack + 1x1 score conv + sigmoid in ONE GEMM.
    A-operands are the raw NHWC feature maps (flattened, no im2col); output is
    lane-dense over the in_size^2 pixels."""
    n = feats[0].shape[0]
    mp = _round_up(n, 8)
    p = out_size * out_size
    a_list = []
    for f in feats:
        a = f.reshape(n, -1)
        if mp != n:
            a = jnp.pad(a, ((0, mp - n), (0, 0)))
        a_list.append(a)

    tp = p if p <= 4096 else 256      # 256 always divides p (in_size % 16 == 0)
    grid = (p // tp,)
    in_specs = ([pl.BlockSpec((mp, a.shape[1]), lambda j: (0, 0)) for a in a_list]
                + [pl.BlockSpec((w.shape[0], tp), lambda j: (0, j)) for w in up_ws]
                + [pl.BlockSpec((1, tp), lambda j: (0, j))])

    out = pl.pallas_call(
        _upscore_kernel,
        out_shape=jax.ShapeDtypeStruct((mp, p), jnp.float32),
        grid_spec=pltpu.PrefetchScalarGridSpec(
            num_scalar_prefetch=0,
            grid=grid,
            in_specs=in_specs,
            out_specs=pl.BlockSpec((mp, tp), lambda j: (0, j)),
        ),
        compiler_params=pltpu.CompilerParams(
            dimension_semantics=("parallel",)),
    )(*a_list, *up_ws, shift_row)
    out = out[:n] if mp != n else out
    return out.reshape(n, 1, out_size, out_size)


# -------------------------------- parameters ---------------------------------

def init_params(key, in_size):
    keys = iter(jax.random.split(key, 64))

    def conv(cout, cin, k):
        return (0.1 * jax.random.normal(next(keys), (cout, cin, k, k), jnp.float32),
                0.1 * jax.random.normal(next(keys), (cout,), jnp.float32))

    def bn(c):
        gamma = jax.random.uniform(next(keys), (c,), jnp.float32, 0.5, 1.5)
        beta = 0.1 * jax.random.normal(next(keys), (c,), jnp.float32)
        rmean = 0.1 * jax.random.normal(next(keys), (c,), jnp.float32)
        rvar = jax.random.uniform(next(keys), (c,), jnp.float32, 0.5, 1.5)
        return (gamma, beta, rmean, rvar)

    def upconv(cin, k):
        return (0.1 * jax.random.normal(next(keys), (cin, 1, k, k), jnp.float32),
                0.1 * jax.random.normal(next(keys), (1,), jnp.float32))

    p = {}
    p["c1a_w"], p["c1a_b"] = conv(32, 3, 5);    p["bn1a"] = bn(32)
    p["c1b_w"], p["c1b_b"] = conv(32, 32, 3);   p["bn1b"] = bn(32)
    p["up1_w"], p["up1_b"] = upconv(32, in_size // 2 + 1)
    p["c2a_w"], p["c2a_b"] = conv(64, 32, 3);   p["bn2a"] = bn(64)
    p["c2b_w"], p["c2b_b"] = conv(64, 64, 3);   p["bn2b"] = bn(64)
    p["up2_w"], p["up2_b"] = upconv(64, 3 * (in_size // 4) + 1)
    p["c3a_w"], p["c3a_b"] = conv(96, 64, 3);   p["bn3a"] = bn(96)
    p["c3b_w"], p["c3b_b"] = conv(96, 96, 3);   p["bn3b"] = bn(96)
    p["up3_w"], p["up3_b"] = upconv(96, 7 * (in_size // 8) + 1)
    p["c4a_w"], p["c4a_b"] = conv(128, 96, 3);  p["bn4a"] = bn(128)
    p["c4b_w"], p["c4b_b"] = conv(128, 128, 3); p["bn4b"] = bn(128)
    p["up4_w"], p["up4_b"] = upconv(128, 15 * (in_size // 16) + 1)
    p["score_w"] = 0.1 * jax.random.normal(next(keys), (1, 4, 1, 1), jnp.float32)
    p["score_b"] = 0.1 * jax.random.normal(next(keys), (1,), jnp.float32)
    return p


def _dense_tconv_matrix(w, s_in, out_size):
    """ConvTranspose2d(stride=1, pad=0, out_channels=1) as a dense
    (S*S*C, out_size^2) matrix.  w: (C, 1, k, k).
    M[(i,j,c),(y,x)] = w[c,0,y-i,x-j] when 0 <= y-i,x-j < k else 0."""
    cin, _, k, _ = w.shape
    wf = w[:, 0]                                              # (C, k, k)
    pad = s_in - 1
    wp = jnp.pad(wf, ((0, 0), (pad, pad), (pad, pad)))
    idx = jnp.arange(out_size)[None, :] - jnp.arange(s_in)[:, None] + pad  # (S, out)
    m = wp[:, idx[:, None, :, None], idx[None, :, None, :]]   # (C, S, S, out, out)
    m = jnp.transpose(m, (1, 2, 0, 3, 4))                     # (S, S, C, out, out)
    return m.reshape(s_in * s_in * cin, out_size * out_size)


def prepare_params(raw, in_size, eps=1e-5):
    """One-time folding: BN into conv weights; transpose convs + score conv
    into dense bf16 matrices with a lane-dense pixel axis."""
    arrays, cfg = {}, {}

    def prep_conv(name, stride, pad):
        w, b = raw[name + "_w"], raw[name + "_b"]
        gamma, beta, mean, var = raw["bn" + name[1:]]
        scale = gamma / jnp.sqrt(var + eps)                   # (Cout,)
        cout, cin, k, _ = w.shape
        wm = (w * scale[:, None, None, None]).transpose(2, 3, 1, 0)
        arrays[name + "_w"] = wm.reshape(k * k * cin, cout).astype(jnp.bfloat16)
        arrays[name + "_shift"] = (beta + (b - mean) * scale)[None, :].astype(jnp.float32)
        cfg[name] = dict(k=k, stride=stride, pad=pad)

    prep_conv("c1a", 2, 2)
    prep_conv("c1b", 1, 1)
    prep_conv("c2a", 1, 1)
    prep_conv("c2b", 1, 1)
    prep_conv("c3a", 1, 1)
    prep_conv("c3b", 1, 1)
    prep_conv("c4a", 1, 1)
    prep_conv("c4b", 1, 1)

    sw = raw["score_w"].reshape(4)
    shift_total = raw["score_b"].reshape(())
    up_ws = []
    for i, name in enumerate(["up1", "up2", "up3", "up4"]):
        w, b = raw[name + "_w"], raw[name + "_b"]
        k = w.shape[2]
        s_in = in_size - k + 1
        m = _dense_tconv_matrix(w, s_in, in_size)             # (S*S*C, in_size^2)
        up_ws.append((m * sw[i]).astype(jnp.bfloat16))
        shift_total = shift_total + sw[i] * b[0]
    arrays["up_ws"] = tuple(up_ws)
    arrays["up_shift"] = jnp.full((1, in_size * in_size), shift_total, jnp.float32)
    return arrays, cfg


# --------------------------------- forward -----------------------------------

def fcn_forward(x_nchw, arrays, *, cfg, in_size):
    x = jnp.transpose(x_nchw, (0, 2, 3, 1)).astype(jnp.bfloat16)   # NHWC bf16

    def conv(name, h):
        c = cfg[name]
        return conv_bn_relu(h, arrays[name + "_w"], arrays[name + "_shift"],
                            k=c["k"], stride=c["stride"], pad=c["pad"])

    x1_ = conv("c1b", conv("c1a", x))                   # convBlock1
    x2_ = conv("c2b", conv("c2a", maxpool2x2(x1_)))     # pool1 + convBlock2
    x3_ = conv("c3b", conv("c3a", maxpool2x2(x2_)))     # pool2 + convBlock3
    x4_ = conv("c4b", conv("c4a", maxpool2x2(x3_)))     # pool3 + convBlock4
    # upsampling1..4 + stack + 1x1 score conv + sigmoid, fused into one GEMM
    return upsample_score([x1_, x2_, x3_, x4_], arrays["up_ws"],
                          arrays["up_shift"], in_size)


if __name__ == "__main__":
    in_size = 16        # smallest size satisfying in_size % 16 == 0
    batch = 2
    kparams, kx = jax.random.split(jax.random.PRNGKey(0))
    raw = init_params(kparams, in_size)
    arrays, cfg = prepare_params(raw, in_size)
    x = jax.random.normal(kx, (batch, 3, in_size, in_size), jnp.float32)

    fwd = jax.jit(functools.partial(fcn_forward, cfg=cfg, in_size=in_size))
    out = jax.block_until_ready(fwd(x, arrays))

    assert out.shape == (batch, 1, in_size, in_size), out.shape
    assert bool(jnp.all(jnp.isfinite(out)))
    assert bool(jnp.all((out >= 0.0) & (out <= 1.0)))   # sigmoid range
    print("KERNEL_OK")
</pallas_src>

<mosaic_0001>
module attributes {stable_mosaic.version = 11 : i64} {
  func.func @_gemm_shift_act_kernel(%arg0: i32, %arg1: memref<128x75xbf16, #tpu.memory_space<vmem>>, %arg2: memref<75x32xbf16, #tpu.memory_space<vmem>>, %arg3: memref<1x32xf32, #tpu.memory_space<vmem>>, %arg4: memref<128x32xbf16, #tpu.memory_space<vmem>>) attributes {dimension_semantics = [#tpu.dimension_semantics<parallel>], iteration_bounds = array<i64: 1>, scalar_prefetch = 0 : i64, scratch_operands = 0 : i64, tpu.core_type = #tpu.core_type<tc>, window_params = [{transform_indices = @transform_0, window_bounds = array<i64: 128, 75>}, {pipeline_mode = #tpu.pipeline_mode<synchronous>, transform_indices = @transform_1, window_bounds = array<i64: 75, 32>}, {pipeline_mode = #tpu.pipeline_mode<synchronous>, transform_indices = @transform_2, window_bounds = array<i64: 1, 32>}, {transform_indices = @transform_3, window_bounds = array<i64: 128, 32>}]} {
    %c0 = arith.constant 0 : index
    %c0_0 = arith.constant 0 : index
    %0 = vector.load %arg1[%c0, %c0_0] : memref<128x75xbf16, #tpu.memory_space<vmem>>, vector<128x75xbf16>
    %c0_1 = arith.constant 0 : index
    %c0_2 = arith.constant 0 : index
    %1 = vector.load %arg2[%c0_1, %c0_2] : memref<75x32xbf16, #tpu.memory_space<vmem>>, vector<75x32xbf16>
    %cst = arith.constant dense<0.000000e+00> : vector<128x32xf32>
    %2 = tpu.matmul %0, %1, %cst {dimension_numbers = #tpu.dot_dimension_numbers<[1], [0], [0], [1], [0, 0, 1, 1], [], []>} : vector<128x75xbf16>, vector<75x32xbf16>, vector<128x32xf32> -> vector<128x32xf32>
    %c0_3 = arith.constant 0 : index
    %c0_4 = arith.constant 0 : index
    %3 = vector.load %arg3[%c0_3, %c0_4] : memref<1x32xf32, #tpu.memory_space<vmem>>, vector<1x32xf32>
    %4 = vector.broadcast %3 : vector<1x32xf32> to vector<128x32xf32>
    %5 = arith.addf %2, %4 : vector<128x32xf32>
    %cst_5 = arith.constant 0.000000e+00 : f32
    %6 = vector.broadcast %cst_5 : f32 to vector<128x32xf32>
    %7 = arith.maximumf %5, %6 : vector<128x32xf32>
    %8 = arith.truncf %7 : vector<128x32xf32> to vector<128x32xbf16>
    %c0_6 = arith.constant 0 : index
    %c0_7 = arith.constant 0 : index
    %9 = vector.load %arg4[%c0_6, %c0_7] : memref<128x32xbf16, #tpu.memory_space<vmem>>, vector<128x32xbf16>
    tpu.vector_store %arg4[%c0_6, %c0_7], %8 {strides = array<i32>} : memref<128x32xbf16, #tpu.memory_space<vmem>>, vector<128x32xbf16>,
    return
  }
  func.func @transform_0(%arg0: i32) -> (i32, i32) {
    %c0_i32 = arith.constant 0 : i32
    %c0_i32_0 = arith.constant 0 : i32
    return %arg0, %c0_i32 : i32, i32
  }
  func.func @transform_1(%arg0: i32) -> (i32, i32) {
    %c0_i32 = arith.constant 0 : i32
    %c0_i32_0 = arith.constant 0 : i32
    %c0_i32_1 = arith.constant 0 : i32
    return %c0_i32, %c0_i32_0 : i32, i32
  }
  func.func @transform_2(%arg0: i32) -> (i32, i32) {
    %c0_i32 = arith.constant 0 : i32
    %c0_i32_0 = arith.constant 0 : i32
    %c0_i32_1 = arith.constant 0 : i32
    return %c0_i32, %c0_i32_0 : i32, i32
  }
  func.func @transform_3(%arg0: i32) -> (i32, i32) {
    %c0_i32 = arith.constant 0 : i32
    %c0_i32_0 = arith.constant 0 : i32
    return %arg0, %c0_i32 : i32, i32
  }
}

module attributes {stable_mosaic.version = 11 : i64} {
  func.func @_gemm_shift_act_kernel(%arg0: i32, %arg1: memref<128x288xbf16, #tpu.memory_space<vmem>>, %arg2: memref<288x32xbf16, #tpu.memory_space<vmem>>, %arg3: memref<1x32xf32, #tpu.memory_space<vmem>>, %arg4: memref<128x32xbf16, #tpu.memory_space<vmem>>) attributes {dimension_semantics = [#tpu.dimension_semantics<parallel>], iteration_bounds = array<i64: 1>, scalar_prefetch = 0 : i64, scratch_operands = 0 : i64, tpu.core_type = #tpu.core_type<tc>, window_params = [{transform_indices = @transform_0, window_bounds = array<i64: 128, 288>}, {pipeline_mode = #tpu.pipeline_mode<synchronous>, transform_indices = @transform_1, window_bounds = array<i64: 288, 32>}, {pipeline_mode = #tpu.pipeline_mode<synchronous>, transform_indices = @transform_2, window_bounds = array<i64: 1, 32>}, {transform_indices = @transform_3, window_bounds = array<i64: 128, 32>}]} {
    %c0 = arith.constant 0 : index
    %c0_0 = arith.constant 0 : index
    %0 = vector.load %arg1[%c0, %c0_0] : memref<128x288xbf16, #tpu.memory_space<vmem>>, vector<128x288xbf16>
    %c0_1 = arith.constant 0 : index
    %c0_2 = arith.constant 0 : index
    %1 = vector.load %arg2[%c0_1, %c0_2] : memref<288x32xbf16, #tpu.memory_space<vmem>>, vector<288x32xbf16>
    %cst = arith.constant dense<0.000000e+00> : vector<128x32xf32>
    %2 = tpu.matmul %0, %1, %cst {dimension_numbers = #tpu.dot_dimension_numbers<[1], [0], [0], [1], [0, 0, 1, 1], [], []>} : vector<128x288xbf16>, vector<288x32xbf16>, vector<128x32xf32> -> vector<128x32xf32>
    %c0_3 = arith.constant 0 : index
    %c0_4 = arith.constant 0 : index
    %3 = vector.load %arg3[%c0_3, %c0_4] : memref<1x32xf32, #tpu.memory_space<vmem>>, vector<1x32xf32>
    %4 = vector.broadcast %3 : vector<1x32xf32> to vector<128x32xf32>
    %5 = arith.addf %2, %4 : vector<128x32xf32>
    %cst_5 = arith.constant 0.000000e+00 : f32
    %6 = vector.broadcast %cst_5 : f32 to vector<128x32xf32>
    %7 = arith.maximumf %5, %6 : vector<128x32xf32>
    %8 = arith.truncf %7 : vector<128x32xf32> to vector<128x32xbf16>
    %c0_6 = arith.constant 0 : index
    %c0_7 = arith.constant 0 : index
    %9 = vector.load %arg4[%c0_6, %c0_7] : memref<128x32xbf16, #tpu.memory_space<vmem>>, vector<128x32xbf16>
    tpu.vector_store %arg4[%c0_6, %c0_7], %8 {strides = array<i32>} : memref<128x32xbf16, #tpu.memory_space<vmem>>, vector<128x32xbf16>,
    return
  }
  func.func @transform_0(%arg0: i32) -> (i32, i32) {
    %c0_i32 = arith.constant 0 : i32
    %c0_i32_0 = arith.constant 0 : i32
    return %arg0, %c0_i32 : i32, i32
  }
  func.func @transform_1(%arg0: i32) -> (i32, i32) {
    %c0_i32 = arith.constant 0 : i32
    %c0_i32_0 = arith.constant 0 : i32
    %c0_i32_1 = arith.constant 0 : i32
    return %c0_i32, %c0_i32_0 : i32, i32
  }
  func.func @transform_2(%arg0: i32) -> (i32, i32) {
    %c0_i32 = arith.constant 0 : i32
    %c0_i32_0 = arith.constant 0 : i32
    %c0_i32_1 = arith.constant 0 : i32
    return %c0_i32, %c0_i32_0 : i32, i32
  }
  func.func @transform_3(%arg0: i32) -> (i32, i32) {
    %c0_i32 = arith.constant 0 : i32
    %c0_i32_0 = arith.constant 0 : i32
    return %arg0, %c0_i32 : i32, i32
  }
}

module attributes {stable_mosaic.version = 11 : i64} {
  func.func @_maxpool_kernel(%arg0: i32, %arg1: memref<8x2x4x32xbf16, #tpu.memory_space<vmem>>, %arg2: memref<8x2x4x32xbf16, #tpu.memory_space<vmem>>, %arg3: memref<8x4x32xbf16, #tpu.memory_space<vmem>>) attributes {dimension_semantics = [#tpu.dimension_semantics<parallel>], iteration_bounds = array<i64: 1>, scalar_prefetch = 0 : i64, scratch_operands = 0 : i64, tpu.core_type = #tpu.core_type<tc>, window_params = [{transform_indices = @transform_0, window_bounds = array<i64: 8, 2, 4, 32>}, {transform_indices = @transform_1, window_bounds = array<i64: 8, 2, 4, 32>}, {transform_indices = @transform_2, window_bounds = array<i64: 8, 4, 32>}]} {
    %c0 = arith.constant 0 : index
    %c0_0 = arith.constant 0 : index
    %c0_1 = arith.constant 0 : index
    %c0_2 = arith.constant 0 : index
    %0 = vector.load %arg1[%c0, %c0_0, %c0_1, %c0_2] : memref<8x2x4x32xbf16, #tpu.memory_space<vmem>>, vector<8x2x4x32xbf16>
    %c0_3 = arith.constant 0 : index
    %c0_4 = arith.constant 0 : index
    %c0_5 = arith.constant 0 : index
    %c0_6 = arith.constant 0 : index
    %1 = vector.load %arg2[%c0_3, %c0_4, %c0_5, %c0_6] : memref<8x2x4x32xbf16, #tpu.memory_space<vmem>>, vector<8x2x4x32xbf16>
    %2 = vector.extract_strided_slice %0 {offsets = [0, 0, 0, 0], sizes = [8, 1, 4, 32], strides = [1, 1, 1, 1]} : vector<8x2x4x32xbf16> to vector<8x1x4x32xbf16>
    %3 = vector.shape_cast %2 : vector<8x1x4x32xbf16> to vector<8x4x32xbf16>
    %4 = vector.extract_strided_slice %0 {offsets = [0, 1, 0, 0], sizes = [8, 1, 4, 32], strides = [1, 1, 1, 1]} : vector<8x2x4x32xbf16> to vector<8x1x4x32xbf16>
    %5 = vector.shape_cast %4 : vector<8x1x4x32xbf16> to vector<8x4x32xbf16>
    %6 = arith.maximumf %3, %5 : vector<8x4x32xbf16>
    %7 = vector.extract_strided_slice %1 {offsets = [0, 0, 0, 0], sizes = [8, 1, 4, 32], strides = [1, 1, 1, 1]} : vector<8x2x4x32xbf16> to vector<8x1x4x32xbf16>
    %8 = vector.shape_cast %7 : vector<8x1x4x32xbf16> to vector<8x4x32xbf16>
    %9 = vector.extract_strided_slice %1 {offsets = [0, 1, 0, 0], sizes = [8, 1, 4, 32], strides = [1, 1, 1, 1]} : vector<8x2x4x32xbf16> to vector<8x1x4x32xbf16>
    %10 = vector.shape_cast %9 : vector<8x1x4x32xbf16> to vector<8x4x32xbf16>
    %11 = arith.maximumf %8, %10 : vector<8x4x32xbf16>
    %12 = arith.maximumf %6, %11 : vector<8x4x32xbf16>
    %c0_7 = arith.constant 0 : index
    %c0_8 = arith.constant 0 : index
    %c0_9 = arith.constant 0 : index
    %13 = vector.load %arg3[%c0_7, %c0_8, %c0_9] : memref<8x4x32xbf16, #tpu.memory_space<vmem>>, vector<8x4x32xbf16>
    tpu.vector_store %arg3[%c0_7, %c0_8, %c0_9], %12 {strides = array<i32>} : memref<8x4x32xbf16, #tpu.memory_space<vmem>>, vector<8x4x32xbf16>,
    return
  }
  func.func @transform_0(%arg0: i32) -> (i32, i32, i32, i32) {
    %c0_i32 = arith.constant 0 : i32
    %c0_i32_0 = arith.constant 0 : i32
    %c0_i32_1 = arith.constant 0 : i32
    %c0_i32_2 = arith.constant 0 : i32
    return %arg0, %c0_i32, %c0_i32_0, %c0_i32_1 : i32, i32, i32, i32
  }
  func.func @transform_1(%arg0: i32) -> (i32, i32, i32, i32) {
    %c0_i32 = arith.constant 0 : i32
    %c0_i32_0 = arith.constant 0 : i32
    %c0_i32_1 = arith.constant 0 : i32
    %c0_i32_2 = arith.constant 0 : i32
    return %arg0, %c0_i32, %c0_i32_0, %c0_i32_1 : i32, i32, i32, i32
  }
  func.func @transform_2(%arg0: i32) -> (i32, i32, i32) {
    %c0_i32 = arith.constant 0 : i32
    %c0_i32_0 = arith.constant 0 : i32
    %c0_i32_1 = arith.constant 0 : i32
    return %arg0, %c0_i32, %c0_i32_0 : i32, i32, i32
  }
}

module attributes {stable_mosaic.version = 11 : i64} {
  func.func @_gemm_shift_act_kernel(%arg0: i32, %arg1: memref<32x288xbf16, #tpu.memory_space<vmem>>, %arg2: memref<288x64xbf16, #tpu.memory_space<vmem>>, %arg3: memref<1x64xf32, #tpu.memory_space<vmem>>, %arg4: memref<32x64xbf16, #tpu.memory_space<vmem>>) attributes {dimension_semantics = [#tpu.dimension_semantics<parallel>], iteration_bounds = array<i64: 1>, scalar_prefetch = 0 : i64, scratch_operands = 0 : i64, tpu.core_type = #tpu.core_type<tc>, window_params = [{transform_indices = @transform_0, window_bounds = array<i64: 32, 288>}, {pipeline_mode = #tpu.pipeline_mode<synchronous>, transform_indices = @transform_1, window_bounds = array<i64: 288, 64>}, {pipeline_mode = #tpu.pipeline_mode<synchronous>, transform_indices = @transform_2, window_bounds = array<i64: 1, 64>}, {transform_indices = @transform_3, window_bounds = array<i64: 32, 64>}]} {
    %c0 = arith.constant 0 : index
    %c0_0 = arith.constant 0 : index
    %0 = vector.load %arg1[%c0, %c0_0] : memref<32x288xbf16, #tpu.memory_space<vmem>>, vector<32x288xbf16>
    %c0_1 = arith.constant 0 : index
    %c0_2 = arith.constant 0 : index
    %1 = vector.load %arg2[%c0_1, %c0_2] : memref<288x64xbf16, #tpu.memory_space<vmem>>, vector<288x64xbf16>
    %cst = arith.constant dense<0.000000e+00> : vector<32x64xf32>
    %2 = tpu.matmul %0, %1, %cst {dimension_numbers = #tpu.dot_dimension_numbers<[1], [0], [0], [1], [0, 0, 1, 1], [], []>} : vector<32x288xbf16>, vector<288x64xbf16>, vector<32x64xf32> -> vector<32x64xf32>
    %c0_3 = arith.constant 0 : index
    %c0_4 = arith.constant 0 : index
    %3 = vector.load %arg3[%c0_3, %c0_4] : memref<1x64xf32, #tpu.memory_space<vmem>>, vector<1x64xf32>
    %4 = vector.broadcast %3 : vector<1x64xf32> to vector<32x64xf32>
    %5 = arith.addf %2, %4 : vector<32x64xf32>
    %cst_5 = arith.constant 0.000000e+00 : f32
    %6 = vector.broadcast %cst_5 : f32 to vector<32x64xf32>
    %7 = arith.maximumf %5, %6 : vector<32x64xf32>
    %8 = arith.truncf %7 : vector<32x64xf32> to vector<32x64xbf16>
    %c0_6 = arith.constant 0 : index
    %c0_7 = arith.constant 0 : index
    %9 = vector.load %arg4[%c0_6, %c0_7] : memref<32x64xbf16, #tpu.memory_space<vmem>>, vector<32x64xbf16>
    tpu.vector_store %arg4[%c0_6, %c0_7], %8 {strides = array<i32>} : memref<32x64xbf16, #tpu.memory_space<vmem>>, vector<32x64xbf16>,
    return
  }
  func.func @transform_0(%arg0: i32) -> (i32, i32) {
    %c0_i32 = arith.constant 0 : i32
    %c0_i32_0 = arith.constant 0 : i32
    return %arg0, %c0_i32 : i32, i32
  }
  func.func @transform_1(%arg0: i32) -> (i32, i32) {
    %c0_i32 = arith.constant 0 : i32
    %c0_i32_0 = arith.constant 0 : i32
    %c0_i32_1 = arith.constant 0 : i32
    return %c0_i32, %c0_i32_0 : i32, i32
  }
  func.func @transform_2(%arg0: i32) -> (i32, i32) {
    %c0_i32 = arith.constant 0 : i32
    %c0_i32_0 = arith.constant 0 : i32
    %c0_i32_1 = arith.constant 0 : i32
    return %c0_i32, %c0_i32_0 : i32, i32
  }
  func.func @transform_3(%arg0: i32) -> (i32, i32) {
    %c0_i32 = arith.constant 0 : i32
    %c0_i32_0 = arith.constant 0 : i32
    return %arg0, %c0_i32 : i32, i32
  }
}

module attributes {stable_mosaic.version = 11 : i64} {
  func.func @_gemm_shift_act_kernel(%arg0: i32, %arg1: memref<32x576xbf16, #tpu.memory_space<vmem>>, %arg2: memref<576x64xbf16, #tpu.memory_space<vmem>>, %arg3: memref<1x64xf32, #tpu.memory_space<vmem>>, %arg4: memref<32x64xbf16, #tpu.memory_space<vmem>>) attributes {dimension_semantics = [#tpu.dimension_semantics<parallel>], iteration_bounds = array<i64: 1>, scalar_prefetch = 0 : i64, scratch_operands = 0 : i64, tpu.core_type = #tpu.core_type<tc>, window_params = [{transform_indices = @transform_0, window_bounds = array<i64: 32, 576>}, {pipeline_mode = #tpu.pipeline_mode<synchronous>, transform_indices = @transform_1, window_bounds = array<i64: 576, 64>}, {pipeline_mode = #tpu.pipeline_mode<synchronous>, transform_indices = @transform_2, window_bounds = array<i64: 1, 64>}, {transform_indices = @transform_3, window_bounds = array<i64: 32, 64>}]} {
    %c0 = arith.constant 0 : index
    %c0_0 = arith.constant 0 : index
    %0 = vector.load %arg1[%c0, %c0_0] : memref<32x576xbf16, #tpu.memory_space<vmem>>, vector<32x576xbf16>
    %c0_1 = arith.constant 0 : index
    %c0_2 = arith.constant 0 : index
    %1 = vector.load %arg2[%c0_1, %c0_2] : memref<576x64xbf16, #tpu.memory_space<vmem>>, vector<576x64xbf16>
    %cst = arith.constant dense<0.000000e+00> : vector<32x64xf32>
    %2 = tpu.matmul %0, %1, %cst {dimension_numbers = #tpu.dot_dimension_numbers<[1], [0], [0], [1], [0, 0, 1, 1], [], []>} : vector<32x576xbf16>, vector<576x64xbf16>, vector<32x64xf32> -> vector<32x64xf32>
    %c0_3 = arith.constant 0 : index
    %c0_4 = arith.constant 0 : index
    %3 = vector.load %arg3[%c0_3, %c0_4] : memref<1x64xf32, #tpu.memory_space<vmem>>, vector<1x64xf32>
    %4 = vector.broadcast %3 : vector<1x64xf32> to vector<32x64xf32>
    %5 = arith.addf %2, %4 : vector<32x64xf32>
    %cst_5 = arith.constant 0.000000e+00 : f32
    %6 = vector.broadcast %cst_5 : f32 to vector<32x64xf32>
    %7 = arith.maximumf %5, %6 : vector<32x64xf32>
    %8 = arith.truncf %7 : vector<32x64xf32> to vector<32x64xbf16>
    %c0_6 = arith.constant 0 : index
    %c0_7 = arith.constant 0 : index
    %9 = vector.load %arg4[%c0_6, %c0_7] : memref<32x64xbf16, #tpu.memory_space<vmem>>, vector<32x64xbf16>
    tpu.vector_store %arg4[%c0_6, %c0_7], %8 {strides = array<i32>} : memref<32x64xbf16, #tpu.memory_space<vmem>>, vector<32x64xbf16>,
    return
  }
  func.func @transform_0(%arg0: i32) -> (i32, i32) {
    %c0_i32 = arith.constant 0 : i32
    %c0_i32_0 = arith.constant 0 : i32
    return %arg0, %c0_i32 : i32, i32
  }
  func.func @transform_1(%arg0: i32) -> (i32, i32) {
    %c0_i32 = arith.constant 0 : i32
    %c0_i32_0 = arith.constant 0 : i32
    %c0_i32_1 = arith.constant 0 : i32
    return %c0_i32, %c0_i32_0 : i32, i32
  }
  func.func @transform_2(%arg0: i32) -> (i32, i32) {
    %c0_i32 = arith.constant 0 : i32
    %c0_i32_0 = arith.constant 0 : i32
    %c0_i32_1 = arith.constant 0 : i32
    return %c0_i32, %c0_i32_0 : i32, i32
  }
  func.func @transform_3(%arg0: i32) -> (i32, i32) {
    %c0_i32 = arith.constant 0 : i32
    %c0_i32_0 = arith.constant 0 : i32
    return %arg0, %c0_i32 : i32, i32
  }
}

module attributes {stable_mosaic.version = 11 : i64} {
  func.func @_maxpool_kernel(%arg0: i32, %arg1: memref<4x2x2x64xbf16, #tpu.memory_space<vmem>>, %arg2: memref<4x2x2x64xbf16, #tpu.memory_space<vmem>>, %arg3: memref<4x2x64xbf16, #tpu.memory_space<vmem>>) attributes {dimension_semantics = [#tpu.dimension_semantics<parallel>], iteration_bounds = array<i64: 1>, scalar_prefetch = 0 : i64, scratch_operands = 0 : i64, tpu.core_type = #tpu.core_type<tc>, window_params = [{transform_indices = @transform_0, window_bounds = array<i64: 4, 2, 2, 64>}, {transform_indices = @transform_1, window_bounds = array<i64: 4, 2, 2, 64>}, {transform_indices = @transform_2, window_bounds = array<i64: 4, 2, 64>}]} {
    %c0 = arith.constant 0 : index
    %c0_0 = arith.constant 0 : index
    %c0_1 = arith.constant 0 : index
    %c0_2 = arith.constant 0 : index
    %0 = vector.load %arg1[%c0, %c0_0, %c0_1, %c0_2] : memref<4x2x2x64xbf16, #tpu.memory_space<vmem>>, vector<4x2x2x64xbf16>
    %c0_3 = arith.constant 0 : index
    %c0_4 = arith.constant 0 : index
    %c0_5 = arith.constant 0 : index
    %c0_6 = arith.constant 0 : index
    %1 = vector.load %arg2[%c0_3, %c0_4, %c0_5, %c0_6] : memref<4x2x2x64xbf16, #tpu.memory_space<vmem>>, vector<4x2x2x64xbf16>
    %2 = vector.extract_strided_slice %0 {offsets = [0, 0, 0, 0], sizes = [4, 1, 2, 64], strides = [1, 1, 1, 1]} : vector<4x2x2x64xbf16> to vector<4x1x2x64xbf16>
    %3 = vector.shape_cast %2 : vector<4x1x2x64xbf16> to vector<4x2x64xbf16>
    %4 = vector.extract_strided_slice %0 {offsets = [0, 1, 0, 0], sizes = [4, 1, 2, 64], strides = [1, 1, 1, 1]} : vector<4x2x2x64xbf16> to vector<4x1x2x64xbf16>
    %5 = vector.shape_cast %4 : vector<4x1x2x64xbf16> to vector<4x2x64xbf16>
    %6 = arith.maximumf %3, %5 : vector<4x2x64xbf16>
    %7 = vector.extract_strided_slice %1 {offsets = [0, 0, 0, 0], sizes = [4, 1, 2, 64], strides = [1, 1, 1, 1]} : vector<4x2x2x64xbf16> to vector<4x1x2x64xbf16>
    %8 = vector.shape_cast %7 : vector<4x1x2x64xbf16> to vector<4x2x64xbf16>
    %9 = vector.extract_strided_slice %1 {offsets = [0, 1, 0, 0], sizes = [4, 1, 2, 64], strides = [1, 1, 1, 1]} : vector<4x2x2x64xbf16> to vector<4x1x2x64xbf16>
    %10 = vector.shape_cast %9 : vector<4x1x2x64xbf16> to vector<4x2x64xbf16>
    %11 = arith.maximumf %8, %10 : vector<4x2x64xbf16>
    %12 = arith.maximumf %6, %11 : vector<4x2x64xbf16>
    %c0_7 = arith.constant 0 : index
    %c0_8 = arith.constant 0 : index
    %c0_9 = arith.constant 0 : index
    %13 = vector.load %arg3[%c0_7, %c0_8, %c0_9] : memref<4x2x64xbf16, #tpu.memory_space<vmem>>, vector<4x2x64xbf16>
    tpu.vector_store %arg3[%c0_7, %c0_8, %c0_9], %12 {strides = array<i32>} : memref<4x2x64xbf16, #tpu.memory_space<vmem>>, vector<4x2x64xbf16>,
    return
  }
  func.func @transform_0(%arg0: i32) -> (i32, i32, i32, i32) {
    %c0_i32 = arith.constant 0 : i32
    %c0_i32_0 = arith.constant 0 : i32
    %c0_i32_1 = arith.constant 0 : i32
    %c0_i32_2 = arith.constant 0 : i32
    return %arg0, %c0_i32, %c0_i32_0, %c0_i32_1 : i32, i32, i32, i32
  }
  func.func @transform_1(%arg0: i32) -> (i32, i32, i32, i32) {
    %c0_i32 = arith.constant 0 : i32
    %c0_i32_0 = arith.constant 0 : i32
    %c0_i32_1 = arith.constant 0 : i32
    %c0_i32_2 = arith.constant 0 : i32
    return %arg0, %c0_i32, %c0_i32_0, %c0_i32_1 : i32, i32, i32, i32
  }
  func.func @transform_2(%arg0: i32) -> (i32, i32, i32) {
    %c0_i32 = arith.constant 0 : i32
    %c0_i32_0 = arith.constant 0 : i32
    %c0_i32_1 = arith.constant 0 : i32
    return %arg0, %c0_i32, %c0_i32_0 : i32, i32, i32
  }
}

module attributes {stable_mosaic.version = 11 : i64} {
  func.func @_gemm_shift_act_kernel(%arg0: i32, %arg1: memref<8x576xbf16, #tpu.memory_space<vmem>>, %arg2: memref<576x96xbf16, #tpu.memory_space<vmem>>, %arg3: memref<1x96xf32, #tpu.memory_space<vmem>>, %arg4: memref<8x96xbf16, #tpu.memory_space<vmem>>) attributes {dimension_semantics = [#tpu.dimension_semantics<parallel>], iteration_bounds = array<i64: 1>, scalar_prefetch = 0 : i64, scratch_operands = 0 : i64, tpu.core_type = #tpu.core_type<tc>, window_params = [{transform_indices = @transform_0, window_bounds = array<i64: 8, 576>}, {pipeline_mode = #tpu.pipeline_mode<synchronous>, transform_indices = @transform_1, window_bounds = array<i64: 576, 96>}, {pipeline_mode = #tpu.pipeline_mode<synchronous>, transform_indices = @transform_2, window_bounds = array<i64: 1, 96>}, {transform_indices = @transform_3, window_bounds = array<i64: 8, 96>}]} {
    %c0 = arith.constant 0 : index
    %c0_0 = arith.constant 0 : index
    %0 = vector.load %arg1[%c0, %c0_0] : memref<8x576xbf16, #tpu.memory_space<vmem>>, vector<8x576xbf16>
    %c0_1 = arith.constant 0 : index
    %c0_2 = arith.constant 0 : index
    %1 = vector.load %arg2[%c0_1, %c0_2] : memref<576x96xbf16, #tpu.memory_space<vmem>>, vector<576x96xbf16>
    %cst = arith.constant dense<0.000000e+00> : vector<8x96xf32>
    %2 = tpu.matmul %0, %1, %cst {dimension_numbers = #tpu.dot_dimension_numbers<[1], [0], [0], [1], [0, 0, 1, 1], [], []>} : vector<8x576xbf16>, vector<576x96xbf16>, vector<8x96xf32> -> vector<8x96xf32>
    %c0_3 = arith.constant 0 : index
    %c0_4 = arith.constant 0 : index
    %3 = vector.load %arg3[%c0_3, %c0_4] : memref<1x96xf32, #tpu.memory_space<vmem>>, vector<1x96xf32>
    %4 = vector.broadcast %3 : vector<1x96xf32> to vector<8x96xf32>
    %5 = arith.addf %2, %4 : vector<8x96xf32>
    %cst_5 = arith.constant 0.000000e+00 : f32
    %6 = vector.broadcast %cst_5 : f32 to vector<8x96xf32>
    %7 = arith.maximumf %5, %6 : vector<8x96xf32>
    %8 = arith.truncf %7 : vector<8x96xf32> to vector<8x96xbf16>
    %c0_6 = arith.constant 0 : index
    %c0_7 = arith.constant 0 : index
    %9 = vector.load %arg4[%c0_6, %c0_7] : memref<8x96xbf16, #tpu.memory_space<vmem>>, vector<8x96xbf16>
    tpu.vector_store %arg4[%c0_6, %c0_7], %8 {strides = array<i32>} : memref<8x96xbf16, #tpu.memory_space<vmem>>, vector<8x96xbf16>,
    return
  }
  func.func @transform_0(%arg0: i32) -> (i32, i32) {
    %c0_i32 = arith.constant 0 : i32
    %c0_i32_0 = arith.constant 0 : i32
    return %arg0, %c0_i32 : i32, i32
  }
  func.func @transform_1(%arg0: i32) -> (i32, i32) {
    %c0_i32 = arith.constant 0 : i32
    %c0_i32_0 = arith.constant 0 : i32
    %c0_i32_1 = arith.constant 0 : i32
    return %c0_i32, %c0_i32_0 : i32, i32
  }
  func.func @transform_2(%arg0: i32) -> (i32, i32) {
    %c0_i32 = arith.constant 0 : i32
    %c0_i32_0 = arith.constant 0 : i32
    %c0_i32_1 = arith.constant 0 : i32
    return %c0_i32, %c0_i32_0 : i32, i32
  }
  func.func @transform_3(%arg0: i32) -> (i32, i32) {
    %c0_i32 = arith.constant 0 : i32
    %c0_i32_0 = arith.constant 0 : i32
    return %arg0, %c0_i32 : i32, i32
  }
}

module attributes {stable_mosaic.version = 11 : i64} {
  func.func @_gemm_shift_act_kernel(%arg0: i32, %arg1: memref<8x864xbf16, #tpu.memory_space<vmem>>, %arg2: memref<864x96xbf16, #tpu.memory_space<vmem>>, %arg3: memref<1x96xf32, #tpu.memory_space<vmem>>, %arg4: memref<8x96xbf16, #tpu.memory_space<vmem>>) attributes {dimension_semantics = [#tpu.dimension_semantics<parallel>], iteration_bounds = array<i64: 1>, scalar_prefetch = 0 : i64, scratch_operands = 0 : i64, tpu.core_type = #tpu.core_type<tc>, window_params = [{transform_indices = @transform_0, window_bounds = array<i64: 8, 864>}, {pipeline_mode = #tpu.pipeline_mode<synchronous>, transform_indices = @transform_1, window_bounds = array<i64: 864, 96>}, {pipeline_mode = #tpu.pipeline_mode<synchronous>, transform_indices = @transform_2, window_bounds = array<i64: 1, 96>}, {transform_indices = @transform_3, window_bounds = array<i64: 8, 96>}]} {
    %c0 = arith.constant 0 : index
    %c0_0 = arith.constant 0 : index
    %0 = vector.load %arg1[%c0, %c0_0] : memref<8x864xbf16, #tpu.memory_space<vmem>>, vector<8x864xbf16>
    %c0_1 = arith.constant 0 : index
    %c0_2 = arith.constant 0 : index
    %1 = vector.load %arg2[%c0_1, %c0_2] : memref<864x96xbf16, #tpu.memory_space<vmem>>, vector<864x96xbf16>
    %cst = arith.constant dense<0.000000e+00> : vector<8x96xf32>
    %2 = tpu.matmul %0, %1, %cst {dimension_numbers = #tpu.dot_dimension_numbers<[1], [0], [0], [1], [0, 0, 1, 1], [], []>} : vector<8x864xbf16>, vector<864x96xbf16>, vector<8x96xf32> -> vector<8x96xf32>
    %c0_3 = arith.constant 0 : index
    %c0_4 = arith.constant 0 : index
    %3 = vector.load %arg3[%c0_3, %c0_4] : memref<1x96xf32, #tpu.memory_space<vmem>>, vector<1x96xf32>
    %4 = vector.broadcast %3 : vector<1x96xf32> to vector<8x96xf32>
    %5 = arith.addf %2, %4 : vector<8x96xf32>
    %cst_5 = arith.constant 0.000000e+00 : f32
    %6 = vector.broadcast %cst_5 : f32 to vector<8x96xf32>
    %7 = arith.maximumf %5, %6 : vector<8x96xf32>
    %8 = arith.truncf %7 : vector<8x96xf32> to vector<8x96xbf16>
    %c0_6 = arith.constant 0 : index
    %c0_7 = arith.constant 0 : index
    %9 = vector.load %arg4[%c0_6, %c0_7] : memref<8x96xbf16, #tpu.memory_space<vmem>>, vector<8x96xbf16>
    tpu.vector_store %arg4[%c0_6, %c0_7], %8 {strides = array<i32>} : memref<8x96xbf16, #tpu.memory_space<vmem>>, vector<8x96xbf16>,
    return
  }
  func.func @transform_0(%arg0: i32) -> (i32, i32) {
    %c0_i32 = arith.constant 0 : i32
    %c0_i32_0 = arith.constant 0 : i32
    return %arg0, %c0_i32 : i32, i32
  }
  func.func @transform_1(%arg0: i32) -> (i32, i32) {
    %c0_i32 = arith.constant 0 : i32
    %c0_i32_0 = arith.constant 0 : i32
    %c0_i32_1 = arith.constant 0 : i32
    return %c0_i32, %c0_i32_0 : i32, i32
  }
  func.func @transform_2(%arg0: i32) -> (i32, i32) {
    %c0_i32 = arith.constant 0 : i32
    %c0_i32_0 = arith.constant 0 : i32
    %c0_i32_1 = arith.constant 0 : i32
    return %c0_i32, %c0_i32_0 : i32, i32
  }
  func.func @transform_3(%arg0: i32) -> (i32, i32) {
    %c0_i32 = arith.constant 0 : i32
    %c0_i32_0 = arith.constant 0 : i32
    return %arg0, %c0_i32 : i32, i32
  }
}

module attributes {stable_mosaic.version = 11 : i64} {
  func.func @_maxpool_kernel(%arg0: i32, %arg1: memref<2x2x1x96xbf16, #tpu.memory_space<vmem>>, %arg2: memref<2x2x1x96xbf16, #tpu.memory_space<vmem>>, %arg3: memref<2x1x96xbf16, #tpu.memory_space<vmem>>) attributes {dimension_semantics = [#tpu.dimension_semantics<parallel>], iteration_bounds = array<i64: 1>, scalar_prefetch = 0 : i64, scratch_operands = 0 : i64, tpu.core_type = #tpu.core_type<tc>, window_params = [{transform_indices = @transform_0, window_bounds = array<i64: 2, 2, 1, 96>}, {transform_indices = @transform_1, window_bounds = array<i64: 2, 2, 1, 96>}, {transform_indices = @transform_2, window_bounds = array<i64: 2, 1, 96>}]} {
    %c0 = arith.constant 0 : index
    %c0_0 = arith.constant 0 : index
    %c0_1 = arith.constant 0 : index
    %c0_2 = arith.constant 0 : index
    %0 = vector.load %arg1[%c0, %c0_0, %c0_1, %c0_2] : memref<2x2x1x96xbf16, #tpu.memory_space<vmem>>, vector<2x2x1x96xbf16>
    %c0_3 = arith.constant 0 : index
    %c0_4 = arith.constant 0 : index
    %c0_5 = arith.constant 0 : index
    %c0_6 = arith.constant 0 : index
    %1 = vector.load %arg2[%c0_3, %c0_4, %c0_5, %c0_6] : memref<2x2x1x96xbf16, #tpu.memory_space<vmem>>, vector<2x2x1x96xbf16>
    %2 = vector.extract_strided_slice %0 {offsets = [0, 0, 0, 0], sizes = [2, 1, 1, 96], strides = [1, 1, 1, 1]} : vector<2x2x1x96xbf16> to vector<2x1x1x96xbf16>
    %3 = vector.shape_cast %2 : vector<2x1x1x96xbf16> to vector<2x1x96xbf16>
    %4 = vector.extract_strided_slice %0 {offsets = [0, 1, 0, 0], sizes = [2, 1, 1, 96], strides = [1, 1, 1, 1]} : vector<2x2x1x96xbf16> to vector<2x1x1x96xbf16>
    %5 = vector.shape_cast %4 : vector<2x1x1x96xbf16> to vector<2x1x96xbf16>
    %6 = arith.maximumf %3, %5 : vector<2x1x96xbf16>
    %7 = vector.extract_strided_slice %1 {offsets = [0, 0, 0, 0], sizes = [2, 1, 1, 96], strides = [1, 1, 1, 1]} : vector<2x2x1x96xbf16> to vector<2x1x1x96xbf16>
    %8 = vector.shape_cast %7 : vector<2x1x1x96xbf16> to vector<2x1x96xbf16>
    %9 = vector.extract_strided_slice %1 {offsets = [0, 1, 0, 0], sizes = [2, 1, 1, 96], strides = [1, 1, 1, 1]} : vector<2x2x1x96xbf16> to vector<2x1x1x96xbf16>
    %10 = vector.shape_cast %9 : vector<2x1x1x96xbf16> to vector<2x1x96xbf16>
    %11 = arith.maximumf %8, %10 : vector<2x1x96xbf16>
    %12 = arith.maximumf %6, %11 : vector<2x1x96xbf16>
    %c0_7 = arith.constant 0 : index
    %c0_8 = arith.constant 0 : index
    %c0_9 = arith.constant 0 : index
    %13 = vector.load %arg3[%c0_7, %c0_8, %c0_9] : memref<2x1x96xbf16, #tpu.memory_space<vmem>>, vector<2x1x96xbf16>
    tpu.vector_store %arg3[%c0_7, %c0_8, %c0_9], %12 {strides = array<i32>} : memref<2x1x96xbf16, #tpu.memory_space<vmem>>, vector<2x1x96xbf16>,
    return
  }
  func.func @transform_0(%arg0: i32) -> (i32, i32, i32, i32) {
    %c0_i32 = arith.constant 0 : i32
    %c0_i32_0 = arith.constant 0 : i32
    %c0_i32_1 = arith.constant 0 : i32
    %c0_i32_2 = arith.constant 0 : i32
    return %arg0, %c0_i32, %c0_i32_0, %c0_i32_1 : i32, i32, i32, i32
  }
  func.func @transform_1(%arg0: i32) -> (i32, i32, i32, i32) {
    %c0_i32 = arith.constant 0 : i32
    %c0_i32_0 = arith.constant 0 : i32
    %c0_i32_1 = arith.constant 0 : i32
    %c0_i32_2 = arith.constant 0 : i32
    return %arg0, %c0_i32, %c0_i32_0, %c0_i32_1 : i32, i32, i32, i32
  }
  func.func @transform_2(%arg0: i32) -> (i32, i32, i32) {
    %c0_i32 = arith.constant 0 : i32
    %c0_i32_0 = arith.constant 0 : i32
    %c0_i32_1 = arith.constant 0 : i32
    return %arg0, %c0_i32, %c0_i32_0 : i32, i32, i32
  }
}

module attributes {stable_mosaic.version = 11 : i64} {
  func.func @_gemm_shift_act_kernel(%arg0: i32, %arg1: memref<8x864xbf16, #tpu.memory_space<vmem>>, %arg2: memref<864x128xbf16, #tpu.memory_space<vmem>>, %arg3: memref<1x128xf32, #tpu.memory_space<vmem>>, %arg4: memref<8x128xbf16, #tpu.memory_space<vmem>>) attributes {dimension_semantics = [#tpu.dimension_semantics<parallel>], iteration_bounds = array<i64: 1>, scalar_prefetch = 0 : i64, scratch_operands = 0 : i64, tpu.core_type = #tpu.core_type<tc>, window_params = [{transform_indices = @transform_0, window_bounds = array<i64: 8, 864>}, {pipeline_mode = #tpu.pipeline_mode<synchronous>, transform_indices = @transform_1, window_bounds = array<i64: 864, 128>}, {pipeline_mode = #tpu.pipeline_mode<synchronous>, transform_indices = @transform_2, window_bounds = array<i64: 1, 128>}, {transform_indices = @transform_3, window_bounds = array<i64: 8, 128>}]} {
    %c0 = arith.constant 0 : index
    %c0_0 = arith.constant 0 : index
    %0 = vector.load %arg1[%c0, %c0_0] : memref<8x864xbf16, #tpu.memory_space<vmem>>, vector<8x864xbf16>
    %c0_1 = arith.constant 0 : index
    %c0_2 = arith.constant 0 : index
    %1 = vector.load %arg2[%c0_1, %c0_2] : memref<864x128xbf16, #tpu.memory_space<vmem>>, vector<864x128xbf16>
    %cst = arith.constant dense<0.000000e+00> : vector<8x128xf32>
    %2 = tpu.matmul %0, %1, %cst {dimension_numbers = #tpu.dot_dimension_numbers<[1], [0], [0], [1], [0, 0, 1, 1], [], []>} : vector<8x864xbf16>, vector<864x128xbf16>, vector<8x128xf32> -> vector<8x128xf32>
    %c0_3 = arith.constant 0 : index
    %c0_4 = arith.constant 0 : index
    %3 = vector.load %arg3[%c0_3, %c0_4] : memref<1x128xf32, #tpu.memory_space<vmem>>, vector<1x128xf32>
    %4 = vector.broadcast %3 : vector<1x128xf32> to vector<8x128xf32>
    %5 = arith.addf %2, %4 : vector<8x128xf32>
    %cst_5 = arith.constant 0.000000e+00 : f32
    %6 = vector.broadcast %cst_5 : f32 to vector<8x128xf32>
    %7 = arith.maximumf %5, %6 : vector<8x128xf32>
    %8 = arith.truncf %7 : vector<8x128xf32> to vector<8x128xbf16>
    %c0_6 = arith.constant 0 : index
    %c0_7 = arith.constant 0 : index
    %9 = vector.load %arg4[%c0_6, %c0_7] : memref<8x128xbf16, #tpu.memory_space<vmem>>, vector<8x128xbf16>
    tpu.vector_store %arg4[%c0_6, %c0_7], %8 {strides = array<i32>} : memref<8x128xbf16, #tpu.memory_space<vmem>>, vector<8x128xbf16>,
    return
  }
  func.func @transform_0(%arg0: i32) -> (i32, i32) {
    %c0_i32 = arith.constant 0 : i32
    %c0_i32_0 = arith.constant 0 : i32
    return %arg0, %c0_i32 : i32, i32
  }
  func.func @transform_1(%arg0: i32) -> (i32, i32) {
    %c0_i32 = arith.constant 0 : i32
    %c0_i32_0 = arith.constant 0 : i32
    %c0_i32_1 = arith.constant 0 : i32
    return %c0_i32, %c0_i32_0 : i32, i32
  }
  func.func @transform_2(%arg0: i32) -> (i32, i32) {
    %c0_i32 = arith.constant 0 : i32
    %c0_i32_0 = arith.constant 0 : i32
    %c0_i32_1 = arith.constant 0 : i32
    return %c0_i32, %c0_i32_0 : i32, i32
  }
  func.func @transform_3(%arg0: i32) -> (i32, i32) {
    %c0_i32 = arith.constant 0 : i32
    %c0_i32_0 = arith.constant 0 : i32
    return %arg0, %c0_i32 : i32, i32
  }
}

module attributes {stable_mosaic.version = 11 : i64} {
  func.func @_gemm_shift_act_kernel(%arg0: i32, %arg1: memref<8x1152xbf16, #tpu.memory_space<vmem>>, %arg2: memref<1152x128xbf16, #tpu.memory_space<vmem>>, %arg3: memref<1x128xf32, #tpu.memory_space<vmem>>, %arg4: memref<8x128xbf16, #tpu.memory_space<vmem>>) attributes {dimension_semantics = [#tpu.dimension_semantics<parallel>], iteration_bounds = array<i64: 1>, scalar_prefetch = 0 : i64, scratch_operands = 0 : i64, tpu.core_type = #tpu.core_type<tc>, window_params = [{transform_indices = @transform_0, window_bounds = array<i64: 8, 1152>}, {pipeline_mode = #tpu.pipeline_mode<synchronous>, transform_indices = @transform_1, window_bounds = array<i64: 1152, 128>}, {pipeline_mode = #tpu.pipeline_mode<synchronous>, transform_indices = @transform_2, window_bounds = array<i64: 1, 128>}, {transform_indices = @transform_3, window_bounds = array<i64: 8, 128>}]} {
    %c0 = arith.constant 0 : index
    %c0_0 = arith.constant 0 : index
    %0 = vector.load %arg1[%c0, %c0_0] : memref<8x1152xbf16, #tpu.memory_space<vmem>>, vector<8x1152xbf16>
    %c0_1 = arith.constant 0 : index
    %c0_2 = arith.constant 0 : index
    %1 = vector.load %arg2[%c0_1, %c0_2] : memref<1152x128xbf16, #tpu.memory_space<vmem>>, vector<1152x128xbf16>
    %cst = arith.constant dense<0.000000e+00> : vector<8x128xf32>
    %2 = tpu.matmul %0, %1, %cst {dimension_numbers = #tpu.dot_dimension_numbers<[1], [0], [0], [1], [0, 0, 1, 1], [], []>} : vector<8x1152xbf16>, vector<1152x128xbf16>, vector<8x128xf32> -> vector<8x128xf32>
    %c0_3 = arith.constant 0 : index
    %c0_4 = arith.constant 0 : index
    %3 = vector.load %arg3[%c0_3, %c0_4] : memref<1x128xf32, #tpu.memory_space<vmem>>, vector<1x128xf32>
    %4 = vector.broadcast %3 : vector<1x128xf32> to vector<8x128xf32>
    %5 = arith.addf %2, %4 : vector<8x128xf32>
    %cst_5 = arith.constant 0.000000e+00 : f32
    %6 = vector.broadcast %cst_5 : f32 to vector<8x128xf32>
    %7 = arith.maximumf %5, %6 : vector<8x128xf32>
    %8 = arith.truncf %7 : vector<8x128xf32> to vector<8x128xbf16>
    %c0_6 = arith.constant 0 : index
    %c0_7 = arith.constant 0 : index
    %9 = vector.load %arg4[%c0_6, %c0_7] : memref<8x128xbf16, #tpu.memory_space<vmem>>, vector<8x128xbf16>
    tpu.vector_store %arg4[%c0_6, %c0_7], %8 {strides = array<i32>} : memref<8x128xbf16, #tpu.memory_space<vmem>>, vector<8x128xbf16>,
    return
  }
  func.func @transform_0(%arg0: i32) -> (i32, i32) {
    %c0_i32 = arith.constant 0 : i32
    %c0_i32_0 = arith.constant 0 : i32
    return %arg0, %c0_i32 : i32, i32
  }
  func.func @transform_1(%arg0: i32) -> (i32, i32) {
    %c0_i32 = arith.constant 0 : i32
    %c0_i32_0 = arith.constant 0 : i32
    %c0_i32_1 = arith.constant 0 : i32
    return %c0_i32, %c0_i32_0 : i32, i32
  }
  func.func @transform_2(%arg0: i32) -> (i32, i32) {
    %c0_i32 = arith.constant 0 : i32
    %c0_i32_0 = arith.constant 0 : i32
    %c0_i32_1 = arith.constant 0 : i32
    return %c0_i32, %c0_i32_0 : i32, i32
  }
  func.func @transform_3(%arg0: i32) -> (i32, i32) {
    %c0_i32 = arith.constant 0 : i32
    %c0_i32_0 = arith.constant 0 : i32
    return %arg0, %c0_i32 : i32, i32
  }
}

module attributes {stable_mosaic.version = 11 : i64} {
  func.func @_upscore_kernel(%arg0: i32, %arg1: memref<8x2048xbf16, #tpu.memory_space<vmem>>, %arg2: memref<8x1024xbf16, #tpu.memory_space<vmem>>, %arg3: memref<8x384xbf16, #tpu.memory_space<vmem>>, %arg4: memref<8x128xbf16, #tpu.memory_space<vmem>>, %arg5: memref<2048x256xbf16, #tpu.memory_space<vmem>>, %arg6: memref<1024x256xbf16, #tpu.memory_space<vmem>>, %arg7: memref<384x256xbf16, #tpu.memory_space<vmem>>, %arg8: memref<128x256xbf16, #tpu.memory_space<vmem>>, %arg9: memref<1x256xf32, #tpu.memory_space<vmem>>, %arg10: memref<8x256xf32, #tpu.memory_space<vmem>>) attributes {dimension_semantics = [#tpu.dimension_semantics<parallel>], iteration_bounds = array<i64: 1>, scalar_prefetch = 0 : i64, scratch_operands = 0 : i64, tpu.core_type = #tpu.core_type<tc>, window_params = [{pipeline_mode = #tpu.pipeline_mode<synchronous>, transform_indices = @transform_0, window_bounds = array<i64: 8, 2048>}, {pipeline_mode = #tpu.pipeline_mode<synchronous>, transform_indices = @transform_1, window_bounds = array<i64: 8, 1024>}, {pipeline_mode = #tpu.pipeline_mode<synchronous>, transform_indices = @transform_2, window_bounds = array<i64: 8, 384>}, {pipeline_mode = #tpu.pipeline_mode<synchronous>, transform_indices = @transform_3, window_bounds = array<i64: 8, 128>}, {transform_indices = @transform_4, window_bounds = array<i64: 2048, 256>}, {transform_indices = @transform_5, window_bounds = array<i64: 1024, 256>}, {transform_indices = @transform_6, window_bounds = array<i64: 384, 256>}, {transform_indices = @transform_7, window_bounds = array<i64: 128, 256>}, {transform_indices = @transform_8, window_bounds = array<i64: 1, 256>}, {transform_indices = @transform_9, window_bounds = array<i64: 8, 256>}]} {
    %c0 = arith.constant 0 : index
    %c0_0 = arith.constant 0 : index
    %0 = vector.load %arg1[%c0, %c0_0] : memref<8x2048xbf16, #tpu.memory_space<vmem>>, vector<8x2048xbf16>
    %c0_1 = arith.constant 0 : index
    %c0_2 = arith.constant 0 : index
    %1 = vector.load %arg5[%c0_1, %c0_2] : memref<2048x256xbf16, #tpu.memory_space<vmem>>, vector<2048x256xbf16>
    %cst = arith.constant dense<0.000000e+00> : vector<8x256xf32>
    %2 = tpu.matmul %0, %1, %cst {dimension_numbers = #tpu.dot_dimension_numbers<[1], [0], [0], [1], [0, 0, 1, 1], [], []>} : vector<8x2048xbf16>, vector<2048x256xbf16>, vector<8x256xf32> -> vector<8x256xf32>
    %c0_3 = arith.constant 0 : index
    %c0_4 = arith.constant 0 : index
    %3 = vector.load %arg2[%c0_3, %c0_4] : memref<8x1024xbf16, #tpu.memory_space<vmem>>, vector<8x1024xbf16>
    %c0_5 = arith.constant 0 : index
    %c0_6 = arith.constant 0 : index
    %4 = vector.load %arg6[%c0_5, %c0_6] : memref<1024x256xbf16, #tpu.memory_space<vmem>>, vector<1024x256xbf16>
    %cst_7 = arith.constant dense<0.000000e+00> : vector<8x256xf32>
    %5 = tpu.matmul %3, %4, %cst_7 {dimension_numbers = #tpu.dot_dimension_numbers<[1], [0], [0], [1], [0, 0, 1, 1], [], []>} : vector<8x1024xbf16>, vector<1024x256xbf16>, vector<8x256xf32> -> vector<8x256xf32>
    %6 = arith.addf %2, %5 : vector<8x256xf32>
    %c0_8 = arith.constant 0 : index
    %c0_9 = arith.constant 0 : index
    %7 = vector.load %arg3[%c0_8, %c0_9] : memref<8x384xbf16, #tpu.memory_space<vmem>>, vector<8x384xbf16>
    %c0_10 = arith.constant 0 : index
    %c0_11 = arith.constant 0 : index
    %8 = vector.load %arg7[%c0_10, %c0_11] : memref<384x256xbf16, #tpu.memory_space<vmem>>, vector<384x256xbf16>
    %cst_12 = arith.constant dense<0.000000e+00> : vector<8x256xf32>
    %9 = tpu.matmul %7, %8, %cst_12 {dimension_numbers = #tpu.dot_dimension_numbers<[1], [0], [0], [1], [0, 0, 1, 1], [], []>} : vector<8x384xbf16>, vector<384x256xbf16>, vector<8x256xf32> -> vector<8x256xf32>
    %10 = arith.addf %6, %9 : vector<8x256xf32>
    %c0_13 = arith.constant 0 : index
    %c0_14 = arith.constant 0 : index
    %11 = vector.load %arg4[%c0_13, %c0_14] : memref<8x128xbf16, #tpu.memory_space<vmem>>, vector<8x128xbf16>
    %c0_15 = arith.constant 0 : index
    %c0_16 = arith.constant 0 : index
    %12 = vector.load %arg8[%c0_15, %c0_16] : memref<128x256xbf16, #tpu.memory_space<vmem>>, vector<128x256xbf16>
    %cst_17 = arith.constant dense<0.000000e+00> : vector<8x256xf32>
    %13 = tpu.matmul %11, %12, %cst_17 {dimension_numbers = #tpu.dot_dimension_numbers<[1], [0], [0], [1], [0, 0, 1, 1], [], []>} : vector<8x128xbf16>, vector<128x256xbf16>, vector<8x256xf32> -> vector<8x256xf32>
    %14 = arith.addf %10, %13 : vector<8x256xf32>
    %c0_18 = arith.constant 0 : index
    %c0_19 = arith.constant 0 : index
    %15 = vector.load %arg9[%c0_18, %c0_19] : memref<1x256xf32, #tpu.memory_space<vmem>>, vector<1x256xf32>
    %16 = vector.broadcast %15 : vector<1x256xf32> to vector<8x256xf32>
    %17 = arith.addf %14, %16 : vector<8x256xf32>
    %cst_20 = arith.constant 5.000000e-01 : f32
    %18 = vector.broadcast %cst_20 : f32 to vector<8x256xf32>
    %19 = arith.mulf %18, %17 : vector<8x256xf32>
    %20 = math.tanh %19 : vector<8x256xf32>
    %cst_21 = arith.constant 1.000000e+00 : f32
    %21 = vector.broadcast %cst_21 : f32 to vector<8x256xf32>
    %22 = arith.addf %20, %21 : vector<8x256xf32>
    %cst_22 = arith.constant 5.000000e-01 : f32
    %23 = vector.broadcast %cst_22 : f32 to vector<8x256xf32>
    %24 = arith.mulf %23, %22 : vector<8x256xf32>
    %c0_23 = arith.constant 0 : index
    %c0_24 = arith.constant 0 : index
    %25 = vector.load %arg10[%c0_23, %c0_24] : memref<8x256xf32, #tpu.memory_space<vmem>>, vector<8x256xf32>
    tpu.vector_store %arg10[%c0_23, %c0_24], %24 {strides = array<i32>} : memref<8x256xf32, #tpu.memory_space<vmem>>, vector<8x256xf32>,
    return
  }
  func.func @transform_0(%arg0: i32) -> (i32, i32) {
    %c0_i32 = arith.constant 0 : i32
    %c0_i32_0 = arith.constant 0 : i32
    %c0_i32_1 = arith.constant 0 : i32
    return %c0_i32, %c0_i32_0 : i32, i32
  }
  func.func @transform_1(%arg0: i32) -> (i32, i32) {
    %c0_i32 = arith.constant 0 : i32
    %c0_i32_0 = arith.constant 0 : i32
    %c0_i32_1 = arith.constant 0 : i32
    return %c0_i32, %c0_i32_0 : i32, i32
  }
  func.func @transform_2(%arg0: i32) -> (i32, i32) {
    %c0_i32 = arith.constant 0 : i32
    %c0_i32_0 = arith.constant 0 : i32
    %c0_i32_1 = arith.constant 0 : i32
    return %c0_i32, %c0_i32_0 : i32, i32
  }
  func.func @transform_3(%arg0: i32) -> (i32, i32) {
    %c0_i32 = arith.constant 0 : i32
    %c0_i32_0 = arith.constant 0 : i32
    %c0_i32_1 = arith.constant 0 : i32
    return %c0_i32, %c0_i32_0 : i32, i32
  }
  func.func @transform_4(%arg0: i32) -> (i32, i32) {
    %c0_i32 = arith.constant 0 : i32
    %c0_i32_0 = arith.constant 0 : i32
    return %c0_i32, %arg0 : i32, i32
  }
  func.func @transform_5(%arg0: i32) -> (i32, i32) {
    %c0_i32 = arith.constant 0 : i32
    %c0_i32_0 = arith.constant 0 : i32
    return %c0_i32, %arg0 : i32, i32
  }
  func.func @transform_6(%arg0: i32) -> (i32, i32) {
    %c0_i32 = arith.constant 0 : i32
    %c0_i32_0 = arith.constant 0 : i32
    return %c0_i32, %arg0 : i32, i32
  }
  func.func @transform_7(%arg0: i32) -> (i32, i32) {
    %c0_i32 = arith.constant 0 : i32
    %c0_i32_0 = arith.constant 0 : i32
    return %c0_i32, %arg0 : i32, i32
  }
  func.func @transform_8(%arg0: i32) -> (i32, i32) {
    %c0_i32 = arith.constant 0 : i32
    %c0_i32_0 = arith.constant 0 : i32
    return %c0_i32, %arg0 : i32, i32
  }
  func.func @transform_9(%arg0: i32) -> (i32, i32) {
    %c0_i32 = arith.constant 0 : i32
    %c0_i32_0 = arith.constant 0 : i32
    return %c0_i32, %arg0 : i32, i32
  }
}

</mosaic_0001>

<llo_original>
// kernel: fcn_forward.12
$region0: #{fcn_forward.12}
  #allocation0 [shape = 'u32[]', space=smem, size = 0x4, offset = 0x4, fixed_abs, tag = 'smem constant byte address 0x4 - core index']
  #allocation1 [shape = 'u32[144,128]{1,0:T(1,128)}', space=vmem, size = 0x12000, scoped, tag = 'internal scratch']
  %s0 = inlined_call_operand.vmem [shape: bf16[128,75], index: 0, kind: input, shape index: {}]
  %s1 = inlined_call_operand.vmem [shape: bf16[75,32], index: 1, kind: input, shape index: {}]
  %s2 = inlined_call_operand.vmem [shape: f32[1,32], index: 2, kind: input, shape index: {}]
  %s3 = inlined_call_operand.vmem [shape: bf16[128,32], index: 3, kind: output, shape index: {}]
  %s4 = sld [smem:[#allocation0]]
  $region22: #{fcn_forward.12} parent=0
    _
  %s6 = ssub.s32 1, %s4
  %s7 = scalar_select 0, %s6, %s4
  // Predicated region
  $region2: #{fcn_forward.12} parent=0 // pred_check
    _
  $region3: #{fcn_forward.12} parent=0 // pred_check_branch
    %9 = sbr.rel (0) target = $region5
  $region4: #{fcn_forward.12} parent=0 // pred_region
    _
  $region5: #{fcn_forward.12} parent=0 // pred_fallthru
    _
  // Predicated region
  $region6: #{fcn_forward.12} parent=0 // pred_check
    _
  $region7: #{fcn_forward.12} parent=0 // pred_check_branch
    %11 = sbr.rel (0) target = $region9
  $region8: #{fcn_forward.12} parent=0 // pred_region
    _
  $region9: #{fcn_forward.12} parent=0 // pred_fallthru
    _
  // Predicated region
  $region10: #{fcn_forward.12} parent=0 // pred_check
    _
  $region11: #{fcn_forward.12} parent=0 // pred_check_branch
    %13 = sbr.rel (0) target = $region13
  $region12: #{fcn_forward.12} parent=0 // pred_region
    _
  $region13: #{fcn_forward.12} parent=0 // pred_fallthru
    _
  %v15 = vld [vmem:[%s0] sm:$0xf]
  %v16 = vld [vmem:[%s0 + $0x4] sm:$0xf]
  %v17 = vld [vmem:[%s0 + $0x8] sm:$0xf]
  %v18 = vld [vmem:[%s0 + $0xc] sm:$0xf]
  %v19 = vld [vmem:[%s0 + $0x10] sm:$0xf]
  %v20 = vld [vmem:[%s0 + $0x14] sm:$0xf]
  %v21 = vld [vmem:[%s0 + $0x18] sm:$0xf]
  %v22 = vld [vmem:[%s0 + $0x1c] sm:$0xf]
  %v23 = vld [vmem:[%s0 + $0x20] sm:$0xf]
  %v24 = vld [vmem:[%s0 + $0x24] sm:$0xf]
  %v25 = vld [vmem:[%s0 + $0x28] sm:$0xf]
  %v26 = vld [vmem:[%s0 + $0x2c] sm:$0xf]
  %v27 = vld [vmem:[%s0 + $0x30] sm:$0xf]
  %v28 = vld [vmem:[%s0 + $0x34] sm:$0xf]
  %v29 = vld [vmem:[%s0 + $0x38] sm:$0xf]
  %v30 = vld [vmem:[%s0 + $0x3c] sm:$0xf]
  %v31 = vld [vmem:[%s1] sm:$0xf]
  %v32 = vld [vmem:[%s1 + $0x4] sm:$0xf]
  %v33 = vld [vmem:[%s1 + $0x8] sm:$0xf]
  %v34 = vld [vmem:[%s1 + $0xc] sm:$0xf]
  %v35 = vld [vmem:[%s1 + $0x10] sm:$0xf]
  %v36 = vld [vmem:[%s1 + $0x14] sm:$0xf]
  %v37 = vld [vmem:[%s1 + $0x18] sm:$0xf]
  %v38 = vld [vmem:[%s1 + $0x1c] sm:$0xf]
  %v39 = vld [vmem:[%s1 + $0x20] sm:$0xf]
  %v40 = vld [vmem:[%s1 + $0x24] sm:$0x3]
  %v41 = vld [vmem:[%s2] sm:$0x1]
  %v43 = vlaneseq
  %v44 = vshrl.u32 %v43, 7
  %v45 = vsub.s32 0, %v44
  %v46 = vrot.slane %v41, %v45
  %v64 = vunpack.c.l.b16 %v15
  %v65 = vunpack.c.l.b16 %v16
  %v66 = vunpack.c.l.b16 %v17
  %v67 = vunpack.c.l.b16 %v18
  %v68 = vunpack.c.l.b16 %v19
  %v69 = vunpack.c.l.b16 %v20
  %v70 = vunpack.c.l.b16 %v21
  %v71 = vunpack.c.l.b16 %v22
  %v72 = vunpack.c.l.b16 %v23
  %v73 = vunpack.c.l.b16 %v24
  %v74 = vunpack.c.l.b16 %v25
  %v75 = vunpack.c.l.b16 %v26
  %v76 = vunpack.c.l.b16 %v27
  %v77 = vunpack.c.l.b16 %v28
  %v78 = vunpack.c.l.b16 %v29
  %v79 = vunpack.c.l.b16 %v30
  %v80 = vpack.c.b16 %v65, %v64
  %v81 = vpack.c.b16 %v67, %v66
  %v82 = vpack.c.b16 %v69, %v68
  %v83 = vpack.c.b16 %v71, %v70
  %v84 = vpack.c.b16 %v73, %v72
  %v85 = vpack.c.b16 %v75, %v74
  %v86 = vpack.c.b16 %v77, %v76
  %v87 = vpack.c.b16 %v79, %v78
  %v98 = vunpack.c.l.b16 %v31
  %v99 = vunpack.c.l.b16 %v32
  %v100 = vunpack.c.l.b16 %v33
  %v101 = vunpack.c.l.b16 %v34
  %v102 = vunpack.c.l.b16 %v35
  %v103 = vunpack.c.l.b16 %v36
  %v104 = vunpack.c.l.b16 %v37
  %v105 = vunpack.c.l.b16 %v38
  %v106 = vunpack.c.l.b16 %v39
  %v107 = vunpack.c.l.b16 %v40
  %v108 = vpack.c.b16 %v99, %v98
  %v109 = vpack.c.b16 %v101, %v100
  %v110 = vpack.c.b16 %v103, %v102
  %v111 = vpack.c.b16 %v105, %v104
  %v112 = vpack.c.b16 %v107, %v106
  %vm117 = vcmask 613376
  %v119 = vsel %vm117, %v80, 0
  %v122 = vsel %vm117, %v81, 0
  %v125 = vsel %vm117, %v82, 0
  %v128 = vsel %vm117, %v83, 0
  %v131 = vsel %vm117, %v84, 0
  %v134 = vsel %vm117, %v85, 0
  %v137 = vsel %vm117, %v86, 0
  %v140 = vsel %vm117, %v87, 0
  %vm142 = vcmask 1044480
  %vm143 = vcmask 1045504
  %v144 = vsel %vm142, 4294967295, 65535
  %v145 = vsel %vm143, %v144, 0
  %v147 = vand.u32 %v112, %v145
  %149 = vmatprep.subr.bf16.mxu0 0
  %150 = vmatpush1.bf16.msra.mxu0 %v108
  %151 = vmatprep.subr.bf16.mxu0 0
  %152 = vmatpush1.bf16.msra.mxu0 %v109
  %153 = vmatprep.subr.bf16.mxu0 0
  %154 = vmatpush1.bf16.msra.mxu0 %v110
  %155 = vmatprep.subr.bf16.mxu0 0
  %156 = vmatpush1.bf16.msra.mxu0 %v111
  %157 = vmatprep.subr.bf16.mxu0 0
  %158 = vmatpush1.bf16.msra.mxu0 %v147
  %159 = vmatprep.subr.bf16.mxu0 0
  %160 = vmatpush1.bf16.msra.mxu0 0
  %161 = vmatprep.subr.bf16.mxu0 0
  %162 = vmatpush1.bf16.msra.mxu0 0
  %163 = vmatprep.subr.bf16.mxu0 0
  %164 = vmatpush1.bf16.msra.mxu0 0
  %165 = vmatprep.subr.bf16.mxu0 0
  %166 = vmatpush1.bf16.msra.mxu0 0
  %167 = vmatprep.subr.bf16.mxu0 0
  %168 = vmatpush1.bf16.msra.mxu0 0
  %169 = vmatprep.subr.bf16.mxu0 0
  %170 = vmatpush1.bf16.msra.mxu0 0
  %171 = vmatprep.subr.bf16.mxu0 0
  %172 = vmatpush1.bf16.msra.mxu0 0
  %173 = vmatprep.subr.bf16.mxu0 0
  %174 = vmatpush1.bf16.msra.mxu0 0
  %175 = vmatprep.subr.bf16.mxu0 0
  %176 = vmatpush1.bf16.msra.mxu0 0
  %177 = vmatprep.subr.bf16.mxu0 0
  %178 = vmatpush1.bf16.msra.mxu0 0
  %179 = vmatprep.subr.bf16.mxu0 0
  %180 = vmatpush1.bf16.msra.mxu0 0
  %181 = vmatprep.mubr.bf16.mxu0 0
  %182 = vmatmul.mubr.bf16.gmra.mrb[0].mxu0 %v119
  %v183 = vpop.f32.mrb[0].mxu0
  %v184 = vadd.f32 %v46, %v183
  %v185 = vpop.f32.mrb[0].mxu0
  %v186 = vpop.f32.mrb[0].mxu0
  %v187 = vadd.f32 %v46, %v186
  %v188 = vpop.f32.mrb[0].mxu0
  %189 = vmatprep.mubr.bf16.mxu0 0
  %190 = vmatmul.mubr.bf16.gmra.mrb[0].mxu0 %v122
  %v191 = vpop.f32.mrb[0].mxu0
  %v192 = vadd.f32 %v46, %v191
  %v193 = vpop.f32.mrb[0].mxu0
  %v194 = vpop.f32.mrb[0].mxu0
  %v195 = vadd.f32 %v46, %v194
  %v196 = vpop.f32.mrb[0].mxu0
  %197 = vmatprep.mubr.bf16.mxu0 0
  %198 = vmatmul.mubr.bf16.gmra.mrb[0].mxu0 %v125
  %v199 = vpop.f32.mrb[0].mxu0
  %v200 = vadd.f32 %v46, %v199
  %v201 = vpop.f32.mrb[0].mxu0
  %v202 = vpop.f32.mrb[0].mxu0
  %v203 = vadd.f32 %v46, %v202
  %v204 = vpop.f32.mrb[0].mxu0
  %205 = vmatprep.mubr.bf16.mxu0 0
  %206 = vmatmul.mubr.bf16.gmra.mrb[0].mxu0 %v128
  %v207 = vpop.f32.mrb[0].mxu0
  %v208 = vadd.f32 %v46, %v207
  %v209 = vpop.f32.mrb[0].mxu0
  %v210 = vpop.f32.mrb[0].mxu0
  %v211 = vadd.f32 %v46, %v210
  %v212 = vpop.f32.mrb[0].mxu0
  %213 = vmatprep.mubr.bf16.mxu0 0
  %214 = vmatmul.mubr.bf16.gmra.mrb[0].mxu0 %v131
  %v215 = vpop.f32.mrb[0].mxu0
  %v216 = vadd.f32 %v46, %v215
  %v217 = vpop.f32.mrb[0].mxu0
  %v218 = vpop.f32.mrb[0].mxu0
  %v219 = vadd.f32 %v46, %v218
  %v220 = vpop.f32.mrb[0].mxu0
  %221 = vmatprep.mubr.bf16.mxu0 0
  %222 = vmatmul.mubr.bf16.gmra.mrb[0].mxu0 %v134
  %v223 = vpop.f32.mrb[0].mxu0
  %v224 = vadd.f32 %v46, %v223
  %v225 = vpop.f32.mrb[0].mxu0
  %v226 = vpop.f32.mrb[0].mxu0
  %v227 = vadd.f32 %v46, %v226
  %v228 = vpop.f32.mrb[0].mxu0
  %229 = vmatprep.mubr.bf16.mxu0 0
  %230 = vmatmul.mubr.bf16.gmra.mrb[0].mxu0 %v137
  %v231 = vpop.f32.mrb[0].mxu0
  %v232 = vadd.f32 %v46, %v231
  %v233 = vpop.f32.mrb[0].mxu0
  %v234 = vpop.f32.mrb[0].mxu0
  %v235 = vadd.f32 %v46, %v234
  %v236 = vpop.f32.mrb[0].mxu0
  %237 = vmatprep.mubr.bf16.mxu0 0
  %238 = vmatmul.mubr.bf16.gmra.mrb[0].mxu0 %v140
  %v239 = vpop.f32.mrb[0].mxu0
  %v240 = vadd.f32 %v46, %v239
  %v241 = vpop.f32.mrb[0].mxu0
  %v242 = vpop.f32.mrb[0].mxu0
  %v243 = vadd.f32 %v46, %v242
  %v244 = vpop.f32.mrb[0].mxu0
  %245 = vdwg.mxu0
  %v246 = vmax.f32 %v184, 0.0
  %v247 = vmax.f32 %v187, 0.0
  %v248 = vmax.f32 %v192, 0.0
  %v249 = vmax.f32 %v195, 0.0
  %v250 = vmax.f32 %v200, 0.0
  %v251 = vmax.f32 %v203, 0.0
  %v252 = vmax.f32 %v208, 0.0
  %v253 = vmax.f32 %v211, 0.0
  %v254 = vmax.f32 %v216, 0.0
  %v255 = vmax.f32 %v219, 0.0
  %v256 = vmax.f32 %v224, 0.0
  %v257 = vmax.f32 %v227, 0.0
  %v258 = vmax.f32 %v232, 0.0
  %v259 = vmax.f32 %v235, 0.0
  %v260 = vmax.f32 %v240, 0.0
  %v261 = vmax.f32 %v243, 0.0
  %v262 = vpack.c.bf16 %v247, %v246
  %v263 = vpack.c.bf16 %v249, %v248
  %v264 = vpack.c.bf16 %v251, %v250
  %v265 = vpack.c.bf16 %v253, %v252
  %v266 = vpack.c.bf16 %v255, %v254
  %v267 = vpack.c.bf16 %v257, %v256
  %v268 = vpack.c.bf16 %v259, %v258
  %v269 = vpack.c.bf16 %v261, %v260
  %v278 = vunpack.c.l.b16 %v262
  %v279 = vunpack.c.h.b16 %v262
  %v280 = vunpack.c.l.b16 %v263
  %v281 = vunpack.c.h.b16 %v263
  %v282 = vunpack.c.l.b16 %v264
  %v283 = vunpack.c.h.b16 %v264
  %v284 = vunpack.c.l.b16 %v265
  %v285 = vunpack.c.h.b16 %v265
  %v286 = vunpack.c.l.b16 %v266
  %v287 = vunpack.c.h.b16 %v266
  %v288 = vunpack.c.l.b16 %v267
  %v289 = vunpack.c.h.b16 %v267
  %v290 = vunpack.c.l.b16 %v268
  %v291 = vunpack.c.h.b16 %v268
  %v292 = vunpack.c.l.b16 %v269
  %v293 = vunpack.c.h.b16 %v269
  %v294 = vpack.c.b16 %v278, %v278
  %v295 = vpack.c.b16 %v279, %v279
  %v296 = vpack.c.b16 %v280, %v280
  %v297 = vpack.c.b16 %v281, %v281
  %v298 = vpack.c.b16 %v282, %v282
  %v299 = vpack.c.b16 %v283, %v283
  %v300 = vpack.c.b16 %v284, %v284
  %v301 = vpack.c.b16 %v285, %v285
  %v302 = vpack.c.b16 %v286, %v286
  %v303 = vpack.c.b16 %v287, %v287
  %v304 = vpack.c.b16 %v288, %v288
  %v305 = vpack.c.b16 %v289, %v289
  %v306 = vpack.c.b16 %v290, %v290
  %v307 = vpack.c.b16 %v291, %v291
  %v308 = vpack.c.b16 %v292, %v292
  %v309 = vpack.c.b16 %v293, %v293
  %vm326 = vcmask 257024
  %327 = vst.msk [vmem:[%s3] sm:$0xf] %vm326, %v294
  %328 = vst.msk [vmem:[%s3 + $0x4] sm:$0xf] %vm326, %v295
  %329 = vst.msk [vmem:[%s3 + $0x8] sm:$0xf] %vm326, %v296
  %330 = vst.msk [vmem:[%s3 + $0xc] sm:$0xf] %vm326, %v297
  %331 = vst.msk [vmem:[%s3 + $0x10] sm:$0xf] %vm326, %v298
  %332 = vst.msk [vmem:[%s3 + $0x14] sm:$0xf] %vm326, %v299
  %333 = vst.msk [vmem:[%s3 + $0x18] sm:$0xf] %vm326, %v300
  %334 = vst.msk [vmem:[%s3 + $0x1c] sm:$0xf] %vm326, %v301
  %335 = vst.msk [vmem:[%s3 + $0x20] sm:$0xf] %vm326, %v302
  %336 = vst.msk [vmem:[%s3 + $0x24] sm:$0xf] %vm326, %v303
  %337 = vst.msk [vmem:[%s3 + $0x28] sm:$0xf] %vm326, %v304
  %338 = vst.msk [vmem:[%s3 + $0x2c] sm:$0xf] %vm326, %v305
  %339 = vst.msk [vmem:[%s3 + $0x30] sm:$0xf] %vm326, %v306
  %340 = vst.msk [vmem:[%s3 + $0x34] sm:$0xf] %vm326, %v307
  %341 = vst.msk [vmem:[%s3 + $0x38] sm:$0xf] %vm326, %v308
  %342 = vst.msk [vmem:[%s3 + $0x3c] sm:$0xf] %vm326, %v309
  // Predicated region
  $region14: #{fcn_forward.12} parent=0 // pred_check
    _
  $region15: #{fcn_forward.12} parent=0 // pred_check_branch
    %344 = sbr.rel (0) target = $region17
  $region16: #{fcn_forward.12} parent=0 // pred_region
    _
  $region17: #{fcn_forward.12} parent=0 // pred_fallthru
    _
  // Predicated region
  $region18: #{fcn_forward.12} parent=0 // pred_check
    _
  $region19: #{fcn_forward.12} parent=0 // pred_check_branch
    %346 = sbr.rel (0) target = $region21
  $region20: #{fcn_forward.12} parent=0 // pred_region
    _
  $region21: #{fcn_forward.12} parent=0 // pred_fallthru
    _

// kernel: fcn_forward.13
$region0: #{fcn_forward.13}
  #allocation0 [shape = 'u32[]', space=smem, size = 0x4, offset = 0x4, fixed_abs, tag = 'smem constant byte address 0x4 - core index']
  #allocation1 [shape = 'u32[144,128]{1,0:T(1,128)}', space=vmem, size = 0x12000, scoped, tag = 'internal scratch']
  %s0 = inlined_call_operand.vmem [shape: bf16[128,288], index: 0, kind: input, shape index: {}]
  %s1 = inlined_call_operand.vmem [shape: bf16[288,32], index: 1, kind: input, shape index: {}]
  %s2 = inlined_call_operand.vmem [shape: f32[1,32], index: 2, kind: input, shape index: {}]
  %s3 = inlined_call_operand.vmem [shape: bf16[128,32], index: 3, kind: output, shape index: {}]
  %s4 = sld [smem:[#allocation0]]
  $region22: #{fcn_forward.13} parent=0
    _
  %s6 = ssub.s32 1, %s4
  %s7 = scalar_select 0, %s6, %s4
  // Predicated region
  $region2: #{fcn_forward.13} parent=0 // pred_check
    _
  $region3: #{fcn_forward.13} parent=0 // pred_check_branch
    %9 = sbr.rel (0) target = $region5
  $region4: #{fcn_forward.13} parent=0 // pred_region
    _
  $region5: #{fcn_forward.13} parent=0 // pred_fallthru
    _
  // Predicated region
  $region6: #{fcn_forward.13} parent=0 // pred_check
    _
  $region7: #{fcn_forward.13} parent=0 // pred_check_branch
    %11 = sbr.rel (0) target = $region9
  $region8: #{fcn_forward.13} parent=0 // pred_region
    _
  $region9: #{fcn_forward.13} parent=0 // pred_fallthru
    _
  // Predicated region
  $region10: #{fcn_forward.13} parent=0 // pred_check
    _
  $region11: #{fcn_forward.13} parent=0 // pred_check_branch
    %13 = sbr.rel (0) target = $region13
  $region12: #{fcn_forward.13} parent=0 // pred_region
    _
  $region13: #{fcn_forward.13} parent=0 // pred_fallthru
    _
  %v15 = vld [vmem:[%s0] sm:$0xff]
  %v16 = vld [vmem:[%s0 + $0x8] sm:$0xf]
  %v17 = vld [vmem:[%s0 + $0xc] sm:$0xff]
  %v18 = vld [vmem:[%s0 + $0x14] sm:$0xf]
  %v19 = vld [vmem:[%s0 + $0x18] sm:$0xff]
  %v20 = vld [vmem:[%s0 + $0x20] sm:$0xf]
  %v21 = vld [vmem:[%s0 + $0x24] sm:$0xff]
  %v22 = vld [vmem:[%s0 + $0x2c] sm:$0xf]
  %v23 = vld [vmem:[%s0 + $0x30] sm:$0xff]
  %v24 = vld [vmem:[%s0 + $0x38] sm:$0xf]
  %v25 = vld [vmem:[%s0 + $0x3c] sm:$0xff]
  %v26 = vld [vmem:[%s0 + $0x44] sm:$0xf]
  %v27 = vld [vmem:[%s0 + $0x48] sm:$0xff]
  %v28 = vld [vmem:[%s0 + $0x50] sm:$0xf]
  %v29 = vld [vmem:[%s0 + $0x54] sm:$0xff]
  %v30 = vld [vmem:[%s0 + $0x5c] sm:$0xf]
  %v31 = vld [vmem:[%s0 + $0x60] sm:$0xff]
  %v32 = vld [vmem:[%s0 + $0x68] sm:$0xf]
  %v33 = vld [vmem:[%s0 + $0x6c] sm:$0xff]
  %v34 = vld [vmem:[%s0 + $0x74] sm:$0xf]
  %v35 = vld [vmem:[%s0 + $0x78] sm:$0xff]
  %v36 = vld [vmem:[%s0 + $0x80] sm:$0xf]
  %v37 = vld [vmem:[%s0 + $0x84] sm:$0xff]
  %v38 = vld [vmem:[%s0 + $0x8c] sm:$0xf]
  %v39 = vld [vmem:[%s0 + $0x90] sm:$0xff]
  %v40 = vld [vmem:[%s0 + $0x98] sm:$0xf]
  %v41 = vld [vmem:[%s0 + $0x9c] sm:$0xff]
  %v42 = vld [vmem:[%s0 + $0xa4] sm:$0xf]
  %v43 = vld [vmem:[%s0 + $0xa8] sm:$0xff]
  %v44 = vld [vmem:[%s0 + $0xb0] sm:$0xf]
  %v45 = vld [vmem:[%s0 + $0xb4] sm:$0xff]
  %v46 = vld [vmem:[%s0 + $0xbc] sm:$0xf]
  %v47 = vld [vmem:[%s1] sm:$0xf]
  %v48 = vld [vmem:[%s1 + $0x4] sm:$0xf]
  %v49 = vld [vmem:[%s1 + $0x8] sm:$0xf]
  %v50 = vld [vmem:[%s1 + $0xc] sm:$0xf]
  %v51 = vld [vmem:[%s1 + $0x10] sm:$0xf]
  %v52 = vld [vmem:[%s1 + $0x14] sm:$0xf]
  %v53 = vld [vmem:[%s1 + $0x18] sm:$0xf]
  %v54 = vld [vmem:[%s1 + $0x1c] sm:$0xf]
  %v55 = vld [vmem:[%s1 + $0x20] sm:$0xf]
  %v56 = vld [vmem:[%s1 + $0x24] sm:$0xf]
  %v57 = vld [vmem:[%s1 + $0x28] sm:$0xf]
  %v58 = vld [vmem:[%s1 + $0x2c] sm:$0xf]
  %v59 = vld [vmem:[%s1 + $0x30] sm:$0xf]
  %v60 = vld [vmem:[%s1 + $0x34] sm:$0xf]
  %v61 = vld [vmem:[%s1 + $0x38] sm:$0xf]
  %v62 = vld [vmem:[%s1 + $0x3c] sm:$0xf]
  %v63 = vld [vmem:[%s1 + $0x40] sm:$0xf]
  %v64 = vld [vmem:[%s1 + $0x44] sm:$0xf]
  %v65 = vld [vmem:[%s1 + $0x48] sm:$0xf]
  %v66 = vld [vmem:[%s1 + $0x4c] sm:$0xf]
  %v67 = vld [vmem:[%s1 + $0x50] sm:$0xf]
  %v68 = vld [vmem:[%s1 + $0x54] sm:$0xf]
  %v69 = vld [vmem:[%s1 + $0x58] sm:$0xf]
  %v70 = vld [vmem:[%s1 + $0x5c] sm:$0xf]
  %v71 = vld [vmem:[%s1 + $0x60] sm:$0xf]
  %v72 = vld [vmem:[%s1 + $0x64] sm:$0xf]
  %v73 = vld [vmem:[%s1 + $0x68] sm:$0xf]
  %v74 = vld [vmem:[%s1 + $0x6c] sm:$0xf]
  %v75 = vld [vmem:[%s1 + $0x70] sm:$0xf]
  %v76 = vld [vmem:[%s1 + $0x74] sm:$0xf]
  %v77 = vld [vmem:[%s1 + $0x78] sm:$0xf]
  %v78 = vld [vmem:[%s1 + $0x7c] sm:$0xf]
  %v79 = vld [vmem:[%s1 + $0x80] sm:$0xf]
  %v80 = vld [vmem:[%s1 + $0x84] sm:$0xf]
  %v81 = vld [vmem:[%s1 + $0x88] sm:$0xf]
  %v82 = vld [vmem:[%s1 + $0x8c] sm:$0xf]
  %v83 = vld [vmem:[%s2] sm:$0x1]
  %v85 = vlaneseq
  %v86 = vshrl.u32 %v85, 7
  %v87 = vsub.s32 0, %v86
  %v88 = vrot.slane %v83, %v87
  %v122 = vunpack.c.l.b16 %v15
  %v123 = vunpack.c.h.b16 %v15
  %v124 = vunpack.c.l.b16 %v16
  %v125 = vunpack.c.l.b16 %v17
  %v126 = vunpack.c.h.b16 %v17
  %v127 = vunpack.c.l.b16 %v18
  %v128 = vunpack.c.l.b16 %v19
  %v129 = vunpack.c.h.b16 %v19
  %v130 = vunpack.c.l.b16 %v20
  %v131 = vunpack.c.l.b16 %v21
  %v132 = vunpack.c.h.b16 %v21
  %v133 = vunpack.c.l.b16 %v22
  %v134 = vunpack.c.l.b16 %v23
  %v135 = vunpack.c.h.b16 %v23
  %v136 = vunpack.c.l.b16 %v24
  %v137 = vunpack.c.l.b16 %v25
  %v138 = vunpack.c.h.b16 %v25
  %v139 = vunpack.c.l.b16 %v26
  %v140 = vunpack.c.l.b16 %v27
  %v141 = vunpack.c.h.b16 %v27
  %v142 = vunpack.c.l.b16 %v28
  %v143 = vunpack.c.l.b16 %v29
  %v144 = vunpack.c.h.b16 %v29
  %v145 = vunpack.c.l.b16 %v30
  %v146 = vunpack.c.l.b16 %v31
  %v147 = vunpack.c.h.b16 %v31
  %v148 = vunpack.c.l.b16 %v32
  %v149 = vunpack.c.l.b16 %v33
  %v150 = vunpack.c.h.b16 %v33
  %v151 = vunpack.c.l.b16 %v34
  %v152 = vunpack.c.l.b16 %v35
  %v153 = vunpack.c.h.b16 %v35
  %v154 = vunpack.c.l.b16 %v36
  %v155 = vunpack.c.l.b16 %v37
  %v156 = vunpack.c.h.b16 %v37
  %v157 = vunpack.c.l.b16 %v38
  %v158 = vunpack.c.l.b16 %v39
  %v159 = vunpack.c.h.b16 %v39
  %v160 = vunpack.c.l.b16 %v40
  %v161 = vunpack.c.l.b16 %v41
  %v162 = vunpack.c.h.b16 %v41
  %v163 = vunpack.c.l.b16 %v42
  %v164 = vunpack.c.l.b16 %v43
  %v165 = vunpack.c.h.b16 %v43
  %v166 = vunpack.c.l.b16 %v44
  %v167 = vunpack.c.l.b16 %v45
  %v168 = vunpack.c.h.b16 %v45
  %v169 = vunpack.c.l.b16 %v46
  %v170 = vpack.c.b16 %v125, %v122
  %v171 = vpack.c.b16 %v126, %v123
  %v172 = vpack.c.b16 %v127, %v124
  %v173 = vpack.c.b16 %v131, %v128
  %v174 = vpack.c.b16 %v132, %v129
  %v175 = vpack.c.b16 %v133, %v130
  %v176 = vpack.c.b16 %v137, %v134
  %v177 = vpack.c.b16 %v138, %v135
  %v178 = vpack.c.b16 %v139, %v136
  %v179 = vpack.c.b16 %v143, %v140
  %v180 = vpack.c.b16 %v144, %v141
  %v181 = vpack.c.b16 %v145, %v142
  %v182 = vpack.c.b16 %v149, %v146
  %v183 = vpack.c.b16 %v150, %v147
  %v184 = vpack.c.b16 %v151, %v148
  %v185 = vpack.c.b16 %v155, %v152
  %v186 = vpack.c.b16 %v156, %v153
  %v187 = vpack.c.b16 %v157, %v154
  %v188 = vpack.c.b16 %v161, %v158
  %v189 = vpack.c.b16 %v162, %v159
  %v190 = vpack.c.b16 %v163, %v160
  %v191 = vpack.c.b16 %v167, %v164
  %v192 = vpack.c.b16 %v168, %v165
  %v193 = vpack.c.b16 %v169, %v166
  %v246 = vunpack.c.l.b16 %v47
  %v247 = vunpack.c.l.b16 %v48
  %v248 = vunpack.c.l.b16 %v49
  %v249 = vunpack.c.l.b16 %v50
  %v250 = vunpack.c.l.b16 %v51
  %v251 = vunpack.c.l.b16 %v52
  %v252 = vunpack.c.l.b16 %v53
  %v253 = vunpack.c.l.b16 %v54
  %v254 = vunpack.c.l.b16 %v55
  %v255 = vunpack.c.l.b16 %v56
  %v256 = vunpack.c.l.b16 %v57
  %v257 = vunpack.c.l.b16 %v58
  %v258 = vunpack.c.l.b16 %v59
  %v259 = vunpack.c.l.b16 %v60
  %v260 = vunpack.c.l.b16 %v61
  %v261 = vunpack.c.l.b16 %v62
  %v262 = vunpack.c.l.b16 %v63
  %v263 = vunpack.c.l.b16 %v64
  %v264 = vunpack.c.l.b16 %v65
  %v265 = vunpack.c.l.b16 %v66
  %v266 = vunpack.c.l.b16 %v67
  %v267 = vunpack.c.l.b16 %v68
  %v268 = vunpack.c.l.b16 %v69
  %v269 = vunpack.c.l.b16 %v70
  %v270 = vunpack.c.l.b16 %v71
  %v271 = vunpack.c.l.b16 %v72
  %v272 = vunpack.c.l.b16 %v73
  %v273 = vunpack.c.l.b16 %v74
  %v274 = vunpack.c.l.b16 %v75
  %v275 = vunpack.c.l.b16 %v76
  %v276 = vunpack.c.l.b16 %v77
  %v277 = vunpack.c.l.b16 %v78
  %v278 = vunpack.c.l.b16 %v79
  %v279 = vunpack.c.l.b16 %v80
  %v280 = vunpack.c.l.b16 %v81
  %v281 = vunpack.c.l.b16 %v82
  %v282 = vpack.c.b16 %v247, %v246
  %v283 = vpack.c.b16 %v249, %v248
  %v284 = vpack.c.b16 %v251, %v250
  %v285 = vpack.c.b16 %v253, %v252
  %v286 = vpack.c.b16 %v255, %v254
  %v287 = vpack.c.b16 %v257, %v256
  %v288 = vpack.c.b16 %v259, %v258
  %v289 = vpack.c.b16 %v261, %v260
  %v290 = vpack.c.b16 %v263, %v262
  %v291 = vpack.c.b16 %v265, %v264
  %v292 = vpack.c.b16 %v267, %v266
  %v293 = vpack.c.b16 %v269, %v268
  %v294 = vpack.c.b16 %v271, %v270
  %v295 = vpack.c.b16 %v273, %v272
  %v296 = vpack.c.b16 %v275, %v274
  %v297 = vpack.c.b16 %v277, %v276
  %v298 = vpack.c.b16 %v279, %v278
  %v299 = vpack.c.b16 %v281, %v280
  %vm318 = vcmask 261120
  %v320 = vsel %vm318, %v172, 0
  %v323 = vsel %vm318, %v175, 0
  %v326 = vsel %vm318, %v178, 0
  %v329 = vsel %vm318, %v181, 0
  %v332 = vsel %vm318, %v184, 0
  %v335 = vsel %vm318, %v187, 0
  %v338 = vsel %vm318, %v190, 0
  %v341 = vsel %vm318, %v193, 0
  %343 = vmatprep.subr.bf16.mxu0 0
  %344 = vmatpush1.bf16.msra.mxu0 %v282
  %345 = vmatprep.subr.bf16.mxu0 0
  %346 = vmatpush1.bf16.msra.mxu0 %v283
  %347 = vmatprep.subr.bf16.mxu0 0
  %348 = vmatpush1.bf16.msra.mxu0 %v284
  %349 = vmatprep.subr.bf16.mxu0 0
  %350 = vmatpush1.bf16.msra.mxu0 %v285
  %351 = vmatprep.subr.bf16.mxu0 0
  %352 = vmatpush1.bf16.msra.mxu0 %v286
  %353 = vmatprep.subr.bf16.mxu0 0
  %354 = vmatpush1.bf16.msra.mxu0 %v287
  %355 = vmatprep.subr.bf16.mxu0 0
  %356 = vmatpush1.bf16.msra.mxu0 %v288
  %357 = vmatprep.subr.bf16.mxu0 0
  %358 = vmatpush1.bf16.msra.mxu0 %v289
  %359 = vmatprep.subr.bf16.mxu0 0
  %360 = vmatpush1.bf16.msra.mxu0 %v290
  %361 = vmatprep.subr.bf16.mxu0 0
  %362 = vmatpush1.bf16.msra.mxu0 %v291
  %363 = vmatprep.subr.bf16.mxu0 0
  %364 = vmatpush1.bf16.msra.mxu0 %v292
  %365 = vmatprep.subr.bf16.mxu0 0
  %366 = vmatpush1.bf16.msra.mxu0 %v293
  %367 = vmatprep.subr.bf16.mxu0 0
  %368 = vmatpush1.bf16.msra.mxu0 %v294
  %369 = vmatprep.subr.bf16.mxu0 0
  %370 = vmatpush1.bf16.msra.mxu0 %v295
  %371 = vmatprep.subr.bf16.mxu0 0
  %372 = vmatpush1.bf16.msra.mxu0 %v296
  %373 = vmatprep.subr.bf16.mxu0 0
  %374 = vmatpush1.bf16.msra.mxu0 %v297
  %375 = vmatprep.mubr.bf16.mxu0 %v171
  %376 = vmatmul.mubr.bf16.gmra.mrb[0].mxu0 %v170
  %v377 = vpop.f32.mrb[0].mxu0
  %v378 = vadd.f32 %v88, %v377
  %v379 = vpop.f32.mrb[0].mxu0
  %v380 = vpop.f32.mrb[0].mxu0
  %v381 = vadd.f32 %v88, %v380
  %v382 = vpop.f32.mrb[0].mxu0
  %383 = vmatprep.mubr.bf16.mxu0 %v174
  %384 = vmatmul.mubr.bf16.gmra.mrb[0].mxu0 %v173
  %v385 = vpop.f32.mrb[0].mxu0
  %v386 = vadd.f32 %v88, %v385
  %v387 = vpop.f32.mrb[0].mxu0
  %v388 = vpop.f32.mrb[0].mxu0
  %v389 = vadd.f32 %v88, %v388
  %v390 = vpop.f32.mrb[0].mxu0
  %391 = vmatprep.mubr.bf16.mxu0 %v177
  %392 = vmatmul.mubr.bf16.gmra.mrb[0].mxu0 %v176
  %v393 = vpop.f32.mrb[0].mxu0
  %v394 = vadd.f32 %v88, %v393
  %v395 = vpop.f32.mrb[0].mxu0
  %v396 = vpop.f32.mrb[0].mxu0
  %v397 = vadd.f32 %v88, %v396
  %v398 = vpop.f32.mrb[0].mxu0
  %399 = vmatprep.mubr.bf16.mxu0 %v180
  %400 = vmatmul.mubr.bf16.gmra.mrb[0].mxu0 %v179
  %v401 = vpop.f32.mrb[0].mxu0
  %v402 = vadd.f32 %v88, %v401
  %v403 = vpop.f32.mrb[0].mxu0
  %v404 = vpop.f32.mrb[0].mxu0
  %v405 = vadd.f32 %v88, %v404
  %v406 = vpop.f32.mrb[0].mxu0
  %407 = vmatprep.mubr.bf16.mxu0 %v183
  %408 = vmatmul.mubr.bf16.gmra.mrb[0].mxu0 %v182
  %v409 = vpop.f32.mrb[0].mxu0
  %v410 = vadd.f32 %v88, %v409
  %v411 = vpop.f32.mrb[0].mxu0
  %v412 = vpop.f32.mrb[0].mxu0
  %v413 = vadd.f32 %v88, %v412
  %v414 = vpop.f32.mrb[0].mxu0
  %415 = vmatprep.mubr.bf16.mxu0 %v186
  %416 = vmatmul.mubr.bf16.gmra.mrb[0].mxu0 %v185
  %v417 = vpop.f32.mrb[0].mxu0
  %v418 = vadd.f32 %v88, %v417
  %v419 = vpop.f32.mrb[0].mxu0
  %v420 = vpop.f32.mrb[0].mxu0
  %v421 = vadd.f32 %v88, %v420
  %v422 = vpop.f32.mrb[0].mxu0
  %423 = vmatprep.mubr.bf16.mxu0 %v189
  %424 = vmatmul.mubr.bf16.gmra.mrb[0].mxu0 %v188
  %v425 = vpop.f32.mrb[0].mxu0
  %v426 = vadd.f32 %v88, %v425
  %v427 = vpop.f32.mrb[0].mxu0
  %v428 = vpop.f32.mrb[0].mxu0
  %v429 = vadd.f32 %v88, %v428
  %v430 = vpop.f32.mrb[0].mxu0
  %431 = vmatprep.mubr.bf16.mxu0 %v192
  %432 = vmatmul.mubr.bf16.gmra.mrb[0].mxu0 %v191
  %v433 = vpop.f32.mrb[0].mxu0
  %v434 = vadd.f32 %v88, %v433
  %v435 = vpop.f32.mrb[0].mxu0
  %v436 = vpop.f32.mrb[0].mxu0
  %v437 = vadd.f32 %v88, %v436
  %v438 = vpop.f32.mrb[0].mxu0
  %439 = vdwg.mxu0
  %440 = vmatprep.subr.bf16.mxu0 0
  %441 = vmatpush1.bf16.msra.mxu0 %v298
  %442 = vmatprep.subr.bf16.mxu0 0
  %443 = vmatpush1.bf16.msra.mxu0 %v299
  %444 = vmatprep.subr.bf16.mxu0 0
  %445 = vmatpush1.bf16.msra.mxu0 0
  %446 = vmatprep.subr.bf16.mxu0 0
  %447 = vmatpush1.bf16.msra.mxu0 0
  %448 = vmatprep.subr.bf16.mxu0 0
  %449 = vmatpush1.bf16.msra.mxu0 0
  %450 = vmatprep.subr.bf16.mxu0 0
  %451 = vmatpush1.bf16.msra.mxu0 0
  %452 = vmatprep.subr.bf16.mxu0 0
  %453 = vmatpush1.bf16.msra.mxu0 0
  %454 = vmatprep.subr.bf16.mxu0 0
  %455 = vmatpush1.bf16.msra.mxu0 0
  %456 = vmatprep.subr.bf16.mxu0 0
  %457 = vmatpush1.bf16.msra.mxu0 0
  %458 = vmatprep.subr.bf16.mxu0 0
  %459 = vmatpush1.bf16.msra.mxu0 0
  %460 = vmatprep.subr.bf16.mxu0 0
  %461 = vmatpush1.bf16.msra.mxu0 0
  %462 = vmatprep.subr.bf16.mxu0 0
  %463 = vmatpush1.bf16.msra.mxu0 0
  %464 = vmatprep.subr.bf16.mxu0 0
  %465 = vmatpush1.bf16.msra.mxu0 0
  %466 = vmatprep.subr.bf16.mxu0 0
  %467 = vmatpush1.bf16.msra.mxu0 0
  %468 = vmatprep.subr.bf16.mxu0 0
  %469 = vmatpush1.bf16.msra.mxu0 0
  %470 = vmatprep.subr.bf16.mxu0 0
  %471 = vmatpush1.bf16.msra.mxu0 0
  %472 = vmatprep.mubr.bf16.mxu0 0
  %473 = vmatmul.mubr.bf16.gmra.mrb[0].mxu0 %v320
  %v474 = vpop.f32.mrb[0].mxu0
  %v475 = vadd.f32 %v378, %v474
  %v476 = vpop.f32.mrb[0].mxu0
  %v477 = vpop.f32.mrb[0].mxu0
  %v478 = vadd.f32 %v381, %v477
  %v479 = vpop.f32.mrb[0].mxu0
  %480 = vmatprep.mubr.bf16.mxu0 0
  %481 = vmatmul.mubr.bf16.gmra.mrb[0].mxu0 %v323
  %v482 = vpop.f32.mrb[0].mxu0
  %v483 = vadd.f32 %v386, %v482
  %v484 = vpop.f32.mrb[0].mxu0
  %v485 = vpop.f32.mrb[0].mxu0
  %v486 = vadd.f32 %v389, %v485
  %v487 = vpop.f32.mrb[0].mxu0
  %488 = vmatprep.mubr.bf16.mxu0 0
  %489 = vmatmul.mubr.bf16.gmra.mrb[0].mxu0 %v326
  %v490 = vpop.f32.mrb[0].mxu0
  %v491 = vadd.f32 %v394, %v490
  %v492 = vpop.f32.mrb[0].mxu0
  %v493 = vpop.f32.mrb[0].mxu0
  %v494 = vadd.f32 %v397, %v493
  %v495 = vpop.f32.mrb[0].mxu0
  %496 = vmatprep.mubr.bf16.mxu0 0
  %497 = vmatmul.mubr.bf16.gmra.mrb[0].mxu0 %v329
  %v498 = vpop.f32.mrb[0].mxu0
  %v499 = vadd.f32 %v402, %v498
  %v500 = vpop.f32.mrb[0].mxu0
  %v501 = vpop.f32.mrb[0].mxu0
  %v502 = vadd.f32 %v405, %v501
  %v503 = vpop.f32.mrb[0].mxu0
  %504 = vmatprep.mubr.bf16.mxu0 0
  %505 = vmatmul.mubr.bf16.gmra.mrb[0].mxu0 %v332
  %v506 = vpop.f32.mrb[0].mxu0
  %v507 = vadd.f32 %v410, %v506
  %v508 = vpop.f32.mrb[0].mxu0
  %v509 = vpop.f32.mrb[0].mxu0
  %v510 = vadd.f32 %v413, %v509
  %v511 = vpop.f32.mrb[0].mxu0
  %512 = vmatprep.mubr.bf16.mxu0 0
  %513 = vmatmul.mubr.bf16.gmra.mrb[0].mxu0 %v335
  %v514 = vpop.f32.mrb[0].mxu0
  %v515 = vadd.f32 %v418, %v514
  %v516 = vpop.f32.mrb[0].mxu0
  %v517 = vpop.f32.mrb[0].mxu0
  %v518 = vadd.f32 %v421, %v517
  %v519 = vpop.f32.mrb[0].mxu0
  %520 = vmatprep.mubr.bf16.mxu0 0
  %521 = vmatmul.mubr.bf16.gmra.mrb[0].mxu0 %v338
  %v522 = vpop.f32.mrb[0].mxu0
  %v523 = vadd.f32 %v426, %v522
  %v524 = vpop.f32.mrb[0].mxu0
  %v525 = vpop.f32.mrb[0].mxu0
  %v526 = vadd.f32 %v429, %v525
  %v527 = vpop.f32.mrb[0].mxu0
  %528 = vmatprep.mubr.bf16.mxu0 0
  %529 = vmatmul.mubr.bf16.gmra.mrb[0].mxu0 %v341
  %v530 = vpop.f32.mrb[0].mxu0
  %v531 = vadd.f32 %v434, %v530
  %v532 = vpop.f32.mrb[0].mxu0
  %v533 = vpop.f32.mrb[0].mxu0
  %v534 = vadd.f32 %v437, %v533
  %v535 = vpop.f32.mrb[0].mxu0
  %536 = vdwg.mxu0
  %v537 = vmax.f32 %v475, 0.0
  %v538 = vmax.f32 %v478, 0.0
  %v539 = vmax.f32 %v483, 0.0
  %v540 = vmax.f32 %v486, 0.0
  %v541 = vmax.f32 %v491, 0.0
  %v542 = vmax.f32 %v494, 0.0
  %v543 = vmax.f32 %v499, 0.0
  %v544 = vmax.f32 %v502, 0.0
  %v545 = vmax.f32 %v507, 0.0
  %v546 = vmax.f32 %v510, 0.0
  %v547 = vmax.f32 %v515, 0.0
  %v548 = vmax.f32 %v518, 0.0
  %v549 = vmax.f32 %v523, 0.0
  %v550 = vmax.f32 %v526, 0.0
  %v551 = vmax.f32 %v531, 0.0
  %v552 = vmax.f32 %v534, 0.0
  %v553 = vpack.c.bf16 %v538, %v537
  %v554 = vpack.c.bf16 %v540, %v539
  %v555 = vpack.c.bf16 %v542, %v541
  %v556 = vpack.c.bf16 %v544, %v543
  %v557 = vpack.c.bf16 %v546, %v545
  %v558 = vpack.c.bf16 %v548, %v547
  %v559 = vpack.c.bf16 %v550, %v549
  %v560 = vpack.c.bf16 %v552, %v551
  %v569 = vunpack.c.l.b16 %v553
  %v570 = vunpack.c.h.b16 %v553
  %v571 = vunpack.c.l.b16 %v554
  %v572 = vunpack.c.h.b16 %v554
  %v573 = vunpack.c.l.b16 %v555
  %v574 = vunpack.c.h.b16 %v555
  %v575 = vunpack.c.l.b16 %v556
  %v576 = vunpack.c.h.b16 %v556
  %v577 = vunpack.c.l.b16 %v557
  %v578 = vunpack.c.h.b16 %v557
  %v579 = vunpack.c.l.b16 %v558
  %v580 = vunpack.c.h.b16 %v558
  %v581 = vunpack.c.l.b16 %v559
  %v582 = vunpack.c.h.b16 %v559
  %v583 = vunpack.c.l.b16 %v560
  %v584 = vunpack.c.h.b16 %v560
  %v585 = vpack.c.b16 %v569, %v569
  %v586 = vpack.c.b16 %v570, %v570
  %v587 = vpack.c.b16 %v571, %v571
  %v588 = vpack.c.b16 %v572, %v572
  %v589 = vpack.c.b16 %v573, %v573
  %v590 = vpack.c.b16 %v574, %v574
  %v591 = vpack.c.b16 %v575, %v575
  %v592 = vpack.c.b16 %v576, %v576
  %v593 = vpack.c.b16 %v577, %v577
  %v594 = vpack.c.b16 %v578, %v578
  %v595 = vpack.c.b16 %v579, %v579
  %v596 = vpack.c.b16 %v580, %v580
  %v597 = vpack.c.b16 %v581, %v581
  %v598 = vpack.c.b16 %v582, %v582
  %v599 = vpack.c.b16 %v583, %v583
  %v600 = vpack.c.b16 %v584, %v584
  %vm617 = vcmask 257024
  %618 = vst.msk [vmem:[%s3] sm:$0xf] %vm617, %v585
  %619 = vst.msk [vmem:[%s3 + $0x4] sm:$0xf] %vm617, %v586
  %620 = vst.msk [vmem:[%s3 + $0x8] sm:$0xf] %vm617, %v587
  %621 = vst.msk [vmem:[%s3 + $0xc] sm:$0xf] %vm617, %v588
  %622 = vst.msk [vmem:[%s3 + $0x10] sm:$0xf] %vm617, %v589
  %623 = vst.msk [vmem:[%s3 + $0x14] sm:$0xf] %vm617, %v590
  %624 = vst.msk [vmem:[%s3 + $0x18] sm:$0xf] %vm617, %v591
  %625 = vst.msk [vmem:[%s3 + $0x1c] sm:$0xf] %vm617, %v592
  %626 = vst.msk [vmem:[%s3 + $0x20] sm:$0xf] %vm617, %v593
  %627 = vst.msk [vmem:[%s3 + $0x24] sm:$0xf] %vm617, %v594
  %628 = vst.msk [vmem:[%s3 + $0x28] sm:$0xf] %vm617, %v595
  %629 = vst.msk [vmem:[%s3 + $0x2c] sm:$0xf] %vm617, %v596
  %630 = vst.msk [vmem:[%s3 + $0x30] sm:$0xf] %vm617, %v597
  %631 = vst.msk [vmem:[%s3 + $0x34] sm:$0xf] %vm617, %v598
  %632 = vst.msk [vmem:[%s3 + $0x38] sm:$0xf] %vm617, %v599
  %633 = vst.msk [vmem:[%s3 + $0x3c] sm:$0xf] %vm617, %v600
  // Predicated region
  $region14: #{fcn_forward.13} parent=0 // pred_check
    _
  $region15: #{fcn_forward.13} parent=0 // pred_check_branch
    %635 = sbr.rel (0) target = $region17
  $region16: #{fcn_forward.13} parent=0 // pred_region
    _
  $region17: #{fcn_forward.13} parent=0 // pred_fallthru
    _
  // Predicated region
  $region18: #{fcn_forward.13} parent=0 // pred_check
    _
  $region19: #{fcn_forward.13} parent=0 // pred_check_branch
    %637 = sbr.rel (0) target = $region21
  $region20: #{fcn_forward.13} parent=0 // pred_region
    _
  $region21: #{fcn_forward.13} parent=0 // pred_fallthru
    _

// kernel: fcn_forward.14
$region0: #{fcn_forward.14}
  #allocation0 [shape = 'u32[]', space=smem, size = 0x4, offset = 0x4, fixed_abs, tag = 'smem constant byte address 0x4 - core index']
  #allocation1 [shape = 'u32[144,128]{1,0:T(1,128)}', space=vmem, size = 0x12000, scoped, tag = 'internal scratch']
  %s0 = inlined_call_operand.vmem [shape: bf16[8,2,4,32], index: 0, kind: input, shape index: {}]
  %s1 = inlined_call_operand.vmem [shape: bf16[8,2,4,32], index: 1, kind: input, shape index: {}]
  %s2 = inlined_call_operand.vmem [shape: bf16[8,4,32], index: 2, kind: output, shape index: {}]
  %s3 = sld [smem:[#allocation0]]
  $region18: #{fcn_forward.14} parent=0
    _
  %s5 = ssub.s32 1, %s3
  %s6 = scalar_select 0, %s5, %s3
  // Predicated region
  $region2: #{fcn_forward.14} parent=0 // pred_check
    _
  $region3: #{fcn_forward.14} parent=0 // pred_check_branch
    %8 = sbr.rel (0) target = $region5
  $region4: #{fcn_forward.14} parent=0 // pred_region
    _
  $region5: #{fcn_forward.14} parent=0 // pred_fallthru
    _
  // Predicated region
  $region6: #{fcn_forward.14} parent=0 // pred_check
    _
  $region7: #{fcn_forward.14} parent=0 // pred_check_branch
    %10 = sbr.rel (0) target = $region9
  $region8: #{fcn_forward.14} parent=0 // pred_region
    _
  $region9: #{fcn_forward.14} parent=0 // pred_fallthru
    _
  %v11 = vld [vmem:[%s0] sm:$0x3]
  %v12 = vld [vmem:[%s0 + $0x2] sm:$0x3]
  %v13 = vld [vmem:[%s0 + $0x4] sm:$0x3]
  %v14 = vld [vmem:[%s0 + $0x6] sm:$0x3]
  %v15 = vld [vmem:[%s0 + $0x8] sm:$0x3]
  %v16 = vld [vmem:[%s0 + $0xa] sm:$0x3]
  %v17 = vld [vmem:[%s0 + $0xc] sm:$0x3]
  %v18 = vld [vmem:[%s0 + $0xe] sm:$0x3]
  %v19 = vld [vmem:[%s0 + $0x10] sm:$0x3]
  %v20 = vld [vmem:[%s0 + $0x12] sm:$0x3]
  %v21 = vld [vmem:[%s0 + $0x14] sm:$0x3]
  %v22 = vld [vmem:[%s0 + $0x16] sm:$0x3]
  %v23 = vld [vmem:[%s0 + $0x18] sm:$0x3]
  %v24 = vld [vmem:[%s0 + $0x1a] sm:$0x3]
  %v25 = vld [vmem:[%s0 + $0x1c] sm:$0x3]
  %v26 = vld [vmem:[%s0 + $0x1e] sm:$0x3]
  %v27 = vld [vmem:[%s1] sm:$0x3]
  %v28 = vld [vmem:[%s1 + $0x2] sm:$0x3]
  %v29 = vld [vmem:[%s1 + $0x4] sm:$0x3]
  %v30 = vld [vmem:[%s1 + $0x6] sm:$0x3]
  %v31 = vld [vmem:[%s1 + $0x8] sm:$0x3]
  %v32 = vld [vmem:[%s1 + $0xa] sm:$0x3]
  %v33 = vld [vmem:[%s1 + $0xc] sm:$0x3]
  %v34 = vld [vmem:[%s1 + $0xe] sm:$0x3]
  %v35 = vld [vmem:[%s1 + $0x10] sm:$0x3]
  %v36 = vld [vmem:[%s1 + $0x12] sm:$0x3]
  %v37 = vld [vmem:[%s1 + $0x14] sm:$0x3]
  %v38 = vld [vmem:[%s1 + $0x16] sm:$0x3]
  %v39 = vld [vmem:[%s1 + $0x18] sm:$0x3]
  %v40 = vld [vmem:[%s1 + $0x1a] sm:$0x3]
  %v41 = vld [vmem:[%s1 + $0x1c] sm:$0x3]
  %v42 = vld [vmem:[%s1 + $0x1e] sm:$0x3]
  %v43 = vmax.bf16 %v11, %v12
  %v44 = vmax.bf16 %v13, %v14
  %v45 = vmax.bf16 %v15, %v16
  %v46 = vmax.bf16 %v17, %v18
  %v47 = vmax.bf16 %v19, %v20
  %v48 = vmax.bf16 %v21, %v22
  %v49 = vmax.bf16 %v23, %v24
  %v50 = vmax.bf16 %v25, %v26
  %v51 = vmax.bf16 %v27, %v28
  %v52 = vmax.bf16 %v29, %v30
  %v53 = vmax.bf16 %v31, %v32
  %v54 = vmax.bf16 %v33, %v34
  %v55 = vmax.bf16 %v35, %v36
  %v56 = vmax.bf16 %v37, %v38
  %v57 = vmax.bf16 %v39, %v40
  %v58 = vmax.bf16 %v41, %v42
  %v59 = vmax.bf16 %v43, %v51
  %v60 = vmax.bf16 %v44, %v52
  %v61 = vmax.bf16 %v45, %v53
  %v62 = vmax.bf16 %v46, %v54
  %v63 = vmax.bf16 %v47, %v55
  %v64 = vmax.bf16 %v48, %v56
  %v65 = vmax.bf16 %v49, %v57
  %v66 = vmax.bf16 %v50, %v58
  %vm67 = vcmask 254976
  %68 = vst.msk [vmem:[%s2] sm:$0x3] %vm67, %v59
  %69 = vst.msk [vmem:[%s2 + $0x2] sm:$0x3] %vm67, %v60
  %70 = vst.msk [vmem:[%s2 + $0x4] sm:$0x3] %vm67, %v61
  %71 = vst.msk [vmem:[%s2 + $0x6] sm:$0x3] %vm67, %v62
  %72 = vst.msk [vmem:[%s2 + $0x8] sm:$0x3] %vm67, %v63
  %73 = vst.msk [vmem:[%s2 + $0xa] sm:$0x3] %vm67, %v64
  %74 = vst.msk [vmem:[%s2 + $0xc] sm:$0x3] %vm67, %v65
  %75 = vst.msk [vmem:[%s2 + $0xe] sm:$0x3] %vm67, %v66
  // Predicated region
  $region10: #{fcn_forward.14} parent=0 // pred_check
    _
  $region11: #{fcn_forward.14} parent=0 // pred_check_branch
    %77 = sbr.rel (0) target = $region13
  $region12: #{fcn_forward.14} parent=0 // pred_region
    _
  $region13: #{fcn_forward.14} parent=0 // pred_fallthru
    _
  // Predicated region
  $region14: #{fcn_forward.14} parent=0 // pred_check
    _
  $region15: #{fcn_forward.14} parent=0 // pred_check_branch
    %79 = sbr.rel (0) target = $region17
  $region16: #{fcn_forward.14} parent=0 // pred_region
    _
  $region17: #{fcn_forward.14} parent=0 // pred_fallthru
    _

// kernel: fcn_forward.15
$region0: #{fcn_forward.15}
  #allocation0 [shape = 'u32[]', space=smem, size = 0x4, offset = 0x4, fixed_abs, tag = 'smem constant byte address 0x4 - core index']
  #allocation1 [shape = 'u32[144,128]{1,0:T(1,128)}', space=vmem, size = 0x12000, scoped, tag = 'internal scratch']
  %s0 = inlined_call_operand.vmem [shape: bf16[32,288], index: 0, kind: input, shape index: {}]
  %s1 = inlined_call_operand.vmem [shape: bf16[288,64], index: 1, kind: input, shape index: {}]
  %s2 = inlined_call_operand.vmem [shape: f32[1,64], index: 2, kind: input, shape index: {}]
  %s3 = inlined_call_operand.vmem [shape: bf16[32,64], index: 3, kind: output, shape index: {}]
  %s4 = sld [smem:[#allocation0]]
  $region22: #{fcn_forward.15} parent=0
    _
  %s6 = ssub.s32 1, %s4
  %s7 = scalar_select 0, %s6, %s4
  // Predicated region
  $region2: #{fcn_forward.15} parent=0 // pred_check
    _
  $region3: #{fcn_forward.15} parent=0 // pred_check_branch
    %9 = sbr.rel (0) target = $region5
  $region4: #{fcn_forward.15} parent=0 // pred_region
    _
  $region5: #{fcn_forward.15} parent=0 // pred_fallthru
    _
  // Predicated region
  $region6: #{fcn_forward.15} parent=0 // pred_check
    _
  $region7: #{fcn_forward.15} parent=0 // pred_check_branch
    %11 = sbr.rel (0) target = $region9
  $region8: #{fcn_forward.15} parent=0 // pred_region
    _
  $region9: #{fcn_forward.15} parent=0 // pred_fallthru
    _
  // Predicated region
  $region10: #{fcn_forward.15} parent=0 // pred_check
    _
  $region11: #{fcn_forward.15} parent=0 // pred_check_branch
    %13 = sbr.rel (0) target = $region13
  $region12: #{fcn_forward.15} parent=0 // pred_region
    _
  $region13: #{fcn_forward.15} parent=0 // pred_fallthru
    _
  %v15 = vld [vmem:[%s0] sm:$0xff]
  %v16 = vld [vmem:[%s0 + $0x8] sm:$0xf]
  %v17 = vld [vmem:[%s0 + $0xc] sm:$0xff]
  %v18 = vld [vmem:[%s0 + $0x14] sm:$0xf]
  %v19 = vld [vmem:[%s0 + $0x18] sm:$0xff]
  %v20 = vld [vmem:[%s0 + $0x20] sm:$0xf]
  %v21 = vld [vmem:[%s0 + $0x24] sm:$0xff]
  %v22 = vld [vmem:[%s0 + $0x2c] sm:$0xf]
  %v23 = vld [vmem:[%s1] sm:$0xf]
  %v24 = vld [vmem:[%s1 + $0x4] sm:$0xf]
  %v25 = vld [vmem:[%s1 + $0x8] sm:$0xf]
  %v26 = vld [vmem:[%s1 + $0xc] sm:$0xf]
  %v27 = vld [vmem:[%s1 + $0x10] sm:$0xf]
  %v28 = vld [vmem:[%s1 + $0x14] sm:$0xf]
  %v29 = vld [vmem:[%s1 + $0x18] sm:$0xf]
  %v30 = vld [vmem:[%s1 + $0x1c] sm:$0xf]
  %v31 = vld [vmem:[%s1 + $0x20] sm:$0xf]
  %v32 = vld [vmem:[%s1 + $0x24] sm:$0xf]
  %v33 = vld [vmem:[%s1 + $0x28] sm:$0xf]
  %v34 = vld [vmem:[%s1 + $0x2c] sm:$0xf]
  %v35 = vld [vmem:[%s1 + $0x30] sm:$0xf]
  %v36 = vld [vmem:[%s1 + $0x34] sm:$0xf]
  %v37 = vld [vmem:[%s1 + $0x38] sm:$0xf]
  %v38 = vld [vmem:[%s1 + $0x3c] sm:$0xf]
  %v39 = vld [vmem:[%s1 + $0x40] sm:$0xf]
  %v40 = vld [vmem:[%s1 + $0x44] sm:$0xf]
  %v41 = vld [vmem:[%s1 + $0x48] sm:$0xf]
  %v42 = vld [vmem:[%s1 + $0x4c] sm:$0xf]
  %v43 = vld [vmem:[%s1 + $0x50] sm:$0xf]
  %v44 = vld [vmem:[%s1 + $0x54] sm:$0xf]
  %v45 = vld [vmem:[%s1 + $0x58] sm:$0xf]
  %v46 = vld [vmem:[%s1 + $0x5c] sm:$0xf]
  %v47 = vld [vmem:[%s1 + $0x60] sm:$0xf]
  %v48 = vld [vmem:[%s1 + $0x64] sm:$0xf]
  %v49 = vld [vmem:[%s1 + $0x68] sm:$0xf]
  %v50 = vld [vmem:[%s1 + $0x6c] sm:$0xf]
  %v51 = vld [vmem:[%s1 + $0x70] sm:$0xf]
  %v52 = vld [vmem:[%s1 + $0x74] sm:$0xf]
  %v53 = vld [vmem:[%s1 + $0x78] sm:$0xf]
  %v54 = vld [vmem:[%s1 + $0x7c] sm:$0xf]
  %v55 = vld [vmem:[%s1 + $0x80] sm:$0xf]
  %v56 = vld [vmem:[%s1 + $0x84] sm:$0xf]
  %v57 = vld [vmem:[%s1 + $0x88] sm:$0xf]
  %v58 = vld [vmem:[%s1 + $0x8c] sm:$0xf]
  %v59 = vld [vmem:[%s2] sm:$0x1]
  %v61 = vlaneseq
  %v62 = vshrl.u32 %v61, 7
  %v63 = vsub.s32 0, %v62
  %v64 = vrot.slane %v59, %v63
  %v74 = vunpack.c.l.b16 %v15
  %v75 = vunpack.c.h.b16 %v15
  %v76 = vunpack.c.l.b16 %v16
  %v77 = vunpack.c.l.b16 %v17
  %v78 = vunpack.c.h.b16 %v17
  %v79 = vunpack.c.l.b16 %v18
  %v80 = vunpack.c.l.b16 %v19
  %v81 = vunpack.c.h.b16 %v19
  %v82 = vunpack.c.l.b16 %v20
  %v83 = vunpack.c.l.b16 %v21
  %v84 = vunpack.c.h.b16 %v21
  %v85 = vunpack.c.l.b16 %v22
  %v86 = vpack.c.b16 %v77, %v74
  %v87 = vpack.c.b16 %v78, %v75
  %v88 = vpack.c.b16 %v79, %v76
  %v89 = vpack.c.b16 %v83, %v80
  %v90 = vpack.c.b16 %v84, %v81
  %v91 = vpack.c.b16 %v85, %v82
  %v132 = vunpack.c.l.b16 %v23
  %v133 = vunpack.c.l.b16 %v24
  %v134 = vunpack.c.l.b16 %v25
  %v135 = vunpack.c.l.b16 %v26
  %v136 = vunpack.c.l.b16 %v27
  %v137 = vunpack.c.l.b16 %v28
  %v138 = vunpack.c.l.b16 %v29
  %v139 = vunpack.c.l.b16 %v30
  %v140 = vunpack.c.l.b16 %v31
  %v141 = vunpack.c.l.b16 %v32
  %v142 = vunpack.c.l.b16 %v33
  %v143 = vunpack.c.l.b16 %v34
  %v144 = vunpack.c.l.b16 %v35
  %v145 = vunpack.c.l.b16 %v36
  %v146 = vunpack.c.l.b16 %v37
  %v147 = vunpack.c.l.b16 %v38
  %v148 = vunpack.c.l.b16 %v39
  %v149 = vunpack.c.l.b16 %v40
  %v150 = vunpack.c.l.b16 %v41
  %v151 = vunpack.c.l.b16 %v42
  %v152 = vunpack.c.l.b16 %v43
  %v153 = vunpack.c.l.b16 %v44
  %v154 = vunpack.c.l.b16 %v45
  %v155 = vunpack.c.l.b16 %v46
  %v156 = vunpack.c.l.b16 %v47
  %v157 = vunpack.c.l.b16 %v48
  %v158 = vunpack.c.l.b16 %v49
  %v159 = vunpack.c.l.b16 %v50
  %v160 = vunpack.c.l.b16 %v51
  %v161 = vunpack.c.l.b16 %v52
  %v162 = vunpack.c.l.b16 %v53
  %v163 = vunpack.c.l.b16 %v54
  %v164 = vunpack.c.l.b16 %v55
  %v165 = vunpack.c.l.b16 %v56
  %v166 = vunpack.c.l.b16 %v57
  %v167 = vunpack.c.l.b16 %v58
  %v168 = vpack.c.b16 %v133, %v132
  %v169 = vpack.c.b16 %v135, %v134
  %v170 = vpack.c.b16 %v137, %v136
  %v171 = vpack.c.b16 %v139, %v138
  %v172 = vpack.c.b16 %v141, %v140
  %v173 = vpack.c.b16 %v143, %v142
  %v174 = vpack.c.b16 %v145, %v144
  %v175 = vpack.c.b16 %v147, %v146
  %v176 = vpack.c.b16 %v149, %v148
  %v177 = vpack.c.b16 %v151, %v150
  %v178 = vpack.c.b16 %v153, %v152
  %v179 = vpack.c.b16 %v155, %v154
  %v180 = vpack.c.b16 %v157, %v156
  %v181 = vpack.c.b16 %v159, %v158
  %v182 = vpack.c.b16 %v161, %v160
  %v183 = vpack.c.b16 %v163, %v162
  %v184 = vpack.c.b16 %v165, %v164
  %v185 = vpack.c.b16 %v167, %v166
  %vm204 = vcmask 261120
  %v206 = vsel %vm204, %v88, 0
  %v209 = vsel %vm204, %v91, 0
  %211 = vmatprep.subr.bf16.mxu0 0
  %212 = vmatpush1.bf16.msra.mxu0 %v168
  %213 = vmatprep.subr.bf16.mxu0 0
  %214 = vmatpush1.bf16.msra.mxu0 %v169
  %215 = vmatprep.subr.bf16.mxu0 0
  %216 = vmatpush1.bf16.msra.mxu0 %v170
  %217 = vmatprep.subr.bf16.mxu0 0
  %218 = vmatpush1.bf16.msra.mxu0 %v171
  %219 = vmatprep.subr.bf16.mxu0 0
  %220 = vmatpush1.bf16.msra.mxu0 %v172
  %221 = vmatprep.subr.bf16.mxu0 0
  %222 = vmatpush1.bf16.msra.mxu0 %v173
  %223 = vmatprep.subr.bf16.mxu0 0
  %224 = vmatpush1.bf16.msra.mxu0 %v174
  %225 = vmatprep.subr.bf16.mxu0 0
  %226 = vmatpush1.bf16.msra.mxu0 %v175
  %227 = vmatprep.subr.bf16.mxu0 0
  %228 = vmatpush1.bf16.msra.mxu0 %v176
  %229 = vmatprep.subr.bf16.mxu0 0
  %230 = vmatpush1.bf16.msra.mxu0 %v177
  %231 = vmatprep.subr.bf16.mxu0 0
  %232 = vmatpush1.bf16.msra.mxu0 %v178
  %233 = vmatprep.subr.bf16.mxu0 0
  %234 = vmatpush1.bf16.msra.mxu0 %v179
  %235 = vmatprep.subr.bf16.mxu0 0
  %236 = vmatpush1.bf16.msra.mxu0 %v180
  %237 = vmatprep.subr.bf16.mxu0 0
  %238 = vmatpush1.bf16.msra.mxu0 %v181
  %239 = vmatprep.subr.bf16.mxu0 0
  %240 = vmatpush1.bf16.msra.mxu0 %v182
  %241 = vmatprep.subr.bf16.mxu0 0
  %242 = vmatpush1.bf16.msra.mxu0 %v183
  %243 = vmatprep.mubr.bf16.mxu0 %v87
  %244 = vmatmul.mubr.bf16.gmra.mrb[0].mxu0 %v86
  %v245 = vpop.f32.mrb[0].mxu0
  %v246 = vadd.f32 %v64, %v245
  %v247 = vpop.f32.mrb[0].mxu0
  %v248 = vpop.f32.mrb[0].mxu0
  %v249 = vadd.f32 %v64, %v248
  %v250 = vpop.f32.mrb[0].mxu0
  %251 = vmatprep.mubr.bf16.mxu0 %v90
  %252 = vmatmul.mubr.bf16.gmra.mrb[0].mxu0 %v89
  %v253 = vpop.f32.mrb[0].mxu0
  %v254 = vadd.f32 %v64, %v253
  %v255 = vpop.f32.mrb[0].mxu0
  %v256 = vpop.f32.mrb[0].mxu0
  %v257 = vadd.f32 %v64, %v256
  %v258 = vpop.f32.mrb[0].mxu0
  %259 = vdwg.mxu0
  %260 = vmatprep.subr.bf16.mxu0 0
  %261 = vmatpush1.bf16.msra.mxu0 %v184
  %262 = vmatprep.subr.bf16.mxu0 0
  %263 = vmatpush1.bf16.msra.mxu0 %v185
  %264 = vmatprep.subr.bf16.mxu0 0
  %265 = vmatpush1.bf16.msra.mxu0 0
  %266 = vmatprep.subr.bf16.mxu0 0
  %267 = vmatpush1.bf16.msra.mxu0 0
  %268 = vmatprep.subr.bf16.mxu0 0
  %269 = vmatpush1.bf16.msra.mxu0 0
  %270 = vmatprep.subr.bf16.mxu0 0
  %271 = vmatpush1.bf16.msra.mxu0 0
  %272 = vmatprep.subr.bf16.mxu0 0
  %273 = vmatpush1.bf16.msra.mxu0 0
  %274 = vmatprep.subr.bf16.mxu0 0
  %275 = vmatpush1.bf16.msra.mxu0 0
  %276 = vmatprep.subr.bf16.mxu0 0
  %277 = vmatpush1.bf16.msra.mxu0 0
  %278 = vmatprep.subr.bf16.mxu0 0
  %279 = vmatpush1.bf16.msra.mxu0 0
  %280 = vmatprep.subr.bf16.mxu0 0
  %281 = vmatpush1.bf16.msra.mxu0 0
  %282 = vmatprep.subr.bf16.mxu0 0
  %283 = vmatpush1.bf16.msra.mxu0 0
  %284 = vmatprep.subr.bf16.mxu0 0
  %285 = vmatpush1.bf16.msra.mxu0 0
  %286 = vmatprep.subr.bf16.mxu0 0
  %287 = vmatpush1.bf16.msra.mxu0 0
  %288 = vmatprep.subr.bf16.mxu0 0
  %289 = vmatpush1.bf16.msra.mxu0 0
  %290 = vmatprep.subr.bf16.mxu0 0
  %291 = vmatpush1.bf16.msra.mxu0 0
  %292 = vmatprep.mubr.bf16.mxu0 0
  %293 = vmatmul.mubr.bf16.gmra.mrb[0].mxu0 %v206
  %v294 = vpop.f32.mrb[0].mxu0
  %v295 = vadd.f32 %v246, %v294
  %v296 = vpop.f32.mrb[0].mxu0
  %v297 = vpop.f32.mrb[0].mxu0
  %v298 = vadd.f32 %v249, %v297
  %v299 = vpop.f32.mrb[0].mxu0
  %300 = vmatprep.mubr.bf16.mxu0 0
  %301 = vmatmul.mubr.bf16.gmra.mrb[0].mxu0 %v209
  %v302 = vpop.f32.mrb[0].mxu0
  %v303 = vadd.f32 %v254, %v302
  %v304 = vpop.f32.mrb[0].mxu0
  %v305 = vpop.f32.mrb[0].mxu0
  %v306 = vadd.f32 %v257, %v305
  %v307 = vpop.f32.mrb[0].mxu0
  %308 = vdwg.mxu0
  %v309 = vmax.f32 %v295, 0.0
  %v310 = vmax.f32 %v298, 0.0
  %v311 = vmax.f32 %v303, 0.0
  %v312 = vmax.f32 %v306, 0.0
  %v313 = vpack.c.bf16 %v310, %v309
  %v314 = vpack.c.bf16 %v312, %v311
  %v317 = vunpack.c.l.b16 %v313
  %v318 = vunpack.c.h.b16 %v313
  %v319 = vunpack.c.l.b16 %v314
  %v320 = vunpack.c.h.b16 %v314
  %v321 = vpack.c.b16 %v317, %v317
  %v322 = vpack.c.b16 %v318, %v318
  %v323 = vpack.c.b16 %v319, %v319
  %v324 = vpack.c.b16 %v320, %v320
  %vm329 = vcmask 519168
  %330 = vst.msk [vmem:[%s3] sm:$0xf] %vm329, %v321
  %331 = vst.msk [vmem:[%s3 + $0x4] sm:$0xf] %vm329, %v322
  %332 = vst.msk [vmem:[%s3 + $0x8] sm:$0xf] %vm329, %v323
  %333 = vst.msk [vmem:[%s3 + $0xc] sm:$0xf] %vm329, %v324
  // Predicated region
  $region14: #{fcn_forward.15} parent=0 // pred_check
    _
  $region15: #{fcn_forward.15} parent=0 // pred_check_branch
    %335 = sbr.rel (0) target = $region17
  $region16: #{fcn_forward.15} parent=0 // pred_region
    _
  $region17: #{fcn_forward.15} parent=0 // pred_fallthru
    _
  // Predicated region
  $region18: #{fcn_forward.15} parent=0 // pred_check
    _
  $region19: #{fcn_forward.15} parent=0 // pred_check_branch
    %337 = sbr.rel (0) target = $region21
  $region20: #{fcn_forward.15} parent=0 // pred_region
    _
  $region21: #{fcn_forward.15} parent=0 // pred_fallthru
    _

// kernel: fcn_forward.16
$region0: #{fcn_forward.16}
  #allocation0 [shape = 'u32[]', space=smem, size = 0x4, offset = 0x4, fixed_abs, tag = 'smem constant byte address 0x4 - core index']
  #allocation1 [shape = 'u32[144,128]{1,0:T(1,128)}', space=vmem, size = 0x12000, scoped, tag = 'internal scratch']
  %s0 = inlined_call_operand.vmem [shape: bf16[32,576], index: 0, kind: input, shape index: {}]
  %s1 = inlined_call_operand.vmem [shape: bf16[576,64], index: 1, kind: input, shape index: {}]
  %s2 = inlined_call_operand.vmem [shape: f32[1,64], index: 2, kind: input, shape index: {}]
  %s3 = inlined_call_operand.vmem [shape: bf16[32,64], index: 3, kind: output, shape index: {}]
  %s4 = sld [smem:[#allocation0]]
  $region22: #{fcn_forward.16} parent=0
    _
  %s6 = ssub.s32 1, %s4
  %s7 = scalar_select 0, %s6, %s4
  // Predicated region
  $region2: #{fcn_forward.16} parent=0 // pred_check
    _
  $region3: #{fcn_forward.16} parent=0 // pred_check_branch
    %9 = sbr.rel (0) target = $region5
  $region4: #{fcn_forward.16} parent=0 // pred_region
    _
  $region5: #{fcn_forward.16} parent=0 // pred_fallthru
    _
  // Predicated region
  $region6: #{fcn_forward.16} parent=0 // pred_check
    _
  $region7: #{fcn_forward.16} parent=0 // pred_check_branch
    %11 = sbr.rel (0) target = $region9
  $region8: #{fcn_forward.16} parent=0 // pred_region
    _
  $region9: #{fcn_forward.16} parent=0 // pred_fallthru
    _
  // Predicated region
  $region10: #{fcn_forward.16} parent=0 // pred_check
    _
  $region11: #{fcn_forward.16} parent=0 // pred_check_branch
    %13 = sbr.rel (0) target = $region13
  $region12: #{fcn_forward.16} parent=0 // pred_region
    _
  $region13: #{fcn_forward.16} parent=0 // pred_fallthru
    _
  %v15 = vld [vmem:[%s0] sm:$0xff]
  %v16 = vld [vmem:[%s0 + $0x8] sm:$0xff]
  %v17 = vld [vmem:[%s0 + $0x10] sm:$0xf]
  %v18 = vld [vmem:[%s0 + $0x14] sm:$0xff]
  %v19 = vld [vmem:[%s0 + $0x1c] sm:$0xff]
  %v20 = vld [vmem:[%s0 + $0x24] sm:$0xf]
  %v21 = vld [vmem:[%s0 + $0x28] sm:$0xff]
  %v22 = vld [vmem:[%s0 + $0x30] sm:$0xff]
  %v23 = vld [vmem:[%s0 + $0x38] sm:$0xf]
  %v24 = vld [vmem:[%s0 + $0x3c] sm:$0xff]
  %v25 = vld [vmem:[%s0 + $0x44] sm:$0xff]
  %v26 = vld [vmem:[%s0 + $0x4c] sm:$0xf]
  %v27 = vld [vmem:[%s1] sm:$0xf]
  %v28 = vld [vmem:[%s1 + $0x4] sm:$0xf]
  %v29 = vld [vmem:[%s1 + $0x8] sm:$0xf]
  %v30 = vld [vmem:[%s1 + $0xc] sm:$0xf]
  %v31 = vld [vmem:[%s1 + $0x10] sm:$0xf]
  %v32 = vld [vmem:[%s1 + $0x14] sm:$0xf]
  %v33 = vld [vmem:[%s1 + $0x18] sm:$0xf]
  %v34 = vld [vmem:[%s1 + $0x1c] sm:$0xf]
  %v35 = vld [vmem:[%s1 + $0x20] sm:$0xf]
  %v36 = vld [vmem:[%s1 + $0x24] sm:$0xf]
  %v37 = vld [vmem:[%s1 + $0x28] sm:$0xf]
  %v38 = vld [vmem:[%s1 + $0x2c] sm:$0xf]
  %v39 = vld [vmem:[%s1 + $0x30] sm:$0xf]
  %v40 = vld [vmem:[%s1 + $0x34] sm:$0xf]
  %v41 = vld [vmem:[%s1 + $0x38] sm:$0xf]
  %v42 = vld [vmem:[%s1 + $0x3c] sm:$0xf]
  %v43 = vld [vmem:[%s1 + $0x40] sm:$0xf]
  %v44 = vld [vmem:[%s1 + $0x44] sm:$0xf]
  %v45 = vld [vmem:[%s1 + $0x48] sm:$0xf]
  %v46 = vld [vmem:[%s1 + $0x4c] sm:$0xf]
  %v47 = vld [vmem:[%s1 + $0x50] sm:$0xf]
  %v48 = vld [vmem:[%s1 + $0x54] sm:$0xf]
  %v49 = vld [vmem:[%s1 + $0x58] sm:$0xf]
  %v50 = vld [vmem:[%s1 + $0x5c] sm:$0xf]
  %v51 = vld [vmem:[%s1 + $0x60] sm:$0xf]
  %v52 = vld [vmem:[%s1 + $0x64] sm:$0xf]
  %v53 = vld [vmem:[%s1 + $0x68] sm:$0xf]
  %v54 = vld [vmem:[%s1 + $0x6c] sm:$0xf]
  %v55 = vld [vmem:[%s1 + $0x70] sm:$0xf]
  %v56 = vld [vmem:[%s1 + $0x74] sm:$0xf]
  %v57 = vld [vmem:[%s1 + $0x78] sm:$0xf]
  %v58 = vld [vmem:[%s1 + $0x7c] sm:$0xf]
  %v59 = vld [vmem:[%s1 + $0x80] sm:$0xf]
  %v60 = vld [vmem:[%s1 + $0x84] sm:$0xf]
  %v61 = vld [vmem:[%s1 + $0x88] sm:$0xf]
  %v62 = vld [vmem:[%s1 + $0x8c] sm:$0xf]
  %v63 = vld [vmem:[%s1 + $0x90] sm:$0xf]
  %v64 = vld [vmem:[%s1 + $0x94] sm:$0xf]
  %v65 = vld [vmem:[%s1 + $0x98] sm:$0xf]
  %v66 = vld [vmem:[%s1 + $0x9c] sm:$0xf]
  %v67 = vld [vmem:[%s1 + $0xa0] sm:$0xf]
  %v68 = vld [vmem:[%s1 + $0xa4] sm:$0xf]
  %v69 = vld [vmem:[%s1 + $0xa8] sm:$0xf]
  %v70 = vld [vmem:[%s1 + $0xac] sm:$0xf]
  %v71 = vld [vmem:[%s1 + $0xb0] sm:$0xf]
  %v72 = vld [vmem:[%s1 + $0xb4] sm:$0xf]
  %v73 = vld [vmem:[%s1 + $0xb8] sm:$0xf]
  %v74 = vld [vmem:[%s1 + $0xbc] sm:$0xf]
  %v75 = vld [vmem:[%s1 + $0xc0] sm:$0xf]
  %v76 = vld [vmem:[%s1 + $0xc4] sm:$0xf]
  %v77 = vld [vmem:[%s1 + $0xc8] sm:$0xf]
  %v78 = vld [vmem:[%s1 + $0xcc] sm:$0xf]
  %v79 = vld [vmem:[%s1 + $0xd0] sm:$0xf]
  %v80 = vld [vmem:[%s1 + $0xd4] sm:$0xf]
  %v81 = vld [vmem:[%s1 + $0xd8] sm:$0xf]
  %v82 = vld [vmem:[%s1 + $0xdc] sm:$0xf]
  %v83 = vld [vmem:[%s1 + $0xe0] sm:$0xf]
  %v84 = vld [vmem:[%s1 + $0xe4] sm:$0xf]
  %v85 = vld [vmem:[%s1 + $0xe8] sm:$0xf]
  %v86 = vld [vmem:[%s1 + $0xec] sm:$0xf]
  %v87 = vld [vmem:[%s1 + $0xf0] sm:$0xf]
  %v88 = vld [vmem:[%s1 + $0xf4] sm:$0xf]
  %v89 = vld [vmem:[%s1 + $0xf8] sm:$0xf]
  %v90 = vld [vmem:[%s1 + $0xfc] sm:$0xf]
  %v91 = vld [vmem:[%s1 + $0x100] sm:$0xf]
  %v92 = vld [vmem:[%s1 + $0x104] sm:$0xf]
  %v93 = vld [vmem:[%s1 + $0x108] sm:$0xf]
  %v94 = vld [vmem:[%s1 + $0x10c] sm:$0xf]
  %v95 = vld [vmem:[%s1 + $0x110] sm:$0xf]
  %v96 = vld [vmem:[%s1 + $0x114] sm:$0xf]
  %v97 = vld [vmem:[%s1 + $0x118] sm:$0xf]
  %v98 = vld [vmem:[%s1 + $0x11c] sm:$0xf]
  %v99 = vld [vmem:[%s2] sm:$0x1]
  %v101 = vlaneseq
  %v102 = vshrl.u32 %v101, 7
  %v103 = vsub.s32 0, %v102
  %v104 = vrot.slane %v99, %v103
  %v118 = vunpack.c.l.b16 %v15
  %v119 = vunpack.c.h.b16 %v15
  %v120 = vunpack.c.l.b16 %v16
  %v121 = vunpack.c.h.b16 %v16
  %v122 = vunpack.c.l.b16 %v17
  %v123 = vunpack.c.l.b16 %v18
  %v124 = vunpack.c.h.b16 %v18
  %v125 = vunpack.c.l.b16 %v19
  %v126 = vunpack.c.h.b16 %v19
  %v127 = vunpack.c.l.b16 %v20
  %v128 = vunpack.c.l.b16 %v21
  %v129 = vunpack.c.h.b16 %v21
  %v130 = vunpack.c.l.b16 %v22
  %v131 = vunpack.c.h.b16 %v22
  %v132 = vunpack.c.l.b16 %v23
  %v133 = vunpack.c.l.b16 %v24
  %v134 = vunpack.c.h.b16 %v24
  %v135 = vunpack.c.l.b16 %v25
  %v136 = vunpack.c.h.b16 %v25
  %v137 = vunpack.c.l.b16 %v26
  %v138 = vpack.c.b16 %v123, %v118
  %v139 = vpack.c.b16 %v124, %v119
  %v140 = vpack.c.b16 %v125, %v120
  %v141 = vpack.c.b16 %v126, %v121
  %v142 = vpack.c.b16 %v127, %v122
  %v143 = vpack.c.b16 %v133, %v128
  %v144 = vpack.c.b16 %v134, %v129
  %v145 = vpack.c.b16 %v135, %v130
  %v146 = vpack.c.b16 %v136, %v131
  %v147 = vpack.c.b16 %v137, %v132
  %v228 = vunpack.c.l.b16 %v27
  %v229 = vunpack.c.l.b16 %v28
  %v230 = vunpack.c.l.b16 %v29
  %v231 = vunpack.c.l.b16 %v30
  %v232 = vunpack.c.l.b16 %v31
  %v233 = vunpack.c.l.b16 %v32
  %v234 = vunpack.c.l.b16 %v33
  %v235 = vunpack.c.l.b16 %v34
  %v236 = vunpack.c.l.b16 %v35
  %v237 = vunpack.c.l.b16 %v36
  %v238 = vunpack.c.l.b16 %v37
  %v239 = vunpack.c.l.b16 %v38
  %v240 = vunpack.c.l.b16 %v39
  %v241 = vunpack.c.l.b16 %v40
  %v242 = vunpack.c.l.b16 %v41
  %v243 = vunpack.c.l.b16 %v42
  %v244 = vunpack.c.l.b16 %v43
  %v245 = vunpack.c.l.b16 %v44
  %v246 = vunpack.c.l.b16 %v45
  %v247 = vunpack.c.l.b16 %v46
  %v248 = vunpack.c.l.b16 %v47
  %v249 = vunpack.c.l.b16 %v48
  %v250 = vunpack.c.l.b16 %v49
  %v251 = vunpack.c.l.b16 %v50
  %v252 = vunpack.c.l.b16 %v51
  %v253 = vunpack.c.l.b16 %v52
  %v254 = vunpack.c.l.b16 %v53
  %v255 = vunpack.c.l.b16 %v54
  %v256 = vunpack.c.l.b16 %v55
  %v257 = vunpack.c.l.b16 %v56
  %v258 = vunpack.c.l.b16 %v57
  %v259 = vunpack.c.l.b16 %v58
  %v260 = vunpack.c.l.b16 %v59
  %v261 = vunpack.c.l.b16 %v60
  %v262 = vunpack.c.l.b16 %v61
  %v263 = vunpack.c.l.b16 %v62
  %v264 = vunpack.c.l.b16 %v63
  %v265 = vunpack.c.l.b16 %v64
  %v266 = vunpack.c.l.b16 %v65
  %v267 = vunpack.c.l.b16 %v66
  %v268 = vunpack.c.l.b16 %v67
  %v269 = vunpack.c.l.b16 %v68
  %v270 = vunpack.c.l.b16 %v69
  %v271 = vunpack.c.l.b16 %v70
  %v272 = vunpack.c.l.b16 %v71
  %v273 = vunpack.c.l.b16 %v72
  %v274 = vunpack.c.l.b16 %v73
  %v275 = vunpack.c.l.b16 %v74
  %v276 = vunpack.c.l.b16 %v75
  %v277 = vunpack.c.l.b16 %v76
  %v278 = vunpack.c.l.b16 %v77
  %v279 = vunpack.c.l.b16 %v78
  %v280 = vunpack.c.l.b16 %v79
  %v281 = vunpack.c.l.b16 %v80
  %v282 = vunpack.c.l.b16 %v81
  %v283 = vunpack.c.l.b16 %v82
  %v284 = vunpack.c.l.b16 %v83
  %v285 = vunpack.c.l.b16 %v84
  %v286 = vunpack.c.l.b16 %v85
  %v287 = vunpack.c.l.b16 %v86
  %v288 = vunpack.c.l.b16 %v87
  %v289 = vunpack.c.l.b16 %v88
  %v290 = vunpack.c.l.b16 %v89
  %v291 = vunpack.c.l.b16 %v90
  %v292 = vunpack.c.l.b16 %v91
  %v293 = vunpack.c.l.b16 %v92
  %v294 = vunpack.c.l.b16 %v93
  %v295 = vunpack.c.l.b16 %v94
  %v296 = vunpack.c.l.b16 %v95
  %v297 = vunpack.c.l.b16 %v96
  %v298 = vunpack.c.l.b16 %v97
  %v299 = vunpack.c.l.b16 %v98
  %v300 = vpack.c.b16 %v229, %v228
  %v301 = vpack.c.b16 %v231, %v230
  %v302 = vpack.c.b16 %v233, %v232
  %v303 = vpack.c.b16 %v235, %v234
  %v304 = vpack.c.b16 %v237, %v236
  %v305 = vpack.c.b16 %v239, %v238
  %v306 = vpack.c.b16 %v241, %v240
  %v307 = vpack.c.b16 %v243, %v242
  %v308 = vpack.c.b16 %v245, %v244
  %v309 = vpack.c.b16 %v247, %v246
  %v310 = vpack.c.b16 %v249, %v248
  %v311 = vpack.c.b16 %v251, %v250
  %v312 = vpack.c.b16 %v253, %v252
  %v313 = vpack.c.b16 %v255, %v254
  %v314 = vpack.c.b16 %v257, %v256
  %v315 = vpack.c.b16 %v259, %v258
  %v316 = vpack.c.b16 %v261, %v260
  %v317 = vpack.c.b16 %v263, %v262
  %v318 = vpack.c.b16 %v265, %v264
  %v319 = vpack.c.b16 %v267, %v266
  %v320 = vpack.c.b16 %v269, %v268
  %v321 = vpack.c.b16 %v271, %v270
  %v322 = vpack.c.b16 %v273, %v272
  %v323 = vpack.c.b16 %v275, %v274
  %v324 = vpack.c.b16 %v277, %v276
  %v325 = vpack.c.b16 %v279, %v278
  %v326 = vpack.c.b16 %v281, %v280
  %v327 = vpack.c.b16 %v283, %v282
  %v328 = vpack.c.b16 %v285, %v284
  %v329 = vpack.c.b16 %v287, %v286
  %v330 = vpack.c.b16 %v289, %v288
  %v331 = vpack.c.b16 %v291, %v290
  %v332 = vpack.c.b16 %v293, %v292
  %v333 = vpack.c.b16 %v295, %v294
  %v334 = vpack.c.b16 %v297, %v296
  %v335 = vpack.c.b16 %v299, %v298
  %vm372 = vcmask 523264
  %v374 = vsel %vm372, %v142, 0
  %v377 = vsel %vm372, %v147, 0
  %379 = vmatprep.subr.bf16.mxu0 0
  %380 = vmatpush1.bf16.msra.mxu0 %v300
  %381 = vmatprep.subr.bf16.mxu0 0
  %382 = vmatpush1.bf16.msra.mxu0 %v301
  %383 = vmatprep.subr.bf16.mxu0 0
  %384 = vmatpush1.bf16.msra.mxu0 %v302
  %385 = vmatprep.subr.bf16.mxu0 0
  %386 = vmatpush1.bf16.msra.mxu0 %v303
  %387 = vmatprep.subr.bf16.mxu0 0
  %388 = vmatpush1.bf16.msra.mxu0 %v304
  %389 = vmatprep.subr.bf16.mxu0 0
  %390 = vmatpush1.bf16.msra.mxu0 %v305
  %391 = vmatprep.subr.bf16.mxu0 0
  %392 = vmatpush1.bf16.msra.mxu0 %v306
  %393 = vmatprep.subr.bf16.mxu0 0
  %394 = vmatpush1.bf16.msra.mxu0 %v307
  %395 = vmatprep.subr.bf16.mxu0 0
  %396 = vmatpush1.bf16.msra.mxu0 %v308
  %397 = vmatprep.subr.bf16.mxu0 0
  %398 = vmatpush1.bf16.msra.mxu0 %v309
  %399 = vmatprep.subr.bf16.mxu0 0
  %400 = vmatpush1.bf16.msra.mxu0 %v310
  %401 = vmatprep.subr.bf16.mxu0 0
  %402 = vmatpush1.bf16.msra.mxu0 %v311
  %403 = vmatprep.subr.bf16.mxu0 0
  %404 = vmatpush1.bf16.msra.mxu0 %v312
  %405 = vmatprep.subr.bf16.mxu0 0
  %406 = vmatpush1.bf16.msra.mxu0 %v313
  %407 = vmatprep.subr.bf16.mxu0 0
  %408 = vmatpush1.bf16.msra.mxu0 %v314
  %409 = vmatprep.subr.bf16.mxu0 0
  %410 = vmatpush1.bf16.msra.mxu0 %v315
  %411 = vmatprep.mubr.bf16.mxu0 %v139
  %412 = vmatmul.mubr.bf16.gmra.mrb[0].mxu0 %v138
  %v413 = vpop.f32.mrb[0].mxu0
  %v414 = vadd.f32 %v104, %v413
  %v415 = vpop.f32.mrb[0].mxu0
  %v416 = vpop.f32.mrb[0].mxu0
  %v417 = vadd.f32 %v104, %v416
  %v418 = vpop.f32.mrb[0].mxu0
  %419 = vmatprep.mubr.bf16.mxu0 %v144
  %420 = vmatmul.mubr.bf16.gmra.mrb[0].mxu0 %v143
  %v421 = vpop.f32.mrb[0].mxu0
  %v422 = vadd.f32 %v104, %v421
  %v423 = vpop.f32.mrb[0].mxu0
  %v424 = vpop.f32.mrb[0].mxu0
  %v425 = vadd.f32 %v104, %v424
  %v426 = vpop.f32.mrb[0].mxu0
  %427 = vdwg.mxu0
  %428 = vmatprep.subr.bf16.mxu0 0
  %429 = vmatpush1.bf16.msra.mxu0 %v316
  %430 = vmatprep.subr.bf16.mxu0 0
  %431 = vmatpush1.bf16.msra.mxu0 %v317
  %432 = vmatprep.subr.bf16.mxu0 0
  %433 = vmatpush1.bf16.msra.mxu0 %v318
  %434 = vmatprep.subr.bf16.mxu0 0
  %435 = vmatpush1.bf16.msra.mxu0 %v319
  %436 = vmatprep.subr.bf16.mxu0 0
  %437 = vmatpush1.bf16.msra.mxu0 %v320
  %438 = vmatprep.subr.bf16.mxu0 0
  %439 = vmatpush1.bf16.msra.mxu0 %v321
  %440 = vmatprep.subr.bf16.mxu0 0
  %441 = vmatpush1.bf16.msra.mxu0 %v322
  %442 = vmatprep.subr.bf16.mxu0 0
  %443 = vmatpush1.bf16.msra.mxu0 %v323
  %444 = vmatprep.subr.bf16.mxu0 0
  %445 = vmatpush1.bf16.msra.mxu0 %v324
  %446 = vmatprep.subr.bf16.mxu0 0
  %447 = vmatpush1.bf16.msra.mxu0 %v325
  %448 = vmatprep.subr.bf16.mxu0 0
  %449 = vmatpush1.bf16.msra.mxu0 %v326
  %450 = vmatprep.subr.bf16.mxu0 0
  %451 = vmatpush1.bf16.msra.mxu0 %v327
  %452 = vmatprep.subr.bf16.mxu0 0
  %453 = vmatpush1.bf16.msra.mxu0 %v328
  %454 = vmatprep.subr.bf16.mxu0 0
  %455 = vmatpush1.bf16.msra.mxu0 %v329
  %456 = vmatprep.subr.bf16.mxu0 0
  %457 = vmatpush1.bf16.msra.mxu0 %v330
  %458 = vmatprep.subr.bf16.mxu0 0
  %459 = vmatpush1.bf16.msra.mxu0 %v331
  %460 = vmatprep.mubr.bf16.mxu0 %v141
  %461 = vmatmul.mubr.bf16.gmra.mrb[0].mxu0 %v140
  %v462 = vpop.f32.mrb[0].mxu0
  %v463 = vadd.f32 %v414, %v462
  %v464 = vpop.f32.mrb[0].mxu0
  %v465 = vpop.f32.mrb[0].mxu0
  %v466 = vadd.f32 %v417, %v465
  %v467 = vpop.f32.mrb[0].mxu0
  %468 = vmatprep.mubr.bf16.mxu0 %v146
  %469 = vmatmul.mubr.bf16.gmra.mrb[0].mxu0 %v145
  %v470 = vpop.f32.mrb[0].mxu0
  %v471 = vadd.f32 %v422, %v470
  %v472 = vpop.f32.mrb[0].mxu0
  %v473 = vpop.f32.mrb[0].mxu0
  %v474 = vadd.f32 %v425, %v473
  %v475 = vpop.f32.mrb[0].mxu0
  %476 = vdwg.mxu0
  %477 = vmatprep.subr.bf16.mxu0 0
  %478 = vmatpush1.bf16.msra.mxu0 %v332
  %479 = vmatprep.subr.bf16.mxu0 0
  %480 = vmatpush1.bf16.msra.mxu0 %v333
  %481 = vmatprep.subr.bf16.mxu0 0
  %482 = vmatpush1.bf16.msra.mxu0 %v334
  %483 = vmatprep.subr.bf16.mxu0 0
  %484 = vmatpush1.bf16.msra.mxu0 %v335
  %485 = vmatprep.subr.bf16.mxu0 0
  %486 = vmatpush1.bf16.msra.mxu0 0
  %487 = vmatprep.subr.bf16.mxu0 0
  %488 = vmatpush1.bf16.msra.mxu0 0
  %489 = vmatprep.subr.bf16.mxu0 0
  %490 = vmatpush1.bf16.msra.mxu0 0
  %491 = vmatprep.subr.bf16.mxu0 0
  %492 = vmatpush1.bf16.msra.mxu0 0
  %493 = vmatprep.subr.bf16.mxu0 0
  %494 = vmatpush1.bf16.msra.mxu0 0
  %495 = vmatprep.subr.bf16.mxu0 0
  %496 = vmatpush1.bf16.msra.mxu0 0
  %497 = vmatprep.subr.bf16.mxu0 0
  %498 = vmatpush1.bf16.msra.mxu0 0
  %499 = vmatprep.subr.bf16.mxu0 0
  %500 = vmatpush1.bf16.msra.mxu0 0
  %501 = vmatprep.subr.bf16.mxu0 0
  %502 = vmatpush1.bf16.msra.mxu0 0
  %503 = vmatprep.subr.bf16.mxu0 0
  %504 = vmatpush1.bf16.msra.mxu0 0
  %505 = vmatprep.subr.bf16.mxu0 0
  %506 = vmatpush1.bf16.msra.mxu0 0
  %507 = vmatprep.subr.bf16.mxu0 0
  %508 = vmatpush1.bf16.msra.mxu0 0
  %509 = vmatprep.mubr.bf16.mxu0 0
  %510 = vmatmul.mubr.bf16.gmra.mrb[0].mxu0 %v374
  %v511 = vpop.f32.mrb[0].mxu0
  %v512 = vadd.f32 %v463, %v511
  %v513 = vpop.f32.mrb[0].mxu0
  %v514 = vpop.f32.mrb[0].mxu0
  %v515 = vadd.f32 %v466, %v514
  %v516 = vpop.f32.mrb[0].mxu0
  %517 = vmatprep.mubr.bf16.mxu0 0
  %518 = vmatmul.mubr.bf16.gmra.mrb[0].mxu0 %v377
  %v519 = vpop.f32.mrb[0].mxu0
  %v520 = vadd.f32 %v471, %v519
  %v521 = vpop.f32.mrb[0].mxu0
  %v522 = vpop.f32.mrb[0].mxu0
  %v523 = vadd.f32 %v474, %v522
  %v524 = vpop.f32.mrb[0].mxu0
  %525 = vdwg.mxu0
  %v526 = vmax.f32 %v512, 0.0
  %v527 = vmax.f32 %v515, 0.0
  %v528 = vmax.f32 %v520, 0.0
  %v529 = vmax.f32 %v523, 0.0
  %v530 = vpack.c.bf16 %v527, %v526
  %v531 = vpack.c.bf16 %v529, %v528
  %v534 = vunpack.c.l.b16 %v530
  %v535 = vunpack.c.h.b16 %v530
  %v536 = vunpack.c.l.b16 %v531
  %v537 = vunpack.c.h.b16 %v531
  %v538 = vpack.c.b16 %v534, %v534
  %v539 = vpack.c.b16 %v535, %v535
  %v540 = vpack.c.b16 %v536, %v536
  %v541 = vpack.c.b16 %v537, %v537
  %vm546 = vcmask 519168
  %547 = vst.msk [vmem:[%s3] sm:$0xf] %vm546, %v538
  %548 = vst.msk [vmem:[%s3 + $0x4] sm:$0xf] %vm546, %v539
  %549 = vst.msk [vmem:[%s3 + $0x8] sm:$0xf] %vm546, %v540
  %550 = vst.msk [vmem:[%s3 + $0xc] sm:$0xf] %vm546, %v541
  // Predicated region
  $region14: #{fcn_forward.16} parent=0 // pred_check
    _
  $region15: #{fcn_forward.16} parent=0 // pred_check_branch
    %552 = sbr.rel (0) target = $region17
  $region16: #{fcn_forward.16} parent=0 // pred_region
    _
  $region17: #{fcn_forward.16} parent=0 // pred_fallthru
    _
  // Predicated region
  $region18: #{fcn_forward.16} parent=0 // pred_check
    _
  $region19: #{fcn_forward.16} parent=0 // pred_check_branch
    %554 = sbr.rel (0) target = $region21
  $region20: #{fcn_forward.16} parent=0 // pred_region
    _
  $region21: #{fcn_forward.16} parent=0 // pred_fallthru
    _

// kernel: fcn_forward.17
$region0: #{fcn_forward.17}
  #allocation0 [shape = 'u32[]', space=smem, size = 0x4, offset = 0x4, fixed_abs, tag = 'smem constant byte address 0x4 - core index']
  #allocation1 [shape = 'u32[144,128]{1,0:T(1,128)}', space=vmem, size = 0x12000, scoped, tag = 'internal scratch']
  %s0 = inlined_call_operand.vmem [shape: bf16[4,2,2,64], index: 0, kind: input, shape index: {}]
  %s1 = inlined_call_operand.vmem [shape: bf16[4,2,2,64], index: 1, kind: input, shape index: {}]
  %s2 = inlined_call_operand.vmem [shape: bf16[4,2,64], index: 2, kind: output, shape index: {}]
  %s3 = sld [smem:[#allocation0]]
  $region18: #{fcn_forward.17} parent=0
    _
  %s5 = ssub.s32 1, %s3
  %s6 = scalar_select 0, %s5, %s3
  // Predicated region
  $region2: #{fcn_forward.17} parent=0 // pred_check
    _
  $region3: #{fcn_forward.17} parent=0 // pred_check_branch
    %8 = sbr.rel (0) target = $region5
  $region4: #{fcn_forward.17} parent=0 // pred_region
    _
  $region5: #{fcn_forward.17} parent=0 // pred_fallthru
    _
  // Predicated region
  $region6: #{fcn_forward.17} parent=0 // pred_check
    _
  $region7: #{fcn_forward.17} parent=0 // pred_check_branch
    %10 = sbr.rel (0) target = $region9
  $region8: #{fcn_forward.17} parent=0 // pred_region
    _
  $region9: #{fcn_forward.17} parent=0 // pred_fallthru
    _
  %v11 = vld [vmem:[%s0] sm:$0x1]
  %v12 = vld [vmem:[%s0 + $0x1] sm:$0x1]
  %v13 = vld [vmem:[%s0 + $0x2] sm:$0x1]
  %v14 = vld [vmem:[%s0 + $0x3] sm:$0x1]
  %v15 = vld [vmem:[%s0 + $0x4] sm:$0x1]
  %v16 = vld [vmem:[%s0 + $0x5] sm:$0x1]
  %v17 = vld [vmem:[%s0 + $0x6] sm:$0x1]
  %v18 = vld [vmem:[%s0 + $0x7] sm:$0x1]
  %v19 = vld [vmem:[%s1] sm:$0x1]
  %v20 = vld [vmem:[%s1 + $0x1] sm:$0x1]
  %v21 = vld [vmem:[%s1 + $0x2] sm:$0x1]
  %v22 = vld [vmem:[%s1 + $0x3] sm:$0x1]
  %v23 = vld [vmem:[%s1 + $0x4] sm:$0x1]
  %v24 = vld [vmem:[%s1 + $0x5] sm:$0x1]
  %v25 = vld [vmem:[%s1 + $0x6] sm:$0x1]
  %v26 = vld [vmem:[%s1 + $0x7] sm:$0x1]
  %v27 = vmax.bf16 %v11, %v12
  %v28 = vmax.bf16 %v13, %v14
  %v29 = vmax.bf16 %v15, %v16
  %v30 = vmax.bf16 %v17, %v18
  %v31 = vmax.bf16 %v19, %v20
  %v32 = vmax.bf16 %v21, %v22
  %v33 = vmax.bf16 %v23, %v24
  %v34 = vmax.bf16 %v25, %v26
  %v35 = vmax.bf16 %v27, %v31
  %v36 = vmax.bf16 %v28, %v32
  %v37 = vmax.bf16 %v29, %v33
  %v38 = vmax.bf16 %v30, %v34
  %vm39 = vcmask 516096
  %40 = vst.msk [vmem:[%s2] sm:$0x1] %vm39, %v35
  %41 = vst.msk [vmem:[%s2 + $0x1] sm:$0x1] %vm39, %v36
  %42 = vst.msk [vmem:[%s2 + $0x2] sm:$0x1] %vm39, %v37
  %43 = vst.msk [vmem:[%s2 + $0x3] sm:$0x1] %vm39, %v38
  // Predicated region
  $region10: #{fcn_forward.17} parent=0 // pred_check
    _
  $region11: #{fcn_forward.17} parent=0 // pred_check_branch
    %45 = sbr.rel (0) target = $region13
  $region12: #{fcn_forward.17} parent=0 // pred_region
    _
  $region13: #{fcn_forward.17} parent=0 // pred_fallthru
    _
  // Predicated region
  $region14: #{fcn_forward.17} parent=0 // pred_check
    _
  $region15: #{fcn_forward.17} parent=0 // pred_check_branch
    %47 = sbr.rel (0) target = $region17
  $region16: #{fcn_forward.17} parent=0 // pred_region
    _
  $region17: #{fcn_forward.17} parent=0 // pred_fallthru
    _

// kernel: fcn_forward.20
$region0: #{fcn_forward.20}
  #allocation0 [shape = 'u32[]', space=smem, size = 0x4, offset = 0x4, fixed_abs, tag = 'smem constant byte address 0x4 - core index']
  #allocation1 [shape = 'u32[144,128]{1,0:T(1,128)}', space=vmem, size = 0x12000, scoped, tag = 'internal scratch']
  %s0 = inlined_call_operand.vmem [shape: bf16[2,2,1,96], index: 0, kind: input, shape index: {}]
  %s1 = inlined_call_operand.vmem [shape: bf16[2,2,1,96], index: 1, kind: input, shape index: {}]
  %s2 = inlined_call_operand.vmem [shape: bf16[2,1,96], index: 2, kind: output, shape index: {}]
  %s3 = sld [smem:[#allocation0]]
  $region18: #{fcn_forward.20} parent=0
    _
  %s5 = ssub.s32 1, %s3
  %s6 = scalar_select 0, %s5, %s3
  // Predicated region
  $region2: #{fcn_forward.20} parent=0 // pred_check
    _
  $region3: #{fcn_forward.20} parent=0 // pred_check_branch
    %8 = sbr.rel (0) target = $region5
  $region4: #{fcn_forward.20} parent=0 // pred_region
    _
  $region5: #{fcn_forward.20} parent=0 // pred_fallthru
    _
  // Predicated region
  $region6: #{fcn_forward.20} parent=0 // pred_check
    _
  $region7: #{fcn_forward.20} parent=0 // pred_check_branch
    %10 = sbr.rel (0) target = $region9
  $region8: #{fcn_forward.20} parent=0 // pred_region
    _
  $region9: #{fcn_forward.20} parent=0 // pred_fallthru
    _
  %v11 = vld [vmem:[%s0] sm:$0x1]
  %v12 = vld [vmem:[%s0 + $0x1] sm:$0x1]
  %v13 = vld [vmem:[%s0 + $0x2] sm:$0x1]
  %v14 = vld [vmem:[%s0 + $0x3] sm:$0x1]
  %v15 = vld [vmem:[%s1] sm:$0x1]
  %v16 = vld [vmem:[%s1 + $0x1] sm:$0x1]
  %v17 = vld [vmem:[%s1 + $0x2] sm:$0x1]
  %v18 = vld [vmem:[%s1 + $0x3] sm:$0x1]
  %v19 = vmax.bf16 %v11, %v12
  %v20 = vmax.bf16 %v13, %v14
  %v21 = vmax.bf16 %v15, %v16
  %v22 = vmax.bf16 %v17, %v18
  %v23 = vmax.bf16 %v19, %v21
  %v24 = vmax.bf16 %v20, %v22
  %vm25 = vcmask 778240
  %vm26 = vsmask.f32 256
  %vm27 = vmand %vm25, %vm26
  %v28 = vld [vmem:[%s2] sm:$0x1]
  %v29 = vsel %vm27, %v23, %v28
  %30 = vst [vmem:[%s2] sm:$0x1] %v29
  %v31 = vld [vmem:[%s2 + $0x1] sm:$0x1]
  %v32 = vsel %vm27, %v24, %v31
  %33 = vst [vmem:[%s2 + $0x1] sm:$0x1] %v32
  // Predicated region
  $region10: #{fcn_forward.20} parent=0 // pred_check
    _
  $region11: #{fcn_forward.20} parent=0 // pred_check_branch
    %35 = sbr.rel (0) target = $region13
  $region12: #{fcn_forward.20} parent=0 // pred_region
    _
  $region13: #{fcn_forward.20} parent=0 // pred_fallthru
    _
  // Predicated region
  $region14: #{fcn_forward.20} parent=0 // pred_check
    _
  $region15: #{fcn_forward.20} parent=0 // pred_check_branch
    %37 = sbr.rel (0) target = $region17
  $region16: #{fcn_forward.20} parent=0 // pred_region
    _
  $region17: #{fcn_forward.20} parent=0 // pred_fallthru
    _

// kernel: fcn_forward.18
$region0: #{fcn_forward.18}
  #allocation0 [shape = 'u32[]', space=smem, size = 0x4, offset = 0x4, fixed_abs, tag = 'smem constant byte address 0x4 - core index']
  #allocation1 [shape = 'u32[144,128]{1,0:T(1,128)}', space=vmem, size = 0x12000, scoped, tag = 'internal scratch']
  %s0 = inlined_call_operand.vmem [shape: bf16[8,576], index: 0, kind: input, shape index: {}]
  %s1 = inlined_call_operand.vmem [shape: bf16[576,96], index: 1, kind: input, shape index: {}]
  %s2 = inlined_call_operand.vmem [shape: f32[1,96], index: 2, kind: input, shape index: {}]
  %s3 = inlined_call_operand.vmem [shape: bf16[8,96], index: 3, kind: output, shape index: {}]
  %s4 = sld [smem:[#allocation0]]
  $region22: #{fcn_forward.18} parent=0
    _
  %s6 = ssub.s32 1, %s4
  %s7 = scalar_select 0, %s6, %s4
  // Predicated region
  $region2: #{fcn_forward.18} parent=0 // pred_check
    _
  $region3: #{fcn_forward.18} parent=0 // pred_check_branch
    %9 = sbr.rel (0) target = $region5
  $region4: #{fcn_forward.18} parent=0 // pred_region
    _
  $region5: #{fcn_forward.18} parent=0 // pred_fallthru
    _
  // Predicated region
  $region6: #{fcn_forward.18} parent=0 // pred_check
    _
  $region7: #{fcn_forward.18} parent=0 // pred_check_branch
    %11 = sbr.rel (0) target = $region9
  $region8: #{fcn_forward.18} parent=0 // pred_region
    _
  $region9: #{fcn_forward.18} parent=0 // pred_fallthru
    _
  // Predicated region
  $region10: #{fcn_forward.18} parent=0 // pred_check
    _
  $region11: #{fcn_forward.18} parent=0 // pred_check_branch
    %13 = sbr.rel (0) target = $region13
  $region12: #{fcn_forward.18} parent=0 // pred_region
    _
  $region13: #{fcn_forward.18} parent=0 // pred_fallthru
    _
  %v15 = vld [vmem:[%s0] sm:$0xff]
  %v16 = vld [vmem:[%s0 + $0x8] sm:$0xff]
  %v17 = vld [vmem:[%s0 + $0x10] sm:$0xf]
  %v18 = vld [vmem:[%s1] sm:$0xf]
  %v19 = vld [vmem:[%s1 + $0x4] sm:$0xf]
  %v20 = vld [vmem:[%s1 + $0x8] sm:$0xf]
  %v21 = vld [vmem:[%s1 + $0xc] sm:$0xf]
  %v22 = vld [vmem:[%s1 + $0x10] sm:$0xf]
  %v23 = vld [vmem:[%s1 + $0x14] sm:$0xf]
  %v24 = vld [vmem:[%s1 + $0x18] sm:$0xf]
  %v25 = vld [vmem:[%s1 + $0x1c] sm:$0xf]
  %v26 = vld [vmem:[%s1 + $0x20] sm:$0xf]
  %v27 = vld [vmem:[%s1 + $0x24] sm:$0xf]
  %v28 = vld [vmem:[%s1 + $0x28] sm:$0xf]
  %v29 = vld [vmem:[%s1 + $0x2c] sm:$0xf]
  %v30 = vld [vmem:[%s1 + $0x30] sm:$0xf]
  %v31 = vld [vmem:[%s1 + $0x34] sm:$0xf]
  %v32 = vld [vmem:[%s1 + $0x38] sm:$0xf]
  %v33 = vld [vmem:[%s1 + $0x3c] sm:$0xf]
  %v34 = vld [vmem:[%s1 + $0x40] sm:$0xf]
  %v35 = vld [vmem:[%s1 + $0x44] sm:$0xf]
  %v36 = vld [vmem:[%s1 + $0x48] sm:$0xf]
  %v37 = vld [vmem:[%s1 + $0x4c] sm:$0xf]
  %v38 = vld [vmem:[%s1 + $0x50] sm:$0xf]
  %v39 = vld [vmem:[%s1 + $0x54] sm:$0xf]
  %v40 = vld [vmem:[%s1 + $0x58] sm:$0xf]
  %v41 = vld [vmem:[%s1 + $0x5c] sm:$0xf]
  %v42 = vld [vmem:[%s1 + $0x60] sm:$0xf]
  %v43 = vld [vmem:[%s1 + $0x64] sm:$0xf]
  %v44 = vld [vmem:[%s1 + $0x68] sm:$0xf]
  %v45 = vld [vmem:[%s1 + $0x6c] sm:$0xf]
  %v46 = vld [vmem:[%s1 + $0x70] sm:$0xf]
  %v47 = vld [vmem:[%s1 + $0x74] sm:$0xf]
  %v48 = vld [vmem:[%s1 + $0x78] sm:$0xf]
  %v49 = vld [vmem:[%s1 + $0x7c] sm:$0xf]
  %v50 = vld [vmem:[%s1 + $0x80] sm:$0xf]
  %v51 = vld [vmem:[%s1 + $0x84] sm:$0xf]
  %v52 = vld [vmem:[%s1 + $0x88] sm:$0xf]
  %v53 = vld [vmem:[%s1 + $0x8c] sm:$0xf]
  %v54 = vld [vmem:[%s1 + $0x90] sm:$0xf]
  %v55 = vld [vmem:[%s1 + $0x94] sm:$0xf]
  %v56 = vld [vmem:[%s1 + $0x98] sm:$0xf]
  %v57 = vld [vmem:[%s1 + $0x9c] sm:$0xf]
  %v58 = vld [vmem:[%s1 + $0xa0] sm:$0xf]
  %v59 = vld [vmem:[%s1 + $0xa4] sm:$0xf]
  %v60 = vld [vmem:[%s1 + $0xa8] sm:$0xf]
  %v61 = vld [vmem:[%s1 + $0xac] sm:$0xf]
  %v62 = vld [vmem:[%s1 + $0xb0] sm:$0xf]
  %v63 = vld [vmem:[%s1 + $0xb4] sm:$0xf]
  %v64 = vld [vmem:[%s1 + $0xb8] sm:$0xf]
  %v65 = vld [vmem:[%s1 + $0xbc] sm:$0xf]
  %v66 = vld [vmem:[%s1 + $0xc0] sm:$0xf]
  %v67 = vld [vmem:[%s1 + $0xc4] sm:$0xf]
  %v68 = vld [vmem:[%s1 + $0xc8] sm:$0xf]
  %v69 = vld [vmem:[%s1 + $0xcc] sm:$0xf]
  %v70 = vld [vmem:[%s1 + $0xd0] sm:$0xf]
  %v71 = vld [vmem:[%s1 + $0xd4] sm:$0xf]
  %v72 = vld [vmem:[%s1 + $0xd8] sm:$0xf]
  %v73 = vld [vmem:[%s1 + $0xdc] sm:$0xf]
  %v74 = vld [vmem:[%s1 + $0xe0] sm:$0xf]
  %v75 = vld [vmem:[%s1 + $0xe4] sm:$0xf]
  %v76 = vld [vmem:[%s1 + $0xe8] sm:$0xf]
  %v77 = vld [vmem:[%s1 + $0xec] sm:$0xf]
  %v78 = vld [vmem:[%s1 + $0xf0] sm:$0xf]
  %v79 = vld [vmem:[%s1 + $0xf4] sm:$0xf]
  %v80 = vld [vmem:[%s1 + $0xf8] sm:$0xf]
  %v81 = vld [vmem:[%s1 + $0xfc] sm:$0xf]
  %v82 = vld [vmem:[%s1 + $0x100] sm:$0xf]
  %v83 = vld [vmem:[%s1 + $0x104] sm:$0xf]
  %v84 = vld [vmem:[%s1 + $0x108] sm:$0xf]
  %v85 = vld [vmem:[%s1 + $0x10c] sm:$0xf]
  %v86 = vld [vmem:[%s1 + $0x110] sm:$0xf]
  %v87 = vld [vmem:[%s1 + $0x114] sm:$0xf]
  %v88 = vld [vmem:[%s1 + $0x118] sm:$0xf]
  %v89 = vld [vmem:[%s1 + $0x11c] sm:$0xf]
  %v90 = vld [vmem:[%s2] sm:$0x1]
  %v92 = vlaneseq
  %v93 = vshrl.u32 %v92, 7
  %v94 = vsub.s32 0, %v93
  %v95 = vrot.slane %v90, %v94
  %v100 = vunpack.c.l.b16 %v15
  %v101 = vunpack.c.h.b16 %v15
  %v102 = vunpack.c.l.b16 %v16
  %v103 = vunpack.c.h.b16 %v16
  %v104 = vunpack.c.l.b16 %v17
  %v105 = vpack.c.b16 %v100, %v100
  %v106 = vpack.c.b16 %v101, %v101
  %v107 = vpack.c.b16 %v102, %v102
  %v108 = vpack.c.b16 %v103, %v103
  %v109 = vpack.c.b16 %v104, %v104
  %v186 = vunpack.c.l.b16 %v18
  %v187 = vunpack.c.l.b16 %v19
  %v188 = vunpack.c.l.b16 %v20
  %v189 = vunpack.c.l.b16 %v21
  %v190 = vunpack.c.l.b16 %v22
  %v191 = vunpack.c.l.b16 %v23
  %v192 = vunpack.c.l.b16 %v24
  %v193 = vunpack.c.l.b16 %v25
  %v194 = vunpack.c.l.b16 %v26
  %v195 = vunpack.c.l.b16 %v27
  %v196 = vunpack.c.l.b16 %v28
  %v197 = vunpack.c.l.b16 %v29
  %v198 = vunpack.c.l.b16 %v30
  %v199 = vunpack.c.l.b16 %v31
  %v200 = vunpack.c.l.b16 %v32
  %v201 = vunpack.c.l.b16 %v33
  %v202 = vunpack.c.l.b16 %v34
  %v203 = vunpack.c.l.b16 %v35
  %v204 = vunpack.c.l.b16 %v36
  %v205 = vunpack.c.l.b16 %v37
  %v206 = vunpack.c.l.b16 %v38
  %v207 = vunpack.c.l.b16 %v39
  %v208 = vunpack.c.l.b16 %v40
  %v209 = vunpack.c.l.b16 %v41
  %v210 = vunpack.c.l.b16 %v42
  %v211 = vunpack.c.l.b16 %v43
  %v212 = vunpack.c.l.b16 %v44
  %v213 = vunpack.c.l.b16 %v45
  %v214 = vunpack.c.l.b16 %v46
  %v215 = vunpack.c.l.b16 %v47
  %v216 = vunpack.c.l.b16 %v48
  %v217 = vunpack.c.l.b16 %v49
  %v218 = vunpack.c.l.b16 %v50
  %v219 = vunpack.c.l.b16 %v51
  %v220 = vunpack.c.l.b16 %v52
  %v221 = vunpack.c.l.b16 %v53
  %v222 = vunpack.c.l.b16 %v54
  %v223 = vunpack.c.l.b16 %v55
  %v224 = vunpack.c.l.b16 %v56
  %v225 = vunpack.c.l.b16 %v57
  %v226 = vunpack.c.l.b16 %v58
  %v227 = vunpack.c.l.b16 %v59
  %v228 = vunpack.c.l.b16 %v60
  %v229 = vunpack.c.l.b16 %v61
  %v230 = vunpack.c.l.b16 %v62
  %v231 = vunpack.c.l.b16 %v63
  %v232 = vunpack.c.l.b16 %v64
  %v233 = vunpack.c.l.b16 %v65
  %v234 = vunpack.c.l.b16 %v66
  %v235 = vunpack.c.l.b16 %v67
  %v236 = vunpack.c.l.b16 %v68
  %v237 = vunpack.c.l.b16 %v69
  %v238 = vunpack.c.l.b16 %v70
  %v239 = vunpack.c.l.b16 %v71
  %v240 = vunpack.c.l.b16 %v72
  %v241 = vunpack.c.l.b16 %v73
  %v242 = vunpack.c.l.b16 %v74
  %v243 = vunpack.c.l.b16 %v75
  %v244 = vunpack.c.l.b16 %v76
  %v245 = vunpack.c.l.b16 %v77
  %v246 = vunpack.c.l.b16 %v78
  %v247 = vunpack.c.l.b16 %v79
  %v248 = vunpack.c.l.b16 %v80
  %v249 = vunpack.c.l.b16 %v81
  %v250 = vunpack.c.l.b16 %v82
  %v251 = vunpack.c.l.b16 %v83
  %v252 = vunpack.c.l.b16 %v84
  %v253 = vunpack.c.l.b16 %v85
  %v254 = vunpack.c.l.b16 %v86
  %v255 = vunpack.c.l.b16 %v87
  %v256 = vunpack.c.l.b16 %v88
  %v257 = vunpack.c.l.b16 %v89
  %v258 = vpack.c.b16 %v187, %v186
  %v259 = vpack.c.b16 %v189, %v188
  %v260 = vpack.c.b16 %v191, %v190
  %v261 = vpack.c.b16 %v193, %v192
  %v262 = vpack.c.b16 %v195, %v194
  %v263 = vpack.c.b16 %v197, %v196
  %v264 = vpack.c.b16 %v199, %v198
  %v265 = vpack.c.b16 %v201, %v200
  %v266 = vpack.c.b16 %v203, %v202
  %v267 = vpack.c.b16 %v205, %v204
  %v268 = vpack.c.b16 %v207, %v206
  %v269 = vpack.c.b16 %v209, %v208
  %v270 = vpack.c.b16 %v211, %v210
  %v271 = vpack.c.b16 %v213, %v212
  %v272 = vpack.c.b16 %v215, %v214
  %v273 = vpack.c.b16 %v217, %v216
  %v274 = vpack.c.b16 %v219, %v218
  %v275 = vpack.c.b16 %v221, %v220
  %v276 = vpack.c.b16 %v223, %v222
  %v277 = vpack.c.b16 %v225, %v224
  %v278 = vpack.c.b16 %v227, %v226
  %v279 = vpack.c.b16 %v229, %v228
  %v280 = vpack.c.b16 %v231, %v230
  %v281 = vpack.c.b16 %v233, %v232
  %v282 = vpack.c.b16 %v235, %v234
  %v283 = vpack.c.b16 %v237, %v236
  %v284 = vpack.c.b16 %v239, %v238
  %v285 = vpack.c.b16 %v241, %v240
  %v286 = vpack.c.b16 %v243, %v242
  %v287 = vpack.c.b16 %v245, %v244
  %v288 = vpack.c.b16 %v247, %v246
  %v289 = vpack.c.b16 %v249, %v248
  %v290 = vpack.c.b16 %v251, %v250
  %v291 = vpack.c.b16 %v253, %v252
  %v292 = vpack.c.b16 %v255, %v254
  %v293 = vpack.c.b16 %v257, %v256
  %vm330 = vcmask 523264
  %v332 = vsel %vm330, %v109, 0
  %334 = vmatprep.subr.bf16.mxu0 0
  %335 = vmatpush1.bf16.msra.mxu0 %v258
  %336 = vmatprep.subr.bf16.mxu0 0
  %337 = vmatpush1.bf16.msra.mxu0 %v259
  %338 = vmatprep.subr.bf16.mxu0 0
  %339 = vmatpush1.bf16.msra.mxu0 %v260
  %340 = vmatprep.subr.bf16.mxu0 0
  %341 = vmatpush1.bf16.msra.mxu0 %v261
  %342 = vmatprep.subr.bf16.mxu0 0
  %343 = vmatpush1.bf16.msra.mxu0 %v262
  %344 = vmatprep.subr.bf16.mxu0 0
  %345 = vmatpush1.bf16.msra.mxu0 %v263
  %346 = vmatprep.subr.bf16.mxu0 0
  %347 = vmatpush1.bf16.msra.mxu0 %v264
  %348 = vmatprep.subr.bf16.mxu0 0
  %349 = vmatpush1.bf16.msra.mxu0 %v265
  %350 = vmatprep.subr.bf16.mxu0 0
  %351 = vmatpush1.bf16.msra.mxu0 %v266
  %352 = vmatprep.subr.bf16.mxu0 0
  %353 = vmatpush1.bf16.msra.mxu0 %v267
  %354 = vmatprep.subr.bf16.mxu0 0
  %355 = vmatpush1.bf16.msra.mxu0 %v268
  %356 = vmatprep.subr.bf16.mxu0 0
  %357 = vmatpush1.bf16.msra.mxu0 %v269
  %358 = vmatprep.subr.bf16.mxu0 0
  %359 = vmatpush1.bf16.msra.mxu0 %v270
  %360 = vmatprep.subr.bf16.mxu0 0
  %361 = vmatpush1.bf16.msra.mxu0 %v271
  %362 = vmatprep.subr.bf16.mxu0 0
  %363 = vmatpush1.bf16.msra.mxu0 %v272
  %364 = vmatprep.subr.bf16.mxu0 0
  %365 = vmatpush1.bf16.msra.mxu0 %v273
  %366 = vmatprep.mubr.bf16.mxu0 %v106
  %367 = vmatmul.mubr.bf16.gmra.mrb[0].mxu0 %v105
  %v368 = vpop.f32.mrb[0].mxu0
  %v369 = vadd.f32 %v95, %v368
  %v370 = vpop.f32.mrb[0].mxu0
  %v371 = vpop.f32.mrb[0].mxu0
  %v372 = vpop.f32.mrb[0].mxu0
  %373 = vdwg.mxu0
  %374 = vmatprep.subr.bf16.mxu0 0
  %375 = vmatpush1.bf16.msra.mxu0 %v274
  %376 = vmatprep.subr.bf16.mxu0 0
  %377 = vmatpush1.bf16.msra.mxu0 %v275
  %378 = vmatprep.subr.bf16.mxu0 0
  %379 = vmatpush1.bf16.msra.mxu0 %v276
  %380 = vmatprep.subr.bf16.mxu0 0
  %381 = vmatpush1.bf16.msra.mxu0 %v277
  %382 = vmatprep.subr.bf16.mxu0 0
  %383 = vmatpush1.bf16.msra.mxu0 %v278
  %384 = vmatprep.subr.bf16.mxu0 0
  %385 = vmatpush1.bf16.msra.mxu0 %v279
  %386 = vmatprep.subr.bf16.mxu0 0
  %387 = vmatpush1.bf16.msra.mxu0 %v280
  %388 = vmatprep.subr.bf16.mxu0 0
  %389 = vmatpush1.bf16.msra.mxu0 %v281
  %390 = vmatprep.subr.bf16.mxu0 0
  %391 = vmatpush1.bf16.msra.mxu0 %v282
  %392 = vmatprep.subr.bf16.mxu0 0
  %393 = vmatpush1.bf16.msra.mxu0 %v283
  %394 = vmatprep.subr.bf16.mxu0 0
  %395 = vmatpush1.bf16.msra.mxu0 %v284
  %396 = vmatprep.subr.bf16.mxu0 0
  %397 = vmatpush1.bf16.msra.mxu0 %v285
  %398 = vmatprep.subr.bf16.mxu0 0
  %399 = vmatpush1.bf16.msra.mxu0 %v286
  %400 = vmatprep.subr.bf16.mxu0 0
  %401 = vmatpush1.bf16.msra.mxu0 %v287
  %402 = vmatprep.subr.bf16.mxu0 0
  %403 = vmatpush1.bf16.msra.mxu0 %v288
  %404 = vmatprep.subr.bf16.mxu0 0
  %405 = vmatpush1.bf16.msra.mxu0 %v289
  %406 = vmatprep.mubr.bf16.mxu0 %v108
  %407 = vmatmul.mubr.bf16.gmra.mrb[0].mxu0 %v107
  %v408 = vpop.f32.mrb[0].mxu0
  %v409 = vadd.f32 %v369, %v408
  %v410 = vpop.f32.mrb[0].mxu0
  %v411 = vpop.f32.mrb[0].mxu0
  %v412 = vpop.f32.mrb[0].mxu0
  %413 = vdwg.mxu0
  %414 = vmatprep.subr.bf16.mxu0 0
  %415 = vmatpush1.bf16.msra.mxu0 %v290
  %416 = vmatprep.subr.bf16.mxu0 0
  %417 = vmatpush1.bf16.msra.mxu0 %v291
  %418 = vmatprep.subr.bf16.mxu0 0
  %419 = vmatpush1.bf16.msra.mxu0 %v292
  %420 = vmatprep.subr.bf16.mxu0 0
  %421 = vmatpush1.bf16.msra.mxu0 %v293
  %422 = vmatprep.subr.bf16.mxu0 0
  %423 = vmatpush1.bf16.msra.mxu0 0
  %424 = vmatprep.subr.bf16.mxu0 0
  %425 = vmatpush1.bf16.msra.mxu0 0
  %426 = vmatprep.subr.bf16.mxu0 0
  %427 = vmatpush1.bf16.msra.mxu0 0
  %428 = vmatprep.subr.bf16.mxu0 0
  %429 = vmatpush1.bf16.msra.mxu0 0
  %430 = vmatprep.subr.bf16.mxu0 0
  %431 = vmatpush1.bf16.msra.mxu0 0
  %432 = vmatprep.subr.bf16.mxu0 0
  %433 = vmatpush1.bf16.msra.mxu0 0
  %434 = vmatprep.subr.bf16.mxu0 0
  %435 = vmatpush1.bf16.msra.mxu0 0
  %436 = vmatprep.subr.bf16.mxu0 0
  %437 = vmatpush1.bf16.msra.mxu0 0
  %438 = vmatprep.subr.bf16.mxu0 0
  %439 = vmatpush1.bf16.msra.mxu0 0
  %440 = vmatprep.subr.bf16.mxu0 0
  %441 = vmatpush1.bf16.msra.mxu0 0
  %442 = vmatprep.subr.bf16.mxu0 0
  %443 = vmatpush1.bf16.msra.mxu0 0
  %444 = vmatprep.subr.bf16.mxu0 0
  %445 = vmatpush1.bf16.msra.mxu0 0
  %446 = vmatprep.mubr.bf16.mxu0 0
  %447 = vmatmul.mubr.bf16.gmra.mrb[0].mxu0 %v332
  %v448 = vpop.f32.mrb[0].mxu0
  %v449 = vadd.f32 %v409, %v448
  %v450 = vpop.f32.mrb[0].mxu0
  %v451 = vpop.f32.mrb[0].mxu0
  %v452 = vpop.f32.mrb[0].mxu0
  %453 = vdwg.mxu0
  %v454 = vmax.f32 %v449, 0.0
  %v455 = vpack.c.bf16 %v454, %v454
  %vm456 = vcmask 781312
  %457 = vst.msk [vmem:[%s3] sm:$0xf] %vm456, %v455
  // Predicated region
  $region14: #{fcn_forward.18} parent=0 // pred_check
    _
  $region15: #{fcn_forward.18} parent=0 // pred_check_branch
    %459 = sbr.rel (0) target = $region17
  $region16: #{fcn_forward.18} parent=0 // pred_region
    _
  $region17: #{fcn_forward.18} parent=0 // pred_fallthru
    _
  // Predicated region
  $region18: #{fcn_forward.18} parent=0 // pred_check
    _
  $region19: #{fcn_forward.18} parent=0 // pred_check_branch
    %461 = sbr.rel (0) target = $region21
  $region20: #{fcn_forward.18} parent=0 // pred_region
    _
  $region21: #{fcn_forward.18} parent=0 // pred_fallthru
    _

// kernel: fcn_forward.19
$region0: #{fcn_forward.19}
  #allocation0 [shape = 'u32[]', space=smem, size = 0x4, offset = 0x4, fixed_abs, tag = 'smem constant byte address 0x4 - core index']
  #allocation1 [shape = 'u32[144,128]{1,0:T(1,128)}', space=vmem, size = 0x12000, scoped, tag = 'internal scratch']
  %s0 = inlined_call_operand.vmem [shape: bf16[8,864], index: 0, kind: input, shape index: {}]
  %s1 = inlined_call_operand.vmem [shape: bf16[864,96], index: 1, kind: input, shape index: {}]
  %s2 = inlined_call_operand.vmem [shape: f32[1,96], index: 2, kind: input, shape index: {}]
  %s3 = inlined_call_operand.vmem [shape: bf16[8,96], index: 3, kind: output, shape index: {}]
  %s4 = sld [smem:[#allocation0]]
  $region22: #{fcn_forward.19} parent=0
    _
  %s6 = ssub.s32 1, %s4
  %s7 = scalar_select 0, %s6, %s4
  // Predicated region
  $region2: #{fcn_forward.19} parent=0 // pred_check
    _
  $region3: #{fcn_forward.19} parent=0 // pred_check_branch
    %9 = sbr.rel (0) target = $region5
  $region4: #{fcn_forward.19} parent=0 // pred_region
    _
  $region5: #{fcn_forward.19} parent=0 // pred_fallthru
    _
  // Predicated region
  $region6: #{fcn_forward.19} parent=0 // pred_check
    _
  $region7: #{fcn_forward.19} parent=0 // pred_check_branch
    %11 = sbr.rel (0) target = $region9
  $region8: #{fcn_forward.19} parent=0 // pred_region
    _
  $region9: #{fcn_forward.19} parent=0 // pred_fallthru
    _
  // Predicated region
  $region10: #{fcn_forward.19} parent=0 // pred_check
    _
  $region11: #{fcn_forward.19} parent=0 // pred_check_branch
    %13 = sbr.rel (0) target = $region13
  $region12: #{fcn_forward.19} parent=0 // pred_region
    _
  $region13: #{fcn_forward.19} parent=0 // pred_fallthru
    _
  %v15 = vld [vmem:[%s0] sm:$0xff]
  %v16 = vld [vmem:[%s0 + $0x8] sm:$0xff]
  %v17 = vld [vmem:[%s0 + $0x10] sm:$0xff]
  %v18 = vld [vmem:[%s0 + $0x18] sm:$0xf]
  %v19 = vld [vmem:[%s1] sm:$0xf]
  %v20 = vld [vmem:[%s1 + $0x4] sm:$0xf]
  %v21 = vld [vmem:[%s1 + $0x8] sm:$0xf]
  %v22 = vld [vmem:[%s1 + $0xc] sm:$0xf]
  %v23 = vld [vmem:[%s1 + $0x10] sm:$0xf]
  %v24 = vld [vmem:[%s1 + $0x14] sm:$0xf]
  %v25 = vld [vmem:[%s1 + $0x18] sm:$0xf]
  %v26 = vld [vmem:[%s1 + $0x1c] sm:$0xf]
  %v27 = vld [vmem:[%s1 + $0x20] sm:$0xf]
  %v28 = vld [vmem:[%s1 + $0x24] sm:$0xf]
  %v29 = vld [vmem:[%s1 + $0x28] sm:$0xf]
  %v30 = vld [vmem:[%s1 + $0x2c] sm:$0xf]
  %v31 = vld [vmem:[%s1 + $0x30] sm:$0xf]
  %v32 = vld [vmem:[%s1 + $0x34] sm:$0xf]
  %v33 = vld [vmem:[%s1 + $0x38] sm:$0xf]
  %v34 = vld [vmem:[%s1 + $0x3c] sm:$0xf]
  %v35 = vld [vmem:[%s1 + $0x40] sm:$0xf]
  %v36 = vld [vmem:[%s1 + $0x44] sm:$0xf]
  %v37 = vld [vmem:[%s1 + $0x48] sm:$0xf]
  %v38 = vld [vmem:[%s1 + $0x4c] sm:$0xf]
  %v39 = vld [vmem:[%s1 + $0x50] sm:$0xf]
  %v40 = vld [vmem:[%s1 + $0x54] sm:$0xf]
  %v41 = vld [vmem:[%s1 + $0x58] sm:$0xf]
  %v42 = vld [vmem:[%s1 + $0x5c] sm:$0xf]
  %v43 = vld [vmem:[%s1 + $0x60] sm:$0xf]
  %v44 = vld [vmem:[%s1 + $0x64] sm:$0xf]
  %v45 = vld [vmem:[%s1 + $0x68] sm:$0xf]
  %v46 = vld [vmem:[%s1 + $0x6c] sm:$0xf]
  %v47 = vld [vmem:[%s1 + $0x70] sm:$0xf]
  %v48 = vld [vmem:[%s1 + $0x74] sm:$0xf]
  %v49 = vld [vmem:[%s1 + $0x78] sm:$0xf]
  %v50 = vld [vmem:[%s1 + $0x7c] sm:$0xf]
  %v51 = vld [vmem:[%s1 + $0x80] sm:$0xf]
  %v52 = vld [vmem:[%s1 + $0x84] sm:$0xf]
  %v53 = vld [vmem:[%s1 + $0x88] sm:$0xf]
  %v54 = vld [vmem:[%s1 + $0x8c] sm:$0xf]
  %v55 = vld [vmem:[%s1 + $0x90] sm:$0xf]
  %v56 = vld [vmem:[%s1 + $0x94] sm:$0xf]
  %v57 = vld [vmem:[%s1 + $0x98] sm:$0xf]
  %v58 = vld [vmem:[%s1 + $0x9c] sm:$0xf]
  %v59 = vld [vmem:[%s1 + $0xa0] sm:$0xf]
  %v60 = vld [vmem:[%s1 + $0xa4] sm:$0xf]
  %v61 = vld [vmem:[%s1 + $0xa8] sm:$0xf]
  %v62 = vld [vmem:[%s1 + $0xac] sm:$0xf]
  %v63 = vld [vmem:[%s1 + $0xb0] sm:$0xf]
  %v64 = vld [vmem:[%s1 + $0xb4] sm:$0xf]
  %v65 = vld [vmem:[%s1 + $0xb8] sm:$0xf]
  %v66 = vld [vmem:[%s1 + $0xbc] sm:$0xf]
  %v67 = vld [vmem:[%s1 + $0xc0] sm:$0xf]
  %v68 = vld [vmem:[%s1 + $0xc4] sm:$0xf]
  %v69 = vld [vmem:[%s1 + $0xc8] sm:$0xf]
  %v70 = vld [vmem:[%s1 + $0xcc] sm:$0xf]
  %v71 = vld [vmem:[%s1 + $0xd0] sm:$0xf]
  %v72 = vld [vmem:[%s1 + $0xd4] sm:$0xf]
  %v73 = vld [vmem:[%s1 + $0xd8] sm:$0xf]
  %v74 = vld [vmem:[%s1 + $0xdc] sm:$0xf]
  %v75 = vld [vmem:[%s1 + $0xe0] sm:$0xf]
  %v76 = vld [vmem:[%s1 + $0xe4] sm:$0xf]
  %v77 = vld [vmem:[%s1 + $0xe8] sm:$0xf]
  %v78 = vld [vmem:[%s1 + $0xec] sm:$0xf]
  %v79 = vld [vmem:[%s1 + $0xf0] sm:$0xf]
  %v80 = vld [vmem:[%s1 + $0xf4] sm:$0xf]
  %v81 = vld [vmem:[%s1 + $0xf8] sm:$0xf]
  %v82 = vld [vmem:[%s1 + $0xfc] sm:$0xf]
  %v83 = vld [vmem:[%s1 + $0x100] sm:$0xf]
  %v84 = vld [vmem:[%s1 + $0x104] sm:$0xf]
  %v85 = vld [vmem:[%s1 + $0x108] sm:$0xf]
  %v86 = vld [vmem:[%s1 + $0x10c] sm:$0xf]
  %v87 = vld [vmem:[%s1 + $0x110] sm:$0xf]
  %v88 = vld [vmem:[%s1 + $0x114] sm:$0xf]
  %v89 = vld [vmem:[%s1 + $0x118] sm:$0xf]
  %v90 = vld [vmem:[%s1 + $0x11c] sm:$0xf]
  %v91 = vld [vmem:[%s1 + $0x120] sm:$0xf]
  %v92 = vld [vmem:[%s1 + $0x124] sm:$0xf]
  %v93 = vld [vmem:[%s1 + $0x128] sm:$0xf]
  %v94 = vld [vmem:[%s1 + $0x12c] sm:$0xf]
  %v95 = vld [vmem:[%s1 + $0x130] sm:$0xf]
  %v96 = vld [vmem:[%s1 + $0x134] sm:$0xf]
  %v97 = vld [vmem:[%s1 + $0x138] sm:$0xf]
  %v98 = vld [vmem:[%s1 + $0x13c] sm:$0xf]
  %v99 = vld [vmem:[%s1 + $0x140] sm:$0xf]
  %v100 = vld [vmem:[%s1 + $0x144] sm:$0xf]
  %v101 = vld [vmem:[%s1 + $0x148] sm:$0xf]
  %v102 = vld [vmem:[%s1 + $0x14c] sm:$0xf]
  %v103 = vld [vmem:[%s1 + $0x150] sm:$0xf]
  %v104 = vld [vmem:[%s1 + $0x154] sm:$0xf]
  %v105 = vld [vmem:[%s1 + $0x158] sm:$0xf]
  %v106 = vld [vmem:[%s1 + $0x15c] sm:$0xf]
  %v107 = vld [vmem:[%s1 + $0x160] sm:$0xf]
  %v108 = vld [vmem:[%s1 + $0x164] sm:$0xf]
  %v109 = vld [vmem:[%s1 + $0x168] sm:$0xf]
  %v110 = vld [vmem:[%s1 + $0x16c] sm:$0xf]
  %v111 = vld [vmem:[%s1 + $0x170] sm:$0xf]
  %v112 = vld [vmem:[%s1 + $0x174] sm:$0xf]
  %v113 = vld [vmem:[%s1 + $0x178] sm:$0xf]
  %v114 = vld [vmem:[%s1 + $0x17c] sm:$0xf]
  %v115 = vld [vmem:[%s1 + $0x180] sm:$0xf]
  %v116 = vld [vmem:[%s1 + $0x184] sm:$0xf]
  %v117 = vld [vmem:[%s1 + $0x188] sm:$0xf]
  %v118 = vld [vmem:[%s1 + $0x18c] sm:$0xf]
  %v119 = vld [vmem:[%s1 + $0x190] sm:$0xf]
  %v120 = vld [vmem:[%s1 + $0x194] sm:$0xf]
  %v121 = vld [vmem:[%s1 + $0x198] sm:$0xf]
  %v122 = vld [vmem:[%s1 + $0x19c] sm:$0xf]
  %v123 = vld [vmem:[%s1 + $0x1a0] sm:$0xf]
  %v124 = vld [vmem:[%s1 + $0x1a4] sm:$0xf]
  %v125 = vld [vmem:[%s1 + $0x1a8] sm:$0xf]
  %v126 = vld [vmem:[%s1 + $0x1ac] sm:$0xf]
  %v127 = vld [vmem:[%s2] sm:$0x1]
  %v129 = vlaneseq
  %v130 = vshrl.u32 %v129, 7
  %v131 = vsub.s32 0, %v130
  %v132 = vrot.slane %v127, %v131
  %v138 = vunpack.c.l.b16 %v15
  %v139 = vunpack.c.h.b16 %v15
  %v140 = vunpack.c.l.b16 %v16
  %v141 = vunpack.c.h.b16 %v16
  %v142 = vunpack.c.l.b16 %v17
  %v143 = vunpack.c.h.b16 %v17
  %v144 = vunpack.c.l.b16 %v18
  %v145 = vpack.c.b16 %v138, %v138
  %v146 = vpack.c.b16 %v139, %v139
  %v147 = vpack.c.b16 %v140, %v140
  %v148 = vpack.c.b16 %v141, %v141
  %v149 = vpack.c.b16 %v142, %v142
  %v150 = vpack.c.b16 %v143, %v143
  %v151 = vpack.c.b16 %v144, %v144
  %v266 = vunpack.c.l.b16 %v19
  %v267 = vunpack.c.l.b16 %v20
  %v268 = vunpack.c.l.b16 %v21
  %v269 = vunpack.c.l.b16 %v22
  %v270 = vunpack.c.l.b16 %v23
  %v271 = vunpack.c.l.b16 %v24
  %v272 = vunpack.c.l.b16 %v25
  %v273 = vunpack.c.l.b16 %v26
  %v274 = vunpack.c.l.b16 %v27
  %v275 = vunpack.c.l.b16 %v28
  %v276 = vunpack.c.l.b16 %v29
  %v277 = vunpack.c.l.b16 %v30
  %v278 = vunpack.c.l.b16 %v31
  %v279 = vunpack.c.l.b16 %v32
  %v280 = vunpack.c.l.b16 %v33
  %v281 = vunpack.c.l.b16 %v34
  %v282 = vunpack.c.l.b16 %v35
  %v283 = vunpack.c.l.b16 %v36
  %v284 = vunpack.c.l.b16 %v37
  %v285 = vunpack.c.l.b16 %v38
  %v286 = vunpack.c.l.b16 %v39
  %v287 = vunpack.c.l.b16 %v40
  %v288 = vunpack.c.l.b16 %v41
  %v289 = vunpack.c.l.b16 %v42
  %v290 = vunpack.c.l.b16 %v43
  %v291 = vunpack.c.l.b16 %v44
  %v292 = vunpack.c.l.b16 %v45
  %v293 = vunpack.c.l.b16 %v46
  %v294 = vunpack.c.l.b16 %v47
  %v295 = vunpack.c.l.b16 %v48
  %v296 = vunpack.c.l.b16 %v49
  %v297 = vunpack.c.l.b16 %v50
  %v298 = vunpack.c.l.b16 %v51
  %v299 = vunpack.c.l.b16 %v52
  %v300 = vunpack.c.l.b16 %v53
  %v301 = vunpack.c.l.b16 %v54
  %v302 = vunpack.c.l.b16 %v55
  %v303 = vunpack.c.l.b16 %v56
  %v304 = vunpack.c.l.b16 %v57
  %v305 = vunpack.c.l.b16 %v58
  %v306 = vunpack.c.l.b16 %v59
  %v307 = vunpack.c.l.b16 %v60
  %v308 = vunpack.c.l.b16 %v61
  %v309 = vunpack.c.l.b16 %v62
  %v310 = vunpack.c.l.b16 %v63
  %v311 = vunpack.c.l.b16 %v64
  %v312 = vunpack.c.l.b16 %v65
  %v313 = vunpack.c.l.b16 %v66
  %v314 = vunpack.c.l.b16 %v67
  %v315 = vunpack.c.l.b16 %v68
  %v316 = vunpack.c.l.b16 %v69
  %v317 = vunpack.c.l.b16 %v70
  %v318 = vunpack.c.l.b16 %v71
  %v319 = vunpack.c.l.b16 %v72
  %v320 = vunpack.c.l.b16 %v73
  %v321 = vunpack.c.l.b16 %v74
  %v322 = vunpack.c.l.b16 %v75
  %v323 = vunpack.c.l.b16 %v76
  %v324 = vunpack.c.l.b16 %v77
  %v325 = vunpack.c.l.b16 %v78
  %v326 = vunpack.c.l.b16 %v79
  %v327 = vunpack.c.l.b16 %v80
  %v328 = vunpack.c.l.b16 %v81
  %v329 = vunpack.c.l.b16 %v82
  %v330 = vunpack.c.l.b16 %v83
  %v331 = vunpack.c.l.b16 %v84
  %v332 = vunpack.c.l.b16 %v85
  %v333 = vunpack.c.l.b16 %v86
  %v334 = vunpack.c.l.b16 %v87
  %v335 = vunpack.c.l.b16 %v88
  %v336 = vunpack.c.l.b16 %v89
  %v337 = vunpack.c.l.b16 %v90
  %v338 = vunpack.c.l.b16 %v91
  %v339 = vunpack.c.l.b16 %v92
  %v340 = vunpack.c.l.b16 %v93
  %v341 = vunpack.c.l.b16 %v94
  %v342 = vunpack.c.l.b16 %v95
  %v343 = vunpack.c.l.b16 %v96
  %v344 = vunpack.c.l.b16 %v97
  %v345 = vunpack.c.l.b16 %v98
  %v346 = vunpack.c.l.b16 %v99
  %v347 = vunpack.c.l.b16 %v100
  %v348 = vunpack.c.l.b16 %v101
  %v349 = vunpack.c.l.b16 %v102
  %v350 = vunpack.c.l.b16 %v103
  %v351 = vunpack.c.l.b16 %v104
  %v352 = vunpack.c.l.b16 %v105
  %v353 = vunpack.c.l.b16 %v106
  %v354 = vunpack.c.l.b16 %v107
  %v355 = vunpack.c.l.b16 %v108
  %v356 = vunpack.c.l.b16 %v109
  %v357 = vunpack.c.l.b16 %v110
  %v358 = vunpack.c.l.b16 %v111
  %v359 = vunpack.c.l.b16 %v112
  %v360 = vunpack.c.l.b16 %v113
  %v361 = vunpack.c.l.b16 %v114
  %v362 = vunpack.c.l.b16 %v115
  %v363 = vunpack.c.l.b16 %v116
  %v364 = vunpack.c.l.b16 %v117
  %v365 = vunpack.c.l.b16 %v118
  %v366 = vunpack.c.l.b16 %v119
  %v367 = vunpack.c.l.b16 %v120
  %v368 = vunpack.c.l.b16 %v121
  %v369 = vunpack.c.l.b16 %v122
  %v370 = vunpack.c.l.b16 %v123
  %v371 = vunpack.c.l.b16 %v124
  %v372 = vunpack.c.l.b16 %v125
  %v373 = vunpack.c.l.b16 %v126
  %v374 = vpack.c.b16 %v267, %v266
  %v375 = vpack.c.b16 %v269, %v268
  %v376 = vpack.c.b16 %v271, %v270
  %v377 = vpack.c.b16 %v273, %v272
  %v378 = vpack.c.b16 %v275, %v274
  %v379 = vpack.c.b16 %v277, %v276
  %v380 = vpack.c.b16 %v279, %v278
  %v381 = vpack.c.b16 %v281, %v280
  %v382 = vpack.c.b16 %v283, %v282
  %v383 = vpack.c.b16 %v285, %v284
  %v384 = vpack.c.b16 %v287, %v286
  %v385 = vpack.c.b16 %v289, %v288
  %v386 = vpack.c.b16 %v291, %v290
  %v387 = vpack.c.b16 %v293, %v292
  %v388 = vpack.c.b16 %v295, %v294
  %v389 = vpack.c.b16 %v297, %v296
  %v390 = vpack.c.b16 %v299, %v298
  %v391 = vpack.c.b16 %v301, %v300
  %v392 = vpack.c.b16 %v303, %v302
  %v393 = vpack.c.b16 %v305, %v304
  %v394 = vpack.c.b16 %v307, %v306
  %v395 = vpack.c.b16 %v309, %v308
  %v396 = vpack.c.b16 %v311, %v310
  %v397 = vpack.c.b16 %v313, %v312
  %v398 = vpack.c.b16 %v315, %v314
  %v399 = vpack.c.b16 %v317, %v316
  %v400 = vpack.c.b16 %v319, %v318
  %v401 = vpack.c.b16 %v321, %v320
  %v402 = vpack.c.b16 %v323, %v322
  %v403 = vpack.c.b16 %v325, %v324
  %v404 = vpack.c.b16 %v327, %v326
  %v405 = vpack.c.b16 %v329, %v328
  %v406 = vpack.c.b16 %v331, %v330
  %v407 = vpack.c.b16 %v333, %v332
  %v408 = vpack.c.b16 %v335, %v334
  %v409 = vpack.c.b16 %v337, %v336
  %v410 = vpack.c.b16 %v339, %v338
  %v411 = vpack.c.b16 %v341, %v340
  %v412 = vpack.c.b16 %v343, %v342
  %v413 = vpack.c.b16 %v345, %v344
  %v414 = vpack.c.b16 %v347, %v346
  %v415 = vpack.c.b16 %v349, %v348
  %v416 = vpack.c.b16 %v351, %v350
  %v417 = vpack.c.b16 %v353, %v352
  %v418 = vpack.c.b16 %v355, %v354
  %v419 = vpack.c.b16 %v357, %v356
  %v420 = vpack.c.b16 %v359, %v358
  %v421 = vpack.c.b16 %v361, %v360
  %v422 = vpack.c.b16 %v363, %v362
  %v423 = vpack.c.b16 %v365, %v364
  %v424 = vpack.c.b16 %v367, %v366
  %v425 = vpack.c.b16 %v369, %v368
  %v426 = vpack.c.b16 %v371, %v370
  %v427 = vpack.c.b16 %v373, %v372
  %vm482 = vcmask 785408
  %v484 = vsel %vm482, %v151, 0
  %486 = vmatprep.subr.bf16.mxu0 0
  %487 = vmatpush1.bf16.msra.mxu0 %v374
  %488 = vmatprep.subr.bf16.mxu0 0
  %489 = vmatpush1.bf16.msra.mxu0 %v375
  %490 = vmatprep.subr.bf16.mxu0 0
  %491 = vmatpush1.bf16.msra.mxu0 %v376
  %492 = vmatprep.subr.bf16.mxu0 0
  %493 = vmatpush1.bf16.msra.mxu0 %v377
  %494 = vmatprep.subr.bf16.mxu0 0
  %495 = vmatpush1.bf16.msra.mxu0 %v378
  %496 = vmatprep.subr.bf16.mxu0 0
  %497 = vmatpush1.bf16.msra.mxu0 %v379
  %498 = vmatprep.subr.bf16.mxu0 0
  %499 = vmatpush1.bf16.msra.mxu0 %v380
  %500 = vmatprep.subr.bf16.mxu0 0
  %501 = vmatpush1.bf16.msra.mxu0 %v381
  %502 = vmatprep.subr.bf16.mxu0 0
  %503 = vmatpush1.bf16.msra.mxu0 %v382
  %504 = vmatprep.subr.bf16.mxu0 0
  %505 = vmatpush1.bf16.msra.mxu0 %v383
  %506 = vmatprep.subr.bf16.mxu0 0
  %507 = vmatpush1.bf16.msra.mxu0 %v384
  %508 = vmatprep.subr.bf16.mxu0 0
  %509 = vmatpush1.bf16.msra.mxu0 %v385
  %510 = vmatprep.subr.bf16.mxu0 0
  %511 = vmatpush1.bf16.msra.mxu0 %v386
  %512 = vmatprep.subr.bf16.mxu0 0
  %513 = vmatpush1.bf16.msra.mxu0 %v387
  %514 = vmatprep.subr.bf16.mxu0 0
  %515 = vmatpush1.bf16.msra.mxu0 %v388
  %516 = vmatprep.subr.bf16.mxu0 0
  %517 = vmatpush1.bf16.msra.mxu0 %v389
  %518 = vmatprep.mubr.bf16.mxu0 %v146
  %519 = vmatmul.mubr.bf16.gmra.mrb[0].mxu0 %v145
  %v520 = vpop.f32.mrb[0].mxu0
  %v521 = vadd.f32 %v132, %v520
  %v522 = vpop.f32.mrb[0].mxu0
  %v523 = vpop.f32.mrb[0].mxu0
  %v524 = vpop.f32.mrb[0].mxu0
  %525 = vdwg.mxu0
  %526 = vmatprep.subr.bf16.mxu0 0
  %527 = vmatpush1.bf16.msra.mxu0 %v390
  %528 = vmatprep.subr.bf16.mxu0 0
  %529 = vmatpush1.bf16.msra.mxu0 %v391
  %530 = vmatprep.subr.bf16.mxu0 0
  %531 = vmatpush1.bf16.msra.mxu0 %v392
  %532 = vmatprep.subr.bf16.mxu0 0
  %533 = vmatpush1.bf16.msra.mxu0 %v393
  %534 = vmatprep.subr.bf16.mxu0 0
  %535 = vmatpush1.bf16.msra.mxu0 %v394
  %536 = vmatprep.subr.bf16.mxu0 0
  %537 = vmatpush1.bf16.msra.mxu0 %v395
  %538 = vmatprep.subr.bf16.mxu0 0
  %539 = vmatpush1.bf16.msra.mxu0 %v396
  %540 = vmatprep.subr.bf16.mxu0 0
  %541 = vmatpush1.bf16.msra.mxu0 %v397
  %542 = vmatprep.subr.bf16.mxu0 0
  %543 = vmatpush1.bf16.msra.mxu0 %v398
  %544 = vmatprep.subr.bf16.mxu0 0
  %545 = vmatpush1.bf16.msra.mxu0 %v399
  %546 = vmatprep.subr.bf16.mxu0 0
  %547 = vmatpush1.bf16.msra.mxu0 %v400
  %548 = vmatprep.subr.bf16.mxu0 0
  %549 = vmatpush1.bf16.msra.mxu0 %v401
  %550 = vmatprep.subr.bf16.mxu0 0
  %551 = vmatpush1.bf16.msra.mxu0 %v402
  %552 = vmatprep.subr.bf16.mxu0 0
  %553 = vmatpush1.bf16.msra.mxu0 %v403
  %554 = vmatprep.subr.bf16.mxu0 0
  %555 = vmatpush1.bf16.msra.mxu0 %v404
  %556 = vmatprep.subr.bf16.mxu0 0
  %557 = vmatpush1.bf16.msra.mxu0 %v405
  %558 = vmatprep.mubr.bf16.mxu0 %v148
  %559 = vmatmul.mubr.bf16.gmra.mrb[0].mxu0 %v147
  %v560 = vpop.f32.mrb[0].mxu0
  %v561 = vadd.f32 %v521, %v560
  %v562 = vpop.f32.mrb[0].mxu0
  %v563 = vpop.f32.mrb[0].mxu0
  %v564 = vpop.f32.mrb[0].mxu0
  %565 = vdwg.mxu0
  %566 = vmatprep.subr.bf16.mxu0 0
  %567 = vmatpush1.bf16.msra.mxu0 %v406
  %568 = vmatprep.subr.bf16.mxu0 0
  %569 = vmatpush1.bf16.msra.mxu0 %v407
  %570 = vmatprep.subr.bf16.mxu0 0
  %571 = vmatpush1.bf16.msra.mxu0 %v408
  %572 = vmatprep.subr.bf16.mxu0 0
  %573 = vmatpush1.bf16.msra.mxu0 %v409
  %574 = vmatprep.subr.bf16.mxu0 0
  %575 = vmatpush1.bf16.msra.mxu0 %v410
  %576 = vmatprep.subr.bf16.mxu0 0
  %577 = vmatpush1.bf16.msra.mxu0 %v411
  %578 = vmatprep.subr.bf16.mxu0 0
  %579 = vmatpush1.bf16.msra.mxu0 %v412
  %580 = vmatprep.subr.bf16.mxu0 0
  %581 = vmatpush1.bf16.msra.mxu0 %v413
  %582 = vmatprep.subr.bf16.mxu0 0
  %583 = vmatpush1.bf16.msra.mxu0 %v414
  %584 = vmatprep.subr.bf16.mxu0 0
  %585 = vmatpush1.bf16.msra.mxu0 %v415
  %586 = vmatprep.subr.bf16.mxu0 0
  %587 = vmatpush1.bf16.msra.mxu0 %v416
  %588 = vmatprep.subr.bf16.mxu0 0
  %589 = vmatpush1.bf16.msra.mxu0 %v417
  %590 = vmatprep.subr.bf16.mxu0 0
  %591 = vmatpush1.bf16.msra.mxu0 %v418
  %592 = vmatprep.subr.bf16.mxu0 0
  %593 = vmatpush1.bf16.msra.mxu0 %v419
  %594 = vmatprep.subr.bf16.mxu0 0
  %595 = vmatpush1.bf16.msra.mxu0 %v420
  %596 = vmatprep.subr.bf16.mxu0 0
  %597 = vmatpush1.bf16.msra.mxu0 %v421
  %598 = vmatprep.mubr.bf16.mxu0 %v150
  %599 = vmatmul.mubr.bf16.gmra.mrb[0].mxu0 %v149
  %v600 = vpop.f32.mrb[0].mxu0
  %v601 = vadd.f32 %v561, %v600
  %v602 = vpop.f32.mrb[0].mxu0
  %v603 = vpop.f32.mrb[0].mxu0
  %v604 = vpop.f32.mrb[0].mxu0
  %605 = vdwg.mxu0
  %606 = vmatprep.subr.bf16.mxu0 0
  %607 = vmatpush1.bf16.msra.mxu0 %v422
  %608 = vmatprep.subr.bf16.mxu0 0
  %609 = vmatpush1.bf16.msra.mxu0 %v423
  %610 = vmatprep.subr.bf16.mxu0 0
  %611 = vmatpush1.bf16.msra.mxu0 %v424
  %612 = vmatprep.subr.bf16.mxu0 0
  %613 = vmatpush1.bf16.msra.mxu0 %v425
  %614 = vmatprep.subr.bf16.mxu0 0
  %615 = vmatpush1.bf16.msra.mxu0 %v426
  %616 = vmatprep.subr.bf16.mxu0 0
  %617 = vmatpush1.bf16.msra.mxu0 %v427
  %618 = vmatprep.subr.bf16.mxu0 0
  %619 = vmatpush1.bf16.msra.mxu0 0
  %620 = vmatprep.subr.bf16.mxu0 0
  %621 = vmatpush1.bf16.msra.mxu0 0
  %622 = vmatprep.subr.bf16.mxu0 0
  %623 = vmatpush1.bf16.msra.mxu0 0
  %624 = vmatprep.subr.bf16.mxu0 0
  %625 = vmatpush1.bf16.msra.mxu0 0
  %626 = vmatprep.subr.bf16.mxu0 0
  %627 = vmatpush1.bf16.msra.mxu0 0
  %628 = vmatprep.subr.bf16.mxu0 0
  %629 = vmatpush1.bf16.msra.mxu0 0
  %630 = vmatprep.subr.bf16.mxu0 0
  %631 = vmatpush1.bf16.msra.mxu0 0
  %632 = vmatprep.subr.bf16.mxu0 0
  %633 = vmatpush1.bf16.msra.mxu0 0
  %634 = vmatprep.subr.bf16.mxu0 0
  %635 = vmatpush1.bf16.msra.mxu0 0
  %636 = vmatprep.subr.bf16.mxu0 0
  %637 = vmatpush1.bf16.msra.mxu0 0
  %638 = vmatprep.mubr.bf16.mxu0 0
  %639 = vmatmul.mubr.bf16.gmra.mrb[0].mxu0 %v484
  %v640 = vpop.f32.mrb[0].mxu0
  %v641 = vadd.f32 %v601, %v640
  %v642 = vpop.f32.mrb[0].mxu0
  %v643 = vpop.f32.mrb[0].mxu0
  %v644 = vpop.f32.mrb[0].mxu0
  %645 = vdwg.mxu0
  %v646 = vmax.f32 %v641, 0.0
  %v647 = vpack.c.bf16 %v646, %v646
  %vm648 = vcmask 781312
  %649 = vst.msk [vmem:[%s3] sm:$0xf] %vm648, %v647
  // Predicated region
  $region14: #{fcn_forward.19} parent=0 // pred_check
    _
  $region15: #{fcn_forward.19} parent=0 // pred_check_branch
    %651 = sbr.rel (0) target = $region17
  $region16: #{fcn_forward.19} parent=0 // pred_region
    _
  $region17: #{fcn_forward.19} parent=0 // pred_fallthru
    _
  // Predicated region
  $region18: #{fcn_forward.19} parent=0 // pred_check
    _
  $region19: #{fcn_forward.19} parent=0 // pred_check_branch
    %653 = sbr.rel (0) target = $region21
  $region20: #{fcn_forward.19} parent=0 // pred_region
    _
  $region21: #{fcn_forward.19} parent=0 // pred_fallthru
    _

// kernel: fcn_forward.21
$region0: #{fcn_forward.21}
  #allocation0 [shape = 'u32[]', space=smem, size = 0x4, offset = 0x4, fixed_abs, tag = 'smem constant byte address 0x4 - core index']
  #allocation1 [shape = 'u32[144,128]{1,0:T(1,128)}', space=vmem, size = 0x12000, scoped, tag = 'internal scratch']
  %s0 = inlined_call_operand.vmem [shape: bf16[8,864], index: 0, kind: input, shape index: {}]
  %s1 = inlined_call_operand.vmem [shape: bf16[864,128], index: 1, kind: input, shape index: {}]
  %s2 = inlined_call_operand.vmem [shape: f32[1,128], index: 2, kind: input, shape index: {}]
  %s3 = inlined_call_operand.vmem [shape: bf16[8,128], index: 3, kind: output, shape index: {}]
  %s4 = sld [smem:[#allocation0]]
  $region22: #{fcn_forward.21} parent=0
    _
  %s6 = ssub.s32 1, %s4
  %s7 = scalar_select 0, %s6, %s4
  // Predicated region
  $region2: #{fcn_forward.21} parent=0 // pred_check
    _
  $region3: #{fcn_forward.21} parent=0 // pred_check_branch
    %9 = sbr.rel (0) target = $region5
  $region4: #{fcn_forward.21} parent=0 // pred_region
    _
  $region5: #{fcn_forward.21} parent=0 // pred_fallthru
    _
  // Predicated region
  $region6: #{fcn_forward.21} parent=0 // pred_check
    _
  $region7: #{fcn_forward.21} parent=0 // pred_check_branch
    %11 = sbr.rel (0) target = $region9
  $region8: #{fcn_forward.21} parent=0 // pred_region
    _
  $region9: #{fcn_forward.21} parent=0 // pred_fallthru
    _
  // Predicated region
  $region10: #{fcn_forward.21} parent=0 // pred_check
    _
  $region11: #{fcn_forward.21} parent=0 // pred_check_branch
    %13 = sbr.rel (0) target = $region13
  $region12: #{fcn_forward.21} parent=0 // pred_region
    _
  $region13: #{fcn_forward.21} parent=0 // pred_fallthru
    _
  %v15 = vld [vmem:[%s0] sm:$0xff]
  %v16 = vld [vmem:[%s0 + $0x8] sm:$0xff]
  %v17 = vld [vmem:[%s0 + $0x10] sm:$0xff]
  %v18 = vld [vmem:[%s0 + $0x18] sm:$0xf]
  %v19 = vld [vmem:[%s1] sm:$0xf]
  %v20 = vld [vmem:[%s1 + $0x4] sm:$0xf]
  %v21 = vld [vmem:[%s1 + $0x8] sm:$0xf]
  %v22 = vld [vmem:[%s1 + $0xc] sm:$0xf]
  %v23 = vld [vmem:[%s1 + $0x10] sm:$0xf]
  %v24 = vld [vmem:[%s1 + $0x14] sm:$0xf]
  %v25 = vld [vmem:[%s1 + $0x18] sm:$0xf]
  %v26 = vld [vmem:[%s1 + $0x1c] sm:$0xf]
  %v27 = vld [vmem:[%s1 + $0x20] sm:$0xf]
  %v28 = vld [vmem:[%s1 + $0x24] sm:$0xf]
  %v29 = vld [vmem:[%s1 + $0x28] sm:$0xf]
  %v30 = vld [vmem:[%s1 + $0x2c] sm:$0xf]
  %v31 = vld [vmem:[%s1 + $0x30] sm:$0xf]
  %v32 = vld [vmem:[%s1 + $0x34] sm:$0xf]
  %v33 = vld [vmem:[%s1 + $0x38] sm:$0xf]
  %v34 = vld [vmem:[%s1 + $0x3c] sm:$0xf]
  %v35 = vld [vmem:[%s1 + $0x40] sm:$0xf]
  %v36 = vld [vmem:[%s1 + $0x44] sm:$0xf]
  %v37 = vld [vmem:[%s1 + $0x48] sm:$0xf]
  %v38 = vld [vmem:[%s1 + $0x4c] sm:$0xf]
  %v39 = vld [vmem:[%s1 + $0x50] sm:$0xf]
  %v40 = vld [vmem:[%s1 + $0x54] sm:$0xf]
  %v41 = vld [vmem:[%s1 + $0x58] sm:$0xf]
  %v42 = vld [vmem:[%s1 + $0x5c] sm:$0xf]
  %v43 = vld [vmem:[%s1 + $0x60] sm:$0xf]
  %v44 = vld [vmem:[%s1 + $0x64] sm:$0xf]
  %v45 = vld [vmem:[%s1 + $0x68] sm:$0xf]
  %v46 = vld [vmem:[%s1 + $0x6c] sm:$0xf]
  %v47 = vld [vmem:[%s1 + $0x70] sm:$0xf]
  %v48 = vld [vmem:[%s1 + $0x74] sm:$0xf]
  %v49 = vld [vmem:[%s1 + $0x78] sm:$0xf]
  %v50 = vld [vmem:[%s1 + $0x7c] sm:$0xf]
  %v51 = vld [vmem:[%s1 + $0x80] sm:$0xf]
  %v52 = vld [vmem:[%s1 + $0x84] sm:$0xf]
  %v53 = vld [vmem:[%s1 + $0x88] sm:$0xf]
  %v54 = vld [vmem:[%s1 + $0x8c] sm:$0xf]
  %v55 = vld [vmem:[%s1 + $0x90] sm:$0xf]
  %v56 = vld [vmem:[%s1 + $0x94] sm:$0xf]
  %v57 = vld [vmem:[%s1 + $0x98] sm:$0xf]
  %v58 = vld [vmem:[%s1 + $0x9c] sm:$0xf]
  %v59 = vld [vmem:[%s1 + $0xa0] sm:$0xf]
  %v60 = vld [vmem:[%s1 + $0xa4] sm:$0xf]
  %v61 = vld [vmem:[%s1 + $0xa8] sm:$0xf]
  %v62 = vld [vmem:[%s1 + $0xac] sm:$0xf]
  %v63 = vld [vmem:[%s1 + $0xb0] sm:$0xf]
  %v64 = vld [vmem:[%s1 + $0xb4] sm:$0xf]
  %v65 = vld [vmem:[%s1 + $0xb8] sm:$0xf]
  %v66 = vld [vmem:[%s1 + $0xbc] sm:$0xf]
  %v67 = vld [vmem:[%s1 + $0xc0] sm:$0xf]
  %v68 = vld [vmem:[%s1 + $0xc4] sm:$0xf]
  %v69 = vld [vmem:[%s1 + $0xc8] sm:$0xf]
  %v70 = vld [vmem:[%s1 + $0xcc] sm:$0xf]
  %v71 = vld [vmem:[%s1 + $0xd0] sm:$0xf]
  %v72 = vld [vmem:[%s1 + $0xd4] sm:$0xf]
  %v73 = vld [vmem:[%s1 + $0xd8] sm:$0xf]
  %v74 = vld [vmem:[%s1 + $0xdc] sm:$0xf]
  %v75 = vld [vmem:[%s1 + $0xe0] sm:$0xf]
  %v76 = vld [vmem:[%s1 + $0xe4] sm:$0xf]
  %v77 = vld [vmem:[%s1 + $0xe8] sm:$0xf]
  %v78 = vld [vmem:[%s1 + $0xec] sm:$0xf]
  %v79 = vld [vmem:[%s1 + $0xf0] sm:$0xf]
  %v80 = vld [vmem:[%s1 + $0xf4] sm:$0xf]
  %v81 = vld [vmem:[%s1 + $0xf8] sm:$0xf]
  %v82 = vld [vmem:[%s1 + $0xfc] sm:$0xf]
  %v83 = vld [vmem:[%s1 + $0x100] sm:$0xf]
  %v84 = vld [vmem:[%s1 + $0x104] sm:$0xf]
  %v85 = vld [vmem:[%s1 + $0x108] sm:$0xf]
  %v86 = vld [vmem:[%s1 + $0x10c] sm:$0xf]
  %v87 = vld [vmem:[%s1 + $0x110] sm:$0xf]
  %v88 = vld [vmem:[%s1 + $0x114] sm:$0xf]
  %v89 = vld [vmem:[%s1 + $0x118] sm:$0xf]
  %v90 = vld [vmem:[%s1 + $0x11c] sm:$0xf]
  %v91 = vld [vmem:[%s1 + $0x120] sm:$0xf]
  %v92 = vld [vmem:[%s1 + $0x124] sm:$0xf]
  %v93 = vld [vmem:[%s1 + $0x128] sm:$0xf]
  %v94 = vld [vmem:[%s1 + $0x12c] sm:$0xf]
  %v95 = vld [vmem:[%s1 + $0x130] sm:$0xf]
  %v96 = vld [vmem:[%s1 + $0x134] sm:$0xf]
  %v97 = vld [vmem:[%s1 + $0x138] sm:$0xf]
  %v98 = vld [vmem:[%s1 + $0x13c] sm:$0xf]
  %v99 = vld [vmem:[%s1 + $0x140] sm:$0xf]
  %v100 = vld [vmem:[%s1 + $0x144] sm:$0xf]
  %v101 = vld [vmem:[%s1 + $0x148] sm:$0xf]
  %v102 = vld [vmem:[%s1 + $0x14c] sm:$0xf]
  %v103 = vld [vmem:[%s1 + $0x150] sm:$0xf]
  %v104 = vld [vmem:[%s1 + $0x154] sm:$0xf]
  %v105 = vld [vmem:[%s1 + $0x158] sm:$0xf]
  %v106 = vld [vmem:[%s1 + $0x15c] sm:$0xf]
  %v107 = vld [vmem:[%s1 + $0x160] sm:$0xf]
  %v108 = vld [vmem:[%s1 + $0x164] sm:$0xf]
  %v109 = vld [vmem:[%s1 + $0x168] sm:$0xf]
  %v110 = vld [vmem:[%s1 + $0x16c] sm:$0xf]
  %v111 = vld [vmem:[%s1 + $0x170] sm:$0xf]
  %v112 = vld [vmem:[%s1 + $0x174] sm:$0xf]
  %v113 = vld [vmem:[%s1 + $0x178] sm:$0xf]
  %v114 = vld [vmem:[%s1 + $0x17c] sm:$0xf]
  %v115 = vld [vmem:[%s1 + $0x180] sm:$0xf]
  %v116 = vld [vmem:[%s1 + $0x184] sm:$0xf]
  %v117 = vld [vmem:[%s1 + $0x188] sm:$0xf]
  %v118 = vld [vmem:[%s1 + $0x18c] sm:$0xf]
  %v119 = vld [vmem:[%s1 + $0x190] sm:$0xf]
  %v120 = vld [vmem:[%s1 + $0x194] sm:$0xf]
  %v121 = vld [vmem:[%s1 + $0x198] sm:$0xf]
  %v122 = vld [vmem:[%s1 + $0x19c] sm:$0xf]
  %v123 = vld [vmem:[%s1 + $0x1a0] sm:$0xf]
  %v124 = vld [vmem:[%s1 + $0x1a4] sm:$0xf]
  %v125 = vld [vmem:[%s1 + $0x1a8] sm:$0xf]
  %v126 = vld [vmem:[%s1 + $0x1ac] sm:$0xf]
  %v127 = vld [vmem:[%s2] sm:$0x1]
  %v129 = vlaneseq
  %v130 = vshrl.u32 %v129, 7
  %v131 = vsub.s32 0, %v130
  %v132 = vrot.slane %v127, %v131
  %v138 = vunpack.c.l.b16 %v15
  %v139 = vunpack.c.h.b16 %v15
  %v140 = vunpack.c.l.b16 %v16
  %v141 = vunpack.c.h.b16 %v16
  %v142 = vunpack.c.l.b16 %v17
  %v143 = vunpack.c.h.b16 %v17
  %v144 = vunpack.c.l.b16 %v18
  %v145 = vpack.c.b16 %v138, %v138
  %v146 = vpack.c.b16 %v139, %v139
  %v147 = vpack.c.b16 %v140, %v140
  %v148 = vpack.c.b16 %v141, %v141
  %v149 = vpack.c.b16 %v142, %v142
  %v150 = vpack.c.b16 %v143, %v143
  %v151 = vpack.c.b16 %v144, %v144
  %v266 = vunpack.c.l.b16 %v19
  %v267 = vunpack.c.l.b16 %v20
  %v268 = vunpack.c.l.b16 %v21
  %v269 = vunpack.c.l.b16 %v22
  %v270 = vunpack.c.l.b16 %v23
  %v271 = vunpack.c.l.b16 %v24
  %v272 = vunpack.c.l.b16 %v25
  %v273 = vunpack.c.l.b16 %v26
  %v274 = vunpack.c.l.b16 %v27
  %v275 = vunpack.c.l.b16 %v28
  %v276 = vunpack.c.l.b16 %v29
  %v277 = vunpack.c.l.b16 %v30
  %v278 = vunpack.c.l.b16 %v31
  %v279 = vunpack.c.l.b16 %v32
  %v280 = vunpack.c.l.b16 %v33
  %v281 = vunpack.c.l.b16 %v34
  %v282 = vunpack.c.l.b16 %v35
  %v283 = vunpack.c.l.b16 %v36
  %v284 = vunpack.c.l.b16 %v37
  %v285 = vunpack.c.l.b16 %v38
  %v286 = vunpack.c.l.b16 %v39
  %v287 = vunpack.c.l.b16 %v40
  %v288 = vunpack.c.l.b16 %v41
  %v289 = vunpack.c.l.b16 %v42
  %v290 = vunpack.c.l.b16 %v43
  %v291 = vunpack.c.l.b16 %v44
  %v292 = vunpack.c.l.b16 %v45
  %v293 = vunpack.c.l.b16 %v46
  %v294 = vunpack.c.l.b16 %v47
  %v295 = vunpack.c.l.b16 %v48
  %v296 = vunpack.c.l.b16 %v49
  %v297 = vunpack.c.l.b16 %v50
  %v298 = vunpack.c.l.b16 %v51
  %v299 = vunpack.c.l.b16 %v52
  %v300 = vunpack.c.l.b16 %v53
  %v301 = vunpack.c.l.b16 %v54
  %v302 = vunpack.c.l.b16 %v55
  %v303 = vunpack.c.l.b16 %v56
  %v304 = vunpack.c.l.b16 %v57
  %v305 = vunpack.c.l.b16 %v58
  %v306 = vunpack.c.l.b16 %v59
  %v307 = vunpack.c.l.b16 %v60
  %v308 = vunpack.c.l.b16 %v61
  %v309 = vunpack.c.l.b16 %v62
  %v310 = vunpack.c.l.b16 %v63
  %v311 = vunpack.c.l.b16 %v64
  %v312 = vunpack.c.l.b16 %v65
  %v313 = vunpack.c.l.b16 %v66
  %v314 = vunpack.c.l.b16 %v67
  %v315 = vunpack.c.l.b16 %v68
  %v316 = vunpack.c.l.b16 %v69
  %v317 = vunpack.c.l.b16 %v70
  %v318 = vunpack.c.l.b16 %v71
  %v319 = vunpack.c.l.b16 %v72
  %v320 = vunpack.c.l.b16 %v73
  %v321 = vunpack.c.l.b16 %v74
  %v322 = vunpack.c.l.b16 %v75
  %v323 = vunpack.c.l.b16 %v76
  %v324 = vunpack.c.l.b16 %v77
  %v325 = vunpack.c.l.b16 %v78
  %v326 = vunpack.c.l.b16 %v79
  %v327 = vunpack.c.l.b16 %v80
  %v328 = vunpack.c.l.b16 %v81
  %v329 = vunpack.c.l.b16 %v82
  %v330 = vunpack.c.l.b16 %v83
  %v331 = vunpack.c.l.b16 %v84
  %v332 = vunpack.c.l.b16 %v85
  %v333 = vunpack.c.l.b16 %v86
  %v334 = vunpack.c.l.b16 %v87
  %v335 = vunpack.c.l.b16 %v88
  %v336 = vunpack.c.l.b16 %v89
  %v337 = vunpack.c.l.b16 %v90
  %v338 = vunpack.c.l.b16 %v91
  %v339 = vunpack.c.l.b16 %v92
  %v340 = vunpack.c.l.b16 %v93
  %v341 = vunpack.c.l.b16 %v94
  %v342 = vunpack.c.l.b16 %v95
  %v343 = vunpack.c.l.b16 %v96
  %v344 = vunpack.c.l.b16 %v97
  %v345 = vunpack.c.l.b16 %v98
  %v346 = vunpack.c.l.b16 %v99
  %v347 = vunpack.c.l.b16 %v100
  %v348 = vunpack.c.l.b16 %v101
  %v349 = vunpack.c.l.b16 %v102
  %v350 = vunpack.c.l.b16 %v103
  %v351 = vunpack.c.l.b16 %v104
  %v352 = vunpack.c.l.b16 %v105
  %v353 = vunpack.c.l.b16 %v106
  %v354 = vunpack.c.l.b16 %v107
  %v355 = vunpack.c.l.b16 %v108
  %v356 = vunpack.c.l.b16 %v109
  %v357 = vunpack.c.l.b16 %v110
  %v358 = vunpack.c.l.b16 %v111
  %v359 = vunpack.c.l.b16 %v112
  %v360 = vunpack.c.l.b16 %v113
  %v361 = vunpack.c.l.b16 %v114
  %v362 = vunpack.c.l.b16 %v115
  %v363 = vunpack.c.l.b16 %v116
  %v364 = vunpack.c.l.b16 %v117
  %v365 = vunpack.c.l.b16 %v118
  %v366 = vunpack.c.l.b16 %v119
  %v367 = vunpack.c.l.b16 %v120
  %v368 = vunpack.c.l.b16 %v121
  %v369 = vunpack.c.l.b16 %v122
  %v370 = vunpack.c.l.b16 %v123
  %v371 = vunpack.c.l.b16 %v124
  %v372 = vunpack.c.l.b16 %v125
  %v373 = vunpack.c.l.b16 %v126
  %v374 = vpack.c.b16 %v267, %v266
  %v375 = vpack.c.b16 %v269, %v268
  %v376 = vpack.c.b16 %v271, %v270
  %v377 = vpack.c.b16 %v273, %v272
  %v378 = vpack.c.b16 %v275, %v274
  %v379 = vpack.c.b16 %v277, %v276
  %v380 = vpack.c.b16 %v279, %v278
  %v381 = vpack.c.b16 %v281, %v280
  %v382 = vpack.c.b16 %v283, %v282
  %v383 = vpack.c.b16 %v285, %v284
  %v384 = vpack.c.b16 %v287, %v286
  %v385 = vpack.c.b16 %v289, %v288
  %v386 = vpack.c.b16 %v291, %v290
  %v387 = vpack.c.b16 %v293, %v292
  %v388 = vpack.c.b16 %v295, %v294
  %v389 = vpack.c.b16 %v297, %v296
  %v390 = vpack.c.b16 %v299, %v298
  %v391 = vpack.c.b16 %v301, %v300
  %v392 = vpack.c.b16 %v303, %v302
  %v393 = vpack.c.b16 %v305, %v304
  %v394 = vpack.c.b16 %v307, %v306
  %v395 = vpack.c.b16 %v309, %v308
  %v396 = vpack.c.b16 %v311, %v310
  %v397 = vpack.c.b16 %v313, %v312
  %v398 = vpack.c.b16 %v315, %v314
  %v399 = vpack.c.b16 %v317, %v316
  %v400 = vpack.c.b16 %v319, %v318
  %v401 = vpack.c.b16 %v321, %v320
  %v402 = vpack.c.b16 %v323, %v322
  %v403 = vpack.c.b16 %v325, %v324
  %v404 = vpack.c.b16 %v327, %v326
  %v405 = vpack.c.b16 %v329, %v328
  %v406 = vpack.c.b16 %v331, %v330
  %v407 = vpack.c.b16 %v333, %v332
  %v408 = vpack.c.b16 %v335, %v334
  %v409 = vpack.c.b16 %v337, %v336
  %v410 = vpack.c.b16 %v339, %v338
  %v411 = vpack.c.b16 %v341, %v340
  %v412 = vpack.c.b16 %v343, %v342
  %v413 = vpack.c.b16 %v345, %v344
  %v414 = vpack.c.b16 %v347, %v346
  %v415 = vpack.c.b16 %v349, %v348
  %v416 = vpack.c.b16 %v351, %v350
  %v417 = vpack.c.b16 %v353, %v352
  %v418 = vpack.c.b16 %v355, %v354
  %v419 = vpack.c.b16 %v357, %v356
  %v420 = vpack.c.b16 %v359, %v358
  %v421 = vpack.c.b16 %v361, %v360
  %v422 = vpack.c.b16 %v363, %v362
  %v423 = vpack.c.b16 %v365, %v364
  %v424 = vpack.c.b16 %v367, %v366
  %v425 = vpack.c.b16 %v369, %v368
  %v426 = vpack.c.b16 %v371, %v370
  %v427 = vpack.c.b16 %v373, %v372
  %vm482 = vcmask 785408
  %v484 = vsel %vm482, %v151, 0
  %486 = vmatprep.subr.bf16.mxu0 0
  %487 = vmatpush1.bf16.msra.mxu0 %v374
  %488 = vmatprep.subr.bf16.mxu0 0
  %489 = vmatpush1.bf16.msra.mxu0 %v375
  %490 = vmatprep.subr.bf16.mxu0 0
  %491 = vmatpush1.bf16.msra.mxu0 %v376
  %492 = vmatprep.subr.bf16.mxu0 0
  %493 = vmatpush1.bf16.msra.mxu0 %v377
  %494 = vmatprep.subr.bf16.mxu0 0
  %495 = vmatpush1.bf16.msra.mxu0 %v378
  %496 = vmatprep.subr.bf16.mxu0 0
  %497 = vmatpush1.bf16.msra.mxu0 %v379
  %498 = vmatprep.subr.bf16.mxu0 0
  %499 = vmatpush1.bf16.msra.mxu0 %v380
  %500 = vmatprep.subr.bf16.mxu0 0
  %501 = vmatpush1.bf16.msra.mxu0 %v381
  %502 = vmatprep.subr.bf16.mxu0 0
  %503 = vmatpush1.bf16.msra.mxu0 %v382
  %504 = vmatprep.subr.bf16.mxu0 0
  %505 = vmatpush1.bf16.msra.mxu0 %v383
  %506 = vmatprep.subr.bf16.mxu0 0
  %507 = vmatpush1.bf16.msra.mxu0 %v384
  %508 = vmatprep.subr.bf16.mxu0 0
  %509 = vmatpush1.bf16.msra.mxu0 %v385
  %510 = vmatprep.subr.bf16.mxu0 0
  %511 = vmatpush1.bf16.msra.mxu0 %v386
  %512 = vmatprep.subr.bf16.mxu0 0
  %513 = vmatpush1.bf16.msra.mxu0 %v387
  %514 = vmatprep.subr.bf16.mxu0 0
  %515 = vmatpush1.bf16.msra.mxu0 %v388
  %516 = vmatprep.subr.bf16.mxu0 0
  %517 = vmatpush1.bf16.msra.mxu0 %v389
  %518 = vmatprep.mubr.bf16.mxu0 %v146
  %519 = vmatmul.mubr.bf16.gmra.mrb[0].mxu0 %v145
  %v520 = vpop.f32.mrb[0].mxu0
  %v521 = vadd.f32 %v132, %v520
  %v522 = vpop.f32.mrb[0].mxu0
  %v523 = vpop.f32.mrb[0].mxu0
  %v524 = vpop.f32.mrb[0].mxu0
  %525 = vdwg.mxu0
  %526 = vmatprep.subr.bf16.mxu0 0
  %527 = vmatpush1.bf16.msra.mxu0 %v390
  %528 = vmatprep.subr.bf16.mxu0 0
  %529 = vmatpush1.bf16.msra.mxu0 %v391
  %530 = vmatprep.subr.bf16.mxu0 0
  %531 = vmatpush1.bf16.msra.mxu0 %v392
  %532 = vmatprep.subr.bf16.mxu0 0
  %533 = vmatpush1.bf16.msra.mxu0 %v393
  %534 = vmatprep.subr.bf16.mxu0 0
  %535 = vmatpush1.bf16.msra.mxu0 %v394
  %536 = vmatprep.subr.bf16.mxu0 0
  %537 = vmatpush1.bf16.msra.mxu0 %v395
  %538 = vmatprep.subr.bf16.mxu0 0
  %539 = vmatpush1.bf16.msra.mxu0 %v396
  %540 = vmatprep.subr.bf16.mxu0 0
  %541 = vmatpush1.bf16.msra.mxu0 %v397
  %542 = vmatprep.subr.bf16.mxu0 0
  %543 = vmatpush1.bf16.msra.mxu0 %v398
  %544 = vmatprep.subr.bf16.mxu0 0
  %545 = vmatpush1.bf16.msra.mxu0 %v399
  %546 = vmatprep.subr.bf16.mxu0 0
  %547 = vmatpush1.bf16.msra.mxu0 %v400
  %548 = vmatprep.subr.bf16.mxu0 0
  %549 = vmatpush1.bf16.msra.mxu0 %v401
  %550 = vmatprep.subr.bf16.mxu0 0
  %551 = vmatpush1.bf16.msra.mxu0 %v402
  %552 = vmatprep.subr.bf16.mxu0 0
  %553 = vmatpush1.bf16.msra.mxu0 %v403
  %554 = vmatprep.subr.bf16.mxu0 0
  %555 = vmatpush1.bf16.msra.mxu0 %v404
  %556 = vmatprep.subr.bf16.mxu0 0
  %557 = vmatpush1.bf16.msra.mxu0 %v405
  %558 = vmatprep.mubr.bf16.mxu0 %v148
  %559 = vmatmul.mubr.bf16.gmra.mrb[0].mxu0 %v147
  %v560 = vpop.f32.mrb[0].mxu0
  %v561 = vadd.f32 %v521, %v560
  %v562 = vpop.f32.mrb[0].mxu0
  %v563 = vpop.f32.mrb[0].mxu0
  %v564 = vpop.f32.mrb[0].mxu0
  %565 = vdwg.mxu0
  %566 = vmatprep.subr.bf16.mxu0 0
  %567 = vmatpush1.bf16.msra.mxu0 %v406
  %568 = vmatprep.subr.bf16.mxu0 0
  %569 = vmatpush1.bf16.msra.mxu0 %v407
  %570 = vmatprep.subr.bf16.mxu0 0
  %571 = vmatpush1.bf16.msra.mxu0 %v408
  %572 = vmatprep.subr.bf16.mxu0 0
  %573 = vmatpush1.bf16.msra.mxu0 %v409
  %574 = vmatprep.subr.bf16.mxu0 0
  %575 = vmatpush1.bf16.msra.mxu0 %v410
  %576 = vmatprep.subr.bf16.mxu0 0
  %577 = vmatpush1.bf16.msra.mxu0 %v411
  %578 = vmatprep.subr.bf16.mxu0 0
  %579 = vmatpush1.bf16.msra.mxu0 %v412
  %580 = vmatprep.subr.bf16.mxu0 0
  %581 = vmatpush1.bf16.msra.mxu0 %v413
  %582 = vmatprep.subr.bf16.mxu0 0
  %583 = vmatpush1.bf16.msra.mxu0 %v414
  %584 = vmatprep.subr.bf16.mxu0 0
  %585 = vmatpush1.bf16.msra.mxu0 %v415
  %586 = vmatprep.subr.bf16.mxu0 0
  %587 = vmatpush1.bf16.msra.mxu0 %v416
  %588 = vmatprep.subr.bf16.mxu0 0
  %589 = vmatpush1.bf16.msra.mxu0 %v417
  %590 = vmatprep.subr.bf16.mxu0 0
  %591 = vmatpush1.bf16.msra.mxu0 %v418
  %592 = vmatprep.subr.bf16.mxu0 0
  %593 = vmatpush1.bf16.msra.mxu0 %v419
  %594 = vmatprep.subr.bf16.mxu0 0
  %595 = vmatpush1.bf16.msra.mxu0 %v420
  %596 = vmatprep.subr.bf16.mxu0 0
  %597 = vmatpush1.bf16.msra.mxu0 %v421
  %598 = vmatprep.mubr.bf16.mxu0 %v150
  %599 = vmatmul.mubr.bf16.gmra.mrb[0].mxu0 %v149
  %v600 = vpop.f32.mrb[0].mxu0
  %v601 = vadd.f32 %v561, %v600
  %v602 = vpop.f32.mrb[0].mxu0
  %v603 = vpop.f32.mrb[0].mxu0
  %v604 = vpop.f32.mrb[0].mxu0
  %605 = vdwg.mxu0
  %606 = vmatprep.subr.bf16.mxu0 0
  %607 = vmatpush1.bf16.msra.mxu0 %v422
  %608 = vmatprep.subr.bf16.mxu0 0
  %609 = vmatpush1.bf16.msra.mxu0 %v423
  %610 = vmatprep.subr.bf16.mxu0 0
  %611 = vmatpush1.bf16.msra.mxu0 %v424
  %612 = vmatprep.subr.bf16.mxu0 0
  %613 = vmatpush1.bf16.msra.mxu0 %v425
  %614 = vmatprep.subr.bf16.mxu0 0
  %615 = vmatpush1.bf16.msra.mxu0 %v426
  %616 = vmatprep.subr.bf16.mxu0 0
  %617 = vmatpush1.bf16.msra.mxu0 %v427
  %618 = vmatprep.subr.bf16.mxu0 0
  %619 = vmatpush1.bf16.msra.mxu0 0
  %620 = vmatprep.subr.bf16.mxu0 0
  %621 = vmatpush1.bf16.msra.mxu0 0
  %622 = vmatprep.subr.bf16.mxu0 0
  %623 = vmatpush1.bf16.msra.mxu0 0
  %624 = vmatprep.subr.bf16.mxu0 0
  %625 = vmatpush1.bf16.msra.mxu0 0
  %626 = vmatprep.subr.bf16.mxu0 0
  %627 = vmatpush1.bf16.msra.mxu0 0
  %628 = vmatprep.subr.bf16.mxu0 0
  %629 = vmatpush1.bf16.msra.mxu0 0
  %630 = vmatprep.subr.bf16.mxu0 0
  %631 = vmatpush1.bf16.msra.mxu0 0
  %632 = vmatprep.subr.bf16.mxu0 0
  %633 = vmatpush1.bf16.msra.mxu0 0
  %634 = vmatprep.subr.bf16.mxu0 0
  %635 = vmatpush1.bf16.msra.mxu0 0
  %636 = vmatprep.subr.bf16.mxu0 0
  %637 = vmatpush1.bf16.msra.mxu0 0
  %638 = vmatprep.mubr.bf16.mxu0 0
  %639 = vmatmul.mubr.bf16.gmra.mrb[0].mxu0 %v484
  %v640 = vpop.f32.mrb[0].mxu0
  %v641 = vadd.f32 %v601, %v640
  %v642 = vpop.f32.mrb[0].mxu0
  %v643 = vpop.f32.mrb[0].mxu0
  %v644 = vpop.f32.mrb[0].mxu0
  %645 = vdwg.mxu0
  %v646 = vmax.f32 %v641, 0.0
  %v647 = vpack.c.bf16 %v646, %v646
  %648 = vst [vmem:[%s3] sm:$0xf] %v647
  // Predicated region
  $region14: #{fcn_forward.21} parent=0 // pred_check
    _
  $region15: #{fcn_forward.21} parent=0 // pred_check_branch
    %650 = sbr.rel (0) target = $region17
  $region16: #{fcn_forward.21} parent=0 // pred_region
    _
  $region17: #{fcn_forward.21} parent=0 // pred_fallthru
    _
  // Predicated region
  $region18: #{fcn_forward.21} parent=0 // pred_check
    _
  $region19: #{fcn_forward.21} parent=0 // pred_check_branch
    %652 = sbr.rel (0) target = $region21
  $region20: #{fcn_forward.21} parent=0 // pred_region
    _
  $region21: #{fcn_forward.21} parent=0 // pred_fallthru
    _

// kernel: fcn_forward.22
$region0: #{fcn_forward.22}
  #allocation0 [shape = 'u32[]', space=smem, size = 0x4, offset = 0x4, fixed_abs, tag = 'smem constant byte address 0x4 - core index']
  #allocation1 [shape = 'u32[144,128]{1,0:T(1,128)}', space=vmem, size = 0x12000, scoped, tag = 'internal scratch']
  %s0 = inlined_call_operand.vmem [shape: bf16[8,1152], index: 0, kind: input, shape index: {}]
  %s1 = inlined_call_operand.vmem [shape: bf16[1152,128], index: 1, kind: input, shape index: {}]
  %s2 = inlined_call_operand.vmem [shape: f32[1,128], index: 2, kind: input, shape index: {}]
  %s3 = inlined_call_operand.vmem [shape: bf16[8,128], index: 3, kind: output, shape index: {}]
  %s4 = sld [smem:[#allocation0]]
  $region22: #{fcn_forward.22} parent=0
    _
  %s6 = ssub.s32 1, %s4
  %s7 = scalar_select 0, %s6, %s4
  // Predicated region
  $region2: #{fcn_forward.22} parent=0 // pred_check
    _
  $region3: #{fcn_forward.22} parent=0 // pred_check_branch
    %9 = sbr.rel (0) target = $region5
  $region4: #{fcn_forward.22} parent=0 // pred_region
    _
  $region5: #{fcn_forward.22} parent=0 // pred_fallthru
    _
  // Predicated region
  $region6: #{fcn_forward.22} parent=0 // pred_check
    _
  $region7: #{fcn_forward.22} parent=0 // pred_check_branch
    %11 = sbr.rel (0) target = $region9
  $region8: #{fcn_forward.22} parent=0 // pred_region
    _
  $region9: #{fcn_forward.22} parent=0 // pred_fallthru
    _
  // Predicated region
  $region10: #{fcn_forward.22} parent=0 // pred_check
    _
  $region11: #{fcn_forward.22} parent=0 // pred_check_branch
    %13 = sbr.rel (0) target = $region13
  $region12: #{fcn_forward.22} parent=0 // pred_region
    _
  $region13: #{fcn_forward.22} parent=0 // pred_fallthru
    _
  %v15 = vld [vmem:[%s0] sm:$0xff]
  %v16 = vld [vmem:[%s0 + $0x8] sm:$0xff]
  %v17 = vld [vmem:[%s0 + $0x10] sm:$0xff]
  %v18 = vld [vmem:[%s0 + $0x18] sm:$0xff]
  %v19 = vld [vmem:[%s0 + $0x20] sm:$0xf]
  %v20 = vld [vmem:[%s1] sm:$0xf]
  %v21 = vld [vmem:[%s1 + $0x4] sm:$0xf]
  %v22 = vld [vmem:[%s1 + $0x8] sm:$0xf]
  %v23 = vld [vmem:[%s1 + $0xc] sm:$0xf]
  %v24 = vld [vmem:[%s1 + $0x10] sm:$0xf]
  %v25 = vld [vmem:[%s1 + $0x14] sm:$0xf]
  %v26 = vld [vmem:[%s1 + $0x18] sm:$0xf]
  %v27 = vld [vmem:[%s1 + $0x1c] sm:$0xf]
  %v28 = vld [vmem:[%s1 + $0x20] sm:$0xf]
  %v29 = vld [vmem:[%s1 + $0x24] sm:$0xf]
  %v30 = vld [vmem:[%s1 + $0x28] sm:$0xf]
  %v31 = vld [vmem:[%s1 + $0x2c] sm:$0xf]
  %v32 = vld [vmem:[%s1 + $0x30] sm:$0xf]
  %v33 = vld [vmem:[%s1 + $0x34] sm:$0xf]
  %v34 = vld [vmem:[%s1 + $0x38] sm:$0xf]
  %v35 = vld [vmem:[%s1 + $0x3c] sm:$0xf]
  %v36 = vld [vmem:[%s1 + $0x40] sm:$0xf]
  %v37 = vld [vmem:[%s1 + $0x44] sm:$0xf]
  %v38 = vld [vmem:[%s1 + $0x48] sm:$0xf]
  %v39 = vld [vmem:[%s1 + $0x4c] sm:$0xf]
  %v40 = vld [vmem:[%s1 + $0x50] sm:$0xf]
  %v41 = vld [vmem:[%s1 + $0x54] sm:$0xf]
  %v42 = vld [vmem:[%s1 + $0x58] sm:$0xf]
  %v43 = vld [vmem:[%s1 + $0x5c] sm:$0xf]
  %v44 = vld [vmem:[%s1 + $0x60] sm:$0xf]
  %v45 = vld [vmem:[%s1 + $0x64] sm:$0xf]
  %v46 = vld [vmem:[%s1 + $0x68] sm:$0xf]
  %v47 = vld [vmem:[%s1 + $0x6c] sm:$0xf]
  %v48 = vld [vmem:[%s1 + $0x70] sm:$0xf]
  %v49 = vld [vmem:[%s1 + $0x74] sm:$0xf]
  %v50 = vld [vmem:[%s1 + $0x78] sm:$0xf]
  %v51 = vld [vmem:[%s1 + $0x7c] sm:$0xf]
  %v52 = vld [vmem:[%s1 + $0x80] sm:$0xf]
  %v53 = vld [vmem:[%s1 + $0x84] sm:$0xf]
  %v54 = vld [vmem:[%s1 + $0x88] sm:$0xf]
  %v55 = vld [vmem:[%s1 + $0x8c] sm:$0xf]
  %v56 = vld [vmem:[%s1 + $0x90] sm:$0xf]
  %v57 = vld [vmem:[%s1 + $0x94] sm:$0xf]
  %v58 = vld [vmem:[%s1 + $0x98] sm:$0xf]
  %v59 = vld [vmem:[%s1 + $0x9c] sm:$0xf]
  %v60 = vld [vmem:[%s1 + $0xa0] sm:$0xf]
  %v61 = vld [vmem:[%s1 + $0xa4] sm:$0xf]
  %v62 = vld [vmem:[%s1 + $0xa8] sm:$0xf]
  %v63 = vld [vmem:[%s1 + $0xac] sm:$0xf]
  %v64 = vld [vmem:[%s1 + $0xb0] sm:$0xf]
  %v65 = vld [vmem:[%s1 + $0xb4] sm:$0xf]
  %v66 = vld [vmem:[%s1 + $0xb8] sm:$0xf]
  %v67 = vld [vmem:[%s1 + $0xbc] sm:$0xf]
  %v68 = vld [vmem:[%s1 + $0xc0] sm:$0xf]
  %v69 = vld [vmem:[%s1 + $0xc4] sm:$0xf]
  %v70 = vld [vmem:[%s1 + $0xc8] sm:$0xf]
  %v71 = vld [vmem:[%s1 + $0xcc] sm:$0xf]
  %v72 = vld [vmem:[%s1 + $0xd0] sm:$0xf]
  %v73 = vld [vmem:[%s1 + $0xd4] sm:$0xf]
  %v74 = vld [vmem:[%s1 + $0xd8] sm:$0xf]
  %v75 = vld [vmem:[%s1 + $0xdc] sm:$0xf]
  %v76 = vld [vmem:[%s1 + $0xe0] sm:$0xf]
  %v77 = vld [vmem:[%s1 + $0xe4] sm:$0xf]
  %v78 = vld [vmem:[%s1 + $0xe8] sm:$0xf]
  %v79 = vld [vmem:[%s1 + $0xec] sm:$0xf]
  %v80 = vld [vmem:[%s1 + $0xf0] sm:$0xf]
  %v81 = vld [vmem:[%s1 + $0xf4] sm:$0xf]
  %v82 = vld [vmem:[%s1 + $0xf8] sm:$0xf]
  %v83 = vld [vmem:[%s1 + $0xfc] sm:$0xf]
  %v84 = vld [vmem:[%s1 + $0x100] sm:$0xf]
  %v85 = vld [vmem:[%s1 + $0x104] sm:$0xf]
  %v86 = vld [vmem:[%s1 + $0x108] sm:$0xf]
  %v87 = vld [vmem:[%s1 + $0x10c] sm:$0xf]
  %v88 = vld [vmem:[%s1 + $0x110] sm:$0xf]
  %v89 = vld [vmem:[%s1 + $0x114] sm:$0xf]
  %v90 = vld [vmem:[%s1 + $0x118] sm:$0xf]
  %v91 = vld [vmem:[%s1 + $0x11c] sm:$0xf]
  %v92 = vld [vmem:[%s1 + $0x120] sm:$0xf]
  %v93 = vld [vmem:[%s1 + $0x124] sm:$0xf]
  %v94 = vld [vmem:[%s1 + $0x128] sm:$0xf]
  %v95 = vld [vmem:[%s1 + $0x12c] sm:$0xf]
  %v96 = vld [vmem:[%s1 + $0x130] sm:$0xf]
  %v97 = vld [vmem:[%s1 + $0x134] sm:$0xf]
  %v98 = vld [vmem:[%s1 + $0x138] sm:$0xf]
  %v99 = vld [vmem:[%s1 + $0x13c] sm:$0xf]
  %v100 = vld [vmem:[%s1 + $0x140] sm:$0xf]
  %v101 = vld [vmem:[%s1 + $0x144] sm:$0xf]
  %v102 = vld [vmem:[%s1 + $0x148] sm:$0xf]
  %v103 = vld [vmem:[%s1 + $0x14c] sm:$0xf]
  %v104 = vld [vmem:[%s1 + $0x150] sm:$0xf]
  %v105 = vld [vmem:[%s1 + $0x154] sm:$0xf]
  %v106 = vld [vmem:[%s1 + $0x158] sm:$0xf]
  %v107 = vld [vmem:[%s1 + $0x15c] sm:$0xf]
  %v108 = vld [vmem:[%s1 + $0x160] sm:$0xf]
  %v109 = vld [vmem:[%s1 + $0x164] sm:$0xf]
  %v110 = vld [vmem:[%s1 + $0x168] sm:$0xf]
  %v111 = vld [vmem:[%s1 + $0x16c] sm:$0xf]
  %v112 = vld [vmem:[%s1 + $0x170] sm:$0xf]
  %v113 = vld [vmem:[%s1 + $0x174] sm:$0xf]
  %v114 = vld [vmem:[%s1 + $0x178] sm:$0xf]
  %v115 = vld [vmem:[%s1 + $0x17c] sm:$0xf]
  %v116 = vld [vmem:[%s1 + $0x180] sm:$0xf]
  %v117 = vld [vmem:[%s1 + $0x184] sm:$0xf]
  %v118 = vld [vmem:[%s1 + $0x188] sm:$0xf]
  %v119 = vld [vmem:[%s1 + $0x18c] sm:$0xf]
  %v120 = vld [vmem:[%s1 + $0x190] sm:$0xf]
  %v121 = vld [vmem:[%s1 + $0x194] sm:$0xf]
  %v122 = vld [vmem:[%s1 + $0x198] sm:$0xf]
  %v123 = vld [vmem:[%s1 + $0x19c] sm:$0xf]
  %v124 = vld [vmem:[%s1 + $0x1a0] sm:$0xf]
  %v125 = vld [vmem:[%s1 + $0x1a4] sm:$0xf]
  %v126 = vld [vmem:[%s1 + $0x1a8] sm:$0xf]
  %v127 = vld [vmem:[%s1 + $0x1ac] sm:$0xf]
  %v128 = vld [vmem:[%s1 + $0x1b0] sm:$0xf]
  %v129 = vld [vmem:[%s1 + $0x1b4] sm:$0xf]
  %v130 = vld [vmem:[%s1 + $0x1b8] sm:$0xf]
  %v131 = vld [vmem:[%s1 + $0x1bc] sm:$0xf]
  %v132 = vld [vmem:[%s1 + $0x1c0] sm:$0xf]
  %v133 = vld [vmem:[%s1 + $0x1c4] sm:$0xf]
  %v134 = vld [vmem:[%s1 + $0x1c8] sm:$0xf]
  %v135 = vld [vmem:[%s1 + $0x1cc] sm:$0xf]
  %v136 = vld [vmem:[%s1 + $0x1d0] sm:$0xf]
  %v137 = vld [vmem:[%s1 + $0x1d4] sm:$0xf]
  %v138 = vld [vmem:[%s1 + $0x1d8] sm:$0xf]
  %v139 = vld [vmem:[%s1 + $0x1dc] sm:$0xf]
  %v140 = vld [vmem:[%s1 + $0x1e0] sm:$0xf]
  %v141 = vld [vmem:[%s1 + $0x1e4] sm:$0xf]
  %v142 = vld [vmem:[%s1 + $0x1e8] sm:$0xf]
  %v143 = vld [vmem:[%s1 + $0x1ec] sm:$0xf]
  %v144 = vld [vmem:[%s1 + $0x1f0] sm:$0xf]
  %v145 = vld [vmem:[%s1 + $0x1f4] sm:$0xf]
  %v146 = vld [vmem:[%s1 + $0x1f8] sm:$0xf]
  %v147 = vld [vmem:[%s1 + $0x1fc] sm:$0xf]
  %v148 = vld [vmem:[%s1 + $0x200] sm:$0xf]
  %v149 = vld [vmem:[%s1 + $0x204] sm:$0xf]
  %v150 = vld [vmem:[%s1 + $0x208] sm:$0xf]
  %v151 = vld [vmem:[%s1 + $0x20c] sm:$0xf]
  %v152 = vld [vmem:[%s1 + $0x210] sm:$0xf]
  %v153 = vld [vmem:[%s1 + $0x214] sm:$0xf]
  %v154 = vld [vmem:[%s1 + $0x218] sm:$0xf]
  %v155 = vld [vmem:[%s1 + $0x21c] sm:$0xf]
  %v156 = vld [vmem:[%s1 + $0x220] sm:$0xf]
  %v157 = vld [vmem:[%s1 + $0x224] sm:$0xf]
  %v158 = vld [vmem:[%s1 + $0x228] sm:$0xf]
  %v159 = vld [vmem:[%s1 + $0x22c] sm:$0xf]
  %v160 = vld [vmem:[%s1 + $0x230] sm:$0xf]
  %v161 = vld [vmem:[%s1 + $0x234] sm:$0xf]
  %v162 = vld [vmem:[%s1 + $0x238] sm:$0xf]
  %v163 = vld [vmem:[%s1 + $0x23c] sm:$0xf]
  %v164 = vld [vmem:[%s2] sm:$0x1]
  %v166 = vlaneseq
  %v167 = vshrl.u32 %v166, 7
  %v168 = vsub.s32 0, %v167
  %v169 = vrot.slane %v164, %v168
  %v176 = vunpack.c.l.b16 %v15
  %v177 = vunpack.c.h.b16 %v15
  %v178 = vunpack.c.l.b16 %v16
  %v179 = vunpack.c.h.b16 %v16
  %v180 = vunpack.c.l.b16 %v17
  %v181 = vunpack.c.h.b16 %v17
  %v182 = vunpack.c.l.b16 %v18
  %v183 = vunpack.c.h.b16 %v18
  %v184 = vunpack.c.l.b16 %v19
  %v185 = vpack.c.b16 %v176, %v176
  %v186 = vpack.c.b16 %v177, %v177
  %v187 = vpack.c.b16 %v178, %v178
  %v188 = vpack.c.b16 %v179, %v179
  %v189 = vpack.c.b16 %v180, %v180
  %v190 = vpack.c.b16 %v181, %v181
  %v191 = vpack.c.b16 %v182, %v182
  %v192 = vpack.c.b16 %v183, %v183
  %v193 = vpack.c.b16 %v184, %v184
  %v347 = vunpack.c.l.b16 %v20
  %v348 = vunpack.c.l.b16 %v21
  %v349 = vunpack.c.l.b16 %v22
  %v350 = vunpack.c.l.b16 %v23
  %v351 = vunpack.c.l.b16 %v24
  %v352 = vunpack.c.l.b16 %v25
  %v353 = vunpack.c.l.b16 %v26
  %v354 = vunpack.c.l.b16 %v27
  %v355 = vunpack.c.l.b16 %v28
  %v356 = vunpack.c.l.b16 %v29
  %v357 = vunpack.c.l.b16 %v30
  %v358 = vunpack.c.l.b16 %v31
  %v359 = vunpack.c.l.b16 %v32
  %v360 = vunpack.c.l.b16 %v33
  %v361 = vunpack.c.l.b16 %v34
  %v362 = vunpack.c.l.b16 %v35
  %v363 = vunpack.c.l.b16 %v36
  %v364 = vunpack.c.l.b16 %v37
  %v365 = vunpack.c.l.b16 %v38
  %v366 = vunpack.c.l.b16 %v39
  %v367 = vunpack.c.l.b16 %v40
  %v368 = vunpack.c.l.b16 %v41
  %v369 = vunpack.c.l.b16 %v42
  %v370 = vunpack.c.l.b16 %v43
  %v371 = vunpack.c.l.b16 %v44
  %v372 = vunpack.c.l.b16 %v45
  %v373 = vunpack.c.l.b16 %v46
  %v374 = vunpack.c.l.b16 %v47
  %v375 = vunpack.c.l.b16 %v48
  %v376 = vunpack.c.l.b16 %v49
  %v377 = vunpack.c.l.b16 %v50
  %v378 = vunpack.c.l.b16 %v51
  %v379 = vunpack.c.l.b16 %v52
  %v380 = vunpack.c.l.b16 %v53
  %v381 = vunpack.c.l.b16 %v54
  %v382 = vunpack.c.l.b16 %v55
  %v383 = vunpack.c.l.b16 %v56
  %v384 = vunpack.c.l.b16 %v57
  %v385 = vunpack.c.l.b16 %v58
  %v386 = vunpack.c.l.b16 %v59
  %v387 = vunpack.c.l.b16 %v60
  %v388 = vunpack.c.l.b16 %v61
  %v389 = vunpack.c.l.b16 %v62
  %v390 = vunpack.c.l.b16 %v63
  %v391 = vunpack.c.l.b16 %v64
  %v392 = vunpack.c.l.b16 %v65
  %v393 = vunpack.c.l.b16 %v66
  %v394 = vunpack.c.l.b16 %v67
  %v395 = vunpack.c.l.b16 %v68
  %v396 = vunpack.c.l.b16 %v69
  %v397 = vunpack.c.l.b16 %v70
  %v398 = vunpack.c.l.b16 %v71
  %v399 = vunpack.c.l.b16 %v72
  %v400 = vunpack.c.l.b16 %v73
  %v401 = vunpack.c.l.b16 %v74
  %v402 = vunpack.c.l.b16 %v75
  %v403 = vunpack.c.l.b16 %v76
  %v404 = vunpack.c.l.b16 %v77
  %v405 = vunpack.c.l.b16 %v78
  %v406 = vunpack.c.l.b16 %v79
  %v407 = vunpack.c.l.b16 %v80
  %v408 = vunpack.c.l.b16 %v81
  %v409 = vunpack.c.l.b16 %v82
  %v410 = vunpack.c.l.b16 %v83
  %v411 = vunpack.c.l.b16 %v84
  %v412 = vunpack.c.l.b16 %v85
  %v413 = vunpack.c.l.b16 %v86
  %v414 = vunpack.c.l.b16 %v87
  %v415 = vunpack.c.l.b16 %v88
  %v416 = vunpack.c.l.b16 %v89
  %v417 = vunpack.c.l.b16 %v90
  %v418 = vunpack.c.l.b16 %v91
  %v419 = vunpack.c.l.b16 %v92
  %v420 = vunpack.c.l.b16 %v93
  %v421 = vunpack.c.l.b16 %v94
  %v422 = vunpack.c.l.b16 %v95
  %v423 = vunpack.c.l.b16 %v96
  %v424 = vunpack.c.l.b16 %v97
  %v425 = vunpack.c.l.b16 %v98
  %v426 = vunpack.c.l.b16 %v99
  %v427 = vunpack.c.l.b16 %v100
  %v428 = vunpack.c.l.b16 %v101
  %v429 = vunpack.c.l.b16 %v102
  %v430 = vunpack.c.l.b16 %v103
  %v431 = vunpack.c.l.b16 %v104
  %v432 = vunpack.c.l.b16 %v105
  %v433 = vunpack.c.l.b16 %v106
  %v434 = vunpack.c.l.b16 %v107
  %v435 = vunpack.c.l.b16 %v108
  %v436 = vunpack.c.l.b16 %v109
  %v437 = vunpack.c.l.b16 %v110
  %v438 = vunpack.c.l.b16 %v111
  %v439 = vunpack.c.l.b16 %v112
  %v440 = vunpack.c.l.b16 %v113
  %v441 = vunpack.c.l.b16 %v114
  %v442 = vunpack.c.l.b16 %v115
  %v443 = vunpack.c.l.b16 %v116
  %v444 = vunpack.c.l.b16 %v117
  %v445 = vunpack.c.l.b16 %v118
  %v446 = vunpack.c.l.b16 %v119
  %v447 = vunpack.c.l.b16 %v120
  %v448 = vunpack.c.l.b16 %v121
  %v449 = vunpack.c.l.b16 %v122
  %v450 = vunpack.c.l.b16 %v123
  %v451 = vunpack.c.l.b16 %v124
  %v452 = vunpack.c.l.b16 %v125
  %v453 = vunpack.c.l.b16 %v126
  %v454 = vunpack.c.l.b16 %v127
  %v455 = vunpack.c.l.b16 %v128
  %v456 = vunpack.c.l.b16 %v129
  %v457 = vunpack.c.l.b16 %v130
  %v458 = vunpack.c.l.b16 %v131
  %v459 = vunpack.c.l.b16 %v132
  %v460 = vunpack.c.l.b16 %v133
  %v461 = vunpack.c.l.b16 %v134
  %v462 = vunpack.c.l.b16 %v135
  %v463 = vunpack.c.l.b16 %v136
  %v464 = vunpack.c.l.b16 %v137
  %v465 = vunpack.c.l.b16 %v138
  %v466 = vunpack.c.l.b16 %v139
  %v467 = vunpack.c.l.b16 %v140
  %v468 = vunpack.c.l.b16 %v141
  %v469 = vunpack.c.l.b16 %v142
  %v470 = vunpack.c.l.b16 %v143
  %v471 = vunpack.c.l.b16 %v144
  %v472 = vunpack.c.l.b16 %v145
  %v473 = vunpack.c.l.b16 %v146
  %v474 = vunpack.c.l.b16 %v147
  %v475 = vunpack.c.l.b16 %v148
  %v476 = vunpack.c.l.b16 %v149
  %v477 = vunpack.c.l.b16 %v150
  %v478 = vunpack.c.l.b16 %v151
  %v479 = vunpack.c.l.b16 %v152
  %v480 = vunpack.c.l.b16 %v153
  %v481 = vunpack.c.l.b16 %v154
  %v482 = vunpack.c.l.b16 %v155
  %v483 = vunpack.c.l.b16 %v156
  %v484 = vunpack.c.l.b16 %v157
  %v485 = vunpack.c.l.b16 %v158
  %v486 = vunpack.c.l.b16 %v159
  %v487 = vunpack.c.l.b16 %v160
  %v488 = vunpack.c.l.b16 %v161
  %v489 = vunpack.c.l.b16 %v162
  %v490 = vunpack.c.l.b16 %v163
  %v491 = vpack.c.b16 %v348, %v347
  %v492 = vpack.c.b16 %v350, %v349
  %v493 = vpack.c.b16 %v352, %v351
  %v494 = vpack.c.b16 %v354, %v353
  %v495 = vpack.c.b16 %v356, %v355
  %v496 = vpack.c.b16 %v358, %v357
  %v497 = vpack.c.b16 %v360, %v359
  %v498 = vpack.c.b16 %v362, %v361
  %v499 = vpack.c.b16 %v364, %v363
  %v500 = vpack.c.b16 %v366, %v365
  %v501 = vpack.c.b16 %v368, %v367
  %v502 = vpack.c.b16 %v370, %v369
  %v503 = vpack.c.b16 %v372, %v371
  %v504 = vpack.c.b16 %v374, %v373
  %v505 = vpack.c.b16 %v376, %v375
  %v506 = vpack.c.b16 %v378, %v377
  %v507 = vpack.c.b16 %v380, %v379
  %v508 = vpack.c.b16 %v382, %v381
  %v509 = vpack.c.b16 %v384, %v383
  %v510 = vpack.c.b16 %v386, %v385
  %v511 = vpack.c.b16 %v388, %v387
  %v512 = vpack.c.b16 %v390, %v389
  %v513 = vpack.c.b16 %v392, %v391
  %v514 = vpack.c.b16 %v394, %v393
  %v515 = vpack.c.b16 %v396, %v395
  %v516 = vpack.c.b16 %v398, %v397
  %v517 = vpack.c.b16 %v400, %v399
  %v518 = vpack.c.b16 %v402, %v401
  %v519 = vpack.c.b16 %v404, %v403
  %v520 = vpack.c.b16 %v406, %v405
  %v521 = vpack.c.b16 %v408, %v407
  %v522 = vpack.c.b16 %v410, %v409
  %v523 = vpack.c.b16 %v412, %v411
  %v524 = vpack.c.b16 %v414, %v413
  %v525 = vpack.c.b16 %v416, %v415
  %v526 = vpack.c.b16 %v418, %v417
  %v527 = vpack.c.b16 %v420, %v419
  %v528 = vpack.c.b16 %v422, %v421
  %v529 = vpack.c.b16 %v424, %v423
  %v530 = vpack.c.b16 %v426, %v425
  %v531 = vpack.c.b16 %v428, %v427
  %v532 = vpack.c.b16 %v430, %v429
  %v533 = vpack.c.b16 %v432, %v431
  %v534 = vpack.c.b16 %v434, %v433
  %v535 = vpack.c.b16 %v436, %v435
  %v536 = vpack.c.b16 %v438, %v437
  %v537 = vpack.c.b16 %v440, %v439
  %v538 = vpack.c.b16 %v442, %v441
  %v539 = vpack.c.b16 %v444, %v443
  %v540 = vpack.c.b16 %v446, %v445
  %v541 = vpack.c.b16 %v448, %v447
  %v542 = vpack.c.b16 %v450, %v449
  %v543 = vpack.c.b16 %v452, %v451
  %v544 = vpack.c.b16 %v454, %v453
  %v545 = vpack.c.b16 %v456, %v455
  %v546 = vpack.c.b16 %v458, %v457
  %v547 = vpack.c.b16 %v460, %v459
  %v548 = vpack.c.b16 %v462, %v461
  %v549 = vpack.c.b16 %v464, %v463
  %v550 = vpack.c.b16 %v466, %v465
  %v551 = vpack.c.b16 %v468, %v467
  %v552 = vpack.c.b16 %v470, %v469
  %v553 = vpack.c.b16 %v472, %v471
  %v554 = vpack.c.b16 %v474, %v473
  %v555 = vpack.c.b16 %v476, %v475
  %v556 = vpack.c.b16 %v478, %v477
  %v557 = vpack.c.b16 %v480, %v479
  %v558 = vpack.c.b16 %v482, %v481
  %v559 = vpack.c.b16 %v484, %v483
  %v560 = vpack.c.b16 %v486, %v485
  %v561 = vpack.c.b16 %v488, %v487
  %v562 = vpack.c.b16 %v490, %v489
  %635 = vmatprep.subr.bf16.mxu0 0
  %636 = vmatpush1.bf16.msra.mxu0 %v491
  %637 = vmatprep.subr.bf16.mxu0 0
  %638 = vmatpush1.bf16.msra.mxu0 %v492
  %639 = vmatprep.subr.bf16.mxu0 0
  %640 = vmatpush1.bf16.msra.mxu0 %v493
  %641 = vmatprep.subr.bf16.mxu0 0
  %642 = vmatpush1.bf16.msra.mxu0 %v494
  %643 = vmatprep.subr.bf16.mxu0 0
  %644 = vmatpush1.bf16.msra.mxu0 %v495
  %645 = vmatprep.subr.bf16.mxu0 0
  %646 = vmatpush1.bf16.msra.mxu0 %v496
  %647 = vmatprep.subr.bf16.mxu0 0
  %648 = vmatpush1.bf16.msra.mxu0 %v497
  %649 = vmatprep.subr.bf16.mxu0 0
  %650 = vmatpush1.bf16.msra.mxu0 %v498
  %651 = vmatprep.subr.bf16.mxu0 0
  %652 = vmatpush1.bf16.msra.mxu0 %v499
  %653 = vmatprep.subr.bf16.mxu0 0
  %654 = vmatpush1.bf16.msra.mxu0 %v500
  %655 = vmatprep.subr.bf16.mxu0 0
  %656 = vmatpush1.bf16.msra.mxu0 %v501
  %657 = vmatprep.subr.bf16.mxu0 0
  %658 = vmatpush1.bf16.msra.mxu0 %v502
  %659 = vmatprep.subr.bf16.mxu0 0
  %660 = vmatpush1.bf16.msra.mxu0 %v503
  %661 = vmatprep.subr.bf16.mxu0 0
  %662 = vmatpush1.bf16.msra.mxu0 %v504
  %663 = vmatprep.subr.bf16.mxu0 0
  %664 = vmatpush1.bf16.msra.mxu0 %v505
  %665 = vmatprep.subr.bf16.mxu0 0
  %666 = vmatpush1.bf16.msra.mxu0 %v506
  %667 = vmatprep.mubr.bf16.mxu0 %v186
  %668 = vmatmul.mubr.bf16.gmra.mrb[0].mxu0 %v185
  %v669 = vpop.f32.mrb[0].mxu0
  %v670 = vadd.f32 %v169, %v669
  %v671 = vpop.f32.mrb[0].mxu0
  %v672 = vpop.f32.mrb[0].mxu0
  %v673 = vpop.f32.mrb[0].mxu0
  %674 = vdwg.mxu0
  %675 = vmatprep.subr.bf16.mxu0 0
  %676 = vmatpush1.bf16.msra.mxu0 %v507
  %677 = vmatprep.subr.bf16.mxu0 0
  %678 = vmatpush1.bf16.msra.mxu0 %v508
  %679 = vmatprep.subr.bf16.mxu0 0
  %680 = vmatpush1.bf16.msra.mxu0 %v509
  %681 = vmatprep.subr.bf16.mxu0 0
  %682 = vmatpush1.bf16.msra.mxu0 %v510
  %683 = vmatprep.subr.bf16.mxu0 0
  %684 = vmatpush1.bf16.msra.mxu0 %v511
  %685 = vmatprep.subr.bf16.mxu0 0
  %686 = vmatpush1.bf16.msra.mxu0 %v512
  %687 = vmatprep.subr.bf16.mxu0 0
  %688 = vmatpush1.bf16.msra.mxu0 %v513
  %689 = vmatprep.subr.bf16.mxu0 0
  %690 = vmatpush1.bf16.msra.mxu0 %v514
  %691 = vmatprep.subr.bf16.mxu0 0
  %692 = vmatpush1.bf16.msra.mxu0 %v515
  %693 = vmatprep.subr.bf16.mxu0 0
  %694 = vmatpush1.bf16.msra.mxu0 %v516
  %695 = vmatprep.subr.bf16.mxu0 0
  %696 = vmatpush1.bf16.msra.mxu0 %v517
  %697 = vmatprep.subr.bf16.mxu0 0
  %698 = vmatpush1.bf16.msra.mxu0 %v518
  %699 = vmatprep.subr.bf16.mxu0 0
  %700 = vmatpush1.bf16.msra.mxu0 %v519
  %701 = vmatprep.subr.bf16.mxu0 0
  %702 = vmatpush1.bf16.msra.mxu0 %v520
  %703 = vmatprep.subr.bf16.mxu0 0
  %704 = vmatpush1.bf16.msra.mxu0 %v521
  %705 = vmatprep.subr.bf16.mxu0 0
  %706 = vmatpush1.bf16.msra.mxu0 %v522
  %707 = vmatprep.mubr.bf16.mxu0 %v188
  %708 = vmatmul.mubr.bf16.gmra.mrb[0].mxu0 %v187
  %v709 = vpop.f32.mrb[0].mxu0
  %v710 = vadd.f32 %v670, %v709
  %v711 = vpop.f32.mrb[0].mxu0
  %v712 = vpop.f32.mrb[0].mxu0
  %v713 = vpop.f32.mrb[0].mxu0
  %714 = vdwg.mxu0
  %715 = vmatprep.subr.bf16.mxu0 0
  %716 = vmatpush1.bf16.msra.mxu0 %v523
  %717 = vmatprep.subr.bf16.mxu0 0
  %718 = vmatpush1.bf16.msra.mxu0 %v524
  %719 = vmatprep.subr.bf16.mxu0 0
  %720 = vmatpush1.bf16.msra.mxu0 %v525
  %721 = vmatprep.subr.bf16.mxu0 0
  %722 = vmatpush1.bf16.msra.mxu0 %v526
  %723 = vmatprep.subr.bf16.mxu0 0
  %724 = vmatpush1.bf16.msra.mxu0 %v527
  %725 = vmatprep.subr.bf16.mxu0 0
  %726 = vmatpush1.bf16.msra.mxu0 %v528
  %727 = vmatprep.subr.bf16.mxu0 0
  %728 = vmatpush1.bf16.msra.mxu0 %v529
  %729 = vmatprep.subr.bf16.mxu0 0
  %730 = vmatpush1.bf16.msra.mxu0 %v530
  %731 = vmatprep.subr.bf16.mxu0 0
  %732 = vmatpush1.bf16.msra.mxu0 %v531
  %733 = vmatprep.subr.bf16.mxu0 0
  %734 = vmatpush1.bf16.msra.mxu0 %v532
  %735 = vmatprep.subr.bf16.mxu0 0
  %736 = vmatpush1.bf16.msra.mxu0 %v533
  %737 = vmatprep.subr.bf16.mxu0 0
  %738 = vmatpush1.bf16.msra.mxu0 %v534
  %739 = vmatprep.subr.bf16.mxu0 0
  %740 = vmatpush1.bf16.msra.mxu0 %v535
  %741 = vmatprep.subr.bf16.mxu0 0
  %742 = vmatpush1.bf16.msra.mxu0 %v536
  %743 = vmatprep.subr.bf16.mxu0 0
  %744 = vmatpush1.bf16.msra.mxu0 %v537
  %745 = vmatprep.subr.bf16.mxu0 0
  %746 = vmatpush1.bf16.msra.mxu0 %v538
  %747 = vmatprep.mubr.bf16.mxu0 %v190
  %748 = vmatmul.mubr.bf16.gmra.mrb[0].mxu0 %v189
  %v749 = vpop.f32.mrb[0].mxu0
  %v750 = vadd.f32 %v710, %v749
  %v751 = vpop.f32.mrb[0].mxu0
  %v752 = vpop.f32.mrb[0].mxu0
  %v753 = vpop.f32.mrb[0].mxu0
  %754 = vdwg.mxu0
  %755 = vmatprep.subr.bf16.mxu0 0
  %756 = vmatpush1.bf16.msra.mxu0 %v539
  %757 = vmatprep.subr.bf16.mxu0 0
  %758 = vmatpush1.bf16.msra.mxu0 %v540
  %759 = vmatprep.subr.bf16.mxu0 0
  %760 = vmatpush1.bf16.msra.mxu0 %v541
  %761 = vmatprep.subr.bf16.mxu0 0
  %762 = vmatpush1.bf16.msra.mxu0 %v542
  %763 = vmatprep.subr.bf16.mxu0 0
  %764 = vmatpush1.bf16.msra.mxu0 %v543
  %765 = vmatprep.subr.bf16.mxu0 0
  %766 = vmatpush1.bf16.msra.mxu0 %v544
  %767 = vmatprep.subr.bf16.mxu0 0
  %768 = vmatpush1.bf16.msra.mxu0 %v545
  %769 = vmatprep.subr.bf16.mxu0 0
  %770 = vmatpush1.bf16.msra.mxu0 %v546
  %771 = vmatprep.subr.bf16.mxu0 0
  %772 = vmatpush1.bf16.msra.mxu0 %v547
  %773 = vmatprep.subr.bf16.mxu0 0
  %774 = vmatpush1.bf16.msra.mxu0 %v548
  %775 = vmatprep.subr.bf16.mxu0 0
  %776 = vmatpush1.bf16.msra.mxu0 %v549
  %777 = vmatprep.subr.bf16.mxu0 0
  %778 = vmatpush1.bf16.msra.mxu0 %v550
  %779 = vmatprep.subr.bf16.mxu0 0
  %780 = vmatpush1.bf16.msra.mxu0 %v551
  %781 = vmatprep.subr.bf16.mxu0 0
  %782 = vmatpush1.bf16.msra.mxu0 %v552
  %783 = vmatprep.subr.bf16.mxu0 0
  %784 = vmatpush1.bf16.msra.mxu0 %v553
  %785 = vmatprep.subr.bf16.mxu0 0
  %786 = vmatpush1.bf16.msra.mxu0 %v554
  %787 = vmatprep.mubr.bf16.mxu0 %v192
  %788 = vmatmul.mubr.bf16.gmra.mrb[0].mxu0 %v191
  %v789 = vpop.f32.mrb[0].mxu0
  %v790 = vadd.f32 %v750, %v789
  %v791 = vpop.f32.mrb[0].mxu0
  %v792 = vpop.f32.mrb[0].mxu0
  %v793 = vpop.f32.mrb[0].mxu0
  %794 = vdwg.mxu0
  %795 = vmatprep.subr.bf16.mxu0 0
  %796 = vmatpush1.bf16.msra.mxu0 %v555
  %797 = vmatprep.subr.bf16.mxu0 0
  %798 = vmatpush1.bf16.msra.mxu0 %v556
  %799 = vmatprep.subr.bf16.mxu0 0
  %800 = vmatpush1.bf16.msra.mxu0 %v557
  %801 = vmatprep.subr.bf16.mxu0 0
  %802 = vmatpush1.bf16.msra.mxu0 %v558
  %803 = vmatprep.subr.bf16.mxu0 0
  %804 = vmatpush1.bf16.msra.mxu0 %v559
  %805 = vmatprep.subr.bf16.mxu0 0
  %806 = vmatpush1.bf16.msra.mxu0 %v560
  %807 = vmatprep.subr.bf16.mxu0 0
  %808 = vmatpush1.bf16.msra.mxu0 %v561
  %809 = vmatprep.subr.bf16.mxu0 0
  %810 = vmatpush1.bf16.msra.mxu0 %v562
  %811 = vmatprep.subr.bf16.mxu0 0
  %812 = vmatpush1.bf16.msra.mxu0 0
  %813 = vmatprep.subr.bf16.mxu0 0
  %814 = vmatpush1.bf16.msra.mxu0 0
  %815 = vmatprep.subr.bf16.mxu0 0
  %816 = vmatpush1.bf16.msra.mxu0 0
  %817 = vmatprep.subr.bf16.mxu0 0
  %818 = vmatpush1.bf16.msra.mxu0 0
  %819 = vmatprep.subr.bf16.mxu0 0
  %820 = vmatpush1.bf16.msra.mxu0 0
  %821 = vmatprep.subr.bf16.mxu0 0
  %822 = vmatpush1.bf16.msra.mxu0 0
  %823 = vmatprep.subr.bf16.mxu0 0
  %824 = vmatpush1.bf16.msra.mxu0 0
  %825 = vmatprep.subr.bf16.mxu0 0
  %826 = vmatpush1.bf16.msra.mxu0 0
  %827 = vmatprep.mubr.bf16.mxu0 0
  %828 = vmatmul.mubr.bf16.gmra.mrb[0].mxu0 %v193
  %v829 = vpop.f32.mrb[0].mxu0
  %v830 = vadd.f32 %v790, %v829
  %v831 = vpop.f32.mrb[0].mxu0
  %v832 = vpop.f32.mrb[0].mxu0
  %v833 = vpop.f32.mrb[0].mxu0
  %834 = vdwg.mxu0
  %v835 = vmax.f32 %v830, 0.0
  %v836 = vpack.c.bf16 %v835, %v835
  %837 = vst [vmem:[%s3] sm:$0xf] %v836
  // Predicated region
  $region14: #{fcn_forward.22} parent=0 // pred_check
    _
  $region15: #{fcn_forward.22} parent=0 // pred_check_branch
    %839 = sbr.rel (0) target = $region17
  $region16: #{fcn_forward.22} parent=0 // pred_region
    _
  $region17: #{fcn_forward.22} parent=0 // pred_fallthru
    _
  // Predicated region
  $region18: #{fcn_forward.22} parent=0 // pred_check
    _
  $region19: #{fcn_forward.22} parent=0 // pred_check_branch
    %841 = sbr.rel (0) target = $region21
  $region20: #{fcn_forward.22} parent=0 // pred_region
    _
  $region21: #{fcn_forward.22} parent=0 // pred_fallthru
    _

// kernel: fcn_forward.23
$region0: #{fcn_forward.23}
  #allocation0 [shape = 'u32[]', space=smem, size = 0x4, offset = 0x4, fixed_abs, tag = 'smem constant byte address 0x4 - core index']
  #allocation1 [shape = 'u32[144,128]{1,0:T(1,128)}', space=vmem, size = 0x12000, scoped, tag = 'internal scratch']
  %s0 = inlined_call_operand.vmem [shape: bf16[8,2048], index: 0, kind: input, shape index: {}]
  %s1 = inlined_call_operand.vmem [shape: bf16[8,1024], index: 1, kind: input, shape index: {}]
  %s2 = inlined_call_operand.vmem [shape: bf16[8,384], index: 2, kind: input, shape index: {}]
  %s3 = inlined_call_operand.vmem [shape: bf16[8,128], index: 3, kind: input, shape index: {}]
  %s4 = inlined_call_operand.vmem [shape: bf16[2048,256], index: 4, kind: input, shape index: {}]
  %s5 = inlined_call_operand.vmem [shape: bf16[1024,256], index: 5, kind: input, shape index: {}]
  %s6 = inlined_call_operand.vmem [shape: bf16[384,256], index: 6, kind: input, shape index: {}]
  %s7 = inlined_call_operand.vmem [shape: bf16[128,256], index: 7, kind: input, shape index: {}]
  %s8 = inlined_call_operand.vmem [shape: f32[1,256], index: 8, kind: input, shape index: {}]
  %s9 = inlined_call_operand.vmem [shape: f32[8,256], index: 9, kind: output, shape index: {}]
  %s10 = sld [smem:[#allocation0]]
  $region46: #{fcn_forward.23} parent=0
    _
  %s12 = ssub.s32 1, %s10
  %s13 = scalar_select 0, %s12, %s10
  // Predicated region
  $region2: #{fcn_forward.23} parent=0 // pred_check
    _
  $region3: #{fcn_forward.23} parent=0 // pred_check_branch
    %15 = sbr.rel (0) target = $region5
  $region4: #{fcn_forward.23} parent=0 // pred_region
    _
  $region5: #{fcn_forward.23} parent=0 // pred_fallthru
    _
  // Predicated region
  $region6: #{fcn_forward.23} parent=0 // pred_check
    _
  $region7: #{fcn_forward.23} parent=0 // pred_check_branch
    %17 = sbr.rel (0) target = $region9
  $region8: #{fcn_forward.23} parent=0 // pred_region
    _
  $region9: #{fcn_forward.23} parent=0 // pred_fallthru
    _
  // Predicated region
  $region10: #{fcn_forward.23} parent=0 // pred_check
    _
  $region11: #{fcn_forward.23} parent=0 // pred_check_branch
    %19 = sbr.rel (0) target = $region13
  $region12: #{fcn_forward.23} parent=0 // pred_region
    _
  $region13: #{fcn_forward.23} parent=0 // pred_fallthru
    _
  // Predicated region
  $region14: #{fcn_forward.23} parent=0 // pred_check
    _
  $region15: #{fcn_forward.23} parent=0 // pred_check_branch
    %21 = sbr.rel (0) target = $region17
  $region16: #{fcn_forward.23} parent=0 // pred_region
    _
  $region17: #{fcn_forward.23} parent=0 // pred_fallthru
    _
  // Predicated region
  $region18: #{fcn_forward.23} parent=0 // pred_check
    _
  $region19: #{fcn_forward.23} parent=0 // pred_check_branch
    %23 = sbr.rel (0) target = $region21
  $region20: #{fcn_forward.23} parent=0 // pred_region
    _
  $region21: #{fcn_forward.23} parent=0 // pred_fallthru
    _
  // Predicated region
  $region22: #{fcn_forward.23} parent=0 // pred_check
    _
  $region23: #{fcn_forward.23} parent=0 // pred_check_branch
    %25 = sbr.rel (0) target = $region25
  $region24: #{fcn_forward.23} parent=0 // pred_region
    _
  $region25: #{fcn_forward.23} parent=0 // pred_fallthru
    _
  // Predicated region
  $region26: #{fcn_forward.23} parent=0 // pred_check
    _
  $region27: #{fcn_forward.23} parent=0 // pred_check_branch
    %27 = sbr.rel (0) target = $region29
  $region28: #{fcn_forward.23} parent=0 // pred_region
    _
  $region29: #{fcn_forward.23} parent=0 // pred_fallthru
    _
  // Predicated region
  $region30: #{fcn_forward.23} parent=0 // pred_check
    _
  $region31: #{fcn_forward.23} parent=0 // pred_check_branch
    %29 = sbr.rel (0) target = $region33
  $region32: #{fcn_forward.23} parent=0 // pred_region
    _
  $region33: #{fcn_forward.23} parent=0 // pred_fallthru
    _
  // Predicated region
  $region34: #{fcn_forward.23} parent=0 // pred_check
    _
  $region35: #{fcn_forward.23} parent=0 // pred_check_branch
    %31 = sbr.rel (0) target = $region37
  $region36: #{fcn_forward.23} parent=0 // pred_region
    _
  $region37: #{fcn_forward.23} parent=0 // pred_fallthru
    _
  %v33 = vld [vmem:[%s0] sm:$0xff]
  %v34 = vld [vmem:[%s0 + $0x8] sm:$0xff]
  %v35 = vld [vmem:[%s0 + $0x10] sm:$0xff]
  %v36 = vld [vmem:[%s0 + $0x18] sm:$0xff]
  %v37 = vld [vmem:[%s0 + $0x20] sm:$0xff]
  %v38 = vld [vmem:[%s0 + $0x28] sm:$0xff]
  %v39 = vld [vmem:[%s0 + $0x30] sm:$0xff]
  %v40 = vld [vmem:[%s0 + $0x38] sm:$0xff]
  %v41 = vld [vmem:[%s4] sm:$0xff]
  %v42 = vld [vmem:[%s4 + $0x8] sm:$0xff]
  %v43 = vld [vmem:[%s4 + $0x10] sm:$0xff]
  %v44 = vld [vmem:[%s4 + $0x18] sm:$0xff]
  %v45 = vld [vmem:[%s4 + $0x20] sm:$0xff]
  %v46 = vld [vmem:[%s4 + $0x28] sm:$0xff]
  %v47 = vld [vmem:[%s4 + $0x30] sm:$0xff]
  %v48 = vld [vmem:[%s4 + $0x38] sm:$0xff]
  %v49 = vld [vmem:[%s4 + $0x40] sm:$0xff]
  %v50 = vld [vmem:[%s4 + $0x48] sm:$0xff]
  %v51 = vld [vmem:[%s4 + $0x50] sm:$0xff]
  %v52 = vld [vmem:[%s4 + $0x58] sm:$0xff]
  %v53 = vld [vmem:[%s4 + $0x60] sm:$0xff]
  %v54 = vld [vmem:[%s4 + $0x68] sm:$0xff]
  %v55 = vld [vmem:[%s4 + $0x70] sm:$0xff]
  %v56 = vld [vmem:[%s4 + $0x78] sm:$0xff]
  %v57 = vld [vmem:[%s4 + $0x80] sm:$0xff]
  %v58 = vld [vmem:[%s4 + $0x88] sm:$0xff]
  %v59 = vld [vmem:[%s4 + $0x90] sm:$0xff]
  %v60 = vld [vmem:[%s4 + $0x98] sm:$0xff]
  %v61 = vld [vmem:[%s4 + $0xa0] sm:$0xff]
  %v62 = vld [vmem:[%s4 + $0xa8] sm:$0xff]
  %v63 = vld [vmem:[%s4 + $0xb0] sm:$0xff]
  %v64 = vld [vmem:[%s4 + $0xb8] sm:$0xff]
  %v65 = vld [vmem:[%s4 + $0xc0] sm:$0xff]
  %v66 = vld [vmem:[%s4 + $0xc8] sm:$0xff]
  %v67 = vld [vmem:[%s4 + $0xd0] sm:$0xff]
  %v68 = vld [vmem:[%s4 + $0xd8] sm:$0xff]
  %v69 = vld [vmem:[%s4 + $0xe0] sm:$0xff]
  %v70 = vld [vmem:[%s4 + $0xe8] sm:$0xff]
  %v71 = vld [vmem:[%s4 + $0xf0] sm:$0xff]
  %v72 = vld [vmem:[%s4 + $0xf8] sm:$0xff]
  %v73 = vld [vmem:[%s4 + $0x100] sm:$0xff]
  %v74 = vld [vmem:[%s4 + $0x108] sm:$0xff]
  %v75 = vld [vmem:[%s4 + $0x110] sm:$0xff]
  %v76 = vld [vmem:[%s4 + $0x118] sm:$0xff]
  %v77 = vld [vmem:[%s4 + $0x120] sm:$0xff]
  %v78 = vld [vmem:[%s4 + $0x128] sm:$0xff]
  %v79 = vld [vmem:[%s4 + $0x130] sm:$0xff]
  %v80 = vld [vmem:[%s4 + $0x138] sm:$0xff]
  %v81 = vld [vmem:[%s4 + $0x140] sm:$0xff]
  %v82 = vld [vmem:[%s4 + $0x148] sm:$0xff]
  %v83 = vld [vmem:[%s4 + $0x150] sm:$0xff]
  %v84 = vld [vmem:[%s4 + $0x158] sm:$0xff]
  %v85 = vld [vmem:[%s4 + $0x160] sm:$0xff]
  %v86 = vld [vmem:[%s4 + $0x168] sm:$0xff]
  %v87 = vld [vmem:[%s4 + $0x170] sm:$0xff]
  %v88 = vld [vmem:[%s4 + $0x178] sm:$0xff]
  %v89 = vld [vmem:[%s4 + $0x180] sm:$0xff]
  %v90 = vld [vmem:[%s4 + $0x188] sm:$0xff]
  %v91 = vld [vmem:[%s4 + $0x190] sm:$0xff]
  %v92 = vld [vmem:[%s4 + $0x198] sm:$0xff]
  %v93 = vld [vmem:[%s4 + $0x1a0] sm:$0xff]
  %v94 = vld [vmem:[%s4 + $0x1a8] sm:$0xff]
  %v95 = vld [vmem:[%s4 + $0x1b0] sm:$0xff]
  %v96 = vld [vmem:[%s4 + $0x1b8] sm:$0xff]
  %v97 = vld [vmem:[%s4 + $0x1c0] sm:$0xff]
  %v98 = vld [vmem:[%s4 + $0x1c8] sm:$0xff]
  %v99 = vld [vmem:[%s4 + $0x1d0] sm:$0xff]
  %v100 = vld [vmem:[%s4 + $0x1d8] sm:$0xff]
  %v101 = vld [vmem:[%s4 + $0x1e0] sm:$0xff]
  %v102 = vld [vmem:[%s4 + $0x1e8] sm:$0xff]
  %v103 = vld [vmem:[%s4 + $0x1f0] sm:$0xff]
  %v104 = vld [vmem:[%s4 + $0x1f8] sm:$0xff]
  %v105 = vld [vmem:[%s4 + $0x200] sm:$0xff]
  %v106 = vld [vmem:[%s4 + $0x208] sm:$0xff]
  %v107 = vld [vmem:[%s4 + $0x210] sm:$0xff]
  %v108 = vld [vmem:[%s4 + $0x218] sm:$0xff]
  %v109 = vld [vmem:[%s4 + $0x220] sm:$0xff]
  %v110 = vld [vmem:[%s4 + $0x228] sm:$0xff]
  %v111 = vld [vmem:[%s4 + $0x230] sm:$0xff]
  %v112 = vld [vmem:[%s4 + $0x238] sm:$0xff]
  %v113 = vld [vmem:[%s4 + $0x240] sm:$0xff]
  %v114 = vld [vmem:[%s4 + $0x248] sm:$0xff]
  %v115 = vld [vmem:[%s4 + $0x250] sm:$0xff]
  %v116 = vld [vmem:[%s4 + $0x258] sm:$0xff]
  %v117 = vld [vmem:[%s4 + $0x260] sm:$0xff]
  %v118 = vld [vmem:[%s4 + $0x268] sm:$0xff]
  %v119 = vld [vmem:[%s4 + $0x270] sm:$0xff]
  %v120 = vld [vmem:[%s4 + $0x278] sm:$0xff]
  %v121 = vld [vmem:[%s4 + $0x280] sm:$0xff]
  %v122 = vld [vmem:[%s4 + $0x288] sm:$0xff]
  %v123 = vld [vmem:[%s4 + $0x290] sm:$0xff]
  %v124 = vld [vmem:[%s4 + $0x298] sm:$0xff]
  %v125 = vld [vmem:[%s4 + $0x2a0] sm:$0xff]
  %v126 = vld [vmem:[%s4 + $0x2a8] sm:$0xff]
  %v127 = vld [vmem:[%s4 + $0x2b0] sm:$0xff]
  %v128 = vld [vmem:[%s4 + $0x2b8] sm:$0xff]
  %v129 = vld [vmem:[%s4 + $0x2c0] sm:$0xff]
  %v130 = vld [vmem:[%s4 + $0x2c8] sm:$0xff]
  %v131 = vld [vmem:[%s4 + $0x2d0] sm:$0xff]
  %v132 = vld [vmem:[%s4 + $0x2d8] sm:$0xff]
  %v133 = vld [vmem:[%s4 + $0x2e0] sm:$0xff]
  %v134 = vld [vmem:[%s4 + $0x2e8] sm:$0xff]
  %v135 = vld [vmem:[%s4 + $0x2f0] sm:$0xff]
  %v136 = vld [vmem:[%s4 + $0x2f8] sm:$0xff]
  %v137 = vld [vmem:[%s4 + $0x300] sm:$0xff]
  %v138 = vld [vmem:[%s4 + $0x308] sm:$0xff]
  %v139 = vld [vmem:[%s4 + $0x310] sm:$0xff]
  %v140 = vld [vmem:[%s4 + $0x318] sm:$0xff]
  %v141 = vld [vmem:[%s4 + $0x320] sm:$0xff]
  %v142 = vld [vmem:[%s4 + $0x328] sm:$0xff]
  %v143 = vld [vmem:[%s4 + $0x330] sm:$0xff]
  %v144 = vld [vmem:[%s4 + $0x338] sm:$0xff]
  %v145 = vld [vmem:[%s4 + $0x340] sm:$0xff]
  %v146 = vld [vmem:[%s4 + $0x348] sm:$0xff]
  %v147 = vld [vmem:[%s4 + $0x350] sm:$0xff]
  %v148 = vld [vmem:[%s4 + $0x358] sm:$0xff]
  %v149 = vld [vmem:[%s4 + $0x360] sm:$0xff]
  %v150 = vld [vmem:[%s4 + $0x368] sm:$0xff]
  %v151 = vld [vmem:[%s4 + $0x370] sm:$0xff]
  %v152 = vld [vmem:[%s4 + $0x378] sm:$0xff]
  %v153 = vld [vmem:[%s4 + $0x380] sm:$0xff]
  %v154 = vld [vmem:[%s4 + $0x388] sm:$0xff]
  %v155 = vld [vmem:[%s4 + $0x390] sm:$0xff]
  %v156 = vld [vmem:[%s4 + $0x398] sm:$0xff]
  %v157 = vld [vmem:[%s4 + $0x3a0] sm:$0xff]
  %v158 = vld [vmem:[%s4 + $0x3a8] sm:$0xff]
  %v159 = vld [vmem:[%s4 + $0x3b0] sm:$0xff]
  %v160 = vld [vmem:[%s4 + $0x3b8] sm:$0xff]
  %v161 = vld [vmem:[%s4 + $0x3c0] sm:$0xff]
  %v162 = vld [vmem:[%s4 + $0x3c8] sm:$0xff]
  %v163 = vld [vmem:[%s4 + $0x3d0] sm:$0xff]
  %v164 = vld [vmem:[%s4 + $0x3d8] sm:$0xff]
  %v165 = vld [vmem:[%s4 + $0x3e0] sm:$0xff]
  %v166 = vld [vmem:[%s4 + $0x3e8] sm:$0xff]
  %v167 = vld [vmem:[%s4 + $0x3f0] sm:$0xff]
  %v168 = vld [vmem:[%s4 + $0x3f8] sm:$0xff]
  %v169 = vld [vmem:[%s4 + $0x400] sm:$0xff]
  %v170 = vld [vmem:[%s4 + $0x408] sm:$0xff]
  %v171 = vld [vmem:[%s4 + $0x410] sm:$0xff]
  %v172 = vld [vmem:[%s4 + $0x418] sm:$0xff]
  %v173 = vld [vmem:[%s4 + $0x420] sm:$0xff]
  %v174 = vld [vmem:[%s4 + $0x428] sm:$0xff]
  %v175 = vld [vmem:[%s4 + $0x430] sm:$0xff]
  %v176 = vld [vmem:[%s4 + $0x438] sm:$0xff]
  %v177 = vld [vmem:[%s4 + $0x440] sm:$0xff]
  %v178 = vld [vmem:[%s4 + $0x448] sm:$0xff]
  %v179 = vld [vmem:[%s4 + $0x450] sm:$0xff]
  %v180 = vld [vmem:[%s4 + $0x458] sm:$0xff]
  %v181 = vld [vmem:[%s4 + $0x460] sm:$0xff]
  %v182 = vld [vmem:[%s4 + $0x468] sm:$0xff]
  %v183 = vld [vmem:[%s4 + $0x470] sm:$0xff]
  %v184 = vld [vmem:[%s4 + $0x478] sm:$0xff]
  %v185 = vld [vmem:[%s4 + $0x480] sm:$0xff]
  %v186 = vld [vmem:[%s4 + $0x488] sm:$0xff]
  %v187 = vld [vmem:[%s4 + $0x490] sm:$0xff]
  %v188 = vld [vmem:[%s4 + $0x498] sm:$0xff]
  %v189 = vld [vmem:[%s4 + $0x4a0] sm:$0xff]
  %v190 = vld [vmem:[%s4 + $0x4a8] sm:$0xff]
  %v191 = vld [vmem:[%s4 + $0x4b0] sm:$0xff]
  %v192 = vld [vmem:[%s4 + $0x4b8] sm:$0xff]
  %v193 = vld [vmem:[%s4 + $0x4c0] sm:$0xff]
  %v194 = vld [vmem:[%s4 + $0x4c8] sm:$0xff]
  %v195 = vld [vmem:[%s4 + $0x4d0] sm:$0xff]
  %v196 = vld [vmem:[%s4 + $0x4d8] sm:$0xff]
  %v197 = vld [vmem:[%s4 + $0x4e0] sm:$0xff]
  %v198 = vld [vmem:[%s4 + $0x4e8] sm:$0xff]
  %v199 = vld [vmem:[%s4 + $0x4f0] sm:$0xff]
  %v200 = vld [vmem:[%s4 + $0x4f8] sm:$0xff]
  %v201 = vld [vmem:[%s4 + $0x500] sm:$0xff]
  %v202 = vld [vmem:[%s4 + $0x508] sm:$0xff]
  %v203 = vld [vmem:[%s4 + $0x510] sm:$0xff]
  %v204 = vld [vmem:[%s4 + $0x518] sm:$0xff]
  %v205 = vld [vmem:[%s4 + $0x520] sm:$0xff]
  %v206 = vld [vmem:[%s4 + $0x528] sm:$0xff]
  %v207 = vld [vmem:[%s4 + $0x530] sm:$0xff]
  %v208 = vld [vmem:[%s4 + $0x538] sm:$0xff]
  %v209 = vld [vmem:[%s4 + $0x540] sm:$0xff]
  %v210 = vld [vmem:[%s4 + $0x548] sm:$0xff]
  %v211 = vld [vmem:[%s4 + $0x550] sm:$0xff]
  %v212 = vld [vmem:[%s4 + $0x558] sm:$0xff]
  %v213 = vld [vmem:[%s4 + $0x560] sm:$0xff]
  %v214 = vld [vmem:[%s4 + $0x568] sm:$0xff]
  %v215 = vld [vmem:[%s4 + $0x570] sm:$0xff]
  %v216 = vld [vmem:[%s4 + $0x578] sm:$0xff]
  %v217 = vld [vmem:[%s4 + $0x580] sm:$0xff]
  %v218 = vld [vmem:[%s4 + $0x588] sm:$0xff]
  %v219 = vld [vmem:[%s4 + $0x590] sm:$0xff]
  %v220 = vld [vmem:[%s4 + $0x598] sm:$0xff]
  %v221 = vld [vmem:[%s4 + $0x5a0] sm:$0xff]
  %v222 = vld [vmem:[%s4 + $0x5a8] sm:$0xff]
  %v223 = vld [vmem:[%s4 + $0x5b0] sm:$0xff]
  %v224 = vld [vmem:[%s4 + $0x5b8] sm:$0xff]
  %v225 = vld [vmem:[%s4 + $0x5c0] sm:$0xff]
  %v226 = vld [vmem:[%s4 + $0x5c8] sm:$0xff]
  %v227 = vld [vmem:[%s4 + $0x5d0] sm:$0xff]
  %v228 = vld [vmem:[%s4 + $0x5d8] sm:$0xff]
  %v229 = vld [vmem:[%s4 + $0x5e0] sm:$0xff]
  %v230 = vld [vmem:[%s4 + $0x5e8] sm:$0xff]
  %v231 = vld [vmem:[%s4 + $0x5f0] sm:$0xff]
  %v232 = vld [vmem:[%s4 + $0x5f8] sm:$0xff]
  %v233 = vld [vmem:[%s4 + $0x600] sm:$0xff]
  %v234 = vld [vmem:[%s4 + $0x608] sm:$0xff]
  %v235 = vld [vmem:[%s4 + $0x610] sm:$0xff]
  %v236 = vld [vmem:[%s4 + $0x618] sm:$0xff]
  %v237 = vld [vmem:[%s4 + $0x620] sm:$0xff]
  %v238 = vld [vmem:[%s4 + $0x628] sm:$0xff]
  %v239 = vld [vmem:[%s4 + $0x630] sm:$0xff]
  %v240 = vld [vmem:[%s4 + $0x638] sm:$0xff]
  %v241 = vld [vmem:[%s4 + $0x640] sm:$0xff]
  %v242 = vld [vmem:[%s4 + $0x648] sm:$0xff]
  %v243 = vld [vmem:[%s4 + $0x650] sm:$0xff]
  %v244 = vld [vmem:[%s4 + $0x658] sm:$0xff]
  %v245 = vld [vmem:[%s4 + $0x660] sm:$0xff]
  %v246 = vld [vmem:[%s4 + $0x668] sm:$0xff]
  %v247 = vld [vmem:[%s4 + $0x670] sm:$0xff]
  %v248 = vld [vmem:[%s4 + $0x678] sm:$0xff]
  %v249 = vld [vmem:[%s4 + $0x680] sm:$0xff]
  %v250 = vld [vmem:[%s4 + $0x688] sm:$0xff]
  %v251 = vld [vmem:[%s4 + $0x690] sm:$0xff]
  %v252 = vld [vmem:[%s4 + $0x698] sm:$0xff]
  %v253 = vld [vmem:[%s4 + $0x6a0] sm:$0xff]
  %v254 = vld [vmem:[%s4 + $0x6a8] sm:$0xff]
  %v255 = vld [vmem:[%s4 + $0x6b0] sm:$0xff]
  %v256 = vld [vmem:[%s4 + $0x6b8] sm:$0xff]
  %v257 = vld [vmem:[%s4 + $0x6c0] sm:$0xff]
  %v258 = vld [vmem:[%s4 + $0x6c8] sm:$0xff]
  %v259 = vld [vmem:[%s4 + $0x6d0] sm:$0xff]
  %v260 = vld [vmem:[%s4 + $0x6d8] sm:$0xff]
  %v261 = vld [vmem:[%s4 + $0x6e0] sm:$0xff]
  %v262 = vld [vmem:[%s4 + $0x6e8] sm:$0xff]
  %v263 = vld [vmem:[%s4 + $0x6f0] sm:$0xff]
  %v264 = vld [vmem:[%s4 + $0x6f8] sm:$0xff]
  %v265 = vld [vmem:[%s4 + $0x700] sm:$0xff]
  %v266 = vld [vmem:[%s4 + $0x708] sm:$0xff]
  %v267 = vld [vmem:[%s4 + $0x710] sm:$0xff]
  %v268 = vld [vmem:[%s4 + $0x718] sm:$0xff]
  %v269 = vld [vmem:[%s4 + $0x720] sm:$0xff]
  %v270 = vld [vmem:[%s4 + $0x728] sm:$0xff]
  %v271 = vld [vmem:[%s4 + $0x730] sm:$0xff]
  %v272 = vld [vmem:[%s4 + $0x738] sm:$0xff]
  %v273 = vld [vmem:[%s4 + $0x740] sm:$0xff]
  %v274 = vld [vmem:[%s4 + $0x748] sm:$0xff]
  %v275 = vld [vmem:[%s4 + $0x750] sm:$0xff]
  %v276 = vld [vmem:[%s4 + $0x758] sm:$0xff]
  %v277 = vld [vmem:[%s4 + $0x760] sm:$0xff]
  %v278 = vld [vmem:[%s4 + $0x768] sm:$0xff]
  %v279 = vld [vmem:[%s4 + $0x770] sm:$0xff]
  %v280 = vld [vmem:[%s4 + $0x778] sm:$0xff]
  %v281 = vld [vmem:[%s4 + $0x780] sm:$0xff]
  %v282 = vld [vmem:[%s4 + $0x788] sm:$0xff]
  %v283 = vld [vmem:[%s4 + $0x790] sm:$0xff]
  %v284 = vld [vmem:[%s4 + $0x798] sm:$0xff]
  %v285 = vld [vmem:[%s4 + $0x7a0] sm:$0xff]
  %v286 = vld [vmem:[%s4 + $0x7a8] sm:$0xff]
  %v287 = vld [vmem:[%s4 + $0x7b0] sm:$0xff]
  %v288 = vld [vmem:[%s4 + $0x7b8] sm:$0xff]
  %v289 = vld [vmem:[%s4 + $0x7c0] sm:$0xff]
  %v290 = vld [vmem:[%s4 + $0x7c8] sm:$0xff]
  %v291 = vld [vmem:[%s4 + $0x7d0] sm:$0xff]
  %v292 = vld [vmem:[%s4 + $0x7d8] sm:$0xff]
  %v293 = vld [vmem:[%s4 + $0x7e0] sm:$0xff]
  %v294 = vld [vmem:[%s4 + $0x7e8] sm:$0xff]
  %v295 = vld [vmem:[%s4 + $0x7f0] sm:$0xff]
  %v296 = vld [vmem:[%s4 + $0x7f8] sm:$0xff]
  %v297 = vld [vmem:[%s1] sm:$0xff]
  %v298 = vld [vmem:[%s1 + $0x8] sm:$0xff]
  %v299 = vld [vmem:[%s1 + $0x10] sm:$0xff]
  %v300 = vld [vmem:[%s1 + $0x18] sm:$0xff]
  %v301 = vld [vmem:[%s5] sm:$0xff]
  %v302 = vld [vmem:[%s5 + $0x8] sm:$0xff]
  %v303 = vld [vmem:[%s5 + $0x10] sm:$0xff]
  %v304 = vld [vmem:[%s5 + $0x18] sm:$0xff]
  %v305 = vld [vmem:[%s5 + $0x20] sm:$0xff]
  %v306 = vld [vmem:[%s5 + $0x28] sm:$0xff]
  %v307 = vld [vmem:[%s5 + $0x30] sm:$0xff]
  %v308 = vld [vmem:[%s5 + $0x38] sm:$0xff]
  %v309 = vld [vmem:[%s5 + $0x40] sm:$0xff]
  %v310 = vld [vmem:[%s5 + $0x48] sm:$0xff]
  %v311 = vld [vmem:[%s5 + $0x50] sm:$0xff]
  %v312 = vld [vmem:[%s5 + $0x58] sm:$0xff]
  %v313 = vld [vmem:[%s5 + $0x60] sm:$0xff]
  %v314 = vld [vmem:[%s5 + $0x68] sm:$0xff]
  %v315 = vld [vmem:[%s5 + $0x70] sm:$0xff]
  %v316 = vld [vmem:[%s5 + $0x78] sm:$0xff]
  %v317 = vld [vmem:[%s5 + $0x80] sm:$0xff]
  %v318 = vld [vmem:[%s5 + $0x88] sm:$0xff]
  %v319 = vld [vmem:[%s5 + $0x90] sm:$0xff]
  %v320 = vld [vmem:[%s5 + $0x98] sm:$0xff]
  %v321 = vld [vmem:[%s5 + $0xa0] sm:$0xff]
  %v322 = vld [vmem:[%s5 + $0xa8] sm:$0xff]
  %v323 = vld [vmem:[%s5 + $0xb0] sm:$0xff]
  %v324 = vld [vmem:[%s5 + $0xb8] sm:$0xff]
  %v325 = vld [vmem:[%s5 + $0xc0] sm:$0xff]
  %v326 = vld [vmem:[%s5 + $0xc8] sm:$0xff]
  %v327 = vld [vmem:[%s5 + $0xd0] sm:$0xff]
  %v328 = vld [vmem:[%s5 + $0xd8] sm:$0xff]
  %v329 = vld [vmem:[%s5 + $0xe0] sm:$0xff]
  %v330 = vld [vmem:[%s5 + $0xe8] sm:$0xff]
  %v331 = vld [vmem:[%s5 + $0xf0] sm:$0xff]
  %v332 = vld [vmem:[%s5 + $0xf8] sm:$0xff]
  %v333 = vld [vmem:[%s5 + $0x100] sm:$0xff]
  %v334 = vld [vmem:[%s5 + $0x108] sm:$0xff]
  %v335 = vld [vmem:[%s5 + $0x110] sm:$0xff]
  %v336 = vld [vmem:[%s5 + $0x118] sm:$0xff]
  %v337 = vld [vmem:[%s5 + $0x120] sm:$0xff]
  %v338 = vld [vmem:[%s5 + $0x128] sm:$0xff]
  %v339 = vld [vmem:[%s5 + $0x130] sm:$0xff]
  %v340 = vld [vmem:[%s5 + $0x138] sm:$0xff]
  %v341 = vld [vmem:[%s5 + $0x140] sm:$0xff]
  %v342 = vld [vmem:[%s5 + $0x148] sm:$0xff]
  %v343 = vld [vmem:[%s5 + $0x150] sm:$0xff]
  %v344 = vld [vmem:[%s5 + $0x158] sm:$0xff]
  %v345 = vld [vmem:[%s5 + $0x160] sm:$0xff]
  %v346 = vld [vmem:[%s5 + $0x168] sm:$0xff]
  %v347 = vld [vmem:[%s5 + $0x170] sm:$0xff]
  %v348 = vld [vmem:[%s5 + $0x178] sm:$0xff]
  %v349 = vld [vmem:[%s5 + $0x180] sm:$0xff]
  %v350 = vld [vmem:[%s5 + $0x188] sm:$0xff]
  %v351 = vld [vmem:[%s5 + $0x190] sm:$0xff]
  %v352 = vld [vmem:[%s5 + $0x198] sm:$0xff]
  %v353 = vld [vmem:[%s5 + $0x1a0] sm:$0xff]
  %v354 = vld [vmem:[%s5 + $0x1a8] sm:$0xff]
  %v355 = vld [vmem:[%s5 + $0x1b0] sm:$0xff]
  %v356 = vld [vmem:[%s5 + $0x1b8] sm:$0xff]
  %v357 = vld [vmem:[%s5 + $0x1c0] sm:$0xff]
  %v358 = vld [vmem:[%s5 + $0x1c8] sm:$0xff]
  %v359 = vld [vmem:[%s5 + $0x1d0] sm:$0xff]
  %v360 = vld [vmem:[%s5 + $0x1d8] sm:$0xff]
  %v361 = vld [vmem:[%s5 + $0x1e0] sm:$0xff]
  %v362 = vld [vmem:[%s5 + $0x1e8] sm:$0xff]
  %v363 = vld [vmem:[%s5 + $0x1f0] sm:$0xff]
  %v364 = vld [vmem:[%s5 + $0x1f8] sm:$0xff]
  %v365 = vld [vmem:[%s5 + $0x200] sm:$0xff]
  %v366 = vld [vmem:[%s5 + $0x208] sm:$0xff]
  %v367 = vld [vmem:[%s5 + $0x210] sm:$0xff]
  %v368 = vld [vmem:[%s5 + $0x218] sm:$0xff]
  %v369 = vld [vmem:[%s5 + $0x220] sm:$0xff]
  %v370 = vld [vmem:[%s5 + $0x228] sm:$0xff]
  %v371 = vld [vmem:[%s5 + $0x230] sm:$0xff]
  %v372 = vld [vmem:[%s5 + $0x238] sm:$0xff]
  %v373 = vld [vmem:[%s5 + $0x240] sm:$0xff]
  %v374 = vld [vmem:[%s5 + $0x248] sm:$0xff]
  %v375 = vld [vmem:[%s5 + $0x250] sm:$0xff]
  %v376 = vld [vmem:[%s5 + $0x258] sm:$0xff]
  %v377 = vld [vmem:[%s5 + $0x260] sm:$0xff]
  %v378 = vld [vmem:[%s5 + $0x268] sm:$0xff]
  %v379 = vld [vmem:[%s5 + $0x270] sm:$0xff]
  %v380 = vld [vmem:[%s5 + $0x278] sm:$0xff]
  %v381 = vld [vmem:[%s5 + $0x280] sm:$0xff]
  %v382 = vld [vmem:[%s5 + $0x288] sm:$0xff]
  %v383 = vld [vmem:[%s5 + $0x290] sm:$0xff]
  %v384 = vld [vmem:[%s5 + $0x298] sm:$0xff]
  %v385 = vld [vmem:[%s5 + $0x2a0] sm:$0xff]
  %v386 = vld [vmem:[%s5 + $0x2a8] sm:$0xff]
  %v387 = vld [vmem:[%s5 + $0x2b0] sm:$0xff]
  %v388 = vld [vmem:[%s5 + $0x2b8] sm:$0xff]
  %v389 = vld [vmem:[%s5 + $0x2c0] sm:$0xff]
  %v390 = vld [vmem:[%s5 + $0x2c8] sm:$0xff]
  %v391 = vld [vmem:[%s5 + $0x2d0] sm:$0xff]
  %v392 = vld [vmem:[%s5 + $0x2d8] sm:$0xff]
  %v393 = vld [vmem:[%s5 + $0x2e0] sm:$0xff]
  %v394 = vld [vmem:[%s5 + $0x2e8] sm:$0xff]
  %v395 = vld [vmem:[%s5 + $0x2f0] sm:$0xff]
  %v396 = vld [vmem:[%s5 + $0x2f8] sm:$0xff]
  %v397 = vld [vmem:[%s5 + $0x300] sm:$0xff]
  %v398 = vld [vmem:[%s5 + $0x308] sm:$0xff]
  %v399 = vld [vmem:[%s5 + $0x310] sm:$0xff]
  %v400 = vld [vmem:[%s5 + $0x318] sm:$0xff]
  %v401 = vld [vmem:[%s5 + $0x320] sm:$0xff]
  %v402 = vld [vmem:[%s5 + $0x328] sm:$0xff]
  %v403 = vld [vmem:[%s5 + $0x330] sm:$0xff]
  %v404 = vld [vmem:[%s5 + $0x338] sm:$0xff]
  %v405 = vld [vmem:[%s5 + $0x340] sm:$0xff]
  %v406 = vld [vmem:[%s5 + $0x348] sm:$0xff]
  %v407 = vld [vmem:[%s5 + $0x350] sm:$0xff]
  %v408 = vld [vmem:[%s5 + $0x358] sm:$0xff]
  %v409 = vld [vmem:[%s5 + $0x360] sm:$0xff]
  %v410 = vld [vmem:[%s5 + $0x368] sm:$0xff]
  %v411 = vld [vmem:[%s5 + $0x370] sm:$0xff]
  %v412 = vld [vmem:[%s5 + $0x378] sm:$0xff]
  %v413 = vld [vmem:[%s5 + $0x380] sm:$0xff]
  %v414 = vld [vmem:[%s5 + $0x388] sm:$0xff]
  %v415 = vld [vmem:[%s5 + $0x390] sm:$0xff]
  %v416 = vld [vmem:[%s5 + $0x398] sm:$0xff]
  %v417 = vld [vmem:[%s5 + $0x3a0] sm:$0xff]
  %v418 = vld [vmem:[%s5 + $0x3a8] sm:$0xff]
  %v419 = vld [vmem:[%s5 + $0x3b0] sm:$0xff]
  %v420 = vld [vmem:[%s5 + $0x3b8] sm:$0xff]
  %v421 = vld [vmem:[%s5 + $0x3c0] sm:$0xff]
  %v422 = vld [vmem:[%s5 + $0x3c8] sm:$0xff]
  %v423 = vld [vmem:[%s5 + $0x3d0] sm:$0xff]
  %v424 = vld [vmem:[%s5 + $0x3d8] sm:$0xff]
  %v425 = vld [vmem:[%s5 + $0x3e0] sm:$0xff]
  %v426 = vld [vmem:[%s5 + $0x3e8] sm:$0xff]
  %v427 = vld [vmem:[%s5 + $0x3f0] sm:$0xff]
  %v428 = vld [vmem:[%s5 + $0x3f8] sm:$0xff]
  %v433 = vunpack.c.l.b16 %v297
  %v434 = vunpack.c.h.b16 %v297
  %v435 = vunpack.c.l.b16 %v298
  %v436 = vunpack.c.h.b16 %v298
  %v437 = vunpack.c.l.b16 %v299
  %v438 = vunpack.c.h.b16 %v299
  %v439 = vunpack.c.l.b16 %v300
  %v440 = vunpack.c.h.b16 %v300
  %v441 = vpack.c.b16 %v433, %v433
  %v442 = vpack.c.b16 %v434, %v434
  %v443 = vpack.c.b16 %v435, %v435
  %v444 = vpack.c.b16 %v436, %v436
  %v445 = vpack.c.b16 %v437, %v437
  %v446 = vpack.c.b16 %v438, %v438
  %v447 = vpack.c.b16 %v439, %v439
  %v448 = vpack.c.b16 %v440, %v440
  %v585 = vunpack.c.l.b16 %v301
  %v586 = vunpack.c.h.b16 %v301
  %v587 = vunpack.c.l.b16 %v302
  %v588 = vunpack.c.h.b16 %v302
  %v589 = vunpack.c.l.b16 %v303
  %v590 = vunpack.c.h.b16 %v303
  %v591 = vunpack.c.l.b16 %v304
  %v592 = vunpack.c.h.b16 %v304
  %v593 = vunpack.c.l.b16 %v305
  %v594 = vunpack.c.h.b16 %v305
  %v595 = vunpack.c.l.b16 %v306
  %v596 = vunpack.c.h.b16 %v306
  %v597 = vunpack.c.l.b16 %v307
  %v598 = vunpack.c.h.b16 %v307
  %v599 = vunpack.c.l.b16 %v308
  %v600 = vunpack.c.h.b16 %v308
  %v601 = vunpack.c.l.b16 %v309
  %v602 = vunpack.c.h.b16 %v309
  %v603 = vunpack.c.l.b16 %v310
  %v604 = vunpack.c.h.b16 %v310
  %v605 = vunpack.c.l.b16 %v311
  %v606 = vunpack.c.h.b16 %v311
  %v607 = vunpack.c.l.b16 %v312
  %v608 = vunpack.c.h.b16 %v312
  %v609 = vunpack.c.l.b16 %v313
  %v610 = vunpack.c.h.b16 %v313
  %v611 = vunpack.c.l.b16 %v314
  %v612 = vunpack.c.h.b16 %v314
  %v613 = vunpack.c.l.b16 %v315
  %v614 = vunpack.c.h.b16 %v315
  %v615 = vunpack.c.l.b16 %v316
  %v616 = vunpack.c.h.b16 %v316
  %v617 = vunpack.c.l.b16 %v317
  %v618 = vunpack.c.h.b16 %v317
  %v619 = vunpack.c.l.b16 %v318
  %v620 = vunpack.c.h.b16 %v318
  %v621 = vunpack.c.l.b16 %v319
  %v622 = vunpack.c.h.b16 %v319
  %v623 = vunpack.c.l.b16 %v320
  %v624 = vunpack.c.h.b16 %v320
  %v625 = vunpack.c.l.b16 %v321
  %v626 = vunpack.c.h.b16 %v321
  %v627 = vunpack.c.l.b16 %v322
  %v628 = vunpack.c.h.b16 %v322
  %v629 = vunpack.c.l.b16 %v323
  %v630 = vunpack.c.h.b16 %v323
  %v631 = vunpack.c.l.b16 %v324
  %v632 = vunpack.c.h.b16 %v324
  %v633 = vunpack.c.l.b16 %v325
  %v634 = vunpack.c.h.b16 %v325
  %v635 = vunpack.c.l.b16 %v326
  %v636 = vunpack.c.h.b16 %v326
  %v637 = vunpack.c.l.b16 %v327
  %v638 = vunpack.c.h.b16 %v327
  %v639 = vunpack.c.l.b16 %v328
  %v640 = vunpack.c.h.b16 %v328
  %v641 = vunpack.c.l.b16 %v329
  %v642 = vunpack.c.h.b16 %v329
  %v643 = vunpack.c.l.b16 %v330
  %v644 = vunpack.c.h.b16 %v330
  %v645 = vunpack.c.l.b16 %v331
  %v646 = vunpack.c.h.b16 %v331
  %v647 = vunpack.c.l.b16 %v332
  %v648 = vunpack.c.h.b16 %v332
  %v649 = vunpack.c.l.b16 %v333
  %v650 = vunpack.c.h.b16 %v333
  %v651 = vunpack.c.l.b16 %v334
  %v652 = vunpack.c.h.b16 %v334
  %v653 = vunpack.c.l.b16 %v335
  %v654 = vunpack.c.h.b16 %v335
  %v655 = vunpack.c.l.b16 %v336
  %v656 = vunpack.c.h.b16 %v336
  %v657 = vunpack.c.l.b16 %v337
  %v658 = vunpack.c.h.b16 %v337
  %v659 = vunpack.c.l.b16 %v338
  %v660 = vunpack.c.h.b16 %v338
  %v661 = vunpack.c.l.b16 %v339
  %v662 = vunpack.c.h.b16 %v339
  %v663 = vunpack.c.l.b16 %v340
  %v664 = vunpack.c.h.b16 %v340
  %v665 = vunpack.c.l.b16 %v341
  %v666 = vunpack.c.h.b16 %v341
  %v667 = vunpack.c.l.b16 %v342
  %v668 = vunpack.c.h.b16 %v342
  %v669 = vunpack.c.l.b16 %v343
  %v670 = vunpack.c.h.b16 %v343
  %v671 = vunpack.c.l.b16 %v344
  %v672 = vunpack.c.h.b16 %v344
  %v673 = vunpack.c.l.b16 %v345
  %v674 = vunpack.c.h.b16 %v345
  %v675 = vunpack.c.l.b16 %v346
  %v676 = vunpack.c.h.b16 %v346
  %v677 = vunpack.c.l.b16 %v347
  %v678 = vunpack.c.h.b16 %v347
  %v679 = vunpack.c.l.b16 %v348
  %v680 = vunpack.c.h.b16 %v348
  %v681 = vunpack.c.l.b16 %v349
  %v682 = vunpack.c.h.b16 %v349
  %v683 = vunpack.c.l.b16 %v350
  %v684 = vunpack.c.h.b16 %v350
  %v685 = vunpack.c.l.b16 %v351
  %v686 = vunpack.c.h.b16 %v351
  %v687 = vunpack.c.l.b16 %v352
  %v688 = vunpack.c.h.b16 %v352
  %v689 = vunpack.c.l.b16 %v353
  %v690 = vunpack.c.h.b16 %v353
  %v691 = vunpack.c.l.b16 %v354
  %v692 = vunpack.c.h.b16 %v354
  %v693 = vunpack.c.l.b16 %v355
  %v694 = vunpack.c.h.b16 %v355
  %v695 = vunpack.c.l.b16 %v356
  %v696 = vunpack.c.h.b16 %v356
  %v697 = vunpack.c.l.b16 %v357
  %v698 = vunpack.c.h.b16 %v357
  %v699 = vunpack.c.l.b16 %v358
  %v700 = vunpack.c.h.b16 %v358
  %v701 = vunpack.c.l.b16 %v359
  %v702 = vunpack.c.h.b16 %v359
  %v703 = vunpack.c.l.b16 %v360
  %v704 = vunpack.c.h.b16 %v360
  %v705 = vunpack.c.l.b16 %v361
  %v706 = vunpack.c.h.b16 %v361
  %v707 = vunpack.c.l.b16 %v362
  %v708 = vunpack.c.h.b16 %v362
  %v709 = vunpack.c.l.b16 %v363
  %v710 = vunpack.c.h.b16 %v363
  %v711 = vunpack.c.l.b16 %v364
  %v712 = vunpack.c.h.b16 %v364
  %v713 = vunpack.c.l.b16 %v365
  %v714 = vunpack.c.h.b16 %v365
  %v715 = vunpack.c.l.b16 %v366
  %v716 = vunpack.c.h.b16 %v366
  %v717 = vunpack.c.l.b16 %v367
  %v718 = vunpack.c.h.b16 %v367
  %v719 = vunpack.c.l.b16 %v368
  %v720 = vunpack.c.h.b16 %v368
  %v721 = vunpack.c.l.b16 %v369
  %v722 = vunpack.c.h.b16 %v369
  %v723 = vunpack.c.l.b16 %v370
  %v724 = vunpack.c.h.b16 %v370
  %v725 = vunpack.c.l.b16 %v371
  %v726 = vunpack.c.h.b16 %v371
  %v727 = vunpack.c.l.b16 %v372
  %v728 = vunpack.c.h.b16 %v372
  %v729 = vunpack.c.l.b16 %v373
  %v730 = vunpack.c.h.b16 %v373
  %v731 = vunpack.c.l.b16 %v374
  %v732 = vunpack.c.h.b16 %v374
  %v733 = vunpack.c.l.b16 %v375
  %v734 = vunpack.c.h.b16 %v375
  %v735 = vunpack.c.l.b16 %v376
  %v736 = vunpack.c.h.b16 %v376
  %v737 = vunpack.c.l.b16 %v377
  %v738 = vunpack.c.h.b16 %v377
  %v739 = vunpack.c.l.b16 %v378
  %v740 = vunpack.c.h.b16 %v378
  %v741 = vunpack.c.l.b16 %v379
  %v742 = vunpack.c.h.b16 %v379
  %v743 = vunpack.c.l.b16 %v380
  %v744 = vunpack.c.h.b16 %v380
  %v745 = vunpack.c.l.b16 %v381
  %v746 = vunpack.c.h.b16 %v381
  %v747 = vunpack.c.l.b16 %v382
  %v748 = vunpack.c.h.b16 %v382
  %v749 = vunpack.c.l.b16 %v383
  %v750 = vunpack.c.h.b16 %v383
  %v751 = vunpack.c.l.b16 %v384
  %v752 = vunpack.c.h.b16 %v384
  %v753 = vunpack.c.l.b16 %v385
  %v754 = vunpack.c.h.b16 %v385
  %v755 = vunpack.c.l.b16 %v386
  %v756 = vunpack.c.h.b16 %v386
  %v757 = vunpack.c.l.b16 %v387
  %v758 = vunpack.c.h.b16 %v387
  %v759 = vunpack.c.l.b16 %v388
  %v760 = vunpack.c.h.b16 %v388
  %v761 = vunpack.c.l.b16 %v389
  %v762 = vunpack.c.h.b16 %v389
  %v763 = vunpack.c.l.b16 %v390
  %v764 = vunpack.c.h.b16 %v390
  %v765 = vunpack.c.l.b16 %v391
  %v766 = vunpack.c.h.b16 %v391
  %v767 = vunpack.c.l.b16 %v392
  %v768 = vunpack.c.h.b16 %v392
  %v769 = vunpack.c.l.b16 %v393
  %v770 = vunpack.c.h.b16 %v393
  %v771 = vunpack.c.l.b16 %v394
  %v772 = vunpack.c.h.b16 %v394
  %v773 = vunpack.c.l.b16 %v395
  %v774 = vunpack.c.h.b16 %v395
  %v775 = vunpack.c.l.b16 %v396
  %v776 = vunpack.c.h.b16 %v396
  %v777 = vunpack.c.l.b16 %v397
  %v778 = vunpack.c.h.b16 %v397
  %v779 = vunpack.c.l.b16 %v398
  %v780 = vunpack.c.h.b16 %v398
  %v781 = vunpack.c.l.b16 %v399
  %v782 = vunpack.c.h.b16 %v399
  %v783 = vunpack.c.l.b16 %v400
  %v784 = vunpack.c.h.b16 %v400
  %v785 = vunpack.c.l.b16 %v401
  %v786 = vunpack.c.h.b16 %v401
  %v787 = vunpack.c.l.b16 %v402
  %v788 = vunpack.c.h.b16 %v402
  %v789 = vunpack.c.l.b16 %v403
  %v790 = vunpack.c.h.b16 %v403
  %v791 = vunpack.c.l.b16 %v404
  %v792 = vunpack.c.h.b16 %v404
  %v793 = vunpack.c.l.b16 %v405
  %v794 = vunpack.c.h.b16 %v405
  %v795 = vunpack.c.l.b16 %v406
  %v796 = vunpack.c.h.b16 %v406
  %v797 = vunpack.c.l.b16 %v407
  %v798 = vunpack.c.h.b16 %v407
  %v799 = vunpack.c.l.b16 %v408
  %v800 = vunpack.c.h.b16 %v408
  %v801 = vunpack.c.l.b16 %v409
  %v802 = vunpack.c.h.b16 %v409
  %v803 = vunpack.c.l.b16 %v410
  %v804 = vunpack.c.h.b16 %v410
  %v805 = vunpack.c.l.b16 %v411
  %v806 = vunpack.c.h.b16 %v411
  %v807 = vunpack.c.l.b16 %v412
  %v808 = vunpack.c.h.b16 %v412
  %v809 = vunpack.c.l.b16 %v413
  %v810 = vunpack.c.h.b16 %v413
  %v811 = vunpack.c.l.b16 %v414
  %v812 = vunpack.c.h.b16 %v414
  %v813 = vunpack.c.l.b16 %v415
  %v814 = vunpack.c.h.b16 %v415
  %v815 = vunpack.c.l.b16 %v416
  %v816 = vunpack.c.h.b16 %v416
  %v817 = vunpack.c.l.b16 %v417
  %v818 = vunpack.c.h.b16 %v417
  %v819 = vunpack.c.l.b16 %v418
  %v820 = vunpack.c.h.b16 %v418
  %v821 = vunpack.c.l.b16 %v419
  %v822 = vunpack.c.h.b16 %v419
  %v823 = vunpack.c.l.b16 %v420
  %v824 = vunpack.c.h.b16 %v420
  %v825 = vunpack.c.l.b16 %v421
  %v826 = vunpack.c.h.b16 %v421
  %v827 = vunpack.c.l.b16 %v422
  %v828 = vunpack.c.h.b16 %v422
  %v829 = vunpack.c.l.b16 %v423
  %v830 = vunpack.c.h.b16 %v423
  %v831 = vunpack.c.l.b16 %v424
  %v832 = vunpack.c.h.b16 %v424
  %v833 = vunpack.c.l.b16 %v425
  %v834 = vunpack.c.h.b16 %v425
  %v835 = vunpack.c.l.b16 %v426
  %v836 = vunpack.c.h.b16 %v426
  %v837 = vunpack.c.l.b16 %v427
  %v838 = vunpack.c.h.b16 %v427
  %v839 = vunpack.c.l.b16 %v428
  %v840 = vunpack.c.h.b16 %v428
  %v841 = vpack.c.b16 %v587, %v585
  %v842 = vpack.c.b16 %v588, %v586
  %v843 = vpack.c.b16 %v591, %v589
  %v844 = vpack.c.b16 %v592, %v590
  %v845 = vpack.c.b16 %v595, %v593
  %v846 = vpack.c.b16 %v596, %v594
  %v847 = vpack.c.b16 %v599, %v597
  %v848 = vpack.c.b16 %v600, %v598
  %v849 = vpack.c.b16 %v603, %v601
  %v850 = vpack.c.b16 %v604, %v602
  %v851 = vpack.c.b16 %v607, %v605
  %v852 = vpack.c.b16 %v608, %v606
  %v853 = vpack.c.b16 %v611, %v609
  %v854 = vpack.c.b16 %v612, %v610
  %v855 = vpack.c.b16 %v615, %v613
  %v856 = vpack.c.b16 %v616, %v614
  %v857 = vpack.c.b16 %v619, %v617
  %v858 = vpack.c.b16 %v620, %v618
  %v859 = vpack.c.b16 %v623, %v621
  %v860 = vpack.c.b16 %v624, %v622
  %v861 = vpack.c.b16 %v627, %v625
  %v862 = vpack.c.b16 %v628, %v626
  %v863 = vpack.c.b16 %v631, %v629
  %v864 = vpack.c.b16 %v632, %v630
  %v865 = vpack.c.b16 %v635, %v633
  %v866 = vpack.c.b16 %v636, %v634
  %v867 = vpack.c.b16 %v639, %v637
  %v868 = vpack.c.b16 %v640, %v638
  %v869 = vpack.c.b16 %v643, %v641
  %v870 = vpack.c.b16 %v644, %v642
  %v871 = vpack.c.b16 %v647, %v645
  %v872 = vpack.c.b16 %v648, %v646
  %v873 = vpack.c.b16 %v651, %v649
  %v874 = vpack.c.b16 %v652, %v650
  %v875 = vpack.c.b16 %v655, %v653
  %v876 = vpack.c.b16 %v656, %v654
  %v877 = vpack.c.b16 %v659, %v657
  %v878 = vpack.c.b16 %v660, %v658
  %v879 = vpack.c.b16 %v663, %v661
  %v880 = vpack.c.b16 %v664, %v662
  %v881 = vpack.c.b16 %v667, %v665
  %v882 = vpack.c.b16 %v668, %v666
  %v883 = vpack.c.b16 %v671, %v669
  %v884 = vpack.c.b16 %v672, %v670
  %v885 = vpack.c.b16 %v675, %v673
  %v886 = vpack.c.b16 %v676, %v674
  %v887 = vpack.c.b16 %v679, %v677
  %v888 = vpack.c.b16 %v680, %v678
  %v889 = vpack.c.b16 %v683, %v681
  %v890 = vpack.c.b16 %v684, %v682
  %v891 = vpack.c.b16 %v687, %v685
  %v892 = vpack.c.b16 %v688, %v686
  %v893 = vpack.c.b16 %v691, %v689
  %v894 = vpack.c.b16 %v692, %v690
  %v895 = vpack.c.b16 %v695, %v693
  %v896 = vpack.c.b16 %v696, %v694
  %v897 = vpack.c.b16 %v699, %v697
  %v898 = vpack.c.b16 %v700, %v698
  %v899 = vpack.c.b16 %v703, %v701
  %v900 = vpack.c.b16 %v704, %v702
  %v901 = vpack.c.b16 %v707, %v705
  %v902 = vpack.c.b16 %v708, %v706
  %v903 = vpack.c.b16 %v711, %v709
  %v904 = vpack.c.b16 %v712, %v710
  %v905 = vpack.c.b16 %v715, %v713
  %v906 = vpack.c.b16 %v716, %v714
  %v907 = vpack.c.b16 %v719, %v717
  %v908 = vpack.c.b16 %v720, %v718
  %v909 = vpack.c.b16 %v723, %v721
  %v910 = vpack.c.b16 %v724, %v722
  %v911 = vpack.c.b16 %v727, %v725
  %v912 = vpack.c.b16 %v728, %v726
  %v913 = vpack.c.b16 %v731, %v729
  %v914 = vpack.c.b16 %v732, %v730
  %v915 = vpack.c.b16 %v735, %v733
  %v916 = vpack.c.b16 %v736, %v734
  %v917 = vpack.c.b16 %v739, %v737
  %v918 = vpack.c.b16 %v740, %v738
  %v919 = vpack.c.b16 %v743, %v741
  %v920 = vpack.c.b16 %v744, %v742
  %v921 = vpack.c.b16 %v747, %v745
  %v922 = vpack.c.b16 %v748, %v746
  %v923 = vpack.c.b16 %v751, %v749
  %v924 = vpack.c.b16 %v752, %v750
  %v925 = vpack.c.b16 %v755, %v753
  %v926 = vpack.c.b16 %v756, %v754
  %v927 = vpack.c.b16 %v759, %v757
  %v928 = vpack.c.b16 %v760, %v758
  %v929 = vpack.c.b16 %v763, %v761
  %v930 = vpack.c.b16 %v764, %v762
  %v931 = vpack.c.b16 %v767, %v765
  %v932 = vpack.c.b16 %v768, %v766
  %v933 = vpack.c.b16 %v771, %v769
  %v934 = vpack.c.b16 %v772, %v770
  %v935 = vpack.c.b16 %v775, %v773
  %v936 = vpack.c.b16 %v776, %v774
  %v937 = vpack.c.b16 %v779, %v777
  %v938 = vpack.c.b16 %v780, %v778
  %v939 = vpack.c.b16 %v783, %v781
  %v940 = vpack.c.b16 %v784, %v782
  %v941 = vpack.c.b16 %v787, %v785
  %v942 = vpack.c.b16 %v788, %v786
  %v943 = vpack.c.b16 %v791, %v789
  %v944 = vpack.c.b16 %v792, %v790
  %v945 = vpack.c.b16 %v795, %v793
  %v946 = vpack.c.b16 %v796, %v794
  %v947 = vpack.c.b16 %v799, %v797
  %v948 = vpack.c.b16 %v800, %v798
  %v949 = vpack.c.b16 %v803, %v801
  %v950 = vpack.c.b16 %v804, %v802
  %v951 = vpack.c.b16 %v807, %v805
  %v952 = vpack.c.b16 %v808, %v806
  %v953 = vpack.c.b16 %v811, %v809
  %v954 = vpack.c.b16 %v812, %v810
  %v955 = vpack.c.b16 %v815, %v813
  %v956 = vpack.c.b16 %v816, %v814
  %v957 = vpack.c.b16 %v819, %v817
  %v958 = vpack.c.b16 %v820, %v818
  %v959 = vpack.c.b16 %v823, %v821
  %v960 = vpack.c.b16 %v824, %v822
  %v961 = vpack.c.b16 %v827, %v825
  %v962 = vpack.c.b16 %v828, %v826
  %v963 = vpack.c.b16 %v831, %v829
  %v964 = vpack.c.b16 %v832, %v830
  %v965 = vpack.c.b16 %v835, %v833
  %v966 = vpack.c.b16 %v836, %v834
  %v967 = vpack.c.b16 %v839, %v837
  %v968 = vpack.c.b16 %v840, %v838
  %1097 = vmatprep.subr.bf16.mxu0 %v842
  %1098 = vmatpush1.bf16.msra.mxu0 %v841
  %1099 = vmatprep.subr.bf16.mxu0 %v844
  %1100 = vmatpush1.bf16.msra.mxu0 %v843
  %1101 = vmatprep.subr.bf16.mxu0 %v846
  %1102 = vmatpush1.bf16.msra.mxu0 %v845
  %1103 = vmatprep.subr.bf16.mxu0 %v848
  %1104 = vmatpush1.bf16.msra.mxu0 %v847
  %1105 = vmatprep.subr.bf16.mxu0 %v850
  %1106 = vmatpush1.bf16.msra.mxu0 %v849
  %1107 = vmatprep.subr.bf16.mxu0 %v852
  %1108 = vmatpush1.bf16.msra.mxu0 %v851
  %1109 = vmatprep.subr.bf16.mxu0 %v854
  %1110 = vmatpush1.bf16.msra.mxu0 %v853
  %1111 = vmatprep.subr.bf16.mxu0 %v856
  %1112 = vmatpush1.bf16.msra.mxu0 %v855
  %1113 = vmatprep.subr.bf16.mxu0 %v858
  %1114 = vmatpush1.bf16.msra.mxu0 %v857
  %1115 = vmatprep.subr.bf16.mxu0 %v860
  %1116 = vmatpush1.bf16.msra.mxu0 %v859
  %1117 = vmatprep.subr.bf16.mxu0 %v862
  %1118 = vmatpush1.bf16.msra.mxu0 %v861
  %1119 = vmatprep.subr.bf16.mxu0 %v864
  %1120 = vmatpush1.bf16.msra.mxu0 %v863
  %1121 = vmatprep.subr.bf16.mxu0 %v866
  %1122 = vmatpush1.bf16.msra.mxu0 %v865
  %1123 = vmatprep.subr.bf16.mxu0 %v868
  %1124 = vmatpush1.bf16.msra.mxu0 %v867
  %1125 = vmatprep.subr.bf16.mxu0 %v870
  %1126 = vmatpush1.bf16.msra.mxu0 %v869
  %1127 = vmatprep.subr.bf16.mxu0 %v872
  %1128 = vmatpush1.bf16.msra.mxu0 %v871
  %1129 = vmatprep.mubr.bf16.mxu0 %v442
  %1130 = vmatmul.mubr.bf16.gmra.mrb[0].mxu0 %v441
  %v1131 = vpop.f32.mrb[0].mxu0
  %v1132 = vadd.f32 0.0, %v1131
  %v1133 = vpop.f32.mrb[0].mxu0
  %v1134 = vadd.f32 0.0, %v1133
  %v1135 = vpop.f32.mrb[0].mxu0
  %v1136 = vpop.f32.mrb[0].mxu0
  %1137 = vdwg.mxu0
  %1138 = vmatprep.subr.bf16.mxu0 %v874
  %1139 = vmatpush1.bf16.msra.mxu0 %v873
  %1140 = vmatprep.subr.bf16.mxu0 %v876
  %1141 = vmatpush1.bf16.msra.mxu0 %v875
  %1142 = vmatprep.subr.bf16.mxu0 %v878
  %1143 = vmatpush1.bf16.msra.mxu0 %v877
  %1144 = vmatprep.subr.bf16.mxu0 %v880
  %1145 = vmatpush1.bf16.msra.mxu0 %v879
  %1146 = vmatprep.subr.bf16.mxu0 %v882
  %1147 = vmatpush1.bf16.msra.mxu0 %v881
  %1148 = vmatprep.subr.bf16.mxu0 %v884
  %1149 = vmatpush1.bf16.msra.mxu0 %v883
  %1150 = vmatprep.subr.bf16.mxu0 %v886
  %1151 = vmatpush1.bf16.msra.mxu0 %v885
  %1152 = vmatprep.subr.bf16.mxu0 %v888
  %1153 = vmatpush1.bf16.msra.mxu0 %v887
  %1154 = vmatprep.subr.bf16.mxu0 %v890
  %1155 = vmatpush1.bf16.msra.mxu0 %v889
  %1156 = vmatprep.subr.bf16.mxu0 %v892
  %1157 = vmatpush1.bf16.msra.mxu0 %v891
  %1158 = vmatprep.subr.bf16.mxu0 %v894
  %1159 = vmatpush1.bf16.msra.mxu0 %v893
  %1160 = vmatprep.subr.bf16.mxu0 %v896
  %1161 = vmatpush1.bf16.msra.mxu0 %v895
  %1162 = vmatprep.subr.bf16.mxu0 %v898
  %1163 = vmatpush1.bf16.msra.mxu0 %v897
  %1164 = vmatprep.subr.bf16.mxu0 %v900
  %1165 = vmatpush1.bf16.msra.mxu0 %v899
  %1166 = vmatprep.subr.bf16.mxu0 %v902
  %1167 = vmatpush1.bf16.msra.mxu0 %v901
  %1168 = vmatprep.subr.bf16.mxu0 %v904
  %1169 = vmatpush1.bf16.msra.mxu0 %v903
  %1170 = vmatprep.mubr.bf16.mxu0 %v444
  %1171 = vmatmul.mubr.bf16.gmra.mrb[0].mxu0 %v443
  %v1172 = vpop.f32.mrb[0].mxu0
  %v1173 = vadd.f32 %v1132, %v1172
  %v1174 = vpop.f32.mrb[0].mxu0
  %v1175 = vadd.f32 %v1134, %v1174
  %v1176 = vpop.f32.mrb[0].mxu0
  %v1177 = vpop.f32.mrb[0].mxu0
  %1178 = vdwg.mxu0
  %1179 = vmatprep.subr.bf16.mxu0 %v906
  %1180 = vmatpush1.bf16.msra.mxu0 %v905
  %1181 = vmatprep.subr.bf16.mxu0 %v908
  %1182 = vmatpush1.bf16.msra.mxu0 %v907
  %1183 = vmatprep.subr.bf16.mxu0 %v910
  %1184 = vmatpush1.bf16.msra.mxu0 %v909
  %1185 = vmatprep.subr.bf16.mxu0 %v912
  %1186 = vmatpush1.bf16.msra.mxu0 %v911
  %1187 = vmatprep.subr.bf16.mxu0 %v914
  %1188 = vmatpush1.bf16.msra.mxu0 %v913
  %1189 = vmatprep.subr.bf16.mxu0 %v916
  %1190 = vmatpush1.bf16.msra.mxu0 %v915
  %1191 = vmatprep.subr.bf16.mxu0 %v918
  %1192 = vmatpush1.bf16.msra.mxu0 %v917
  %1193 = vmatprep.subr.bf16.mxu0 %v920
  %1194 = vmatpush1.bf16.msra.mxu0 %v919
  %1195 = vmatprep.subr.bf16.mxu0 %v922
  %1196 = vmatpush1.bf16.msra.mxu0 %v921
  %1197 = vmatprep.subr.bf16.mxu0 %v924
  %1198 = vmatpush1.bf16.msra.mxu0 %v923
  %1199 = vmatprep.subr.bf16.mxu0 %v926
  %1200 = vmatpush1.bf16.msra.mxu0 %v925
  %1201 = vmatprep.subr.bf16.mxu0 %v928
  %1202 = vmatpush1.bf16.msra.mxu0 %v927
  %1203 = vmatprep.subr.bf16.mxu0 %v930
  %1204 = vmatpush1.bf16.msra.mxu0 %v929
  %1205 = vmatprep.subr.bf16.mxu0 %v932
  %1206 = vmatpush1.bf16.msra.mxu0 %v931
  %1207 = vmatprep.subr.bf16.mxu0 %v934
  %1208 = vmatpush1.bf16.msra.mxu0 %v933
  %1209 = vmatprep.subr.bf16.mxu0 %v936
  %1210 = vmatpush1.bf16.msra.mxu0 %v935
  %1211 = vmatprep.mubr.bf16.mxu0 %v446
  %1212 = vmatmul.mubr.bf16.gmra.mrb[0].mxu0 %v445
  %v1213 = vpop.f32.mrb[0].mxu0
  %v1214 = vadd.f32 %v1173, %v1213
  %v1215 = vpop.f32.mrb[0].mxu0
  %v1216 = vadd.f32 %v1175, %v1215
  %v1217 = vpop.f32.mrb[0].mxu0
  %v1218 = vpop.f32.mrb[0].mxu0
  %1219 = vdwg.mxu0
  %1220 = vmatprep.subr.bf16.mxu0 %v938
  %1221 = vmatpush1.bf16.msra.mxu0 %v937
  %1222 = vmatprep.subr.bf16.mxu0 %v940
  %1223 = vmatpush1.bf16.msra.mxu0 %v939
  %1224 = vmatprep.subr.bf16.mxu0 %v942
  %1225 = vmatpush1.bf16.msra.mxu0 %v941
  %1226 = vmatprep.subr.bf16.mxu0 %v944
  %1227 = vmatpush1.bf16.msra.mxu0 %v943
  %1228 = vmatprep.subr.bf16.mxu0 %v946
  %1229 = vmatpush1.bf16.msra.mxu0 %v945
  %1230 = vmatprep.subr.bf16.mxu0 %v948
  %1231 = vmatpush1.bf16.msra.mxu0 %v947
  %1232 = vmatprep.subr.bf16.mxu0 %v950
  %1233 = vmatpush1.bf16.msra.mxu0 %v949
  %1234 = vmatprep.subr.bf16.mxu0 %v952
  %1235 = vmatpush1.bf16.msra.mxu0 %v951
  %1236 = vmatprep.subr.bf16.mxu0 %v954
  %1237 = vmatpush1.bf16.msra.mxu0 %v953
  %1238 = vmatprep.subr.bf16.mxu0 %v956
  %1239 = vmatpush1.bf16.msra.mxu0 %v955
  %1240 = vmatprep.subr.bf16.mxu0 %v958
  %1241 = vmatpush1.bf16.msra.mxu0 %v957
  %1242 = vmatprep.subr.bf16.mxu0 %v960
  %1243 = vmatpush1.bf16.msra.mxu0 %v959
  %1244 = vmatprep.subr.bf16.mxu0 %v962
  %1245 = vmatpush1.bf16.msra.mxu0 %v961
  %1246 = vmatprep.subr.bf16.mxu0 %v964
  %1247 = vmatpush1.bf16.msra.mxu0 %v963
  %1248 = vmatprep.subr.bf16.mxu0 %v966
  %1249 = vmatpush1.bf16.msra.mxu0 %v965
  %1250 = vmatprep.subr.bf16.mxu0 %v968
  %1251 = vmatpush1.bf16.msra.mxu0 %v967
  %1252 = vmatprep.mubr.bf16.mxu0 %v448
  %1253 = vmatmul.mubr.bf16.gmra.mrb[0].mxu0 %v447
  %v1254 = vpop.f32.mrb[0].mxu0
  %v1255 = vadd.f32 %v1214, %v1254
  %v1256 = vpop.f32.mrb[0].mxu0
  %v1257 = vadd.f32 %v1216, %v1256
  %v1258 = vpop.f32.mrb[0].mxu0
  %v1259 = vpop.f32.mrb[0].mxu0
  %1260 = vdwg.mxu0
  %v1269 = vunpack.c.l.b16 %v33
  %v1270 = vunpack.c.h.b16 %v33
  %v1271 = vunpack.c.l.b16 %v34
  %v1272 = vunpack.c.h.b16 %v34
  %v1273 = vunpack.c.l.b16 %v35
  %v1274 = vunpack.c.h.b16 %v35
  %v1275 = vunpack.c.l.b16 %v36
  %v1276 = vunpack.c.h.b16 %v36
  %v1277 = vunpack.c.l.b16 %v37
  %v1278 = vunpack.c.h.b16 %v37
  %v1279 = vunpack.c.l.b16 %v38
  %v1280 = vunpack.c.h.b16 %v38
  %v1281 = vunpack.c.l.b16 %v39
  %v1282 = vunpack.c.h.b16 %v39
  %v1283 = vunpack.c.l.b16 %v40
  %v1284 = vunpack.c.h.b16 %v40
  %v1285 = vpack.c.b16 %v1269, %v1269
  %v1286 = vpack.c.b16 %v1270, %v1270
  %v1287 = vpack.c.b16 %v1271, %v1271
  %v1288 = vpack.c.b16 %v1272, %v1272
  %v1289 = vpack.c.b16 %v1273, %v1273
  %v1290 = vpack.c.b16 %v1274, %v1274
  %v1291 = vpack.c.b16 %v1275, %v1275
  %v1292 = vpack.c.b16 %v1276, %v1276
  %v1293 = vpack.c.b16 %v1277, %v1277
  %v1294 = vpack.c.b16 %v1278, %v1278
  %v1295 = vpack.c.b16 %v1279, %v1279
  %v1296 = vpack.c.b16 %v1280, %v1280
  %v1297 = vpack.c.b16 %v1281, %v1281
  %v1298 = vpack.c.b16 %v1282, %v1282
  %v1299 = vpack.c.b16 %v1283, %v1283
  %v1300 = vpack.c.b16 %v1284, %v1284
  %v1573 = vunpack.c.l.b16 %v41
  %v1574 = vunpack.c.h.b16 %v41
  %v1575 = vunpack.c.l.b16 %v42
  %v1576 = vunpack.c.h.b16 %v42
  %v1577 = vunpack.c.l.b16 %v43
  %v1578 = vunpack.c.h.b16 %v43
  %v1579 = vunpack.c.l.b16 %v44
  %v1580 = vunpack.c.h.b16 %v44
  %v1581 = vunpack.c.l.b16 %v45
  %v1582 = vunpack.c.h.b16 %v45
  %v1583 = vunpack.c.l.b16 %v46
  %v1584 = vunpack.c.h.b16 %v46
  %v1585 = vunpack.c.l.b16 %v47
  %v1586 = vunpack.c.h.b16 %v47
  %v1587 = vunpack.c.l.b16 %v48
  %v1588 = vunpack.c.h.b16 %v48
  %v1589 = vunpack.c.l.b16 %v49
  %v1590 = vunpack.c.h.b16 %v49
  %v1591 = vunpack.c.l.b16 %v50
  %v1592 = vunpack.c.h.b16 %v50
  %v1593 = vunpack.c.l.b16 %v51
  %v1594 = vunpack.c.h.b16 %v51
  %v1595 = vunpack.c.l.b16 %v52
  %v1596 = vunpack.c.h.b16 %v52
  %v1597 = vunpack.c.l.b16 %v53
  %v1598 = vunpack.c.h.b16 %v53
  %v1599 = vunpack.c.l.b16 %v54
  %v1600 = vunpack.c.h.b16 %v54
  %v1601 = vunpack.c.l.b16 %v55
  %v1602 = vunpack.c.h.b16 %v55
  %v1603 = vunpack.c.l.b16 %v56
  %v1604 = vunpack.c.h.b16 %v56
  %v1605 = vunpack.c.l.b16 %v57
  %v1606 = vunpack.c.h.b16 %v57
  %v1607 = vunpack.c.l.b16 %v58
  %v1608 = vunpack.c.h.b16 %v58
  %v1609 = vunpack.c.l.b16 %v59
  %v1610 = vunpack.c.h.b16 %v59
  %v1611 = vunpack.c.l.b16 %v60
  %v1612 = vunpack.c.h.b16 %v60
  %v1613 = vunpack.c.l.b16 %v61
  %v1614 = vunpack.c.h.b16 %v61
  %v1615 = vunpack.c.l.b16 %v62
  %v1616 = vunpack.c.h.b16 %v62
  %v1617 = vunpack.c.l.b16 %v63
  %v1618 = vunpack.c.h.b16 %v63
  %v1619 = vunpack.c.l.b16 %v64
  %v1620 = vunpack.c.h.b16 %v64
  %v1621 = vunpack.c.l.b16 %v65
  %v1622 = vunpack.c.h.b16 %v65
  %v1623 = vunpack.c.l.b16 %v66
  %v1624 = vunpack.c.h.b16 %v66
  %v1625 = vunpack.c.l.b16 %v67
  %v1626 = vunpack.c.h.b16 %v67
  %v1627 = vunpack.c.l.b16 %v68
  %v1628 = vunpack.c.h.b16 %v68
  %v1629 = vunpack.c.l.b16 %v69
  %v1630 = vunpack.c.h.b16 %v69
  %v1631 = vunpack.c.l.b16 %v70
  %v1632 = vunpack.c.h.b16 %v70
  %v1633 = vunpack.c.l.b16 %v71
  %v1634 = vunpack.c.h.b16 %v71
  %v1635 = vunpack.c.l.b16 %v72
  %v1636 = vunpack.c.h.b16 %v72
  %v1637 = vunpack.c.l.b16 %v73
  %v1638 = vunpack.c.h.b16 %v73
  %v1639 = vunpack.c.l.b16 %v74
  %v1640 = vunpack.c.h.b16 %v74
  %v1641 = vunpack.c.l.b16 %v75
  %v1642 = vunpack.c.h.b16 %v75
  %v1643 = vunpack.c.l.b16 %v76
  %v1644 = vunpack.c.h.b16 %v76
  %v1645 = vunpack.c.l.b16 %v77
  %v1646 = vunpack.c.h.b16 %v77
  %v1647 = vunpack.c.l.b16 %v78
  %v1648 = vunpack.c.h.b16 %v78
  %v1649 = vunpack.c.l.b16 %v79
  %v1650 = vunpack.c.h.b16 %v79
  %v1651 = vunpack.c.l.b16 %v80
  %v1652 = vunpack.c.h.b16 %v80
  %v1653 = vunpack.c.l.b16 %v81
  %v1654 = vunpack.c.h.b16 %v81
  %v1655 = vunpack.c.l.b16 %v82
  %v1656 = vunpack.c.h.b16 %v82
  %v1657 = vunpack.c.l.b16 %v83
  %v1658 = vunpack.c.h.b16 %v83
  %v1659 = vunpack.c.l.b16 %v84
  %v1660 = vunpack.c.h.b16 %v84
  %v1661 = vunpack.c.l.b16 %v85
  %v1662 = vunpack.c.h.b16 %v85
  %v1663 = vunpack.c.l.b16 %v86
  %v1664 = vunpack.c.h.b16 %v86
  %v1665 = vunpack.c.l.b16 %v87
  %v1666 = vunpack.c.h.b16 %v87
  %v1667 = vunpack.c.l.b16 %v88
  %v1668 = vunpack.c.h.b16 %v88
  %v1669 = vunpack.c.l.b16 %v89
  %v1670 = vunpack.c.h.b16 %v89
  %v1671 = vunpack.c.l.b16 %v90
  %v1672 = vunpack.c.h.b16 %v90
  %v1673 = vunpack.c.l.b16 %v91
  %v1674 = vunpack.c.h.b16 %v91
  %v1675 = vunpack.c.l.b16 %v92
  %v1676 = vunpack.c.h.b16 %v92
  %v1677 = vunpack.c.l.b16 %v93
  %v1678 = vunpack.c.h.b16 %v93
  %v1679 = vunpack.c.l.b16 %v94
  %v1680 = vunpack.c.h.b16 %v94
  %v1681 = vunpack.c.l.b16 %v95
  %v1682 = vunpack.c.h.b16 %v95
  %v1683 = vunpack.c.l.b16 %v96
  %v1684 = vunpack.c.h.b16 %v96
  %v1685 = vunpack.c.l.b16 %v97
  %v1686 = vunpack.c.h.b16 %v97
  %v1687 = vunpack.c.l.b16 %v98
  %v1688 = vunpack.c.h.b16 %v98
  %v1689 = vunpack.c.l.b16 %v99
  %v1690 = vunpack.c.h.b16 %v99
  %v1691 = vunpack.c.l.b16 %v100
  %v1692 = vunpack.c.h.b16 %v100
  %v1693 = vunpack.c.l.b16 %v101
  %v1694 = vunpack.c.h.b16 %v101
  %v1695 = vunpack.c.l.b16 %v102
  %v1696 = vunpack.c.h.b16 %v102
  %v1697 = vunpack.c.l.b16 %v103
  %v1698 = vunpack.c.h.b16 %v103
  %v1699 = vunpack.c.l.b16 %v104
  %v1700 = vunpack.c.h.b16 %v104
  %v1701 = vunpack.c.l.b16 %v105
  %v1702 = vunpack.c.h.b16 %v105
  %v1703 = vunpack.c.l.b16 %v106
  %v1704 = vunpack.c.h.b16 %v106
  %v1705 = vunpack.c.l.b16 %v107
  %v1706 = vunpack.c.h.b16 %v107
  %v1707 = vunpack.c.l.b16 %v108
  %v1708 = vunpack.c.h.b16 %v108
  %v1709 = vunpack.c.l.b16 %v109
  %v1710 = vunpack.c.h.b16 %v109
  %v1711 = vunpack.c.l.b16 %v110
  %v1712 = vunpack.c.h.b16 %v110
  %v1713 = vunpack.c.l.b16 %v111
  %v1714 = vunpack.c.h.b16 %v111
  %v1715 = vunpack.c.l.b16 %v112
  %v1716 = vunpack.c.h.b16 %v112
  %v1717 = vunpack.c.l.b16 %v113
  %v1718 = vunpack.c.h.b16 %v113
  %v1719 = vunpack.c.l.b16 %v114
  %v1720 = vunpack.c.h.b16 %v114
  %v1721 = vunpack.c.l.b16 %v115
  %v1722 = vunpack.c.h.b16 %v115
  %v1723 = vunpack.c.l.b16 %v116
  %v1724 = vunpack.c.h.b16 %v116
  %v1725 = vunpack.c.l.b16 %v117
  %v1726 = vunpack.c.h.b16 %v117
  %v1727 = vunpack.c.l.b16 %v118
  %v1728 = vunpack.c.h.b16 %v118
  %v1729 = vunpack.c.l.b16 %v119
  %v1730 = vunpack.c.h.b16 %v119
  %v1731 = vunpack.c.l.b16 %v120
  %v1732 = vunpack.c.h.b16 %v120
  %v1733 = vunpack.c.l.b16 %v121
  %v1734 = vunpack.c.h.b16 %v121
  %v1735 = vunpack.c.l.b16 %v122
  %v1736 = vunpack.c.h.b16 %v122
  %v1737 = vunpack.c.l.b16 %v123
  %v1738 = vunpack.c.h.b16 %v123
  %v1739 = vunpack.c.l.b16 %v124
  %v1740 = vunpack.c.h.b16 %v124
  %v1741 = vunpack.c.l.b16 %v125
  %v1742 = vunpack.c.h.b16 %v125
  %v1743 = vunpack.c.l.b16 %v126
  %v1744 = vunpack.c.h.b16 %v126
  %v1745 = vunpack.c.l.b16 %v127
  %v1746 = vunpack.c.h.b16 %v127
  %v1747 = vunpack.c.l.b16 %v128
  %v1748 = vunpack.c.h.b16 %v128
  %v1749 = vunpack.c.l.b16 %v129
  %v1750 = vunpack.c.h.b16 %v129
  %v1751 = vunpack.c.l.b16 %v130
  %v1752 = vunpack.c.h.b16 %v130
  %v1753 = vunpack.c.l.b16 %v131
  %v1754 = vunpack.c.h.b16 %v131
  %v1755 = vunpack.c.l.b16 %v132
  %v1756 = vunpack.c.h.b16 %v132
  %v1757 = vunpack.c.l.b16 %v133
  %v1758 = vunpack.c.h.b16 %v133
  %v1759 = vunpack.c.l.b16 %v134
  %v1760 = vunpack.c.h.b16 %v134
  %v1761 = vunpack.c.l.b16 %v135
  %v1762 = vunpack.c.h.b16 %v135
  %v1763 = vunpack.c.l.b16 %v136
  %v1764 = vunpack.c.h.b16 %v136
  %v1765 = vunpack.c.l.b16 %v137
  %v1766 = vunpack.c.h.b16 %v137
  %v1767 = vunpack.c.l.b16 %v138
  %v1768 = vunpack.c.h.b16 %v138
  %v1769 = vunpack.c.l.b16 %v139
  %v1770 = vunpack.c.h.b16 %v139
  %v1771 = vunpack.c.l.b16 %v140
  %v1772 = vunpack.c.h.b16 %v140
  %v1773 = vunpack.c.l.b16 %v141
  %v1774 = vunpack.c.h.b16 %v141
  %v1775 = vunpack.c.l.b16 %v142
  %v1776 = vunpack.c.h.b16 %v142
  %v1777 = vunpack.c.l.b16 %v143
  %v1778 = vunpack.c.h.b16 %v143
  %v1779 = vunpack.c.l.b16 %v144
  %v1780 = vunpack.c.h.b16 %v144
  %v1781 = vunpack.c.l.b16 %v145
  %v1782 = vunpack.c.h.b16 %v145
  %v1783 = vunpack.c.l.b16 %v146
  %v1784 = vunpack.c.h.b16 %v146
  %v1785 = vunpack.c.l.b16 %v147
  %v1786 = vunpack.c.h.b16 %v147
  %v1787 = vunpack.c.l.b16 %v148
  %v1788 = vunpack.c.h.b16 %v148
  %v1789 = vunpack.c.l.b16 %v149
  %v1790 = vunpack.c.h.b16 %v149
  %v1791 = vunpack.c.l.b16 %v150
  %v1792 = vunpack.c.h.b16 %v150
  %v1793 = vunpack.c.l.b16 %v151
  %v1794 = vunpack.c.h.b16 %v151
  %v1795 = vunpack.c.l.b16 %v152
  %v1796 = vunpack.c.h.b16 %v152
  %v1797 = vunpack.c.l.b16 %v153
  %v1798 = vunpack.c.h.b16 %v153
  %v1799 = vunpack.c.l.b16 %v154
  %v1800 = vunpack.c.h.b16 %v154
  %v1801 = vunpack.c.l.b16 %v155
  %v1802 = vunpack.c.h.b16 %v155
  %v1803 = vunpack.c.l.b16 %v156
  %v1804 = vunpack.c.h.b16 %v156
  %v1805 = vunpack.c.l.b16 %v157
  %v1806 = vunpack.c.h.b16 %v157
  %v1807 = vunpack.c.l.b16 %v158
  %v1808 = vunpack.c.h.b16 %v158
  %v1809 = vunpack.c.l.b16 %v159
  %v1810 = vunpack.c.h.b16 %v159
  %v1811 = vunpack.c.l.b16 %v160
  %v1812 = vunpack.c.h.b16 %v160
  %v1813 = vunpack.c.l.b16 %v161
  %v1814 = vunpack.c.h.b16 %v161
  %v1815 = vunpack.c.l.b16 %v162
  %v1816 = vunpack.c.h.b16 %v162
  %v1817 = vunpack.c.l.b16 %v163
  %v1818 = vunpack.c.h.b16 %v163
  %v1819 = vunpack.c.l.b16 %v164
  %v1820 = vunpack.c.h.b16 %v164
  %v1821 = vunpack.c.l.b16 %v165
  %v1822 = vunpack.c.h.b16 %v165
  %v1823 = vunpack.c.l.b16 %v166
  %v1824 = vunpack.c.h.b16 %v166
  %v1825 = vunpack.c.l.b16 %v167
  %v1826 = vunpack.c.h.b16 %v167
  %v1827 = vunpack.c.l.b16 %v168
  %v1828 = vunpack.c.h.b16 %v168
  %v1829 = vunpack.c.l.b16 %v169
  %v1830 = vunpack.c.h.b16 %v169
  %v1831 = vunpack.c.l.b16 %v170
  %v1832 = vunpack.c.h.b16 %v170
  %v1833 = vunpack.c.l.b16 %v171
  %v1834 = vunpack.c.h.b16 %v171
  %v1835 = vunpack.c.l.b16 %v172
  %v1836 = vunpack.c.h.b16 %v172
  %v1837 = vunpack.c.l.b16 %v173
  %v1838 = vunpack.c.h.b16 %v173
  %v1839 = vunpack.c.l.b16 %v174
  %v1840 = vunpack.c.h.b16 %v174
  %v1841 = vunpack.c.l.b16 %v175
  %v1842 = vunpack.c.h.b16 %v175
  %v1843 = vunpack.c.l.b16 %v176
  %v1844 = vunpack.c.h.b16 %v176
  %v1845 = vunpack.c.l.b16 %v177
  %v1846 = vunpack.c.h.b16 %v177
  %v1847 = vunpack.c.l.b16 %v178
  %v1848 = vunpack.c.h.b16 %v178
  %v1849 = vunpack.c.l.b16 %v179
  %v1850 = vunpack.c.h.b16 %v179
  %v1851 = vunpack.c.l.b16 %v180
  %v1852 = vunpack.c.h.b16 %v180
  %v1853 = vunpack.c.l.b16 %v181
  %v1854 = vunpack.c.h.b16 %v181
  %v1855 = vunpack.c.l.b16 %v182
  %v1856 = vunpack.c.h.b16 %v182
  %v1857 = vunpack.c.l.b16 %v183
  %v1858 = vunpack.c.h.b16 %v183
  %v1859 = vunpack.c.l.b16 %v184
  %v1860 = vunpack.c.h.b16 %v184
  %v1861 = vunpack.c.l.b16 %v185
  %v1862 = vunpack.c.h.b16 %v185
  %v1863 = vunpack.c.l.b16 %v186
  %v1864 = vunpack.c.h.b16 %v186
  %v1865 = vunpack.c.l.b16 %v187
  %v1866 = vunpack.c.h.b16 %v187
  %v1867 = vunpack.c.l.b16 %v188
  %v1868 = vunpack.c.h.b16 %v188
  %v1869 = vunpack.c.l.b16 %v189
  %v1870 = vunpack.c.h.b16 %v189
  %v1871 = vunpack.c.l.b16 %v190
  %v1872 = vunpack.c.h.b16 %v190
  %v1873 = vunpack.c.l.b16 %v191
  %v1874 = vunpack.c.h.b16 %v191
  %v1875 = vunpack.c.l.b16 %v192
  %v1876 = vunpack.c.h.b16 %v192
  %v1877 = vunpack.c.l.b16 %v193
  %v1878 = vunpack.c.h.b16 %v193
  %v1879 = vunpack.c.l.b16 %v194
  %v1880 = vunpack.c.h.b16 %v194
  %v1881 = vunpack.c.l.b16 %v195
  %v1882 = vunpack.c.h.b16 %v195
  %v1883 = vunpack.c.l.b16 %v196
  %v1884 = vunpack.c.h.b16 %v196
  %v1885 = vunpack.c.l.b16 %v197
  %v1886 = vunpack.c.h.b16 %v197
  %v1887 = vunpack.c.l.b16 %v198
  %v1888 = vunpack.c.h.b16 %v198
  %v1889 = vunpack.c.l.b16 %v199
  %v1890 = vunpack.c.h.b16 %v199
  %v1891 = vunpack.c.l.b16 %v200
  %v1892 = vunpack.c.h.b16 %v200
  %v1893 = vunpack.c.l.b16 %v201
  %v1894 = vunpack.c.h.b16 %v201
  %v1895 = vunpack.c.l.b16 %v202
  %v1896 = vunpack.c.h.b16 %v202
  %v1897 = vunpack.c.l.b16 %v203
  %v1898 = vunpack.c.h.b16 %v203
  %v1899 = vunpack.c.l.b16 %v204
  %v1900 = vunpack.c.h.b16 %v204
  %v1901 = vunpack.c.l.b16 %v205
  %v1902 = vunpack.c.h.b16 %v205
  %v1903 = vunpack.c.l.b16 %v206
  %v1904 = vunpack.c.h.b16 %v206
  %v1905 = vunpack.c.l.b16 %v207
  %v1906 = vunpack.c.h.b16 %v207
  %v1907 = vunpack.c.l.b16 %v208
  %v1908 = vunpack.c.h.b16 %v208
  %v1909 = vunpack.c.l.b16 %v209
  %v1910 = vunpack.c.h.b16 %v209
  %v1911 = vunpack.c.l.b16 %v210
  %v1912 = vunpack.c.h.b16 %v210
  %v1913 = vunpack.c.l.b16 %v211
  %v1914 = vunpack.c.h.b16 %v211
  %v1915 = vunpack.c.l.b16 %v212
  %v1916 = vunpack.c.h.b16 %v212
  %v1917 = vunpack.c.l.b16 %v213
  %v1918 = vunpack.c.h.b16 %v213
  %v1919 = vunpack.c.l.b16 %v214
  %v1920 = vunpack.c.h.b16 %v214
  %v1921 = vunpack.c.l.b16 %v215
  %v1922 = vunpack.c.h.b16 %v215
  %v1923 = vunpack.c.l.b16 %v216
  %v1924 = vunpack.c.h.b16 %v216
  %v1925 = vunpack.c.l.b16 %v217
  %v1926 = vunpack.c.h.b16 %v217
  %v1927 = vunpack.c.l.b16 %v218
  %v1928 = vunpack.c.h.b16 %v218
  %v1929 = vunpack.c.l.b16 %v219
  %v1930 = vunpack.c.h.b16 %v219
  %v1931 = vunpack.c.l.b16 %v220
  %v1932 = vunpack.c.h.b16 %v220
  %v1933 = vunpack.c.l.b16 %v221
  %v1934 = vunpack.c.h.b16 %v221
  %v1935 = vunpack.c.l.b16 %v222
  %v1936 = vunpack.c.h.b16 %v222
  %v1937 = vunpack.c.l.b16 %v223
  %v1938 = vunpack.c.h.b16 %v223
  %v1939 = vunpack.c.l.b16 %v224
  %v1940 = vunpack.c.h.b16 %v224
  %v1941 = vunpack.c.l.b16 %v225
  %v1942 = vunpack.c.h.b16 %v225
  %v1943 = vunpack.c.l.b16 %v226
  %v1944 = vunpack.c.h.b16 %v226
  %v1945 = vunpack.c.l.b16 %v227
  %v1946 = vunpack.c.h.b16 %v227
  %v1947 = vunpack.c.l.b16 %v228
  %v1948 = vunpack.c.h.b16 %v228
  %v1949 = vunpack.c.l.b16 %v229
  %v1950 = vunpack.c.h.b16 %v229
  %v1951 = vunpack.c.l.b16 %v230
  %v1952 = vunpack.c.h.b16 %v230
  %v1953 = vunpack.c.l.b16 %v231
  %v1954 = vunpack.c.h.b16 %v231
  %v1955 = vunpack.c.l.b16 %v232
  %v1956 = vunpack.c.h.b16 %v232
  %v1957 = vunpack.c.l.b16 %v233
  %v1958 = vunpack.c.h.b16 %v233
  %v1959 = vunpack.c.l.b16 %v234
  %v1960 = vunpack.c.h.b16 %v234
  %v1961 = vunpack.c.l.b16 %v235
  %v1962 = vunpack.c.h.b16 %v235
  %v1963 = vunpack.c.l.b16 %v236
  %v1964 = vunpack.c.h.b16 %v236
  %v1965 = vunpack.c.l.b16 %v237
  %v1966 = vunpack.c.h.b16 %v237
  %v1967 = vunpack.c.l.b16 %v238
  %v1968 = vunpack.c.h.b16 %v238
  %v1969 = vunpack.c.l.b16 %v239
  %v1970 = vunpack.c.h.b16 %v239
  %v1971 = vunpack.c.l.b16 %v240
  %v1972 = vunpack.c.h.b16 %v240
  %v1973 = vunpack.c.l.b16 %v241
  %v1974 = vunpack.c.h.b16 %v241
  %v1975 = vunpack.c.l.b16 %v242
  %v1976 = vunpack.c.h.b16 %v242
  %v1977 = vunpack.c.l.b16 %v243
  %v1978 = vunpack.c.h.b16 %v243
  %v1979 = vunpack.c.l.b16 %v244
  %v1980 = vunpack.c.h.b16 %v244
  %v1981 = vunpack.c.l.b16 %v245
  %v1982 = vunpack.c.h.b16 %v245
  %v1983 = vunpack.c.l.b16 %v246
  %v1984 = vunpack.c.h.b16 %v246
  %v1985 = vunpack.c.l.b16 %v247
  %v1986 = vunpack.c.h.b16 %v247
  %v1987 = vunpack.c.l.b16 %v248
  %v1988 = vunpack.c.h.b16 %v248
  %v1989 = vunpack.c.l.b16 %v249
  %v1990 = vunpack.c.h.b16 %v249
  %v1991 = vunpack.c.l.b16 %v250
  %v1992 = vunpack.c.h.b16 %v250
  %v1993 = vunpack.c.l.b16 %v251
  %v1994 = vunpack.c.h.b16 %v251
  %v1995 = vunpack.c.l.b16 %v252
  %v1996 = vunpack.c.h.b16 %v252
  %v1997 = vunpack.c.l.b16 %v253
  %v1998 = vunpack.c.h.b16 %v253
  %v1999 = vunpack.c.l.b16 %v254
  %v2000 = vunpack.c.h.b16 %v254
  %v2001 = vunpack.c.l.b16 %v255
  %v2002 = vunpack.c.h.b16 %v255
  %v2003 = vunpack.c.l.b16 %v256
  %v2004 = vunpack.c.h.b16 %v256
  %v2005 = vunpack.c.l.b16 %v257
  %v2006 = vunpack.c.h.b16 %v257
  %v2007 = vunpack.c.l.b16 %v258
  %v2008 = vunpack.c.h.b16 %v258
  %v2009 = vunpack.c.l.b16 %v259
  %v2010 = vunpack.c.h.b16 %v259
  %v2011 = vunpack.c.l.b16 %v260
  %v2012 = vunpack.c.h.b16 %v260
  %v2013 = vunpack.c.l.b16 %v261
  %v2014 = vunpack.c.h.b16 %v261
  %v2015 = vunpack.c.l.b16 %v262
  %v2016 = vunpack.c.h.b16 %v262
  %v2017 = vunpack.c.l.b16 %v263
  %v2018 = vunpack.c.h.b16 %v263
  %v2019 = vunpack.c.l.b16 %v264
  %v2020 = vunpack.c.h.b16 %v264
  %v2021 = vunpack.c.l.b16 %v265
  %v2022 = vunpack.c.h.b16 %v265
  %v2023 = vunpack.c.l.b16 %v266
  %v2024 = vunpack.c.h.b16 %v266
  %v2025 = vunpack.c.l.b16 %v267
  %v2026 = vunpack.c.h.b16 %v267
  %v2027 = vunpack.c.l.b16 %v268
  %v2028 = vunpack.c.h.b16 %v268
  %v2029 = vunpack.c.l.b16 %v269
  %v2030 = vunpack.c.h.b16 %v269
  %v2031 = vunpack.c.l.b16 %v270
  %v2032 = vunpack.c.h.b16 %v270
  %v2033 = vunpack.c.l.b16 %v271
  %v2034 = vunpack.c.h.b16 %v271
  %v2035 = vunpack.c.l.b16 %v272
  %v2036 = vunpack.c.h.b16 %v272
  %v2037 = vunpack.c.l.b16 %v273
  %v2038 = vunpack.c.h.b16 %v273
  %v2039 = vunpack.c.l.b16 %v274
  %v2040 = vunpack.c.h.b16 %v274
  %v2041 = vunpack.c.l.b16 %v275
  %v2042 = vunpack.c.h.b16 %v275
  %v2043 = vunpack.c.l.b16 %v276
  %v2044 = vunpack.c.h.b16 %v276
  %v2045 = vunpack.c.l.b16 %v277
  %v2046 = vunpack.c.h.b16 %v277
  %v2047 = vunpack.c.l.b16 %v278
  %v2048 = vunpack.c.h.b16 %v278
  %v2049 = vunpack.c.l.b16 %v279
  %v2050 = vunpack.c.h.b16 %v279
  %v2051 = vunpack.c.l.b16 %v280
  %v2052 = vunpack.c.h.b16 %v280
  %v2053 = vunpack.c.l.b16 %v281
  %v2054 = vunpack.c.h.b16 %v281
  %v2055 = vunpack.c.l.b16 %v282
  %v2056 = vunpack.c.h.b16 %v282
  %v2057 = vunpack.c.l.b16 %v283
  %v2058 = vunpack.c.h.b16 %v283
  %v2059 = vunpack.c.l.b16 %v284
  %v2060 = vunpack.c.h.b16 %v284
  %v2061 = vunpack.c.l.b16 %v285
  %v2062 = vunpack.c.h.b16 %v285
  %v2063 = vunpack.c.l.b16 %v286
  %v2064 = vunpack.c.h.b16 %v286
  %v2065 = vunpack.c.l.b16 %v287
  %v2066 = vunpack.c.h.b16 %v287
  %v2067 = vunpack.c.l.b16 %v288
  %v2068 = vunpack.c.h.b16 %v288
  %v2069 = vunpack.c.l.b16 %v289
  %v2070 = vunpack.c.h.b16 %v289
  %v2071 = vunpack.c.l.b16 %v290
  %v2072 = vunpack.c.h.b16 %v290
  %v2073 = vunpack.c.l.b16 %v291
  %v2074 = vunpack.c.h.b16 %v291
  %v2075 = vunpack.c.l.b16 %v292
  %v2076 = vunpack.c.h.b16 %v292
  %v2077 = vunpack.c.l.b16 %v293
  %v2078 = vunpack.c.h.b16 %v293
  %v2079 = vunpack.c.l.b16 %v294
  %v2080 = vunpack.c.h.b16 %v294
  %v2081 = vunpack.c.l.b16 %v295
  %v2082 = vunpack.c.h.b16 %v295
  %v2083 = vunpack.c.l.b16 %v296
  %v2084 = vunpack.c.h.b16 %v296
  %v2085 = vpack.c.b16 %v1575, %v1573
  %v2086 = vpack.c.b16 %v1576, %v1574
  %v2087 = vpack.c.b16 %v1579, %v1577
  %v2088 = vpack.c.b16 %v1580, %v1578
  %v2089 = vpack.c.b16 %v1583, %v1581
  %v2090 = vpack.c.b16 %v1584, %v1582
  %v2091 = vpack.c.b16 %v1587, %v1585
  %v2092 = vpack.c.b16 %v1588, %v1586
  %v2093 = vpack.c.b16 %v1591, %v1589
  %v2094 = vpack.c.b16 %v1592, %v1590
  %v2095 = vpack.c.b16 %v1595, %v1593
  %v2096 = vpack.c.b16 %v1596, %v1594
  %v2097 = vpack.c.b16 %v1599, %v1597
  %v2098 = vpack.c.b16 %v1600, %v1598
  %v2099 = vpack.c.b16 %v1603, %v1601
  %v2100 = vpack.c.b16 %v1604, %v1602
  %v2101 = vpack.c.b16 %v1607, %v1605
  %v2102 = vpack.c.b16 %v1608, %v1606
  %v2103 = vpack.c.b16 %v1611, %v1609
  %v2104 = vpack.c.b16 %v1612, %v1610
  %v2105 = vpack.c.b16 %v1615, %v1613
  %v2106 = vpack.c.b16 %v1616, %v1614
  %v2107 = vpack.c.b16 %v1619, %v1617
  %v2108 = vpack.c.b16 %v1620, %v1618
  %v2109 = vpack.c.b16 %v1623, %v1621
  %v2110 = vpack.c.b16 %v1624, %v1622
  %v2111 = vpack.c.b16 %v1627, %v1625
  %v2112 = vpack.c.b16 %v1628, %v1626
  %v2113 = vpack.c.b16 %v1631, %v1629
  %v2114 = vpack.c.b16 %v1632, %v1630
  %v2115 = vpack.c.b16 %v1635, %v1633
  %v2116 = vpack.c.b16 %v1636, %v1634
  %v2117 = vpack.c.b16 %v1639, %v1637
  %v2118 = vpack.c.b16 %v1640, %v1638
  %v2119 = vpack.c.b16 %v1643, %v1641
  %v2120 = vpack.c.b16 %v1644, %v1642
  %v2121 = vpack.c.b16 %v1647, %v1645
  %v2122 = vpack.c.b16 %v1648, %v1646
  %v2123 = vpack.c.b16 %v1651, %v1649
  %v2124 = vpack.c.b16 %v1652, %v1650
  %v2125 = vpack.c.b16 %v1655, %v1653
  %v2126 = vpack.c.b16 %v1656, %v1654
  %v2127 = vpack.c.b16 %v1659, %v1657
  %v2128 = vpack.c.b16 %v1660, %v1658
  %v2129 = vpack.c.b16 %v1663, %v1661
  %v2130 = vpack.c.b16 %v1664, %v1662
  %v2131 = vpack.c.b16 %v1667, %v1665
  %v2132 = vpack.c.b16 %v1668, %v1666
  %v2133 = vpack.c.b16 %v1671, %v1669
  %v2134 = vpack.c.b16 %v1672, %v1670
  %v2135 = vpack.c.b16 %v1675, %v1673
  %v2136 = vpack.c.b16 %v1676, %v1674
  %v2137 = vpack.c.b16 %v1679, %v1677
  %v2138 = vpack.c.b16 %v1680, %v1678
  %v2139 = vpack.c.b16 %v1683, %v1681
  %v2140 = vpack.c.b16 %v1684, %v1682
  %v2141 = vpack.c.b16 %v1687, %v1685
  %v2142 = vpack.c.b16 %v1688, %v1686
  %v2143 = vpack.c.b16 %v1691, %v1689
  %v2144 = vpack.c.b16 %v1692, %v1690
  %v2145 = vpack.c.b16 %v1695, %v1693
  %v2146 = vpack.c.b16 %v1696, %v1694
  %v2147 = vpack.c.b16 %v1699, %v1697
  %v2148 = vpack.c.b16 %v1700, %v1698
  %v2149 = vpack.c.b16 %v1703, %v1701
  %v2150 = vpack.c.b16 %v1704, %v1702
  %v2151 = vpack.c.b16 %v1707, %v1705
  %v2152 = vpack.c.b16 %v1708, %v1706
  %v2153 = vpack.c.b16 %v1711, %v1709
  %v2154 = vpack.c.b16 %v1712, %v1710
  %v2155 = vpack.c.b16 %v1715, %v1713
  %v2156 = vpack.c.b16 %v1716, %v1714
  %v2157 = vpack.c.b16 %v1719, %v1717
  %v2158 = vpack.c.b16 %v1720, %v1718
  %v2159 = vpack.c.b16 %v1723, %v1721
  %v2160 = vpack.c.b16 %v1724, %v1722
  %v2161 = vpack.c.b16 %v1727, %v1725
  %v2162 = vpack.c.b16 %v1728, %v1726
  %v2163 = vpack.c.b16 %v1731, %v1729
  %v2164 = vpack.c.b16 %v1732, %v1730
  %v2165 = vpack.c.b16 %v1735, %v1733
  %v2166 = vpack.c.b16 %v1736, %v1734
  %v2167 = vpack.c.b16 %v1739, %v1737
  %v2168 = vpack.c.b16 %v1740, %v1738
  %v2169 = vpack.c.b16 %v1743, %v1741
  %v2170 = vpack.c.b16 %v1744, %v1742
  %v2171 = vpack.c.b16 %v1747, %v1745
  %v2172 = vpack.c.b16 %v1748, %v1746
  %v2173 = vpack.c.b16 %v1751, %v1749
  %v2174 = vpack.c.b16 %v1752, %v1750
  %v2175 = vpack.c.b16 %v1755, %v1753
  %v2176 = vpack.c.b16 %v1756, %v1754
  %v2177 = vpack.c.b16 %v1759, %v1757
  %v2178 = vpack.c.b16 %v1760, %v1758
  %v2179 = vpack.c.b16 %v1763, %v1761
  %v2180 = vpack.c.b16 %v1764, %v1762
  %v2181 = vpack.c.b16 %v1767, %v1765
  %v2182 = vpack.c.b16 %v1768, %v1766
  %v2183 = vpack.c.b16 %v1771, %v1769
  %v2184 = vpack.c.b16 %v1772, %v1770
  %v2185 = vpack.c.b16 %v1775, %v1773
  %v2186 = vpack.c.b16 %v1776, %v1774
  %v2187 = vpack.c.b16 %v1779, %v1777
  %v2188 = vpack.c.b16 %v1780, %v1778
  %v2189 = vpack.c.b16 %v1783, %v1781
  %v2190 = vpack.c.b16 %v1784, %v1782
  %v2191 = vpack.c.b16 %v1787, %v1785
  %v2192 = vpack.c.b16 %v1788, %v1786
  %v2193 = vpack.c.b16 %v1791, %v1789
  %v2194 = vpack.c.b16 %v1792, %v1790
  %v2195 = vpack.c.b16 %v1795, %v1793
  %v2196 = vpack.c.b16 %v1796, %v1794
  %v2197 = vpack.c.b16 %v1799, %v1797
  %v2198 = vpack.c.b16 %v1800, %v1798
  %v2199 = vpack.c.b16 %v1803, %v1801
  %v2200 = vpack.c.b16 %v1804, %v1802
  %v2201 = vpack.c.b16 %v1807, %v1805
  %v2202 = vpack.c.b16 %v1808, %v1806
  %v2203 = vpack.c.b16 %v1811, %v1809
  %v2204 = vpack.c.b16 %v1812, %v1810
  %v2205 = vpack.c.b16 %v1815, %v1813
  %v2206 = vpack.c.b16 %v1816, %v1814
  %v2207 = vpack.c.b16 %v1819, %v1817
  %v2208 = vpack.c.b16 %v1820, %v1818
  %v2209 = vpack.c.b16 %v1823, %v1821
  %v2210 = vpack.c.b16 %v1824, %v1822
  %v2211 = vpack.c.b16 %v1827, %v1825
  %v2212 = vpack.c.b16 %v1828, %v1826
  %v2213 = vpack.c.b16 %v1831, %v1829
  %v2214 = vpack.c.b16 %v1832, %v1830
  %v2215 = vpack.c.b16 %v1835, %v1833
  %v2216 = vpack.c.b16 %v1836, %v1834
  %v2217 = vpack.c.b16 %v1839, %v1837
  %v2218 = vpack.c.b16 %v1840, %v1838
  %v2219 = vpack.c.b16 %v1843, %v1841
  %v2220 = vpack.c.b16 %v1844, %v1842
  %v2221 = vpack.c.b16 %v1847, %v1845
  %v2222 = vpack.c.b16 %v1848, %v1846
  %v2223 = vpack.c.b16 %v1851, %v1849
  %v2224 = vpack.c.b16 %v1852, %v1850
  %v2225 = vpack.c.b16 %v1855, %v1853
  %v2226 = vpack.c.b16 %v1856, %v1854
  %v2227 = vpack.c.b16 %v1859, %v1857
  %v2228 = vpack.c.b16 %v1860, %v1858
  %v2229 = vpack.c.b16 %v1863, %v1861
  %v2230 = vpack.c.b16 %v1864, %v1862
  %v2231 = vpack.c.b16 %v1867, %v1865
  %v2232 = vpack.c.b16 %v1868, %v1866
  %v2233 = vpack.c.b16 %v1871, %v1869
  %v2234 = vpack.c.b16 %v1872, %v1870
  %v2235 = vpack.c.b16 %v1875, %v1873
  %v2236 = vpack.c.b16 %v1876, %v1874
  %v2237 = vpack.c.b16 %v1879, %v1877
  %v2238 = vpack.c.b16 %v1880, %v1878
  %v2239 = vpack.c.b16 %v1883, %v1881
  %v2240 = vpack.c.b16 %v1884, %v1882
  %v2241 = vpack.c.b16 %v1887, %v1885
  %v2242 = vpack.c.b16 %v1888, %v1886
  %v2243 = vpack.c.b16 %v1891, %v1889
  %v2244 = vpack.c.b16 %v1892, %v1890
  %v2245 = vpack.c.b16 %v1895, %v1893
  %v2246 = vpack.c.b16 %v1896, %v1894
  %v2247 = vpack.c.b16 %v1899, %v1897
  %v2248 = vpack.c.b16 %v1900, %v1898
  %v2249 = vpack.c.b16 %v1903, %v1901
  %v2250 = vpack.c.b16 %v1904, %v1902
  %v2251 = vpack.c.b16 %v1907, %v1905
  %v2252 = vpack.c.b16 %v1908, %v1906
  %v2253 = vpack.c.b16 %v1911, %v1909
  %v2254 = vpack.c.b16 %v1912, %v1910
  %v2255 = vpack.c.b16 %v1915, %v1913
  %v2256 = vpack.c.b16 %v1916, %v1914
  %v2257 = vpack.c.b16 %v1919, %v1917
  %v2258 = vpack.c.b16 %v1920, %v1918
  %v2259 = vpack.c.b16 %v1923, %v1921
  %v2260 = vpack.c.b16 %v1924, %v1922
  %v2261 = vpack.c.b16 %v1927, %v1925
  %v2262 = vpack.c.b16 %v1928, %v1926
  %v2263 = vpack.c.b16 %v1931, %v1929
  %v2264 = vpack.c.b16 %v1932, %v1930
  %v2265 = vpack.c.b16 %v1935, %v1933
  %v2266 = vpack.c.b16 %v1936, %v1934
  %v2267 = vpack.c.b16 %v1939, %v1937
  %v2268 = vpack.c.b16 %v1940, %v1938
  %v2269 = vpack.c.b16 %v1943, %v1941
  %v2270 = vpack.c.b16 %v1944, %v1942
  %v2271 = vpack.c.b16 %v1947, %v1945
  %v2272 = vpack.c.b16 %v1948, %v1946
  %v2273 = vpack.c.b16 %v1951, %v1949
  %v2274 = vpack.c.b16 %v1952, %v1950
  %v2275 = vpack.c.b16 %v1955, %v1953
  %v2276 = vpack.c.b16 %v1956, %v1954
  %v2277 = vpack.c.b16 %v1959, %v1957
  %v2278 = vpack.c.b16 %v1960, %v1958
  %v2279 = vpack.c.b16 %v1963, %v1961
  %v2280 = vpack.c.b16 %v1964, %v1962
  %v2281 = vpack.c.b16 %v1967, %v1965
  %v2282 = vpack.c.b16 %v1968, %v1966
  %v2283 = vpack.c.b16 %v1971, %v1969
  %v2284 = vpack.c.b16 %v1972, %v1970
  %v2285 = vpack.c.b16 %v1975, %v1973
  %v2286 = vpack.c.b16 %v1976, %v1974
  %v2287 = vpack.c.b16 %v1979, %v1977
  %v2288 = vpack.c.b16 %v1980, %v1978
  %v2289 = vpack.c.b16 %v1983, %v1981
  %v2290 = vpack.c.b16 %v1984, %v1982
  %v2291 = vpack.c.b16 %v1987, %v1985
  %v2292 = vpack.c.b16 %v1988, %v1986
  %v2293 = vpack.c.b16 %v1991, %v1989
  %v2294 = vpack.c.b16 %v1992, %v1990
  %v2295 = vpack.c.b16 %v1995, %v1993
  %v2296 = vpack.c.b16 %v1996, %v1994
  %v2297 = vpack.c.b16 %v1999, %v1997
  %v2298 = vpack.c.b16 %v2000, %v1998
  %v2299 = vpack.c.b16 %v2003, %v2001
  %v2300 = vpack.c.b16 %v2004, %v2002
  %v2301 = vpack.c.b16 %v2007, %v2005
  %v2302 = vpack.c.b16 %v2008, %v2006
  %v2303 = vpack.c.b16 %v2011, %v2009
  %v2304 = vpack.c.b16 %v2012, %v2010
  %v2305 = vpack.c.b16 %v2015, %v2013
  %v2306 = vpack.c.b16 %v2016, %v2014
  %v2307 = vpack.c.b16 %v2019, %v2017
  %v2308 = vpack.c.b16 %v2020, %v2018
  %v2309 = vpack.c.b16 %v2023, %v2021
  %v2310 = vpack.c.b16 %v2024, %v2022
  %v2311 = vpack.c.b16 %v2027, %v2025
  %v2312 = vpack.c.b16 %v2028, %v2026
  %v2313 = vpack.c.b16 %v2031, %v2029
  %v2314 = vpack.c.b16 %v2032, %v2030
  %v2315 = vpack.c.b16 %v2035, %v2033
  %v2316 = vpack.c.b16 %v2036, %v2034
  %v2317 = vpack.c.b16 %v2039, %v2037
  %v2318 = vpack.c.b16 %v2040, %v2038
  %v2319 = vpack.c.b16 %v2043, %v2041
  %v2320 = vpack.c.b16 %v2044, %v2042
  %v2321 = vpack.c.b16 %v2047, %v2045
  %v2322 = vpack.c.b16 %v2048, %v2046
  %v2323 = vpack.c.b16 %v2051, %v2049
  %v2324 = vpack.c.b16 %v2052, %v2050
  %v2325 = vpack.c.b16 %v2055, %v2053
  %v2326 = vpack.c.b16 %v2056, %v2054
  %v2327 = vpack.c.b16 %v2059, %v2057
  %v2328 = vpack.c.b16 %v2060, %v2058
  %v2329 = vpack.c.b16 %v2063, %v2061
  %v2330 = vpack.c.b16 %v2064, %v2062
  %v2331 = vpack.c.b16 %v2067, %v2065
  %v2332 = vpack.c.b16 %v2068, %v2066
  %v2333 = vpack.c.b16 %v2071, %v2069
  %v2334 = vpack.c.b16 %v2072, %v2070
  %v2335 = vpack.c.b16 %v2075, %v2073
  %v2336 = vpack.c.b16 %v2076, %v2074
  %v2337 = vpack.c.b16 %v2079, %v2077
  %v2338 = vpack.c.b16 %v2080, %v2078
  %v2339 = vpack.c.b16 %v2083, %v2081
  %v2340 = vpack.c.b16 %v2084, %v2082
  %2597 = vmatprep.subr.bf16.mxu0 %v2086
  %2598 = vmatpush1.bf16.msra.mxu0 %v2085
  %2599 = vmatprep.subr.bf16.mxu0 %v2088
  %2600 = vmatpush1.bf16.msra.mxu0 %v2087
  %2601 = vmatprep.subr.bf16.mxu0 %v2090
  %2602 = vmatpush1.bf16.msra.mxu0 %v2089
  %2603 = vmatprep.subr.bf16.mxu0 %v2092
  %2604 = vmatpush1.bf16.msra.mxu0 %v2091
  %2605 = vmatprep.subr.bf16.mxu0 %v2094
  %2606 = vmatpush1.bf16.msra.mxu0 %v2093
  %2607 = vmatprep.subr.bf16.mxu0 %v2096
  %2608 = vmatpush1.bf16.msra.mxu0 %v2095
  %2609 = vmatprep.subr.bf16.mxu0 %v2098
  %2610 = vmatpush1.bf16.msra.mxu0 %v2097
  %2611 = vmatprep.subr.bf16.mxu0 %v2100
  %2612 = vmatpush1.bf16.msra.mxu0 %v2099
  %2613 = vmatprep.subr.bf16.mxu0 %v2102
  %2614 = vmatpush1.bf16.msra.mxu0 %v2101
  %2615 = vmatprep.subr.bf16.mxu0 %v2104
  %2616 = vmatpush1.bf16.msra.mxu0 %v2103
  %2617 = vmatprep.subr.bf16.mxu0 %v2106
  %2618 = vmatpush1.bf16.msra.mxu0 %v2105
  %2619 = vmatprep.subr.bf16.mxu0 %v2108
  %2620 = vmatpush1.bf16.msra.mxu0 %v2107
  %2621 = vmatprep.subr.bf16.mxu0 %v2110
  %2622 = vmatpush1.bf16.msra.mxu0 %v2109
  %2623 = vmatprep.subr.bf16.mxu0 %v2112
  %2624 = vmatpush1.bf16.msra.mxu0 %v2111
  %2625 = vmatprep.subr.bf16.mxu0 %v2114
  %2626 = vmatpush1.bf16.msra.mxu0 %v2113
  %2627 = vmatprep.subr.bf16.mxu0 %v2116
  %2628 = vmatpush1.bf16.msra.mxu0 %v2115
  %2629 = vmatprep.mubr.bf16.mxu0 %v1286
  %2630 = vmatmul.mubr.bf16.gmra.mrb[0].mxu0 %v1285
  %v2631 = vpop.f32.mrb[0].mxu0
  %v2632 = vadd.f32 %v1255, %v2631
  %v2633 = vpop.f32.mrb[0].mxu0
  %v2634 = vadd.f32 %v1257, %v2633
  %v2635 = vpop.f32.mrb[0].mxu0
  %v2636 = vpop.f32.mrb[0].mxu0
  %2637 = vdwg.mxu0
  %2638 = vmatprep.subr.bf16.mxu0 %v2118
  %2639 = vmatpush1.bf16.msra.mxu0 %v2117
  %2640 = vmatprep.subr.bf16.mxu0 %v2120
  %2641 = vmatpush1.bf16.msra.mxu0 %v2119
  %2642 = vmatprep.subr.bf16.mxu0 %v2122
  %2643 = vmatpush1.bf16.msra.mxu0 %v2121
  %2644 = vmatprep.subr.bf16.mxu0 %v2124
  %2645 = vmatpush1.bf16.msra.mxu0 %v2123
  %2646 = vmatprep.subr.bf16.mxu0 %v2126
  %2647 = vmatpush1.bf16.msra.mxu0 %v2125
  %2648 = vmatprep.subr.bf16.mxu0 %v2128
  %2649 = vmatpush1.bf16.msra.mxu0 %v2127
  %2650 = vmatprep.subr.bf16.mxu0 %v2130
  %2651 = vmatpush1.bf16.msra.mxu0 %v2129
  %2652 = vmatprep.subr.bf16.mxu0 %v2132
  %2653 = vmatpush1.bf16.msra.mxu0 %v2131
  %2654 = vmatprep.subr.bf16.mxu0 %v2134
  %2655 = vmatpush1.bf16.msra.mxu0 %v2133
  %2656 = vmatprep.subr.bf16.mxu0 %v2136
  %2657 = vmatpush1.bf16.msra.mxu0 %v2135
  %2658 = vmatprep.subr.bf16.mxu0 %v2138
  %2659 = vmatpush1.bf16.msra.mxu0 %v2137
  %2660 = vmatprep.subr.bf16.mxu0 %v2140
  %2661 = vmatpush1.bf16.msra.mxu0 %v2139
  %2662 = vmatprep.subr.bf16.mxu0 %v2142
  %2663 = vmatpush1.bf16.msra.mxu0 %v2141
  %2664 = vmatprep.subr.bf16.mxu0 %v2144
  %2665 = vmatpush1.bf16.msra.mxu0 %v2143
  %2666 = vmatprep.subr.bf16.mxu0 %v2146
  %2667 = vmatpush1.bf16.msra.mxu0 %v2145
  %2668 = vmatprep.subr.bf16.mxu0 %v2148
  %2669 = vmatpush1.bf16.msra.mxu0 %v2147
  %2670 = vmatprep.mubr.bf16.mxu0 %v1288
  %2671 = vmatmul.mubr.bf16.gmra.mrb[0].mxu0 %v1287
  %v2672 = vpop.f32.mrb[0].mxu0
  %v2673 = vadd.f32 %v2632, %v2672
  %v2674 = vpop.f32.mrb[0].mxu0
  %v2675 = vadd.f32 %v2634, %v2674
  %v2676 = vpop.f32.mrb[0].mxu0
  %v2677 = vpop.f32.mrb[0].mxu0
  %2678 = vdwg.mxu0
  %2679 = vmatprep.subr.bf16.mxu0 %v2150
  %2680 = vmatpush1.bf16.msra.mxu0 %v2149
  %2681 = vmatprep.subr.bf16.mxu0 %v2152
  %2682 = vmatpush1.bf16.msra.mxu0 %v2151
  %2683 = vmatprep.subr.bf16.mxu0 %v2154
  %2684 = vmatpush1.bf16.msra.mxu0 %v2153
  %2685 = vmatprep.subr.bf16.mxu0 %v2156
  %2686 = vmatpush1.bf16.msra.mxu0 %v2155
  %2687 = vmatprep.subr.bf16.mxu0 %v2158
  %2688 = vmatpush1.bf16.msra.mxu0 %v2157
  %2689 = vmatprep.subr.bf16.mxu0 %v2160
  %2690 = vmatpush1.bf16.msra.mxu0 %v2159
  %2691 = vmatprep.subr.bf16.mxu0 %v2162
  %2692 = vmatpush1.bf16.msra.mxu0 %v2161
  %2693 = vmatprep.subr.bf16.mxu0 %v2164
  %2694 = vmatpush1.bf16.msra.mxu0 %v2163
  %2695 = vmatprep.subr.bf16.mxu0 %v2166
  %2696 = vmatpush1.bf16.msra.mxu0 %v2165
  %2697 = vmatprep.subr.bf16.mxu0 %v2168
  %2698 = vmatpush1.bf16.msra.mxu0 %v2167
  %2699 = vmatprep.subr.bf16.mxu0 %v2170
  %2700 = vmatpush1.bf16.msra.mxu0 %v2169
  %2701 = vmatprep.subr.bf16.mxu0 %v2172
  %2702 = vmatpush1.bf16.msra.mxu0 %v2171
  %2703 = vmatprep.subr.bf16.mxu0 %v2174
  %2704 = vmatpush1.bf16.msra.mxu0 %v2173
  %2705 = vmatprep.subr.bf16.mxu0 %v2176
  %2706 = vmatpush1.bf16.msra.mxu0 %v2175
  %2707 = vmatprep.subr.bf16.mxu0 %v2178
  %2708 = vmatpush1.bf16.msra.mxu0 %v2177
  %2709 = vmatprep.subr.bf16.mxu0 %v2180
  %2710 = vmatpush1.bf16.msra.mxu0 %v2179
  %2711 = vmatprep.mubr.bf16.mxu0 %v1290
  %2712 = vmatmul.mubr.bf16.gmra.mrb[0].mxu0 %v1289
  %v2713 = vpop.f32.mrb[0].mxu0
  %v2714 = vadd.f32 %v2673, %v2713
  %v2715 = vpop.f32.mrb[0].mxu0
  %v2716 = vadd.f32 %v2675, %v2715
  %v2717 = vpop.f32.mrb[0].mxu0
  %v2718 = vpop.f32.mrb[0].mxu0
  %2719 = vdwg.mxu0
  %2720 = vmatprep.subr.bf16.mxu0 %v2182
  %2721 = vmatpush1.bf16.msra.mxu0 %v2181
  %2722 = vmatprep.subr.bf16.mxu0 %v2184
  %2723 = vmatpush1.bf16.msra.mxu0 %v2183
  %2724 = vmatprep.subr.bf16.mxu0 %v2186
  %2725 = vmatpush1.bf16.msra.mxu0 %v2185
  %2726 = vmatprep.subr.bf16.mxu0 %v2188
  %2727 = vmatpush1.bf16.msra.mxu0 %v2187
  %2728 = vmatprep.subr.bf16.mxu0 %v2190
  %2729 = vmatpush1.bf16.msra.mxu0 %v2189
  %2730 = vmatprep.subr.bf16.mxu0 %v2192
  %2731 = vmatpush1.bf16.msra.mxu0 %v2191
  %2732 = vmatprep.subr.bf16.mxu0 %v2194
  %2733 = vmatpush1.bf16.msra.mxu0 %v2193
  %2734 = vmatprep.subr.bf16.mxu0 %v2196
  %2735 = vmatpush1.bf16.msra.mxu0 %v2195
  %2736 = vmatprep.subr.bf16.mxu0 %v2198
  %2737 = vmatpush1.bf16.msra.mxu0 %v2197
  %2738 = vmatprep.subr.bf16.mxu0 %v2200
  %2739 = vmatpush1.bf16.msra.mxu0 %v2199
  %2740 = vmatprep.subr.bf16.mxu0 %v2202
  %2741 = vmatpush1.bf16.msra.mxu0 %v2201
  %2742 = vmatprep.subr.bf16.mxu0 %v2204
  %2743 = vmatpush1.bf16.msra.mxu0 %v2203
  %2744 = vmatprep.subr.bf16.mxu0 %v2206
  %2745 = vmatpush1.bf16.msra.mxu0 %v2205
  %2746 = vmatprep.subr.bf16.mxu0 %v2208
  %2747 = vmatpush1.bf16.msra.mxu0 %v2207
  %2748 = vmatprep.subr.bf16.mxu0 %v2210
  %2749 = vmatpush1.bf16.msra.mxu0 %v2209
  %2750 = vmatprep.subr.bf16.mxu0 %v2212
  %2751 = vmatpush1.bf16.msra.mxu0 %v2211
  %2752 = vmatprep.mubr.bf16.mxu0 %v1292
  %2753 = vmatmul.mubr.bf16.gmra.mrb[0].mxu0 %v1291
  %v2754 = vpop.f32.mrb[0].mxu0
  %v2755 = vadd.f32 %v2714, %v2754
  %v2756 = vpop.f32.mrb[0].mxu0
  %v2757 = vadd.f32 %v2716, %v2756
  %v2758 = vpop.f32.mrb[0].mxu0
  %v2759 = vpop.f32.mrb[0].mxu0
  %2760 = vdwg.mxu0
  %2761 = vmatprep.subr.bf16.mxu0 %v2214
  %2762 = vmatpush1.bf16.msra.mxu0 %v2213
  %2763 = vmatprep.subr.bf16.mxu0 %v2216
  %2764 = vmatpush1.bf16.msra.mxu0 %v2215
  %2765 = vmatprep.subr.bf16.mxu0 %v2218
  %2766 = vmatpush1.bf16.msra.mxu0 %v2217
  %2767 = vmatprep.subr.bf16.mxu0 %v2220
  %2768 = vmatpush1.bf16.msra.mxu0 %v2219
  %2769 = vmatprep.subr.bf16.mxu0 %v2222
  %2770 = vmatpush1.bf16.msra.mxu0 %v2221
  %2771 = vmatprep.subr.bf16.mxu0 %v2224
  %2772 = vmatpush1.bf16.msra.mxu0 %v2223
  %2773 = vmatprep.subr.bf16.mxu0 %v2226
  %2774 = vmatpush1.bf16.msra.mxu0 %v2225
  %2775 = vmatprep.subr.bf16.mxu0 %v2228
  %2776 = vmatpush1.bf16.msra.mxu0 %v2227
  %2777 = vmatprep.subr.bf16.mxu0 %v2230
  %2778 = vmatpush1.bf16.msra.mxu0 %v2229
  %2779 = vmatprep.subr.bf16.mxu0 %v2232
  %2780 = vmatpush1.bf16.msra.mxu0 %v2231
  %2781 = vmatprep.subr.bf16.mxu0 %v2234
  %2782 = vmatpush1.bf16.msra.mxu0 %v2233
  %2783 = vmatprep.subr.bf16.mxu0 %v2236
  %2784 = vmatpush1.bf16.msra.mxu0 %v2235
  %2785 = vmatprep.subr.bf16.mxu0 %v2238
  %2786 = vmatpush1.bf16.msra.mxu0 %v2237
  %2787 = vmatprep.subr.bf16.mxu0 %v2240
  %2788 = vmatpush1.bf16.msra.mxu0 %v2239
  %2789 = vmatprep.subr.bf16.mxu0 %v2242
  %2790 = vmatpush1.bf16.msra.mxu0 %v2241
  %2791 = vmatprep.subr.bf16.mxu0 %v2244
  %2792 = vmatpush1.bf16.msra.mxu0 %v2243
  %2793 = vmatprep.mubr.bf16.mxu0 %v1294
  %2794 = vmatmul.mubr.bf16.gmra.mrb[0].mxu0 %v1293
  %v2795 = vpop.f32.mrb[0].mxu0
  %v2796 = vadd.f32 %v2755, %v2795
  %v2797 = vpop.f32.mrb[0].mxu0
  %v2798 = vadd.f32 %v2757, %v2797
  %v2799 = vpop.f32.mrb[0].mxu0
  %v2800 = vpop.f32.mrb[0].mxu0
  %2801 = vdwg.mxu0
  %2802 = vmatprep.subr.bf16.mxu0 %v2246
  %2803 = vmatpush1.bf16.msra.mxu0 %v2245
  %2804 = vmatprep.subr.bf16.mxu0 %v2248
  %2805 = vmatpush1.bf16.msra.mxu0 %v2247
  %2806 = vmatprep.subr.bf16.mxu0 %v2250
  %2807 = vmatpush1.bf16.msra.mxu0 %v2249
  %2808 = vmatprep.subr.bf16.mxu0 %v2252
  %2809 = vmatpush1.bf16.msra.mxu0 %v2251
  %2810 = vmatprep.subr.bf16.mxu0 %v2254
  %2811 = vmatpush1.bf16.msra.mxu0 %v2253
  %2812 = vmatprep.subr.bf16.mxu0 %v2256
  %2813 = vmatpush1.bf16.msra.mxu0 %v2255
  %2814 = vmatprep.subr.bf16.mxu0 %v2258
  %2815 = vmatpush1.bf16.msra.mxu0 %v2257
  %2816 = vmatprep.subr.bf16.mxu0 %v2260
  %2817 = vmatpush1.bf16.msra.mxu0 %v2259
  %2818 = vmatprep.subr.bf16.mxu0 %v2262
  %2819 = vmatpush1.bf16.msra.mxu0 %v2261
  %2820 = vmatprep.subr.bf16.mxu0 %v2264
  %2821 = vmatpush1.bf16.msra.mxu0 %v2263
  %2822 = vmatprep.subr.bf16.mxu0 %v2266
  %2823 = vmatpush1.bf16.msra.mxu0 %v2265
  %2824 = vmatprep.subr.bf16.mxu0 %v2268
  %2825 = vmatpush1.bf16.msra.mxu0 %v2267
  %2826 = vmatprep.subr.bf16.mxu0 %v2270
  %2827 = vmatpush1.bf16.msra.mxu0 %v2269
  %2828 = vmatprep.subr.bf16.mxu0 %v2272
  %2829 = vmatpush1.bf16.msra.mxu0 %v2271
  %2830 = vmatprep.subr.bf16.mxu0 %v2274
  %2831 = vmatpush1.bf16.msra.mxu0 %v2273
  %2832 = vmatprep.subr.bf16.mxu0 %v2276
  %2833 = vmatpush1.bf16.msra.mxu0 %v2275
  %2834 = vmatprep.mubr.bf16.mxu0 %v1296
  %2835 = vmatmul.mubr.bf16.gmra.mrb[0].mxu0 %v1295
  %v2836 = vpop.f32.mrb[0].mxu0
  %v2837 = vadd.f32 %v2796, %v2836
  %v2838 = vpop.f32.mrb[0].mxu0
  %v2839 = vadd.f32 %v2798, %v2838
  %v2840 = vpop.f32.mrb[0].mxu0
  %v2841 = vpop.f32.mrb[0].mxu0
  %2842 = vdwg.mxu0
  %2843 = vmatprep.subr.bf16.mxu0 %v2278
  %2844 = vmatpush1.bf16.msra.mxu0 %v2277
  %2845 = vmatprep.subr.bf16.mxu0 %v2280
  %2846 = vmatpush1.bf16.msra.mxu0 %v2279
  %2847 = vmatprep.subr.bf16.mxu0 %v2282
  %2848 = vmatpush1.bf16.msra.mxu0 %v2281
  %2849 = vmatprep.subr.bf16.mxu0 %v2284
  %2850 = vmatpush1.bf16.msra.mxu0 %v2283
  %2851 = vmatprep.subr.bf16.mxu0 %v2286
  %2852 = vmatpush1.bf16.msra.mxu0 %v2285
  %2853 = vmatprep.subr.bf16.mxu0 %v2288
  %2854 = vmatpush1.bf16.msra.mxu0 %v2287
  %2855 = vmatprep.subr.bf16.mxu0 %v2290
  %2856 = vmatpush1.bf16.msra.mxu0 %v2289
  %2857 = vmatprep.subr.bf16.mxu0 %v2292
  %2858 = vmatpush1.bf16.msra.mxu0 %v2291
  %2859 = vmatprep.subr.bf16.mxu0 %v2294
  %2860 = vmatpush1.bf16.msra.mxu0 %v2293
  %2861 = vmatprep.subr.bf16.mxu0 %v2296
  %2862 = vmatpush1.bf16.msra.mxu0 %v2295
  %2863 = vmatprep.subr.bf16.mxu0 %v2298
  %2864 = vmatpush1.bf16.msra.mxu0 %v2297
  %2865 = vmatprep.subr.bf16.mxu0 %v2300
  %2866 = vmatpush1.bf16.msra.mxu0 %v2299
  %2867 = vmatprep.subr.bf16.mxu0 %v2302
  %2868 = vmatpush1.bf16.msra.mxu0 %v2301
  %2869 = vmatprep.subr.bf16.mxu0 %v2304
  %2870 = vmatpush1.bf16.msra.mxu0 %v2303
  %2871 = vmatprep.subr.bf16.mxu0 %v2306
  %2872 = vmatpush1.bf16.msra.mxu0 %v2305
  %2873 = vmatprep.subr.bf16.mxu0 %v2308
  %2874 = vmatpush1.bf16.msra.mxu0 %v2307
  %2875 = vmatprep.mubr.bf16.mxu0 %v1298
  %2876 = vmatmul.mubr.bf16.gmra.mrb[0].mxu0 %v1297
  %v2877 = vpop.f32.mrb[0].mxu0
  %v2878 = vadd.f32 %v2837, %v2877
  %v2879 = vpop.f32.mrb[0].mxu0
  %v2880 = vadd.f32 %v2839, %v2879
  %v2881 = vpop.f32.mrb[0].mxu0
  %v2882 = vpop.f32.mrb[0].mxu0
  %2883 = vdwg.mxu0
  %2884 = vmatprep.subr.bf16.mxu0 %v2310
  %2885 = vmatpush1.bf16.msra.mxu0 %v2309
  %2886 = vmatprep.subr.bf16.mxu0 %v2312
  %2887 = vmatpush1.bf16.msra.mxu0 %v2311
  %2888 = vmatprep.subr.bf16.mxu0 %v2314
  %2889 = vmatpush1.bf16.msra.mxu0 %v2313
  %2890 = vmatprep.subr.bf16.mxu0 %v2316
  %2891 = vmatpush1.bf16.msra.mxu0 %v2315
  %2892 = vmatprep.subr.bf16.mxu0 %v2318
  %2893 = vmatpush1.bf16.msra.mxu0 %v2317
  %2894 = vmatprep.subr.bf16.mxu0 %v2320
  %2895 = vmatpush1.bf16.msra.mxu0 %v2319
  %2896 = vmatprep.subr.bf16.mxu0 %v2322
  %2897 = vmatpush1.bf16.msra.mxu0 %v2321
  %2898 = vmatprep.subr.bf16.mxu0 %v2324
  %2899 = vmatpush1.bf16.msra.mxu0 %v2323
  %2900 = vmatprep.subr.bf16.mxu0 %v2326
  %2901 = vmatpush1.bf16.msra.mxu0 %v2325
  %2902 = vmatprep.subr.bf16.mxu0 %v2328
  %2903 = vmatpush1.bf16.msra.mxu0 %v2327
  %2904 = vmatprep.subr.bf16.mxu0 %v2330
  %2905 = vmatpush1.bf16.msra.mxu0 %v2329
  %2906 = vmatprep.subr.bf16.mxu0 %v2332
  %2907 = vmatpush1.bf16.msra.mxu0 %v2331
  %2908 = vmatprep.subr.bf16.mxu0 %v2334
  %2909 = vmatpush1.bf16.msra.mxu0 %v2333
  %2910 = vmatprep.subr.bf16.mxu0 %v2336
  %2911 = vmatpush1.bf16.msra.mxu0 %v2335
  %2912 = vmatprep.subr.bf16.mxu0 %v2338
  %2913 = vmatpush1.bf16.msra.mxu0 %v2337
  %2914 = vmatprep.subr.bf16.mxu0 %v2340
  %2915 = vmatpush1.bf16.msra.mxu0 %v2339
  %2916 = vmatprep.mubr.bf16.mxu0 %v1300
  %2917 = vmatmul.mubr.bf16.gmra.mrb[0].mxu0 %v1299
  %v2918 = vpop.f32.mrb[0].mxu0
  %v2919 = vadd.f32 %v2878, %v2918
  %v2920 = vpop.f32.mrb[0].mxu0
  %v2921 = vadd.f32 %v2880, %v2920
  %v2922 = vpop.f32.mrb[0].mxu0
  %v2923 = vpop.f32.mrb[0].mxu0
  %2924 = vdwg.mxu0
  %v2925 = vld [vmem:[%s2] sm:$0xff]
  %v2926 = vld [vmem:[%s2 + $0x8] sm:$0xf]
  %v2927 = vld [vmem:[%s6] sm:$0xff]
  %v2928 = vld [vmem:[%s6 + $0x8] sm:$0xff]
  %v2929 = vld [vmem:[%s6 + $0x10] sm:$0xff]
  %v2930 = vld [vmem:[%s6 + $0x18] sm:$0xff]
  %v2931 = vld [vmem:[%s6 + $0x20] sm:$0xff]
  %v2932 = vld [vmem:[%s6 + $0x28] sm:$0xff]
  %v2933 = vld [vmem:[%s6 + $0x30] sm:$0xff]
  %v2934 = vld [vmem:[%s6 + $0x38] sm:$0xff]
  %v2935 = vld [vmem:[%s6 + $0x40] sm:$0xff]
  %v2936 = vld [vmem:[%s6 + $0x48] sm:$0xff]
  %v2937 = vld [vmem:[%s6 + $0x50] sm:$0xff]
  %v2938 = vld [vmem:[%s6 + $0x58] sm:$0xff]
  %v2939 = vld [vmem:[%s6 + $0x60] sm:$0xff]
  %v2940 = vld [vmem:[%s6 + $0x68] sm:$0xff]
  %v2941 = vld [vmem:[%s6 + $0x70] sm:$0xff]
  %v2942 = vld [vmem:[%s6 + $0x78] sm:$0xff]
  %v2943 = vld [vmem:[%s6 + $0x80] sm:$0xff]
  %v2944 = vld [vmem:[%s6 + $0x88] sm:$0xff]
  %v2945 = vld [vmem:[%s6 + $0x90] sm:$0xff]
  %v2946 = vld [vmem:[%s6 + $0x98] sm:$0xff]
  %v2947 = vld [vmem:[%s6 + $0xa0] sm:$0xff]
  %v2948 = vld [vmem:[%s6 + $0xa8] sm:$0xff]
  %v2949 = vld [vmem:[%s6 + $0xb0] sm:$0xff]
  %v2950 = vld [vmem:[%s6 + $0xb8] sm:$0xff]
  %v2951 = vld [vmem:[%s6 + $0xc0] sm:$0xff]
  %v2952 = vld [vmem:[%s6 + $0xc8] sm:$0xff]
  %v2953 = vld [vmem:[%s6 + $0xd0] sm:$0xff]
  %v2954 = vld [vmem:[%s6 + $0xd8] sm:$0xff]
  %v2955 = vld [vmem:[%s6 + $0xe0] sm:$0xff]
  %v2956 = vld [vmem:[%s6 + $0xe8] sm:$0xff]
  %v2957 = vld [vmem:[%s6 + $0xf0] sm:$0xff]
  %v2958 = vld [vmem:[%s6 + $0xf8] sm:$0xff]
  %v2959 = vld [vmem:[%s6 + $0x100] sm:$0xff]
  %v2960 = vld [vmem:[%s6 + $0x108] sm:$0xff]
  %v2961 = vld [vmem:[%s6 + $0x110] sm:$0xff]
  %v2962 = vld [vmem:[%s6 + $0x118] sm:$0xff]
  %v2963 = vld [vmem:[%s6 + $0x120] sm:$0xff]
  %v2964 = vld [vmem:[%s6 + $0x128] sm:$0xff]
  %v2965 = vld [vmem:[%s6 + $0x130] sm:$0xff]
  %v2966 = vld [vmem:[%s6 + $0x138] sm:$0xff]
  %v2967 = vld [vmem:[%s6 + $0x140] sm:$0xff]
  %v2968 = vld [vmem:[%s6 + $0x148] sm:$0xff]
  %v2969 = vld [vmem:[%s6 + $0x150] sm:$0xff]
  %v2970 = vld [vmem:[%s6 + $0x158] sm:$0xff]
  %v2971 = vld [vmem:[%s6 + $0x160] sm:$0xff]
  %v2972 = vld [vmem:[%s6 + $0x168] sm:$0xff]
  %v2973 = vld [vmem:[%s6 + $0x170] sm:$0xff]
  %v2974 = vld [vmem:[%s6 + $0x178] sm:$0xff]
  %v2977 = vunpack.c.l.b16 %v2925
  %v2978 = vunpack.c.h.b16 %v2925
  %v2979 = vunpack.c.l.b16 %v2926
  %v2980 = vpack.c.b16 %v2977, %v2977
  %v2981 = vpack.c.b16 %v2978, %v2978
  %v2982 = vpack.c.b16 %v2979, %v2979
  %v3034 = vunpack.c.l.b16 %v2927
  %v3035 = vunpack.c.h.b16 %v2927
  %v3036 = vunpack.c.l.b16 %v2928
  %v3037 = vunpack.c.h.b16 %v2928
  %v3038 = vunpack.c.l.b16 %v2929
  %v3039 = vunpack.c.h.b16 %v2929
  %v3040 = vunpack.c.l.b16 %v2930
  %v3041 = vunpack.c.h.b16 %v2930
  %v3042 = vunpack.c.l.b16 %v2931
  %v3043 = vunpack.c.h.b16 %v2931
  %v3044 = vunpack.c.l.b16 %v2932
  %v3045 = vunpack.c.h.b16 %v2932
  %v3046 = vunpack.c.l.b16 %v2933
  %v3047 = vunpack.c.h.b16 %v2933
  %v3048 = vunpack.c.l.b16 %v2934
  %v3049 = vunpack.c.h.b16 %v2934
  %v3050 = vunpack.c.l.b16 %v2935
  %v3051 = vunpack.c.h.b16 %v2935
  %v3052 = vunpack.c.l.b16 %v2936
  %v3053 = vunpack.c.h.b16 %v2936
  %v3054 = vunpack.c.l.b16 %v2937
  %v3055 = vunpack.c.h.b16 %v2937
  %v3056 = vunpack.c.l.b16 %v2938
  %v3057 = vunpack.c.h.b16 %v2938
  %v3058 = vunpack.c.l.b16 %v2939
  %v3059 = vunpack.c.h.b16 %v2939
  %v3060 = vunpack.c.l.b16 %v2940
  %v3061 = vunpack.c.h.b16 %v2940
  %v3062 = vunpack.c.l.b16 %v2941
  %v3063 = vunpack.c.h.b16 %v2941
  %v3064 = vunpack.c.l.b16 %v2942
  %v3065 = vunpack.c.h.b16 %v2942
  %v3066 = vunpack.c.l.b16 %v2943
  %v3067 = vunpack.c.h.b16 %v2943
  %v3068 = vunpack.c.l.b16 %v2944
  %v3069 = vunpack.c.h.b16 %v2944
  %v3070 = vunpack.c.l.b16 %v2945
  %v3071 = vunpack.c.h.b16 %v2945
  %v3072 = vunpack.c.l.b16 %v2946
  %v3073 = vunpack.c.h.b16 %v2946
  %v3074 = vunpack.c.l.b16 %v2947
  %v3075 = vunpack.c.h.b16 %v2947
  %v3076 = vunpack.c.l.b16 %v2948
  %v3077 = vunpack.c.h.b16 %v2948
  %v3078 = vunpack.c.l.b16 %v2949
  %v3079 = vunpack.c.h.b16 %v2949
  %v3080 = vunpack.c.l.b16 %v2950
  %v3081 = vunpack.c.h.b16 %v2950
  %v3082 = vunpack.c.l.b16 %v2951
  %v3083 = vunpack.c.h.b16 %v2951
  %v3084 = vunpack.c.l.b16 %v2952
  %v3085 = vunpack.c.h.b16 %v2952
  %v3086 = vunpack.c.l.b16 %v2953
  %v3087 = vunpack.c.h.b16 %v2953
  %v3088 = vunpack.c.l.b16 %v2954
  %v3089 = vunpack.c.h.b16 %v2954
  %v3090 = vunpack.c.l.b16 %v2955
  %v3091 = vunpack.c.h.b16 %v2955
  %v3092 = vunpack.c.l.b16 %v2956
  %v3093 = vunpack.c.h.b16 %v2956
  %v3094 = vunpack.c.l.b16 %v2957
  %v3095 = vunpack.c.h.b16 %v2957
  %v3096 = vunpack.c.l.b16 %v2958
  %v3097 = vunpack.c.h.b16 %v2958
  %v3098 = vunpack.c.l.b16 %v2959
  %v3099 = vunpack.c.h.b16 %v2959
  %v3100 = vunpack.c.l.b16 %v2960
  %v3101 = vunpack.c.h.b16 %v2960
  %v3102 = vunpack.c.l.b16 %v2961
  %v3103 = vunpack.c.h.b16 %v2961
  %v3104 = vunpack.c.l.b16 %v2962
  %v3105 = vunpack.c.h.b16 %v2962
  %v3106 = vunpack.c.l.b16 %v2963
  %v3107 = vunpack.c.h.b16 %v2963
  %v3108 = vunpack.c.l.b16 %v2964
  %v3109 = vunpack.c.h.b16 %v2964
  %v3110 = vunpack.c.l.b16 %v2965
  %v3111 = vunpack.c.h.b16 %v2965
  %v3112 = vunpack.c.l.b16 %v2966
  %v3113 = vunpack.c.h.b16 %v2966
  %v3114 = vunpack.c.l.b16 %v2967
  %v3115 = vunpack.c.h.b16 %v2967
  %v3116 = vunpack.c.l.b16 %v2968
  %v3117 = vunpack.c.h.b16 %v2968
  %v3118 = vunpack.c.l.b16 %v2969
  %v3119 = vunpack.c.h.b16 %v2969
  %v3120 = vunpack.c.l.b16 %v2970
  %v3121 = vunpack.c.h.b16 %v2970
  %v3122 = vunpack.c.l.b16 %v2971
  %v3123 = vunpack.c.h.b16 %v2971
  %v3124 = vunpack.c.l.b16 %v2972
  %v3125 = vunpack.c.h.b16 %v2972
  %v3126 = vunpack.c.l.b16 %v2973
  %v3127 = vunpack.c.h.b16 %v2973
  %v3128 = vunpack.c.l.b16 %v2974
  %v3129 = vunpack.c.h.b16 %v2974
  %v3130 = vpack.c.b16 %v3036, %v3034
  %v3131 = vpack.c.b16 %v3037, %v3035
  %v3132 = vpack.c.b16 %v3040, %v3038
  %v3133 = vpack.c.b16 %v3041, %v3039
  %v3134 = vpack.c.b16 %v3044, %v3042
  %v3135 = vpack.c.b16 %v3045, %v3043
  %v3136 = vpack.c.b16 %v3048, %v3046
  %v3137 = vpack.c.b16 %v3049, %v3047
  %v3138 = vpack.c.b16 %v3052, %v3050
  %v3139 = vpack.c.b16 %v3053, %v3051
  %v3140 = vpack.c.b16 %v3056, %v3054
  %v3141 = vpack.c.b16 %v3057, %v3055
  %v3142 = vpack.c.b16 %v3060, %v3058
  %v3143 = vpack.c.b16 %v3061, %v3059
  %v3144 = vpack.c.b16 %v3064, %v3062
  %v3145 = vpack.c.b16 %v3065, %v3063
  %v3146 = vpack.c.b16 %v3068, %v3066
  %v3147 = vpack.c.b16 %v3069, %v3067
  %v3148 = vpack.c.b16 %v3072, %v3070
  %v3149 = vpack.c.b16 %v3073, %v3071
  %v3150 = vpack.c.b16 %v3076, %v3074
  %v3151 = vpack.c.b16 %v3077, %v3075
  %v3152 = vpack.c.b16 %v3080, %v3078
  %v3153 = vpack.c.b16 %v3081, %v3079
  %v3154 = vpack.c.b16 %v3084, %v3082
  %v3155 = vpack.c.b16 %v3085, %v3083
  %v3156 = vpack.c.b16 %v3088, %v3086
  %v3157 = vpack.c.b16 %v3089, %v3087
  %v3158 = vpack.c.b16 %v3092, %v3090
  %v3159 = vpack.c.b16 %v3093, %v3091
  %v3160 = vpack.c.b16 %v3096, %v3094
  %v3161 = vpack.c.b16 %v3097, %v3095
  %v3162 = vpack.c.b16 %v3100, %v3098
  %v3163 = vpack.c.b16 %v3101, %v3099
  %v3164 = vpack.c.b16 %v3104, %v3102
  %v3165 = vpack.c.b16 %v3105, %v3103
  %v3166 = vpack.c.b16 %v3108, %v3106
  %v3167 = vpack.c.b16 %v3109, %v3107
  %v3168 = vpack.c.b16 %v3112, %v3110
  %v3169 = vpack.c.b16 %v3113, %v3111
  %v3170 = vpack.c.b16 %v3116, %v3114
  %v3171 = vpack.c.b16 %v3117, %v3115
  %v3172 = vpack.c.b16 %v3120, %v3118
  %v3173 = vpack.c.b16 %v3121, %v3119
  %v3174 = vpack.c.b16 %v3124, %v3122
  %v3175 = vpack.c.b16 %v3125, %v3123
  %v3176 = vpack.c.b16 %v3128, %v3126
  %v3177 = vpack.c.b16 %v3129, %v3127
  %3226 = vmatprep.subr.bf16.mxu0 %v3131
  %3227 = vmatpush1.bf16.msra.mxu0 %v3130
  %3228 = vmatprep.subr.bf16.mxu0 %v3133
  %3229 = vmatpush1.bf16.msra.mxu0 %v3132
  %3230 = vmatprep.subr.bf16.mxu0 %v3135
  %3231 = vmatpush1.bf16.msra.mxu0 %v3134
  %3232 = vmatprep.subr.bf16.mxu0 %v3137
  %3233 = vmatpush1.bf16.msra.mxu0 %v3136
  %3234 = vmatprep.subr.bf16.mxu0 %v3139
  %3235 = vmatpush1.bf16.msra.mxu0 %v3138
  %3236 = vmatprep.subr.bf16.mxu0 %v3141
  %3237 = vmatpush1.bf16.msra.mxu0 %v3140
  %3238 = vmatprep.subr.bf16.mxu0 %v3143
  %3239 = vmatpush1.bf16.msra.mxu0 %v3142
  %3240 = vmatprep.subr.bf16.mxu0 %v3145
  %3241 = vmatpush1.bf16.msra.mxu0 %v3144
  %3242 = vmatprep.subr.bf16.mxu0 %v3147
  %3243 = vmatpush1.bf16.msra.mxu0 %v3146
  %3244 = vmatprep.subr.bf16.mxu0 %v3149
  %3245 = vmatpush1.bf16.msra.mxu0 %v3148
  %3246 = vmatprep.subr.bf16.mxu0 %v3151
  %3247 = vmatpush1.bf16.msra.mxu0 %v3150
  %3248 = vmatprep.subr.bf16.mxu0 %v3153
  %3249 = vmatpush1.bf16.msra.mxu0 %v3152
  %3250 = vmatprep.subr.bf16.mxu0 %v3155
  %3251 = vmatpush1.bf16.msra.mxu0 %v3154
  %3252 = vmatprep.subr.bf16.mxu0 %v3157
  %3253 = vmatpush1.bf16.msra.mxu0 %v3156
  %3254 = vmatprep.subr.bf16.mxu0 %v3159
  %3255 = vmatpush1.bf16.msra.mxu0 %v3158
  %3256 = vmatprep.subr.bf16.mxu0 %v3161
  %3257 = vmatpush1.bf16.msra.mxu0 %v3160
  %3258 = vmatprep.mubr.bf16.mxu0 %v2981
  %3259 = vmatmul.mubr.bf16.gmra.mrb[0].mxu0 %v2980
  %v3260 = vpop.f32.mrb[0].mxu0
  %v3261 = vadd.f32 0.0, %v3260
  %v3262 = vpop.f32.mrb[0].mxu0
  %v3263 = vadd.f32 0.0, %v3262
  %v3264 = vpop.f32.mrb[0].mxu0
  %v3265 = vpop.f32.mrb[0].mxu0
  %3266 = vdwg.mxu0
  %3267 = vmatprep.subr.bf16.mxu0 %v3163
  %3268 = vmatpush1.bf16.msra.mxu0 %v3162
  %3269 = vmatprep.subr.bf16.mxu0 %v3165
  %3270 = vmatpush1.bf16.msra.mxu0 %v3164
  %3271 = vmatprep.subr.bf16.mxu0 %v3167
  %3272 = vmatpush1.bf16.msra.mxu0 %v3166
  %3273 = vmatprep.subr.bf16.mxu0 %v3169
  %3274 = vmatpush1.bf16.msra.mxu0 %v3168
  %3275 = vmatprep.subr.bf16.mxu0 %v3171
  %3276 = vmatpush1.bf16.msra.mxu0 %v3170
  %3277 = vmatprep.subr.bf16.mxu0 %v3173
  %3278 = vmatpush1.bf16.msra.mxu0 %v3172
  %3279 = vmatprep.subr.bf16.mxu0 %v3175
  %3280 = vmatpush1.bf16.msra.mxu0 %v3174
  %3281 = vmatprep.subr.bf16.mxu0 %v3177
  %3282 = vmatpush1.bf16.msra.mxu0 %v3176
  %3283 = vmatprep.subr.bf16.mxu0 0
  %3284 = vmatpush1.bf16.msra.mxu0 0
  %3285 = vmatprep.subr.bf16.mxu0 0
  %3286 = vmatpush1.bf16.msra.mxu0 0
  %3287 = vmatprep.subr.bf16.mxu0 0
  %3288 = vmatpush1.bf16.msra.mxu0 0
  %3289 = vmatprep.subr.bf16.mxu0 0
  %3290 = vmatpush1.bf16.msra.mxu0 0
  %3291 = vmatprep.subr.bf16.mxu0 0
  %3292 = vmatpush1.bf16.msra.mxu0 0
  %3293 = vmatprep.subr.bf16.mxu0 0
  %3294 = vmatpush1.bf16.msra.mxu0 0
  %3295 = vmatprep.subr.bf16.mxu0 0
  %3296 = vmatpush1.bf16.msra.mxu0 0
  %3297 = vmatprep.subr.bf16.mxu0 0
  %3298 = vmatpush1.bf16.msra.mxu0 0
  %3299 = vmatprep.mubr.bf16.mxu0 0
  %3300 = vmatmul.mubr.bf16.gmra.mrb[0].mxu0 %v2982
  %v3301 = vpop.f32.mrb[0].mxu0
  %v3302 = vadd.f32 %v3261, %v3301
  %v3303 = vpop.f32.mrb[0].mxu0
  %v3304 = vadd.f32 %v3263, %v3303
  %v3305 = vpop.f32.mrb[0].mxu0
  %v3306 = vpop.f32.mrb[0].mxu0
  %3307 = vdwg.mxu0
  %v3308 = vadd.f32 %v2919, %v3302
  %v3309 = vadd.f32 %v2921, %v3304
  %v3310 = vld [vmem:[%s3] sm:$0xf]
  %v3311 = vld [vmem:[%s7] sm:$0xff]
  %v3312 = vld [vmem:[%s7 + $0x8] sm:$0xff]
  %v3313 = vld [vmem:[%s7 + $0x10] sm:$0xff]
  %v3314 = vld [vmem:[%s7 + $0x18] sm:$0xff]
  %v3315 = vld [vmem:[%s7 + $0x20] sm:$0xff]
  %v3316 = vld [vmem:[%s7 + $0x28] sm:$0xff]
  %v3317 = vld [vmem:[%s7 + $0x30] sm:$0xff]
  %v3318 = vld [vmem:[%s7 + $0x38] sm:$0xff]
  %v3319 = vld [vmem:[%s7 + $0x40] sm:$0xff]
  %v3320 = vld [vmem:[%s7 + $0x48] sm:$0xff]
  %v3321 = vld [vmem:[%s7 + $0x50] sm:$0xff]
  %v3322 = vld [vmem:[%s7 + $0x58] sm:$0xff]
  %v3323 = vld [vmem:[%s7 + $0x60] sm:$0xff]
  %v3324 = vld [vmem:[%s7 + $0x68] sm:$0xff]
  %v3325 = vld [vmem:[%s7 + $0x70] sm:$0xff]
  %v3326 = vld [vmem:[%s7 + $0x78] sm:$0xff]
  %v3343 = vunpack.c.l.b16 %v3311
  %v3344 = vunpack.c.h.b16 %v3311
  %v3345 = vunpack.c.l.b16 %v3312
  %v3346 = vunpack.c.h.b16 %v3312
  %v3347 = vunpack.c.l.b16 %v3313
  %v3348 = vunpack.c.h.b16 %v3313
  %v3349 = vunpack.c.l.b16 %v3314
  %v3350 = vunpack.c.h.b16 %v3314
  %v3351 = vunpack.c.l.b16 %v3315
  %v3352 = vunpack.c.h.b16 %v3315
  %v3353 = vunpack.c.l.b16 %v3316
  %v3354 = vunpack.c.h.b16 %v3316
  %v3355 = vunpack.c.l.b16 %v3317
  %v3356 = vunpack.c.h.b16 %v3317
  %v3357 = vunpack.c.l.b16 %v3318
  %v3358 = vunpack.c.h.b16 %v3318
  %v3359 = vunpack.c.l.b16 %v3319
  %v3360 = vunpack.c.h.b16 %v3319
  %v3361 = vunpack.c.l.b16 %v3320
  %v3362 = vunpack.c.h.b16 %v3320
  %v3363 = vunpack.c.l.b16 %v3321
  %v3364 = vunpack.c.h.b16 %v3321
  %v3365 = vunpack.c.l.b16 %v3322
  %v3366 = vunpack.c.h.b16 %v3322
  %v3367 = vunpack.c.l.b16 %v3323
  %v3368 = vunpack.c.h.b16 %v3323
  %v3369 = vunpack.c.l.b16 %v3324
  %v3370 = vunpack.c.h.b16 %v3324
  %v3371 = vunpack.c.l.b16 %v3325
  %v3372 = vunpack.c.h.b16 %v3325
  %v3373 = vunpack.c.l.b16 %v3326
  %v3374 = vunpack.c.h.b16 %v3326
  %v3375 = vpack.c.b16 %v3345, %v3343
  %v3376 = vpack.c.b16 %v3346, %v3344
  %v3377 = vpack.c.b16 %v3349, %v3347
  %v3378 = vpack.c.b16 %v3350, %v3348
  %v3379 = vpack.c.b16 %v3353, %v3351
  %v3380 = vpack.c.b16 %v3354, %v3352
  %v3381 = vpack.c.b16 %v3357, %v3355
  %v3382 = vpack.c.b16 %v3358, %v3356
  %v3383 = vpack.c.b16 %v3361, %v3359
  %v3384 = vpack.c.b16 %v3362, %v3360
  %v3385 = vpack.c.b16 %v3365, %v3363
  %v3386 = vpack.c.b16 %v3366, %v3364
  %v3387 = vpack.c.b16 %v3369, %v3367
  %v3388 = vpack.c.b16 %v3370, %v3368
  %v3389 = vpack.c.b16 %v3373, %v3371
  %v3390 = vpack.c.b16 %v3374, %v3372
  %3407 = vmatprep.subr.bf16.mxu0 %v3376
  %3408 = vmatpush1.bf16.msra.mxu0 %v3375
  %3409 = vmatprep.subr.bf16.mxu0 %v3378
  %3410 = vmatpush1.bf16.msra.mxu0 %v3377
  %3411 = vmatprep.subr.bf16.mxu0 %v3380
  %3412 = vmatpush1.bf16.msra.mxu0 %v3379
  %3413 = vmatprep.subr.bf16.mxu0 %v3382
  %3414 = vmatpush1.bf16.msra.mxu0 %v3381
  %3415 = vmatprep.subr.bf16.mxu0 %v3384
  %3416 = vmatpush1.bf16.msra.mxu0 %v3383
  %3417 = vmatprep.subr.bf16.mxu0 %v3386
  %3418 = vmatpush1.bf16.msra.mxu0 %v3385
  %3419 = vmatprep.subr.bf16.mxu0 %v3388
  %3420 = vmatpush1.bf16.msra.mxu0 %v3387
  %3421 = vmatprep.subr.bf16.mxu0 %v3390
  %3422 = vmatpush1.bf16.msra.mxu0 %v3389
  %3423 = vmatprep.subr.bf16.mxu0 0
  %3424 = vmatpush1.bf16.msra.mxu0 0
  %3425 = vmatprep.subr.bf16.mxu0 0
  %3426 = vmatpush1.bf16.msra.mxu0 0
  %3427 = vmatprep.subr.bf16.mxu0 0
  %3428 = vmatpush1.bf16.msra.mxu0 0
  %3429 = vmatprep.subr.bf16.mxu0 0
  %3430 = vmatpush1.bf16.msra.mxu0 0
  %3431 = vmatprep.subr.bf16.mxu0 0
  %3432 = vmatpush1.bf16.msra.mxu0 0
  %3433 = vmatprep.subr.bf16.mxu0 0
  %3434 = vmatpush1.bf16.msra.mxu0 0
  %3435 = vmatprep.subr.bf16.mxu0 0
  %3436 = vmatpush1.bf16.msra.mxu0 0
  %3437 = vmatprep.subr.bf16.mxu0 0
  %3438 = vmatpush1.bf16.msra.mxu0 0
  %3439 = vmatprep.mubr.bf16.mxu0 0
  %3440 = vmatmul.mubr.bf16.gmra.mrb[0].mxu0 %v3310
  %v3441 = vpop.f32.mrb[0].mxu0
  %v3442 = vadd.f32 0.0, %v3441
  %v3443 = vpop.f32.mrb[0].mxu0
  %v3444 = vadd.f32 0.0, %v3443
  %v3445 = vpop.f32.mrb[0].mxu0
  %v3446 = vpop.f32.mrb[0].mxu0
  %3447 = vdwg.mxu0
  %v3448 = vadd.f32 %v3308, %v3442
  %v3449 = vadd.f32 %v3309, %v3444
  %v3450 = vld [vmem:[%s8] sm:$0x3]
  %v3452 = vlaneseq
  %v3453 = vshrl.u32 %v3452, 7
  %v3454 = vsub.s32 0, %v3453
  %v3455 = vrot.slane %v3450, %v3454
  %v3456 = vlaneseq
  %v3457 = vshrl.u32 %v3456, 7
  %v3458 = vsub.s32 1, %v3457
  %v3459 = vrot.slane %v3450, %v3458
  %v3462 = vadd.f32 %v3448, %v3455
  %v3463 = vadd.f32 %v3449, %v3459
  %v3464 = vmul.f32 %v3462, 0.5
  %v3465 = vmul.f32 %v3463, 0.5
  %v3466 = vtanh.pop %v3464
  %v3467 = vtanh.pop %v3465
  %v3468 = vadd.f32 %v3466, 1.0
  %v3469 = vadd.f32 %v3467, 1.0
  %v3470 = vmul.f32 %v3468, 0.5
  %v3471 = vmul.f32 %v3469, 0.5
  %3472 = vst [vmem:[%s9] sm:$0xff] %v3470
  %3473 = vst [vmem:[%s9 + $0x8] sm:$0xff] %v3471
  // Predicated region
  $region38: #{fcn_forward.23} parent=0 // pred_check
    _
  $region39: #{fcn_forward.23} parent=0 // pred_check_branch
    %3475 = sbr.rel (0) target = $region41
  $region40: #{fcn_forward.23} parent=0 // pred_region
    _
  $region41: #{fcn_forward.23} parent=0 // pred_fallthru
    _
  // Predicated region
  $region42: #{fcn_forward.23} parent=0 // pred_check
    _
  $region43: #{fcn_forward.23} parent=0 // pred_check_branch
    %3477 = sbr.rel (0) target = $region45
  $region44: #{fcn_forward.23} parent=0 // pred_region
    _
  $region45: #{fcn_forward.23} parent=0 // pred_fallthru
    _

</llo_original>
